<compile_context>
chip_gen: v7x
topology: tpu7x:2x2x1
jax: 0.10.0
libtpu: 0.0.40
codegen_flags: <defaults>
</compile_context>

<pallas_src>
import functools
import math

import jax
import jax.numpy as jnp
import numpy as np
from jax.experimental import pallas as pl
from jax.experimental.pallas import tpu as pltpu

BN_EPS = 1e-5


# ----------------------------------------------------------------------------
# Fused Pallas kernel: entire KAGIN_cls forward (node_level=True), one graph / step
# ----------------------------------------------------------------------------
def fused_forward_kernel(*refs, gin_flags, has_bias, grid_size, spline_order,
                         mxu_dtype):
    """refs = (adj, x0, [base_w, spline_w(C,in,out), (bias)] * n_layers, out)."""
    adj_ref, x_ref = refs[0], refs[1]
    o_ref = refs[-1]
    wrefs = refs[2:-1]

    # Uniform B-spline grid (grid_range = [-1, 1]) baked in as f32 compile-time consts.
    num_pts = grid_size + 2 * spline_order + 1          # knots t_0 .. t_{num_pts-1}
    h = np.float32(2.0) / np.float32(grid_size)
    t0 = -np.float32(spline_order) * h - np.float32(1.0)
    inv_h = np.float32(1.0) / h

    def to_mxu(a):
        return a if a.dtype == mxu_dtype else a.astype(mxu_dtype)

    adj = adj_ref[0]                # (N, N) f32
    adj_m = to_mxu(adj)             # cast once; reused by every GIN aggregation
    x = x_ref[0]                    # (N, F0) f32

    widx = 0
    for l in range(len(gin_flags)):
        if gin_flags[l]:
            # GINConv sum-aggregation; (1+eps)*x self term (eps=0) added on the VPU so
            # the self contribution does not go through MXU input truncation.
            x = x + jnp.dot(adj_m, to_mxu(x), preferred_element_type=jnp.float32)

        bw_ref, sw_ref = wrefs[widx], wrefs[widx + 1]    # (in,out), (C,in,out)
        widx += 2

        # ---- base path: silu(x) @ W_base (logistic on the EUP) ----
        acc = jnp.dot(to_mxu(jax.nn.silu(x)), bw_ref[...],
                      preferred_element_type=jnp.float32)

        # ---- spline path: uniform-knot Cox-de Boor, unnormalised ----
        # v_j = (x - t_j)/h via chained single subtractions (v_{j+1} = v_j - 1).
        v = [(x - float(t0)) * float(inv_h)]
        for _ in range(num_pts - 1):
            v.append(v[-1] - 1.0)
        # level-0 indicators via step differences: b_j = [x>=t_j] - [x>=t_{j+1}]
        ge = [jnp.where(vj >= 0.0, 1.0, 0.0) for vj in v]
        b = [ge[j] - ge[j + 1] for j in range(num_pts - 1)]
        # levels 1..order; the uniform 1/(k*h) denominators are dropped — the constant
        # 1/spline_order! is folded into the spline weights host-side (fold_params).
        for k in range(1, spline_order + 1):
            b = [v[j] * b[j] - v[j + k + 1] * b[j + 1] for j in range(len(b) - 1)]

        # Per-coefficient matmuls: no lane-misaligned concat; each basis piece is
        # consumed right after it is final (bounded live ranges); the MXU has plenty
        # of idle pushes at these sizes.
        for j in range(len(b)):                          # len(b) == grid_size + spline_order
            acc = acc + jnp.dot(to_mxu(b[j]), sw_ref[j],
                                preferred_element_type=jnp.float32)

        if has_bias[l]:                                  # folded BatchNorm1d (eval) shift
            acc = acc + wrefs[widx][...]
            widx += 1
        x = acc
        # Dropout: identity in eval mode.

    # fused log_softmax epilogue (exp/log on the EUP, no vector divide)
    m = jnp.max(x, axis=-1, keepdims=True)
    z = x - m
    lse = jnp.log(jnp.sum(jnp.exp(z), axis=-1, keepdims=True))
    o_ref[0] = z - lse


# ----------------------------------------------------------------------------
# Wrapper: one fused pallas_call, graphs batched along a 'parallel' grid axis
# ----------------------------------------------------------------------------
def kagin_forward(x, adj, flat_weights, *, gin_flags, has_bias, grid_size,
                  spline_order, num_classes):
    g, n, f0 = x.shape
    n_pad = ((n + 7) // 8) * 8                  # pad nodes to a sublane multiple
    if n_pad != n:
        x = jnp.pad(x, ((0, 0), (0, n_pad - n), (0, 0)))
        adj = jnp.pad(adj, ((0, 0), (0, n_pad - n), (0, n_pad - n)))

    kernel = functools.partial(
        fused_forward_kernel, gin_flags=gin_flags, has_bias=has_bias,
        grid_size=grid_size, spline_order=spline_order,
        mxu_dtype=flat_weights[0].dtype)

    # Per-graph blocks for adjacency / features / output; weights fully resident.
    in_specs = [pl.BlockSpec((1, n_pad, n_pad), lambda i: (i, 0, 0)),
                pl.BlockSpec((1, n_pad, f0), lambda i: (i, 0, 0))]
    for w in flat_weights:
        in_specs.append(pl.BlockSpec(w.shape, lambda i, nd=w.ndim: (0,) * nd))

    # Explicit VMEM budget (sized for the smallest generation, v7x = 64 MiB physical).
    weight_bytes = sum(int(np.prod(w.shape)) * w.dtype.itemsize for w in flat_weights)
    block_bytes = 4 * (n_pad * n_pad + n_pad * f0 + n_pad * num_classes)
    vmem_limit = int(min(64 << 20, max(8 << 20, 8 * (weight_bytes + 2 * block_bytes))))

    out = pl.pallas_call(
        kernel,
        out_shape=jax.ShapeDtypeStruct((g, n_pad, num_classes), jnp.float32),
        grid=(g,),
        in_specs=in_specs,
        out_specs=pl.BlockSpec((1, n_pad, num_classes), lambda i: (i, 0, 0)),
        compiler_params=pltpu.CompilerParams(
            dimension_semantics=("parallel",),
            vmem_limit_bytes=vmem_limit),
    )(adj, x, *flat_weights)
    return out[:, :n, :]


# ----------------------------------------------------------------------------
# Parameter construction (deterministic, synthetic) + host-side folding
# ----------------------------------------------------------------------------
def init_model(key, gnn_layers, num_features, hidden_dim, num_classes,
               hidden_layers, grid_size, spline_order):
    num_coef = grid_size + spline_order

    def init_kan(key, sizes):
        layers = []
        for fi, fo in zip(sizes[:-1], sizes[1:]):
            key, k1, k2, k3 = jax.random.split(key, 4)
            bw = jax.random.normal(k1, (fi, fo), jnp.float32) / jnp.sqrt(float(fi))
            sw = jax.random.normal(k2, (num_coef, fi, fo), jnp.float32) * 0.1
            # standalone spline scaler (per in,out), folded into spline_w at init
            scaler = 1.0 + 0.1 * jax.random.normal(k3, (fi, fo), jnp.float32)
            layers.append({"base_w": bw, "spline_w": sw * scaler[None]})
        return layers, key

    convs = []
    sizes = [num_features] + [hidden_dim] * (hidden_layers - 1) + [hidden_dim]
    lyrs, key = init_kan(key, sizes)
    convs.append(lyrs)
    for _ in range(gnn_layers - 1):
        sizes = [hidden_dim] + [hidden_dim] * (hidden_layers - 1) + [hidden_dim]
        lyrs, key = init_kan(key, sizes)
        convs.append(lyrs)

    # BatchNorm1d eval-mode parameters (non-trivial, as if trained)
    bns = []
    for _ in range(gnn_layers):
        key, k1, k2, k3, k4 = jax.random.split(key, 5)
        bns.append({
            "gamma": 1.0 + 0.1 * jax.random.normal(k1, (hidden_dim,), jnp.float32),
            "beta": 0.1 * jax.random.normal(k2, (hidden_dim,), jnp.float32),
            "mean": 0.1 * jax.random.normal(k3, (hidden_dim,), jnp.float32),
            "var": 1.0 + 0.2 * jax.random.uniform(k4, (hidden_dim,), jnp.float32),
        })

    head_sizes = [hidden_dim] + [hidden_dim] * (hidden_layers - 1) + [num_classes]
    head, key = init_kan(key, head_sizes)
    return {"conv": convs, "bn": bns, "head": head}


def fold_params(params, spline_order, mxu_dtype=jnp.float32):
    """Fold BN (eval) into the last KANLinear of each conv KAN, fold the 1/order!
    normalisation of the uniform-knot recursion into the spline weights, keep the
    spline weights as (C, in, out) for the per-coefficient matmuls, and cast the
    matmul weights to the requested MXU input dtype (bias rows stay f32)."""
    flat, gin_flags, has_bias = [], [], []
    spline_norm = 1.0 / float(math.factorial(spline_order))

    def add_kan(layers, bn=None, gin_first=False):
        last = len(layers) - 1
        for li, lp in enumerate(layers):
            gin_flags.append(bool(gin_first and li == 0))
            bw = lp["base_w"]
            sw = lp["spline_w"] * spline_norm          # (C, in, out)
            if bn is not None and li == last:
                s = bn["gamma"] / jnp.sqrt(bn["var"] + BN_EPS)          # (out,)
                shift = bn["beta"] - bn["mean"] * s
                flat.extend([(bw * s[None, :]).astype(mxu_dtype),
                             (sw * s[None, None, :]).astype(mxu_dtype),
                             shift.reshape(1, -1)])                      # bias stays f32
                has_bias.append(True)
            else:
                flat.extend([bw.astype(mxu_dtype), sw.astype(mxu_dtype)])
                has_bias.append(False)

    for gi, layers in enumerate(params["conv"]):
        add_kan(layers, bn=params["bn"][gi], gin_first=True)
    add_kan(params["head"], bn=None, gin_first=False)
    return flat, tuple(gin_flags), tuple(has_bias)


# ----------------------------------------------------------------------------
# Pure-JAX reference (unfused, HIGHEST precision) for a numerical sanity check
# ----------------------------------------------------------------------------
def _kan_linear_ref(x, base_w, spline_w, grid_size, spline_order):
    hp = jax.lax.Precision.HIGHEST
    num_pts = grid_size + 2 * spline_order + 1
    h = 2.0 / grid_size
    g = ((jnp.arange(num_pts, dtype=jnp.float32) - spline_order) * h - 1.0)[:, None, None]
    xb = x[None]                                            # (1, T, in)
    bases = ((xb >= g[:-1]) & (xb < g[1:])).astype(jnp.float32)
    for k in range(1, spline_order + 1):
        bases = ((xb - g[:-(k + 1)]) / (g[k:-1] - g[:-(k + 1)]) * bases[:-1]
                 + (g[k + 1:] - xb) / (g[k + 1:] - g[1:-k]) * bases[1:])
    base = jnp.dot(jax.nn.silu(x), base_w, precision=hp)
    spl = jnp.einsum("cti,cio->to", bases, spline_w, precision=hp)
    return base + spl


def forward_ref(x, adj, params, grid_size, spline_order):
    hp = jax.lax.Precision.HIGHEST
    for gi, layers in enumerate(params["conv"]):
        x = x + jnp.dot(adj, x, precision=hp)               # GINConv, eps=0
        for lp in layers:
            x = _kan_linear_ref(x, lp["base_w"], lp["spline_w"], grid_size, spline_order)
        bn = params["bn"][gi]
        s = bn["gamma"] / jnp.sqrt(bn["var"] + BN_EPS)
        x = x * s + (bn["beta"] - bn["mean"] * s)            # BatchNorm1d (eval)
        # Dropout: identity in eval mode
    for lp in params["head"]:
        x = _kan_linear_ref(x, lp["base_w"], lp["spline_w"], grid_size, spline_order)
    return jax.nn.log_softmax(x, axis=1)


# ----------------------------------------------------------------------------
if __name__ == "__main__":
    # Model config (small, consistent with KAGIN_cls.__init__)
    gnn_layers, num_features, hidden_dim, num_classes = 2, 8, 32, 4
    hidden_layers, grid_size, spline_order, dropout = 2, 5, 3, 0.5

    # Batch of 2 small graphs, 16 nodes each.  PyG processes a batch as one disjoint
    # graph; with node-level output and eval-mode BatchNorm the graphs are independent,
    # so each graph maps to one step of the 'parallel' grid axis.
    num_graphs, num_nodes = 2, 16
    adj_np = np.zeros((num_graphs, num_nodes, num_nodes), np.float32)
    for i in range(num_nodes):
        j1 = (i + 1) % num_nodes
        j2 = (i + 2) % num_nodes
        adj_np[0, i, j1] = adj_np[0, j1, i] = 1.0      # graph 0: bidirectional ring
        adj_np[1, i, j1] = adj_np[1, j1, i] = 1.0      # graph 1: ring + stride-2 chords
        adj_np[1, i, j2] = adj_np[1, j2, i] = 1.0
    adj = jnp.asarray(adj_np)                          # adj[g, dst, src]

    key = jax.random.PRNGKey(0)
    key, kx = jax.random.split(key)
    x = jax.random.normal(kx, (num_graphs, num_nodes, num_features), jnp.float32)

    params = init_model(key, gnn_layers, num_features, hidden_dim, num_classes,
                        hidden_layers, grid_size, spline_order)

    ref = jnp.stack([forward_ref(x[g], adj[g], params, grid_size, spline_order)
                     for g in range(num_graphs)])

    # f32 MXU inputs (tight tolerance) and bf16 MXU inputs with f32 accumulation
    # (looser tolerance: bf16 keeps ~3 decimal digits on matmul inputs).
    for mxu_dtype, rtol, atol in ((jnp.float32, 1e-2, 1e-2),
                                  (jnp.bfloat16, 5e-2, 1e-1)):
        flat_w, gin_flags, has_bias = fold_params(params, spline_order, mxu_dtype)
        forward = jax.jit(functools.partial(
            kagin_forward, gin_flags=gin_flags, has_bias=has_bias,
            grid_size=grid_size, spline_order=spline_order,
            num_classes=num_classes))
        out = jax.block_until_ready(forward(x, adj, flat_w))
        assert out.shape == (num_graphs, num_nodes, num_classes)
        np.testing.assert_allclose(np.asarray(out), np.asarray(ref),
                                   rtol=rtol, atol=atol)

    print("KERNEL_OK")
</pallas_src>

<mosaic_0001>
module attributes {stable_mosaic.version = 11 : i64} {
  func.func @fused_forward_kernel(%arg0: i32, %arg1: memref<1x16x16xf32, #tpu.memory_space<vmem>>, %arg2: memref<1x16x8xf32, #tpu.memory_space<vmem>>, %arg3: memref<8x32xf32, #tpu.memory_space<vmem>>, %arg4: memref<8x8x32xf32, #tpu.memory_space<vmem>>, %arg5: memref<32x32xf32, #tpu.memory_space<vmem>>, %arg6: memref<8x32x32xf32, #tpu.memory_space<vmem>>, %arg7: memref<1x32xf32, #tpu.memory_space<vmem>>, %arg8: memref<32x32xf32, #tpu.memory_space<vmem>>, %arg9: memref<8x32x32xf32, #tpu.memory_space<vmem>>, %arg10: memref<32x32xf32, #tpu.memory_space<vmem>>, %arg11: memref<8x32x32xf32, #tpu.memory_space<vmem>>, %arg12: memref<1x32xf32, #tpu.memory_space<vmem>>, %arg13: memref<32x32xf32, #tpu.memory_space<vmem>>, %arg14: memref<8x32x32xf32, #tpu.memory_space<vmem>>, %arg15: memref<32x4xf32, #tpu.memory_space<vmem>>, %arg16: memref<8x32x4xf32, #tpu.memory_space<vmem>>, %arg17: memref<1x16x4xf32, #tpu.memory_space<vmem>>) attributes {dimension_semantics = [#tpu.dimension_semantics<parallel>], iteration_bounds = array<i64: 2>, scalar_prefetch = 0 : i64, scratch_operands = 0 : i64, tpu.core_type = #tpu.core_type<tc>, window_params = [{transform_indices = @transform_0, window_bounds = array<i64: 1, 16, 16>}, {transform_indices = @transform_1, window_bounds = array<i64: 1, 16, 8>}, {pipeline_mode = #tpu.pipeline_mode<synchronous>, transform_indices = @transform_2, window_bounds = array<i64: 8, 32>}, {pipeline_mode = #tpu.pipeline_mode<synchronous>, transform_indices = @transform_3, window_bounds = array<i64: 8, 8, 32>}, {pipeline_mode = #tpu.pipeline_mode<synchronous>, transform_indices = @transform_4, window_bounds = array<i64: 32, 32>}, {pipeline_mode = #tpu.pipeline_mode<synchronous>, transform_indices = @transform_5, window_bounds = array<i64: 8, 32, 32>}, {pipeline_mode = #tpu.pipeline_mode<synchronous>, transform_indices = @transform_6, window_bounds = array<i64: 1, 32>}, {pipeline_mode = #tpu.pipeline_mode<synchronous>, transform_indices = @transform_7, window_bounds = array<i64: 32, 32>}, {pipeline_mode = #tpu.pipeline_mode<synchronous>, transform_indices = @transform_8, window_bounds = array<i64: 8, 32, 32>}, {pipeline_mode = #tpu.pipeline_mode<synchronous>, transform_indices = @transform_9, window_bounds = array<i64: 32, 32>}, {pipeline_mode = #tpu.pipeline_mode<synchronous>, transform_indices = @transform_10, window_bounds = array<i64: 8, 32, 32>}, {pipeline_mode = #tpu.pipeline_mode<synchronous>, transform_indices = @transform_11, window_bounds = array<i64: 1, 32>}, {pipeline_mode = #tpu.pipeline_mode<synchronous>, transform_indices = @transform_12, window_bounds = array<i64: 32, 32>}, {pipeline_mode = #tpu.pipeline_mode<synchronous>, transform_indices = @transform_13, window_bounds = array<i64: 8, 32, 32>}, {pipeline_mode = #tpu.pipeline_mode<synchronous>, transform_indices = @transform_14, window_bounds = array<i64: 32, 4>}, {pipeline_mode = #tpu.pipeline_mode<synchronous>, transform_indices = @transform_15, window_bounds = array<i64: 8, 32, 4>}, {transform_indices = @transform_16, window_bounds = array<i64: 1, 16, 4>}]} {
    %c0 = arith.constant 0 : index
    %c0_0 = arith.constant 0 : index
    %c0_1 = arith.constant 0 : index
    %0 = vector.load %arg1[%c0, %c0_0, %c0_1] : memref<1x16x16xf32, #tpu.memory_space<vmem>>, vector<1x16x16xf32>
    %1 = vector.shape_cast %0 : vector<1x16x16xf32> to vector<16x16xf32>
    %c0_2 = arith.constant 0 : index
    %c0_3 = arith.constant 0 : index
    %c0_4 = arith.constant 0 : index
    %2 = vector.load %arg2[%c0_2, %c0_3, %c0_4] : memref<1x16x8xf32, #tpu.memory_space<vmem>>, vector<1x16x8xf32>
    %3 = vector.shape_cast %2 : vector<1x16x8xf32> to vector<16x8xf32>
    %cst = arith.constant dense<0.000000e+00> : vector<16x8xf32>
    %4 = tpu.matmul %1, %3, %cst {dimension_numbers = #tpu.dot_dimension_numbers<[1], [0], [0], [1], [0, 0, 1, 1], [], []>} : vector<16x16xf32>, vector<16x8xf32>, vector<16x8xf32> -> vector<16x8xf32>
    %5 = arith.addf %3, %4 : vector<16x8xf32>
    %6 = arith.negf %5 : vector<16x8xf32>
    %7 = math.exp %6 : vector<16x8xf32>
    %cst_5 = arith.constant 1.000000e+00 : f32
    %8 = vector.broadcast %cst_5 : f32 to vector<16x8xf32>
    %9 = arith.addf %8, %7 : vector<16x8xf32>
    %10 = arith.divf %8, %9 : vector<16x8xf32>
    %11 = arith.mulf %5, %10 : vector<16x8xf32>
    %c0_6 = arith.constant 0 : index
    %c0_7 = arith.constant 0 : index
    %12 = vector.load %arg3[%c0_6, %c0_7] : memref<8x32xf32, #tpu.memory_space<vmem>>, vector<8x32xf32>
    %cst_8 = arith.constant dense<0.000000e+00> : vector<16x32xf32>
    %13 = tpu.matmul %11, %12, %cst_8 {dimension_numbers = #tpu.dot_dimension_numbers<[1], [0], [0], [1], [0, 0, 1, 1], [], []>} : vector<16x8xf32>, vector<8x32xf32>, vector<16x32xf32> -> vector<16x32xf32>
    %cst_9 = arith.constant -2.200000e+00 : f32
    %14 = vector.broadcast %cst_9 : f32 to vector<16x8xf32>
    %15 = arith.subf %5, %14 : vector<16x8xf32>
    %cst_10 = arith.constant 2.500000e+00 : f32
    %16 = vector.broadcast %cst_10 : f32 to vector<16x8xf32>
    %17 = arith.mulf %15, %16 : vector<16x8xf32>
    %cst_11 = arith.constant 1.000000e+00 : f32
    %18 = vector.broadcast %cst_11 : f32 to vector<16x8xf32>
    %19 = arith.subf %17, %18 : vector<16x8xf32>
    %cst_12 = arith.constant 1.000000e+00 : f32
    %20 = vector.broadcast %cst_12 : f32 to vector<16x8xf32>
    %21 = arith.subf %19, %20 : vector<16x8xf32>
    %cst_13 = arith.constant 1.000000e+00 : f32
    %22 = vector.broadcast %cst_13 : f32 to vector<16x8xf32>
    %23 = arith.subf %21, %22 : vector<16x8xf32>
    %cst_14 = arith.constant 1.000000e+00 : f32
    %24 = vector.broadcast %cst_14 : f32 to vector<16x8xf32>
    %25 = arith.subf %23, %24 : vector<16x8xf32>
    %cst_15 = arith.constant 1.000000e+00 : f32
    %26 = vector.broadcast %cst_15 : f32 to vector<16x8xf32>
    %27 = arith.subf %25, %26 : vector<16x8xf32>
    %cst_16 = arith.constant 1.000000e+00 : f32
    %28 = vector.broadcast %cst_16 : f32 to vector<16x8xf32>
    %29 = arith.subf %27, %28 : vector<16x8xf32>
    %cst_17 = arith.constant 1.000000e+00 : f32
    %30 = vector.broadcast %cst_17 : f32 to vector<16x8xf32>
    %31 = arith.subf %29, %30 : vector<16x8xf32>
    %cst_18 = arith.constant 1.000000e+00 : f32
    %32 = vector.broadcast %cst_18 : f32 to vector<16x8xf32>
    %33 = arith.subf %31, %32 : vector<16x8xf32>
    %cst_19 = arith.constant 1.000000e+00 : f32
    %34 = vector.broadcast %cst_19 : f32 to vector<16x8xf32>
    %35 = arith.subf %33, %34 : vector<16x8xf32>
    %cst_20 = arith.constant 1.000000e+00 : f32
    %36 = vector.broadcast %cst_20 : f32 to vector<16x8xf32>
    %37 = arith.subf %35, %36 : vector<16x8xf32>
    %cst_21 = arith.constant 1.000000e+00 : f32
    %38 = vector.broadcast %cst_21 : f32 to vector<16x8xf32>
    %39 = arith.subf %37, %38 : vector<16x8xf32>
    %cst_22 = arith.constant 0.000000e+00 : f32
    %40 = vector.broadcast %cst_22 : f32 to vector<16x8xf32>
    %41 = arith.cmpf oge, %17, %40 : vector<16x8xf32>
    %cst_23 = arith.constant 1.000000e+00 : f32
    %cst_24 = arith.constant 0.000000e+00 : f32
    %42 = vector.broadcast %cst_23 : f32 to vector<16x8xf32>
    %43 = vector.broadcast %cst_24 : f32 to vector<16x8xf32>
    %44 = arith.select %41, %42, %43 : vector<16x8xi1>, vector<16x8xf32>
    %cst_25 = arith.constant 0.000000e+00 : f32
    %45 = vector.broadcast %cst_25 : f32 to vector<16x8xf32>
    %46 = arith.cmpf oge, %19, %45 : vector<16x8xf32>
    %cst_26 = arith.constant 1.000000e+00 : f32
    %cst_27 = arith.constant 0.000000e+00 : f32
    %47 = vector.broadcast %cst_26 : f32 to vector<16x8xf32>
    %48 = vector.broadcast %cst_27 : f32 to vector<16x8xf32>
    %49 = arith.select %46, %47, %48 : vector<16x8xi1>, vector<16x8xf32>
    %cst_28 = arith.constant 0.000000e+00 : f32
    %50 = vector.broadcast %cst_28 : f32 to vector<16x8xf32>
    %51 = arith.cmpf oge, %21, %50 : vector<16x8xf32>
    %cst_29 = arith.constant 1.000000e+00 : f32
    %cst_30 = arith.constant 0.000000e+00 : f32
    %52 = vector.broadcast %cst_29 : f32 to vector<16x8xf32>
    %53 = vector.broadcast %cst_30 : f32 to vector<16x8xf32>
    %54 = arith.select %51, %52, %53 : vector<16x8xi1>, vector<16x8xf32>
    %cst_31 = arith.constant 0.000000e+00 : f32
    %55 = vector.broadcast %cst_31 : f32 to vector<16x8xf32>
    %56 = arith.cmpf oge, %23, %55 : vector<16x8xf32>
    %cst_32 = arith.constant 1.000000e+00 : f32
    %cst_33 = arith.constant 0.000000e+00 : f32
    %57 = vector.broadcast %cst_32 : f32 to vector<16x8xf32>
    %58 = vector.broadcast %cst_33 : f32 to vector<16x8xf32>
    %59 = arith.select %56, %57, %58 : vector<16x8xi1>, vector<16x8xf32>
    %cst_34 = arith.constant 0.000000e+00 : f32
    %60 = vector.broadcast %cst_34 : f32 to vector<16x8xf32>
    %61 = arith.cmpf oge, %25, %60 : vector<16x8xf32>
    %cst_35 = arith.constant 1.000000e+00 : f32
    %cst_36 = arith.constant 0.000000e+00 : f32
    %62 = vector.broadcast %cst_35 : f32 to vector<16x8xf32>
    %63 = vector.broadcast %cst_36 : f32 to vector<16x8xf32>
    %64 = arith.select %61, %62, %63 : vector<16x8xi1>, vector<16x8xf32>
    %cst_37 = arith.constant 0.000000e+00 : f32
    %65 = vector.broadcast %cst_37 : f32 to vector<16x8xf32>
    %66 = arith.cmpf oge, %27, %65 : vector<16x8xf32>
    %cst_38 = arith.constant 1.000000e+00 : f32
    %cst_39 = arith.constant 0.000000e+00 : f32
    %67 = vector.broadcast %cst_38 : f32 to vector<16x8xf32>
    %68 = vector.broadcast %cst_39 : f32 to vector<16x8xf32>
    %69 = arith.select %66, %67, %68 : vector<16x8xi1>, vector<16x8xf32>
    %cst_40 = arith.constant 0.000000e+00 : f32
    %70 = vector.broadcast %cst_40 : f32 to vector<16x8xf32>
    %71 = arith.cmpf oge, %29, %70 : vector<16x8xf32>
    %cst_41 = arith.constant 1.000000e+00 : f32
    %cst_42 = arith.constant 0.000000e+00 : f32
    %72 = vector.broadcast %cst_41 : f32 to vector<16x8xf32>
    %73 = vector.broadcast %cst_42 : f32 to vector<16x8xf32>
    %74 = arith.select %71, %72, %73 : vector<16x8xi1>, vector<16x8xf32>
    %cst_43 = arith.constant 0.000000e+00 : f32
    %75 = vector.broadcast %cst_43 : f32 to vector<16x8xf32>
    %76 = arith.cmpf oge, %31, %75 : vector<16x8xf32>
    %cst_44 = arith.constant 1.000000e+00 : f32
    %cst_45 = arith.constant 0.000000e+00 : f32
    %77 = vector.broadcast %cst_44 : f32 to vector<16x8xf32>
    %78 = vector.broadcast %cst_45 : f32 to vector<16x8xf32>
    %79 = arith.select %76, %77, %78 : vector<16x8xi1>, vector<16x8xf32>
    %cst_46 = arith.constant 0.000000e+00 : f32
    %80 = vector.broadcast %cst_46 : f32 to vector<16x8xf32>
    %81 = arith.cmpf oge, %33, %80 : vector<16x8xf32>
    %cst_47 = arith.constant 1.000000e+00 : f32
    %cst_48 = arith.constant 0.000000e+00 : f32
    %82 = vector.broadcast %cst_47 : f32 to vector<16x8xf32>
    %83 = vector.broadcast %cst_48 : f32 to vector<16x8xf32>
    %84 = arith.select %81, %82, %83 : vector<16x8xi1>, vector<16x8xf32>
    %cst_49 = arith.constant 0.000000e+00 : f32
    %85 = vector.broadcast %cst_49 : f32 to vector<16x8xf32>
    %86 = arith.cmpf oge, %35, %85 : vector<16x8xf32>
    %cst_50 = arith.constant 1.000000e+00 : f32
    %cst_51 = arith.constant 0.000000e+00 : f32
    %87 = vector.broadcast %cst_50 : f32 to vector<16x8xf32>
    %88 = vector.broadcast %cst_51 : f32 to vector<16x8xf32>
    %89 = arith.select %86, %87, %88 : vector<16x8xi1>, vector<16x8xf32>
    %cst_52 = arith.constant 0.000000e+00 : f32
    %90 = vector.broadcast %cst_52 : f32 to vector<16x8xf32>
    %91 = arith.cmpf oge, %37, %90 : vector<16x8xf32>
    %cst_53 = arith.constant 1.000000e+00 : f32
    %cst_54 = arith.constant 0.000000e+00 : f32
    %92 = vector.broadcast %cst_53 : f32 to vector<16x8xf32>
    %93 = vector.broadcast %cst_54 : f32 to vector<16x8xf32>
    %94 = arith.select %91, %92, %93 : vector<16x8xi1>, vector<16x8xf32>
    %cst_55 = arith.constant 0.000000e+00 : f32
    %95 = vector.broadcast %cst_55 : f32 to vector<16x8xf32>
    %96 = arith.cmpf oge, %39, %95 : vector<16x8xf32>
    %cst_56 = arith.constant 1.000000e+00 : f32
    %cst_57 = arith.constant 0.000000e+00 : f32
    %97 = vector.broadcast %cst_56 : f32 to vector<16x8xf32>
    %98 = vector.broadcast %cst_57 : f32 to vector<16x8xf32>
    %99 = arith.select %96, %97, %98 : vector<16x8xi1>, vector<16x8xf32>
    %100 = arith.subf %44, %49 : vector<16x8xf32>
    %101 = arith.subf %49, %54 : vector<16x8xf32>
    %102 = arith.subf %54, %59 : vector<16x8xf32>
    %103 = arith.subf %59, %64 : vector<16x8xf32>
    %104 = arith.subf %64, %69 : vector<16x8xf32>
    %105 = arith.subf %69, %74 : vector<16x8xf32>
    %106 = arith.subf %74, %79 : vector<16x8xf32>
    %107 = arith.subf %79, %84 : vector<16x8xf32>
    %108 = arith.subf %84, %89 : vector<16x8xf32>
    %109 = arith.subf %89, %94 : vector<16x8xf32>
    %110 = arith.subf %94, %99 : vector<16x8xf32>
    %111 = arith.mulf %17, %100 : vector<16x8xf32>
    %112 = arith.mulf %21, %101 : vector<16x8xf32>
    %113 = arith.subf %111, %112 : vector<16x8xf32>
    %114 = arith.mulf %19, %101 : vector<16x8xf32>
    %115 = arith.mulf %23, %102 : vector<16x8xf32>
    %116 = arith.subf %114, %115 : vector<16x8xf32>
    %117 = arith.mulf %21, %102 : vector<16x8xf32>
    %118 = arith.mulf %25, %103 : vector<16x8xf32>
    %119 = arith.subf %117, %118 : vector<16x8xf32>
    %120 = arith.mulf %23, %103 : vector<16x8xf32>
    %121 = arith.mulf %27, %104 : vector<16x8xf32>
    %122 = arith.subf %120, %121 : vector<16x8xf32>
    %123 = arith.mulf %25, %104 : vector<16x8xf32>
    %124 = arith.mulf %29, %105 : vector<16x8xf32>
    %125 = arith.subf %123, %124 : vector<16x8xf32>
    %126 = arith.mulf %27, %105 : vector<16x8xf32>
    %127 = arith.mulf %31, %106 : vector<16x8xf32>
    %128 = arith.subf %126, %127 : vector<16x8xf32>
    %129 = arith.mulf %29, %106 : vector<16x8xf32>
    %130 = arith.mulf %33, %107 : vector<16x8xf32>
    %131 = arith.subf %129, %130 : vector<16x8xf32>
    %132 = arith.mulf %31, %107 : vector<16x8xf32>
    %133 = arith.mulf %35, %108 : vector<16x8xf32>
    %134 = arith.subf %132, %133 : vector<16x8xf32>
    %135 = arith.mulf %33, %108 : vector<16x8xf32>
    %136 = arith.mulf %37, %109 : vector<16x8xf32>
    %137 = arith.subf %135, %136 : vector<16x8xf32>
    %138 = arith.mulf %35, %109 : vector<16x8xf32>
    %139 = arith.mulf %39, %110 : vector<16x8xf32>
    %140 = arith.subf %138, %139 : vector<16x8xf32>
    %141 = arith.mulf %17, %113 : vector<16x8xf32>
    %142 = arith.mulf %23, %116 : vector<16x8xf32>
    %143 = arith.subf %141, %142 : vector<16x8xf32>
    %144 = arith.mulf %19, %116 : vector<16x8xf32>
    %145 = arith.mulf %25, %119 : vector<16x8xf32>
    %146 = arith.subf %144, %145 : vector<16x8xf32>
    %147 = arith.mulf %21, %119 : vector<16x8xf32>
    %148 = arith.mulf %27, %122 : vector<16x8xf32>
    %149 = arith.subf %147, %148 : vector<16x8xf32>
    %150 = arith.mulf %23, %122 : vector<16x8xf32>
    %151 = arith.mulf %29, %125 : vector<16x8xf32>
    %152 = arith.subf %150, %151 : vector<16x8xf32>
    %153 = arith.mulf %25, %125 : vector<16x8xf32>
    %154 = arith.mulf %31, %128 : vector<16x8xf32>
    %155 = arith.subf %153, %154 : vector<16x8xf32>
    %156 = arith.mulf %27, %128 : vector<16x8xf32>
    %157 = arith.mulf %33, %131 : vector<16x8xf32>
    %158 = arith.subf %156, %157 : vector<16x8xf32>
    %159 = arith.mulf %29, %131 : vector<16x8xf32>
    %160 = arith.mulf %35, %134 : vector<16x8xf32>
    %161 = arith.subf %159, %160 : vector<16x8xf32>
    %162 = arith.mulf %31, %134 : vector<16x8xf32>
    %163 = arith.mulf %37, %137 : vector<16x8xf32>
    %164 = arith.subf %162, %163 : vector<16x8xf32>
    %165 = arith.mulf %33, %137 : vector<16x8xf32>
    %166 = arith.mulf %39, %140 : vector<16x8xf32>
    %167 = arith.subf %165, %166 : vector<16x8xf32>
    %168 = arith.mulf %17, %143 : vector<16x8xf32>
    %169 = arith.mulf %25, %146 : vector<16x8xf32>
    %170 = arith.subf %168, %169 : vector<16x8xf32>
    %171 = arith.mulf %19, %146 : vector<16x8xf32>
    %172 = arith.mulf %27, %149 : vector<16x8xf32>
    %173 = arith.subf %171, %172 : vector<16x8xf32>
    %174 = arith.mulf %21, %149 : vector<16x8xf32>
    %175 = arith.mulf %29, %152 : vector<16x8xf32>
    %176 = arith.subf %174, %175 : vector<16x8xf32>
    %177 = arith.mulf %23, %152 : vector<16x8xf32>
    %178 = arith.mulf %31, %155 : vector<16x8xf32>
    %179 = arith.subf %177, %178 : vector<16x8xf32>
    %180 = arith.mulf %25, %155 : vector<16x8xf32>
    %181 = arith.mulf %33, %158 : vector<16x8xf32>
    %182 = arith.subf %180, %181 : vector<16x8xf32>
    %183 = arith.mulf %27, %158 : vector<16x8xf32>
    %184 = arith.mulf %35, %161 : vector<16x8xf32>
    %185 = arith.subf %183, %184 : vector<16x8xf32>
    %186 = arith.mulf %29, %161 : vector<16x8xf32>
    %187 = arith.mulf %37, %164 : vector<16x8xf32>
    %188 = arith.subf %186, %187 : vector<16x8xf32>
    %189 = arith.mulf %31, %164 : vector<16x8xf32>
    %190 = arith.mulf %39, %167 : vector<16x8xf32>
    %191 = arith.subf %189, %190 : vector<16x8xf32>
    %c0_58 = arith.constant 0 : index
    %c0_59 = arith.constant 0 : index
    %c0_60 = arith.constant 0 : index
    %192 = vector.load %arg4[%c0_58, %c0_59, %c0_60] : memref<8x8x32xf32, #tpu.memory_space<vmem>>, vector<1x8x32xf32>
    %193 = vector.shape_cast %192 : vector<1x8x32xf32> to vector<8x32xf32>
    %cst_61 = arith.constant dense<0.000000e+00> : vector<16x32xf32>
    %194 = tpu.matmul %170, %193, %cst_61 {dimension_numbers = #tpu.dot_dimension_numbers<[1], [0], [0], [1], [0, 0, 1, 1], [], []>} : vector<16x8xf32>, vector<8x32xf32>, vector<16x32xf32> -> vector<16x32xf32>
    %195 = arith.addf %13, %194 : vector<16x32xf32>
    %c1 = arith.constant 1 : index
    %c0_62 = arith.constant 0 : index
    %c0_63 = arith.constant 0 : index
    %196 = vector.load %arg4[%c1, %c0_62, %c0_63] : memref<8x8x32xf32, #tpu.memory_space<vmem>>, vector<1x8x32xf32>
    %197 = vector.shape_cast %196 : vector<1x8x32xf32> to vector<8x32xf32>
    %cst_64 = arith.constant dense<0.000000e+00> : vector<16x32xf32>
    %198 = tpu.matmul %173, %197, %cst_64 {dimension_numbers = #tpu.dot_dimension_numbers<[1], [0], [0], [1], [0, 0, 1, 1], [], []>} : vector<16x8xf32>, vector<8x32xf32>, vector<16x32xf32> -> vector<16x32xf32>
    %199 = arith.addf %195, %198 : vector<16x32xf32>
    %c2 = arith.constant 2 : index
    %c0_65 = arith.constant 0 : index
    %c0_66 = arith.constant 0 : index
    %200 = vector.load %arg4[%c2, %c0_65, %c0_66] : memref<8x8x32xf32, #tpu.memory_space<vmem>>, vector<1x8x32xf32>
    %201 = vector.shape_cast %200 : vector<1x8x32xf32> to vector<8x32xf32>
    %cst_67 = arith.constant dense<0.000000e+00> : vector<16x32xf32>
    %202 = tpu.matmul %176, %201, %cst_67 {dimension_numbers = #tpu.dot_dimension_numbers<[1], [0], [0], [1], [0, 0, 1, 1], [], []>} : vector<16x8xf32>, vector<8x32xf32>, vector<16x32xf32> -> vector<16x32xf32>
    %203 = arith.addf %199, %202 : vector<16x32xf32>
    %c3 = arith.constant 3 : index
    %c0_68 = arith.constant 0 : index
    %c0_69 = arith.constant 0 : index
    %204 = vector.load %arg4[%c3, %c0_68, %c0_69] : memref<8x8x32xf32, #tpu.memory_space<vmem>>, vector<1x8x32xf32>
    %205 = vector.shape_cast %204 : vector<1x8x32xf32> to vector<8x32xf32>
    %cst_70 = arith.constant dense<0.000000e+00> : vector<16x32xf32>
    %206 = tpu.matmul %179, %205, %cst_70 {dimension_numbers = #tpu.dot_dimension_numbers<[1], [0], [0], [1], [0, 0, 1, 1], [], []>} : vector<16x8xf32>, vector<8x32xf32>, vector<16x32xf32> -> vector<16x32xf32>
    %207 = arith.addf %203, %206 : vector<16x32xf32>
    %c4 = arith.constant 4 : index
    %c0_71 = arith.constant 0 : index
    %c0_72 = arith.constant 0 : index
    %208 = vector.load %arg4[%c4, %c0_71, %c0_72] : memref<8x8x32xf32, #tpu.memory_space<vmem>>, vector<1x8x32xf32>
    %209 = vector.shape_cast %208 : vector<1x8x32xf32> to vector<8x32xf32>
    %cst_73 = arith.constant dense<0.000000e+00> : vector<16x32xf32>
    %210 = tpu.matmul %182, %209, %cst_73 {dimension_numbers = #tpu.dot_dimension_numbers<[1], [0], [0], [1], [0, 0, 1, 1], [], []>} : vector<16x8xf32>, vector<8x32xf32>, vector<16x32xf32> -> vector<16x32xf32>
    %211 = arith.addf %207, %210 : vector<16x32xf32>
    %c5 = arith.constant 5 : index
    %c0_74 = arith.constant 0 : index
    %c0_75 = arith.constant 0 : index
    %212 = vector.load %arg4[%c5, %c0_74, %c0_75] : memref<8x8x32xf32, #tpu.memory_space<vmem>>, vector<1x8x32xf32>
    %213 = vector.shape_cast %212 : vector<1x8x32xf32> to vector<8x32xf32>
    %cst_76 = arith.constant dense<0.000000e+00> : vector<16x32xf32>
    %214 = tpu.matmul %185, %213, %cst_76 {dimension_numbers = #tpu.dot_dimension_numbers<[1], [0], [0], [1], [0, 0, 1, 1], [], []>} : vector<16x8xf32>, vector<8x32xf32>, vector<16x32xf32> -> vector<16x32xf32>
    %215 = arith.addf %211, %214 : vector<16x32xf32>
    %c6 = arith.constant 6 : index
    %c0_77 = arith.constant 0 : index
    %c0_78 = arith.constant 0 : index
    %216 = vector.load %arg4[%c6, %c0_77, %c0_78] : memref<8x8x32xf32, #tpu.memory_space<vmem>>, vector<1x8x32xf32>
    %217 = vector.shape_cast %216 : vector<1x8x32xf32> to vector<8x32xf32>
    %cst_79 = arith.constant dense<0.000000e+00> : vector<16x32xf32>
    %218 = tpu.matmul %188, %217, %cst_79 {dimension_numbers = #tpu.dot_dimension_numbers<[1], [0], [0], [1], [0, 0, 1, 1], [], []>} : vector<16x8xf32>, vector<8x32xf32>, vector<16x32xf32> -> vector<16x32xf32>
    %219 = arith.addf %215, %218 : vector<16x32xf32>
    %c7 = arith.constant 7 : index
    %c0_80 = arith.constant 0 : index
    %c0_81 = arith.constant 0 : index
    %220 = vector.load %arg4[%c7, %c0_80, %c0_81] : memref<8x8x32xf32, #tpu.memory_space<vmem>>, vector<1x8x32xf32>
    %221 = vector.shape_cast %220 : vector<1x8x32xf32> to vector<8x32xf32>
    %cst_82 = arith.constant dense<0.000000e+00> : vector<16x32xf32>
    %222 = tpu.matmul %191, %221, %cst_82 {dimension_numbers = #tpu.dot_dimension_numbers<[1], [0], [0], [1], [0, 0, 1, 1], [], []>} : vector<16x8xf32>, vector<8x32xf32>, vector<16x32xf32> -> vector<16x32xf32>
    %223 = arith.addf %219, %222 : vector<16x32xf32>
    %224 = arith.negf %223 : vector<16x32xf32>
    %225 = math.exp %224 : vector<16x32xf32>
    %cst_83 = arith.constant 1.000000e+00 : f32
    %226 = vector.broadcast %cst_83 : f32 to vector<16x32xf32>
    %227 = arith.addf %226, %225 : vector<16x32xf32>
    %228 = arith.divf %226, %227 : vector<16x32xf32>
    %229 = arith.mulf %223, %228 : vector<16x32xf32>
    %c0_84 = arith.constant 0 : index
    %c0_85 = arith.constant 0 : index
    %230 = vector.load %arg5[%c0_84, %c0_85] : memref<32x32xf32, #tpu.memory_space<vmem>>, vector<32x32xf32>
    %cst_86 = arith.constant dense<0.000000e+00> : vector<16x32xf32>
    %231 = tpu.matmul %229, %230, %cst_86 {dimension_numbers = #tpu.dot_dimension_numbers<[1], [0], [0], [1], [0, 0, 1, 1], [], []>} : vector<16x32xf32>, vector<32x32xf32>, vector<16x32xf32> -> vector<16x32xf32>
    %cst_87 = arith.constant -2.200000e+00 : f32
    %232 = vector.broadcast %cst_87 : f32 to vector<16x32xf32>
    %233 = arith.subf %223, %232 : vector<16x32xf32>
    %cst_88 = arith.constant 2.500000e+00 : f32
    %234 = vector.broadcast %cst_88 : f32 to vector<16x32xf32>
    %235 = arith.mulf %233, %234 : vector<16x32xf32>
    %cst_89 = arith.constant 1.000000e+00 : f32
    %236 = vector.broadcast %cst_89 : f32 to vector<16x32xf32>
    %237 = arith.subf %235, %236 : vector<16x32xf32>
    %cst_90 = arith.constant 1.000000e+00 : f32
    %238 = vector.broadcast %cst_90 : f32 to vector<16x32xf32>
    %239 = arith.subf %237, %238 : vector<16x32xf32>
    %cst_91 = arith.constant 1.000000e+00 : f32
    %240 = vector.broadcast %cst_91 : f32 to vector<16x32xf32>
    %241 = arith.subf %239, %240 : vector<16x32xf32>
    %cst_92 = arith.constant 1.000000e+00 : f32
    %242 = vector.broadcast %cst_92 : f32 to vector<16x32xf32>
    %243 = arith.subf %241, %242 : vector<16x32xf32>
    %cst_93 = arith.constant 1.000000e+00 : f32
    %244 = vector.broadcast %cst_93 : f32 to vector<16x32xf32>
    %245 = arith.subf %243, %244 : vector<16x32xf32>
    %cst_94 = arith.constant 1.000000e+00 : f32
    %246 = vector.broadcast %cst_94 : f32 to vector<16x32xf32>
    %247 = arith.subf %245, %246 : vector<16x32xf32>
    %cst_95 = arith.constant 1.000000e+00 : f32
    %248 = vector.broadcast %cst_95 : f32 to vector<16x32xf32>
    %249 = arith.subf %247, %248 : vector<16x32xf32>
    %cst_96 = arith.constant 1.000000e+00 : f32
    %250 = vector.broadcast %cst_96 : f32 to vector<16x32xf32>
    %251 = arith.subf %249, %250 : vector<16x32xf32>
    %cst_97 = arith.constant 1.000000e+00 : f32
    %252 = vector.broadcast %cst_97 : f32 to vector<16x32xf32>
    %253 = arith.subf %251, %252 : vector<16x32xf32>
    %cst_98 = arith.constant 1.000000e+00 : f32
    %254 = vector.broadcast %cst_98 : f32 to vector<16x32xf32>
    %255 = arith.subf %253, %254 : vector<16x32xf32>
    %cst_99 = arith.constant 1.000000e+00 : f32
    %256 = vector.broadcast %cst_99 : f32 to vector<16x32xf32>
    %257 = arith.subf %255, %256 : vector<16x32xf32>
    %cst_100 = arith.constant 0.000000e+00 : f32
    %258 = vector.broadcast %cst_100 : f32 to vector<16x32xf32>
    %259 = arith.cmpf oge, %235, %258 : vector<16x32xf32>
    %cst_101 = arith.constant 1.000000e+00 : f32
    %cst_102 = arith.constant 0.000000e+00 : f32
    %260 = vector.broadcast %cst_101 : f32 to vector<16x32xf32>
    %261 = vector.broadcast %cst_102 : f32 to vector<16x32xf32>
    %262 = arith.select %259, %260, %261 : vector<16x32xi1>, vector<16x32xf32>
    %cst_103 = arith.constant 0.000000e+00 : f32
    %263 = vector.broadcast %cst_103 : f32 to vector<16x32xf32>
    %264 = arith.cmpf oge, %237, %263 : vector<16x32xf32>
    %cst_104 = arith.constant 1.000000e+00 : f32
    %cst_105 = arith.constant 0.000000e+00 : f32
    %265 = vector.broadcast %cst_104 : f32 to vector<16x32xf32>
    %266 = vector.broadcast %cst_105 : f32 to vector<16x32xf32>
    %267 = arith.select %264, %265, %266 : vector<16x32xi1>, vector<16x32xf32>
    %cst_106 = arith.constant 0.000000e+00 : f32
    %268 = vector.broadcast %cst_106 : f32 to vector<16x32xf32>
    %269 = arith.cmpf oge, %239, %268 : vector<16x32xf32>
    %cst_107 = arith.constant 1.000000e+00 : f32
    %cst_108 = arith.constant 0.000000e+00 : f32
    %270 = vector.broadcast %cst_107 : f32 to vector<16x32xf32>
    %271 = vector.broadcast %cst_108 : f32 to vector<16x32xf32>
    %272 = arith.select %269, %270, %271 : vector<16x32xi1>, vector<16x32xf32>
    %cst_109 = arith.constant 0.000000e+00 : f32
    %273 = vector.broadcast %cst_109 : f32 to vector<16x32xf32>
    %274 = arith.cmpf oge, %241, %273 : vector<16x32xf32>
    %cst_110 = arith.constant 1.000000e+00 : f32
    %cst_111 = arith.constant 0.000000e+00 : f32
    %275 = vector.broadcast %cst_110 : f32 to vector<16x32xf32>
    %276 = vector.broadcast %cst_111 : f32 to vector<16x32xf32>
    %277 = arith.select %274, %275, %276 : vector<16x32xi1>, vector<16x32xf32>
    %cst_112 = arith.constant 0.000000e+00 : f32
    %278 = vector.broadcast %cst_112 : f32 to vector<16x32xf32>
    %279 = arith.cmpf oge, %243, %278 : vector<16x32xf32>
    %cst_113 = arith.constant 1.000000e+00 : f32
    %cst_114 = arith.constant 0.000000e+00 : f32
    %280 = vector.broadcast %cst_113 : f32 to vector<16x32xf32>
    %281 = vector.broadcast %cst_114 : f32 to vector<16x32xf32>
    %282 = arith.select %279, %280, %281 : vector<16x32xi1>, vector<16x32xf32>
    %cst_115 = arith.constant 0.000000e+00 : f32
    %283 = vector.broadcast %cst_115 : f32 to vector<16x32xf32>
    %284 = arith.cmpf oge, %245, %283 : vector<16x32xf32>
    %cst_116 = arith.constant 1.000000e+00 : f32
    %cst_117 = arith.constant 0.000000e+00 : f32
    %285 = vector.broadcast %cst_116 : f32 to vector<16x32xf32>
    %286 = vector.broadcast %cst_117 : f32 to vector<16x32xf32>
    %287 = arith.select %284, %285, %286 : vector<16x32xi1>, vector<16x32xf32>
    %cst_118 = arith.constant 0.000000e+00 : f32
    %288 = vector.broadcast %cst_118 : f32 to vector<16x32xf32>
    %289 = arith.cmpf oge, %247, %288 : vector<16x32xf32>
    %cst_119 = arith.constant 1.000000e+00 : f32
    %cst_120 = arith.constant 0.000000e+00 : f32
    %290 = vector.broadcast %cst_119 : f32 to vector<16x32xf32>
    %291 = vector.broadcast %cst_120 : f32 to vector<16x32xf32>
    %292 = arith.select %289, %290, %291 : vector<16x32xi1>, vector<16x32xf32>
    %cst_121 = arith.constant 0.000000e+00 : f32
    %293 = vector.broadcast %cst_121 : f32 to vector<16x32xf32>
    %294 = arith.cmpf oge, %249, %293 : vector<16x32xf32>
    %cst_122 = arith.constant 1.000000e+00 : f32
    %cst_123 = arith.constant 0.000000e+00 : f32
    %295 = vector.broadcast %cst_122 : f32 to vector<16x32xf32>
    %296 = vector.broadcast %cst_123 : f32 to vector<16x32xf32>
    %297 = arith.select %294, %295, %296 : vector<16x32xi1>, vector<16x32xf32>
    %cst_124 = arith.constant 0.000000e+00 : f32
    %298 = vector.broadcast %cst_124 : f32 to vector<16x32xf32>
    %299 = arith.cmpf oge, %251, %298 : vector<16x32xf32>
    %cst_125 = arith.constant 1.000000e+00 : f32
    %cst_126 = arith.constant 0.000000e+00 : f32
    %300 = vector.broadcast %cst_125 : f32 to vector<16x32xf32>
    %301 = vector.broadcast %cst_126 : f32 to vector<16x32xf32>
    %302 = arith.select %299, %300, %301 : vector<16x32xi1>, vector<16x32xf32>
    %cst_127 = arith.constant 0.000000e+00 : f32
    %303 = vector.broadcast %cst_127 : f32 to vector<16x32xf32>
    %304 = arith.cmpf oge, %253, %303 : vector<16x32xf32>
    %cst_128 = arith.constant 1.000000e+00 : f32
    %cst_129 = arith.constant 0.000000e+00 : f32
    %305 = vector.broadcast %cst_128 : f32 to vector<16x32xf32>
    %306 = vector.broadcast %cst_129 : f32 to vector<16x32xf32>
    %307 = arith.select %304, %305, %306 : vector<16x32xi1>, vector<16x32xf32>
    %cst_130 = arith.constant 0.000000e+00 : f32
    %308 = vector.broadcast %cst_130 : f32 to vector<16x32xf32>
    %309 = arith.cmpf oge, %255, %308 : vector<16x32xf32>
    %cst_131 = arith.constant 1.000000e+00 : f32
    %cst_132 = arith.constant 0.000000e+00 : f32
    %310 = vector.broadcast %cst_131 : f32 to vector<16x32xf32>
    %311 = vector.broadcast %cst_132 : f32 to vector<16x32xf32>
    %312 = arith.select %309, %310, %311 : vector<16x32xi1>, vector<16x32xf32>
    %cst_133 = arith.constant 0.000000e+00 : f32
    %313 = vector.broadcast %cst_133 : f32 to vector<16x32xf32>
    %314 = arith.cmpf oge, %257, %313 : vector<16x32xf32>
    %cst_134 = arith.constant 1.000000e+00 : f32
    %cst_135 = arith.constant 0.000000e+00 : f32
    %315 = vector.broadcast %cst_134 : f32 to vector<16x32xf32>
    %316 = vector.broadcast %cst_135 : f32 to vector<16x32xf32>
    %317 = arith.select %314, %315, %316 : vector<16x32xi1>, vector<16x32xf32>
    %318 = arith.subf %262, %267 : vector<16x32xf32>
    %319 = arith.subf %267, %272 : vector<16x32xf32>
    %320 = arith.subf %272, %277 : vector<16x32xf32>
    %321 = arith.subf %277, %282 : vector<16x32xf32>
    %322 = arith.subf %282, %287 : vector<16x32xf32>
    %323 = arith.subf %287, %292 : vector<16x32xf32>
    %324 = arith.subf %292, %297 : vector<16x32xf32>
    %325 = arith.subf %297, %302 : vector<16x32xf32>
    %326 = arith.subf %302, %307 : vector<16x32xf32>
    %327 = arith.subf %307, %312 : vector<16x32xf32>
    %328 = arith.subf %312, %317 : vector<16x32xf32>
    %329 = arith.mulf %235, %318 : vector<16x32xf32>
    %330 = arith.mulf %239, %319 : vector<16x32xf32>
    %331 = arith.subf %329, %330 : vector<16x32xf32>
    %332 = arith.mulf %237, %319 : vector<16x32xf32>
    %333 = arith.mulf %241, %320 : vector<16x32xf32>
    %334 = arith.subf %332, %333 : vector<16x32xf32>
    %335 = arith.mulf %239, %320 : vector<16x32xf32>
    %336 = arith.mulf %243, %321 : vector<16x32xf32>
    %337 = arith.subf %335, %336 : vector<16x32xf32>
    %338 = arith.mulf %241, %321 : vector<16x32xf32>
    %339 = arith.mulf %245, %322 : vector<16x32xf32>
    %340 = arith.subf %338, %339 : vector<16x32xf32>
    %341 = arith.mulf %243, %322 : vector<16x32xf32>
    %342 = arith.mulf %247, %323 : vector<16x32xf32>
    %343 = arith.subf %341, %342 : vector<16x32xf32>
    %344 = arith.mulf %245, %323 : vector<16x32xf32>
    %345 = arith.mulf %249, %324 : vector<16x32xf32>
    %346 = arith.subf %344, %345 : vector<16x32xf32>
    %347 = arith.mulf %247, %324 : vector<16x32xf32>
    %348 = arith.mulf %251, %325 : vector<16x32xf32>
    %349 = arith.subf %347, %348 : vector<16x32xf32>
    %350 = arith.mulf %249, %325 : vector<16x32xf32>
    %351 = arith.mulf %253, %326 : vector<16x32xf32>
    %352 = arith.subf %350, %351 : vector<16x32xf32>
    %353 = arith.mulf %251, %326 : vector<16x32xf32>
    %354 = arith.mulf %255, %327 : vector<16x32xf32>
    %355 = arith.subf %353, %354 : vector<16x32xf32>
    %356 = arith.mulf %253, %327 : vector<16x32xf32>
    %357 = arith.mulf %257, %328 : vector<16x32xf32>
    %358 = arith.subf %356, %357 : vector<16x32xf32>
    %359 = arith.mulf %235, %331 : vector<16x32xf32>
    %360 = arith.mulf %241, %334 : vector<16x32xf32>
    %361 = arith.subf %359, %360 : vector<16x32xf32>
    %362 = arith.mulf %237, %334 : vector<16x32xf32>
    %363 = arith.mulf %243, %337 : vector<16x32xf32>
    %364 = arith.subf %362, %363 : vector<16x32xf32>
    %365 = arith.mulf %239, %337 : vector<16x32xf32>
    %366 = arith.mulf %245, %340 : vector<16x32xf32>
    %367 = arith.subf %365, %366 : vector<16x32xf32>
    %368 = arith.mulf %241, %340 : vector<16x32xf32>
    %369 = arith.mulf %247, %343 : vector<16x32xf32>
    %370 = arith.subf %368, %369 : vector<16x32xf32>
    %371 = arith.mulf %243, %343 : vector<16x32xf32>
    %372 = arith.mulf %249, %346 : vector<16x32xf32>
    %373 = arith.subf %371, %372 : vector<16x32xf32>
    %374 = arith.mulf %245, %346 : vector<16x32xf32>
    %375 = arith.mulf %251, %349 : vector<16x32xf32>
    %376 = arith.subf %374, %375 : vector<16x32xf32>
    %377 = arith.mulf %247, %349 : vector<16x32xf32>
    %378 = arith.mulf %253, %352 : vector<16x32xf32>
    %379 = arith.subf %377, %378 : vector<16x32xf32>
    %380 = arith.mulf %249, %352 : vector<16x32xf32>
    %381 = arith.mulf %255, %355 : vector<16x32xf32>
    %382 = arith.subf %380, %381 : vector<16x32xf32>
    %383 = arith.mulf %251, %355 : vector<16x32xf32>
    %384 = arith.mulf %257, %358 : vector<16x32xf32>
    %385 = arith.subf %383, %384 : vector<16x32xf32>
    %386 = arith.mulf %235, %361 : vector<16x32xf32>
    %387 = arith.mulf %243, %364 : vector<16x32xf32>
    %388 = arith.subf %386, %387 : vector<16x32xf32>
    %389 = arith.mulf %237, %364 : vector<16x32xf32>
    %390 = arith.mulf %245, %367 : vector<16x32xf32>
    %391 = arith.subf %389, %390 : vector<16x32xf32>
    %392 = arith.mulf %239, %367 : vector<16x32xf32>
    %393 = arith.mulf %247, %370 : vector<16x32xf32>
    %394 = arith.subf %392, %393 : vector<16x32xf32>
    %395 = arith.mulf %241, %370 : vector<16x32xf32>
    %396 = arith.mulf %249, %373 : vector<16x32xf32>
    %397 = arith.subf %395, %396 : vector<16x32xf32>
    %398 = arith.mulf %243, %373 : vector<16x32xf32>
    %399 = arith.mulf %251, %376 : vector<16x32xf32>
    %400 = arith.subf %398, %399 : vector<16x32xf32>
    %401 = arith.mulf %245, %376 : vector<16x32xf32>
    %402 = arith.mulf %253, %379 : vector<16x32xf32>
    %403 = arith.subf %401, %402 : vector<16x32xf32>
    %404 = arith.mulf %247, %379 : vector<16x32xf32>
    %405 = arith.mulf %255, %382 : vector<16x32xf32>
    %406 = arith.subf %404, %405 : vector<16x32xf32>
    %407 = arith.mulf %249, %382 : vector<16x32xf32>
    %408 = arith.mulf %257, %385 : vector<16x32xf32>
    %409 = arith.subf %407, %408 : vector<16x32xf32>
    %c0_136 = arith.constant 0 : index
    %c0_137 = arith.constant 0 : index
    %c0_138 = arith.constant 0 : index
    %410 = vector.load %arg6[%c0_136, %c0_137, %c0_138] : memref<8x32x32xf32, #tpu.memory_space<vmem>>, vector<1x32x32xf32>
    %411 = vector.shape_cast %410 : vector<1x32x32xf32> to vector<32x32xf32>
    %cst_139 = arith.constant dense<0.000000e+00> : vector<16x32xf32>
    %412 = tpu.matmul %388, %411, %cst_139 {dimension_numbers = #tpu.dot_dimension_numbers<[1], [0], [0], [1], [0, 0, 1, 1], [], []>} : vector<16x32xf32>, vector<32x32xf32>, vector<16x32xf32> -> vector<16x32xf32>
    %413 = arith.addf %231, %412 : vector<16x32xf32>
    %c1_140 = arith.constant 1 : index
    %c0_141 = arith.constant 0 : index
    %c0_142 = arith.constant 0 : index
    %414 = vector.load %arg6[%c1_140, %c0_141, %c0_142] : memref<8x32x32xf32, #tpu.memory_space<vmem>>, vector<1x32x32xf32>
    %415 = vector.shape_cast %414 : vector<1x32x32xf32> to vector<32x32xf32>
    %cst_143 = arith.constant dense<0.000000e+00> : vector<16x32xf32>
    %416 = tpu.matmul %391, %415, %cst_143 {dimension_numbers = #tpu.dot_dimension_numbers<[1], [0], [0], [1], [0, 0, 1, 1], [], []>} : vector<16x32xf32>, vector<32x32xf32>, vector<16x32xf32> -> vector<16x32xf32>
    %417 = arith.addf %413, %416 : vector<16x32xf32>
    %c2_144 = arith.constant 2 : index
    %c0_145 = arith.constant 0 : index
    %c0_146 = arith.constant 0 : index
    %418 = vector.load %arg6[%c2_144, %c0_145, %c0_146] : memref<8x32x32xf32, #tpu.memory_space<vmem>>, vector<1x32x32xf32>
    %419 = vector.shape_cast %418 : vector<1x32x32xf32> to vector<32x32xf32>
    %cst_147 = arith.constant dense<0.000000e+00> : vector<16x32xf32>
    %420 = tpu.matmul %394, %419, %cst_147 {dimension_numbers = #tpu.dot_dimension_numbers<[1], [0], [0], [1], [0, 0, 1, 1], [], []>} : vector<16x32xf32>, vector<32x32xf32>, vector<16x32xf32> -> vector<16x32xf32>
    %421 = arith.addf %417, %420 : vector<16x32xf32>
    %c3_148 = arith.constant 3 : index
    %c0_149 = arith.constant 0 : index
    %c0_150 = arith.constant 0 : index
    %422 = vector.load %arg6[%c3_148, %c0_149, %c0_150] : memref<8x32x32xf32, #tpu.memory_space<vmem>>, vector<1x32x32xf32>
    %423 = vector.shape_cast %422 : vector<1x32x32xf32> to vector<32x32xf32>
    %cst_151 = arith.constant dense<0.000000e+00> : vector<16x32xf32>
    %424 = tpu.matmul %397, %423, %cst_151 {dimension_numbers = #tpu.dot_dimension_numbers<[1], [0], [0], [1], [0, 0, 1, 1], [], []>} : vector<16x32xf32>, vector<32x32xf32>, vector<16x32xf32> -> vector<16x32xf32>
    %425 = arith.addf %421, %424 : vector<16x32xf32>
    %c4_152 = arith.constant 4 : index
    %c0_153 = arith.constant 0 : index
    %c0_154 = arith.constant 0 : index
    %426 = vector.load %arg6[%c4_152, %c0_153, %c0_154] : memref<8x32x32xf32, #tpu.memory_space<vmem>>, vector<1x32x32xf32>
    %427 = vector.shape_cast %426 : vector<1x32x32xf32> to vector<32x32xf32>
    %cst_155 = arith.constant dense<0.000000e+00> : vector<16x32xf32>
    %428 = tpu.matmul %400, %427, %cst_155 {dimension_numbers = #tpu.dot_dimension_numbers<[1], [0], [0], [1], [0, 0, 1, 1], [], []>} : vector<16x32xf32>, vector<32x32xf32>, vector<16x32xf32> -> vector<16x32xf32>
    %429 = arith.addf %425, %428 : vector<16x32xf32>
    %c5_156 = arith.constant 5 : index
    %c0_157 = arith.constant 0 : index
    %c0_158 = arith.constant 0 : index
    %430 = vector.load %arg6[%c5_156, %c0_157, %c0_158] : memref<8x32x32xf32, #tpu.memory_space<vmem>>, vector<1x32x32xf32>
    %431 = vector.shape_cast %430 : vector<1x32x32xf32> to vector<32x32xf32>
    %cst_159 = arith.constant dense<0.000000e+00> : vector<16x32xf32>
    %432 = tpu.matmul %403, %431, %cst_159 {dimension_numbers = #tpu.dot_dimension_numbers<[1], [0], [0], [1], [0, 0, 1, 1], [], []>} : vector<16x32xf32>, vector<32x32xf32>, vector<16x32xf32> -> vector<16x32xf32>
    %433 = arith.addf %429, %432 : vector<16x32xf32>
    %c6_160 = arith.constant 6 : index
    %c0_161 = arith.constant 0 : index
    %c0_162 = arith.constant 0 : index
    %434 = vector.load %arg6[%c6_160, %c0_161, %c0_162] : memref<8x32x32xf32, #tpu.memory_space<vmem>>, vector<1x32x32xf32>
    %435 = vector.shape_cast %434 : vector<1x32x32xf32> to vector<32x32xf32>
    %cst_163 = arith.constant dense<0.000000e+00> : vector<16x32xf32>
    %436 = tpu.matmul %406, %435, %cst_163 {dimension_numbers = #tpu.dot_dimension_numbers<[1], [0], [0], [1], [0, 0, 1, 1], [], []>} : vector<16x32xf32>, vector<32x32xf32>, vector<16x32xf32> -> vector<16x32xf32>
    %437 = arith.addf %433, %436 : vector<16x32xf32>
    %c7_164 = arith.constant 7 : index
    %c0_165 = arith.constant 0 : index
    %c0_166 = arith.constant 0 : index
    %438 = vector.load %arg6[%c7_164, %c0_165, %c0_166] : memref<8x32x32xf32, #tpu.memory_space<vmem>>, vector<1x32x32xf32>
    %439 = vector.shape_cast %438 : vector<1x32x32xf32> to vector<32x32xf32>
    %cst_167 = arith.constant dense<0.000000e+00> : vector<16x32xf32>
    %440 = tpu.matmul %409, %439, %cst_167 {dimension_numbers = #tpu.dot_dimension_numbers<[1], [0], [0], [1], [0, 0, 1, 1], [], []>} : vector<16x32xf32>, vector<32x32xf32>, vector<16x32xf32> -> vector<16x32xf32>
    %441 = arith.addf %437, %440 : vector<16x32xf32>
    %c0_168 = arith.constant 0 : index
    %c0_169 = arith.constant 0 : index
    %442 = vector.load %arg7[%c0_168, %c0_169] : memref<1x32xf32, #tpu.memory_space<vmem>>, vector<1x32xf32>
    %443 = vector.broadcast %442 : vector<1x32xf32> to vector<16x32xf32>
    %444 = arith.addf %441, %443 : vector<16x32xf32>
    %cst_170 = arith.constant dense<0.000000e+00> : vector<16x32xf32>
    %445 = tpu.matmul %1, %444, %cst_170 {dimension_numbers = #tpu.dot_dimension_numbers<[1], [0], [0], [1], [0, 0, 1, 1], [], []>} : vector<16x16xf32>, vector<16x32xf32>, vector<16x32xf32> -> vector<16x32xf32>
    %446 = arith.addf %444, %445 : vector<16x32xf32>
    %447 = arith.negf %446 : vector<16x32xf32>
    %448 = math.exp %447 : vector<16x32xf32>
    %cst_171 = arith.constant 1.000000e+00 : f32
    %449 = vector.broadcast %cst_171 : f32 to vector<16x32xf32>
    %450 = arith.addf %449, %448 : vector<16x32xf32>
    %451 = arith.divf %449, %450 : vector<16x32xf32>
    %452 = arith.mulf %446, %451 : vector<16x32xf32>
    %c0_172 = arith.constant 0 : index
    %c0_173 = arith.constant 0 : index
    %453 = vector.load %arg8[%c0_172, %c0_173] : memref<32x32xf32, #tpu.memory_space<vmem>>, vector<32x32xf32>
    %cst_174 = arith.constant dense<0.000000e+00> : vector<16x32xf32>
    %454 = tpu.matmul %452, %453, %cst_174 {dimension_numbers = #tpu.dot_dimension_numbers<[1], [0], [0], [1], [0, 0, 1, 1], [], []>} : vector<16x32xf32>, vector<32x32xf32>, vector<16x32xf32> -> vector<16x32xf32>
    %cst_175 = arith.constant -2.200000e+00 : f32
    %455 = vector.broadcast %cst_175 : f32 to vector<16x32xf32>
    %456 = arith.subf %446, %455 : vector<16x32xf32>
    %cst_176 = arith.constant 2.500000e+00 : f32
    %457 = vector.broadcast %cst_176 : f32 to vector<16x32xf32>
    %458 = arith.mulf %456, %457 : vector<16x32xf32>
    %cst_177 = arith.constant 1.000000e+00 : f32
    %459 = vector.broadcast %cst_177 : f32 to vector<16x32xf32>
    %460 = arith.subf %458, %459 : vector<16x32xf32>
    %cst_178 = arith.constant 1.000000e+00 : f32
    %461 = vector.broadcast %cst_178 : f32 to vector<16x32xf32>
    %462 = arith.subf %460, %461 : vector<16x32xf32>
    %cst_179 = arith.constant 1.000000e+00 : f32
    %463 = vector.broadcast %cst_179 : f32 to vector<16x32xf32>
    %464 = arith.subf %462, %463 : vector<16x32xf32>
    %cst_180 = arith.constant 1.000000e+00 : f32
    %465 = vector.broadcast %cst_180 : f32 to vector<16x32xf32>
    %466 = arith.subf %464, %465 : vector<16x32xf32>
    %cst_181 = arith.constant 1.000000e+00 : f32
    %467 = vector.broadcast %cst_181 : f32 to vector<16x32xf32>
    %468 = arith.subf %466, %467 : vector<16x32xf32>
    %cst_182 = arith.constant 1.000000e+00 : f32
    %469 = vector.broadcast %cst_182 : f32 to vector<16x32xf32>
    %470 = arith.subf %468, %469 : vector<16x32xf32>
    %cst_183 = arith.constant 1.000000e+00 : f32
    %471 = vector.broadcast %cst_183 : f32 to vector<16x32xf32>
    %472 = arith.subf %470, %471 : vector<16x32xf32>
    %cst_184 = arith.constant 1.000000e+00 : f32
    %473 = vector.broadcast %cst_184 : f32 to vector<16x32xf32>
    %474 = arith.subf %472, %473 : vector<16x32xf32>
    %cst_185 = arith.constant 1.000000e+00 : f32
    %475 = vector.broadcast %cst_185 : f32 to vector<16x32xf32>
    %476 = arith.subf %474, %475 : vector<16x32xf32>
    %cst_186 = arith.constant 1.000000e+00 : f32
    %477 = vector.broadcast %cst_186 : f32 to vector<16x32xf32>
    %478 = arith.subf %476, %477 : vector<16x32xf32>
    %cst_187 = arith.constant 1.000000e+00 : f32
    %479 = vector.broadcast %cst_187 : f32 to vector<16x32xf32>
    %480 = arith.subf %478, %479 : vector<16x32xf32>
    %cst_188 = arith.constant 0.000000e+00 : f32
    %481 = vector.broadcast %cst_188 : f32 to vector<16x32xf32>
    %482 = arith.cmpf oge, %458, %481 : vector<16x32xf32>
    %cst_189 = arith.constant 1.000000e+00 : f32
    %cst_190 = arith.constant 0.000000e+00 : f32
    %483 = vector.broadcast %cst_189 : f32 to vector<16x32xf32>
    %484 = vector.broadcast %cst_190 : f32 to vector<16x32xf32>
    %485 = arith.select %482, %483, %484 : vector<16x32xi1>, vector<16x32xf32>
    %cst_191 = arith.constant 0.000000e+00 : f32
    %486 = vector.broadcast %cst_191 : f32 to vector<16x32xf32>
    %487 = arith.cmpf oge, %460, %486 : vector<16x32xf32>
    %cst_192 = arith.constant 1.000000e+00 : f32
    %cst_193 = arith.constant 0.000000e+00 : f32
    %488 = vector.broadcast %cst_192 : f32 to vector<16x32xf32>
    %489 = vector.broadcast %cst_193 : f32 to vector<16x32xf32>
    %490 = arith.select %487, %488, %489 : vector<16x32xi1>, vector<16x32xf32>
    %cst_194 = arith.constant 0.000000e+00 : f32
    %491 = vector.broadcast %cst_194 : f32 to vector<16x32xf32>
    %492 = arith.cmpf oge, %462, %491 : vector<16x32xf32>
    %cst_195 = arith.constant 1.000000e+00 : f32
    %cst_196 = arith.constant 0.000000e+00 : f32
    %493 = vector.broadcast %cst_195 : f32 to vector<16x32xf32>
    %494 = vector.broadcast %cst_196 : f32 to vector<16x32xf32>
    %495 = arith.select %492, %493, %494 : vector<16x32xi1>, vector<16x32xf32>
    %cst_197 = arith.constant 0.000000e+00 : f32
    %496 = vector.broadcast %cst_197 : f32 to vector<16x32xf32>
    %497 = arith.cmpf oge, %464, %496 : vector<16x32xf32>
    %cst_198 = arith.constant 1.000000e+00 : f32
    %cst_199 = arith.constant 0.000000e+00 : f32
    %498 = vector.broadcast %cst_198 : f32 to vector<16x32xf32>
    %499 = vector.broadcast %cst_199 : f32 to vector<16x32xf32>
    %500 = arith.select %497, %498, %499 : vector<16x32xi1>, vector<16x32xf32>
    %cst_200 = arith.constant 0.000000e+00 : f32
    %501 = vector.broadcast %cst_200 : f32 to vector<16x32xf32>
    %502 = arith.cmpf oge, %466, %501 : vector<16x32xf32>
    %cst_201 = arith.constant 1.000000e+00 : f32
    %cst_202 = arith.constant 0.000000e+00 : f32
    %503 = vector.broadcast %cst_201 : f32 to vector<16x32xf32>
    %504 = vector.broadcast %cst_202 : f32 to vector<16x32xf32>
    %505 = arith.select %502, %503, %504 : vector<16x32xi1>, vector<16x32xf32>
    %cst_203 = arith.constant 0.000000e+00 : f32
    %506 = vector.broadcast %cst_203 : f32 to vector<16x32xf32>
    %507 = arith.cmpf oge, %468, %506 : vector<16x32xf32>
    %cst_204 = arith.constant 1.000000e+00 : f32
    %cst_205 = arith.constant 0.000000e+00 : f32
    %508 = vector.broadcast %cst_204 : f32 to vector<16x32xf32>
    %509 = vector.broadcast %cst_205 : f32 to vector<16x32xf32>
    %510 = arith.select %507, %508, %509 : vector<16x32xi1>, vector<16x32xf32>
    %cst_206 = arith.constant 0.000000e+00 : f32
    %511 = vector.broadcast %cst_206 : f32 to vector<16x32xf32>
    %512 = arith.cmpf oge, %470, %511 : vector<16x32xf32>
    %cst_207 = arith.constant 1.000000e+00 : f32
    %cst_208 = arith.constant 0.000000e+00 : f32
    %513 = vector.broadcast %cst_207 : f32 to vector<16x32xf32>
    %514 = vector.broadcast %cst_208 : f32 to vector<16x32xf32>
    %515 = arith.select %512, %513, %514 : vector<16x32xi1>, vector<16x32xf32>
    %cst_209 = arith.constant 0.000000e+00 : f32
    %516 = vector.broadcast %cst_209 : f32 to vector<16x32xf32>
    %517 = arith.cmpf oge, %472, %516 : vector<16x32xf32>
    %cst_210 = arith.constant 1.000000e+00 : f32
    %cst_211 = arith.constant 0.000000e+00 : f32
    %518 = vector.broadcast %cst_210 : f32 to vector<16x32xf32>
    %519 = vector.broadcast %cst_211 : f32 to vector<16x32xf32>
    %520 = arith.select %517, %518, %519 : vector<16x32xi1>, vector<16x32xf32>
    %cst_212 = arith.constant 0.000000e+00 : f32
    %521 = vector.broadcast %cst_212 : f32 to vector<16x32xf32>
    %522 = arith.cmpf oge, %474, %521 : vector<16x32xf32>
    %cst_213 = arith.constant 1.000000e+00 : f32
    %cst_214 = arith.constant 0.000000e+00 : f32
    %523 = vector.broadcast %cst_213 : f32 to vector<16x32xf32>
    %524 = vector.broadcast %cst_214 : f32 to vector<16x32xf32>
    %525 = arith.select %522, %523, %524 : vector<16x32xi1>, vector<16x32xf32>
    %cst_215 = arith.constant 0.000000e+00 : f32
    %526 = vector.broadcast %cst_215 : f32 to vector<16x32xf32>
    %527 = arith.cmpf oge, %476, %526 : vector<16x32xf32>
    %cst_216 = arith.constant 1.000000e+00 : f32
    %cst_217 = arith.constant 0.000000e+00 : f32
    %528 = vector.broadcast %cst_216 : f32 to vector<16x32xf32>
    %529 = vector.broadcast %cst_217 : f32 to vector<16x32xf32>
    %530 = arith.select %527, %528, %529 : vector<16x32xi1>, vector<16x32xf32>
    %cst_218 = arith.constant 0.000000e+00 : f32
    %531 = vector.broadcast %cst_218 : f32 to vector<16x32xf32>
    %532 = arith.cmpf oge, %478, %531 : vector<16x32xf32>
    %cst_219 = arith.constant 1.000000e+00 : f32
    %cst_220 = arith.constant 0.000000e+00 : f32
    %533 = vector.broadcast %cst_219 : f32 to vector<16x32xf32>
    %534 = vector.broadcast %cst_220 : f32 to vector<16x32xf32>
    %535 = arith.select %532, %533, %534 : vector<16x32xi1>, vector<16x32xf32>
    %cst_221 = arith.constant 0.000000e+00 : f32
    %536 = vector.broadcast %cst_221 : f32 to vector<16x32xf32>
    %537 = arith.cmpf oge, %480, %536 : vector<16x32xf32>
    %cst_222 = arith.constant 1.000000e+00 : f32
    %cst_223 = arith.constant 0.000000e+00 : f32
    %538 = vector.broadcast %cst_222 : f32 to vector<16x32xf32>
    %539 = vector.broadcast %cst_223 : f32 to vector<16x32xf32>
    %540 = arith.select %537, %538, %539 : vector<16x32xi1>, vector<16x32xf32>
    %541 = arith.subf %485, %490 : vector<16x32xf32>
    %542 = arith.subf %490, %495 : vector<16x32xf32>
    %543 = arith.subf %495, %500 : vector<16x32xf32>
    %544 = arith.subf %500, %505 : vector<16x32xf32>
    %545 = arith.subf %505, %510 : vector<16x32xf32>
    %546 = arith.subf %510, %515 : vector<16x32xf32>
    %547 = arith.subf %515, %520 : vector<16x32xf32>
    %548 = arith.subf %520, %525 : vector<16x32xf32>
    %549 = arith.subf %525, %530 : vector<16x32xf32>
    %550 = arith.subf %530, %535 : vector<16x32xf32>
    %551 = arith.subf %535, %540 : vector<16x32xf32>
    %552 = arith.mulf %458, %541 : vector<16x32xf32>
    %553 = arith.mulf %462, %542 : vector<16x32xf32>
    %554 = arith.subf %552, %553 : vector<16x32xf32>
    %555 = arith.mulf %460, %542 : vector<16x32xf32>
    %556 = arith.mulf %464, %543 : vector<16x32xf32>
    %557 = arith.subf %555, %556 : vector<16x32xf32>
    %558 = arith.mulf %462, %543 : vector<16x32xf32>
    %559 = arith.mulf %466, %544 : vector<16x32xf32>
    %560 = arith.subf %558, %559 : vector<16x32xf32>
    %561 = arith.mulf %464, %544 : vector<16x32xf32>
    %562 = arith.mulf %468, %545 : vector<16x32xf32>
    %563 = arith.subf %561, %562 : vector<16x32xf32>
    %564 = arith.mulf %466, %545 : vector<16x32xf32>
    %565 = arith.mulf %470, %546 : vector<16x32xf32>
    %566 = arith.subf %564, %565 : vector<16x32xf32>
    %567 = arith.mulf %468, %546 : vector<16x32xf32>
    %568 = arith.mulf %472, %547 : vector<16x32xf32>
    %569 = arith.subf %567, %568 : vector<16x32xf32>
    %570 = arith.mulf %470, %547 : vector<16x32xf32>
    %571 = arith.mulf %474, %548 : vector<16x32xf32>
    %572 = arith.subf %570, %571 : vector<16x32xf32>
    %573 = arith.mulf %472, %548 : vector<16x32xf32>
    %574 = arith.mulf %476, %549 : vector<16x32xf32>
    %575 = arith.subf %573, %574 : vector<16x32xf32>
    %576 = arith.mulf %474, %549 : vector<16x32xf32>
    %577 = arith.mulf %478, %550 : vector<16x32xf32>
    %578 = arith.subf %576, %577 : vector<16x32xf32>
    %579 = arith.mulf %476, %550 : vector<16x32xf32>
    %580 = arith.mulf %480, %551 : vector<16x32xf32>
    %581 = arith.subf %579, %580 : vector<16x32xf32>
    %582 = arith.mulf %458, %554 : vector<16x32xf32>
    %583 = arith.mulf %464, %557 : vector<16x32xf32>
    %584 = arith.subf %582, %583 : vector<16x32xf32>
    %585 = arith.mulf %460, %557 : vector<16x32xf32>
    %586 = arith.mulf %466, %560 : vector<16x32xf32>
    %587 = arith.subf %585, %586 : vector<16x32xf32>
    %588 = arith.mulf %462, %560 : vector<16x32xf32>
    %589 = arith.mulf %468, %563 : vector<16x32xf32>
    %590 = arith.subf %588, %589 : vector<16x32xf32>
    %591 = arith.mulf %464, %563 : vector<16x32xf32>
    %592 = arith.mulf %470, %566 : vector<16x32xf32>
    %593 = arith.subf %591, %592 : vector<16x32xf32>
    %594 = arith.mulf %466, %566 : vector<16x32xf32>
    %595 = arith.mulf %472, %569 : vector<16x32xf32>
    %596 = arith.subf %594, %595 : vector<16x32xf32>
    %597 = arith.mulf %468, %569 : vector<16x32xf32>
    %598 = arith.mulf %474, %572 : vector<16x32xf32>
    %599 = arith.subf %597, %598 : vector<16x32xf32>
    %600 = arith.mulf %470, %572 : vector<16x32xf32>
    %601 = arith.mulf %476, %575 : vector<16x32xf32>
    %602 = arith.subf %600, %601 : vector<16x32xf32>
    %603 = arith.mulf %472, %575 : vector<16x32xf32>
    %604 = arith.mulf %478, %578 : vector<16x32xf32>
    %605 = arith.subf %603, %604 : vector<16x32xf32>
    %606 = arith.mulf %474, %578 : vector<16x32xf32>
    %607 = arith.mulf %480, %581 : vector<16x32xf32>
    %608 = arith.subf %606, %607 : vector<16x32xf32>
    %609 = arith.mulf %458, %584 : vector<16x32xf32>
    %610 = arith.mulf %466, %587 : vector<16x32xf32>
    %611 = arith.subf %609, %610 : vector<16x32xf32>
    %612 = arith.mulf %460, %587 : vector<16x32xf32>
    %613 = arith.mulf %468, %590 : vector<16x32xf32>
    %614 = arith.subf %612, %613 : vector<16x32xf32>
    %615 = arith.mulf %462, %590 : vector<16x32xf32>
    %616 = arith.mulf %470, %593 : vector<16x32xf32>
    %617 = arith.subf %615, %616 : vector<16x32xf32>
    %618 = arith.mulf %464, %593 : vector<16x32xf32>
    %619 = arith.mulf %472, %596 : vector<16x32xf32>
    %620 = arith.subf %618, %619 : vector<16x32xf32>
    %621 = arith.mulf %466, %596 : vector<16x32xf32>
    %622 = arith.mulf %474, %599 : vector<16x32xf32>
    %623 = arith.subf %621, %622 : vector<16x32xf32>
    %624 = arith.mulf %468, %599 : vector<16x32xf32>
    %625 = arith.mulf %476, %602 : vector<16x32xf32>
    %626 = arith.subf %624, %625 : vector<16x32xf32>
    %627 = arith.mulf %470, %602 : vector<16x32xf32>
    %628 = arith.mulf %478, %605 : vector<16x32xf32>
    %629 = arith.subf %627, %628 : vector<16x32xf32>
    %630 = arith.mulf %472, %605 : vector<16x32xf32>
    %631 = arith.mulf %480, %608 : vector<16x32xf32>
    %632 = arith.subf %630, %631 : vector<16x32xf32>
    %c0_224 = arith.constant 0 : index
    %c0_225 = arith.constant 0 : index
    %c0_226 = arith.constant 0 : index
    %633 = vector.load %arg9[%c0_224, %c0_225, %c0_226] : memref<8x32x32xf32, #tpu.memory_space<vmem>>, vector<1x32x32xf32>
    %634 = vector.shape_cast %633 : vector<1x32x32xf32> to vector<32x32xf32>
    %cst_227 = arith.constant dense<0.000000e+00> : vector<16x32xf32>
    %635 = tpu.matmul %611, %634, %cst_227 {dimension_numbers = #tpu.dot_dimension_numbers<[1], [0], [0], [1], [0, 0, 1, 1], [], []>} : vector<16x32xf32>, vector<32x32xf32>, vector<16x32xf32> -> vector<16x32xf32>
    %636 = arith.addf %454, %635 : vector<16x32xf32>
    %c1_228 = arith.constant 1 : index
    %c0_229 = arith.constant 0 : index
    %c0_230 = arith.constant 0 : index
    %637 = vector.load %arg9[%c1_228, %c0_229, %c0_230] : memref<8x32x32xf32, #tpu.memory_space<vmem>>, vector<1x32x32xf32>
    %638 = vector.shape_cast %637 : vector<1x32x32xf32> to vector<32x32xf32>
    %cst_231 = arith.constant dense<0.000000e+00> : vector<16x32xf32>
    %639 = tpu.matmul %614, %638, %cst_231 {dimension_numbers = #tpu.dot_dimension_numbers<[1], [0], [0], [1], [0, 0, 1, 1], [], []>} : vector<16x32xf32>, vector<32x32xf32>, vector<16x32xf32> -> vector<16x32xf32>
    %640 = arith.addf %636, %639 : vector<16x32xf32>
    %c2_232 = arith.constant 2 : index
    %c0_233 = arith.constant 0 : index
    %c0_234 = arith.constant 0 : index
    %641 = vector.load %arg9[%c2_232, %c0_233, %c0_234] : memref<8x32x32xf32, #tpu.memory_space<vmem>>, vector<1x32x32xf32>
    %642 = vector.shape_cast %641 : vector<1x32x32xf32> to vector<32x32xf32>
    %cst_235 = arith.constant dense<0.000000e+00> : vector<16x32xf32>
    %643 = tpu.matmul %617, %642, %cst_235 {dimension_numbers = #tpu.dot_dimension_numbers<[1], [0], [0], [1], [0, 0, 1, 1], [], []>} : vector<16x32xf32>, vector<32x32xf32>, vector<16x32xf32> -> vector<16x32xf32>
    %644 = arith.addf %640, %643 : vector<16x32xf32>
    %c3_236 = arith.constant 3 : index
    %c0_237 = arith.constant 0 : index
    %c0_238 = arith.constant 0 : index
    %645 = vector.load %arg9[%c3_236, %c0_237, %c0_238] : memref<8x32x32xf32, #tpu.memory_space<vmem>>, vector<1x32x32xf32>
    %646 = vector.shape_cast %645 : vector<1x32x32xf32> to vector<32x32xf32>
    %cst_239 = arith.constant dense<0.000000e+00> : vector<16x32xf32>
    %647 = tpu.matmul %620, %646, %cst_239 {dimension_numbers = #tpu.dot_dimension_numbers<[1], [0], [0], [1], [0, 0, 1, 1], [], []>} : vector<16x32xf32>, vector<32x32xf32>, vector<16x32xf32> -> vector<16x32xf32>
    %648 = arith.addf %644, %647 : vector<16x32xf32>
    %c4_240 = arith.constant 4 : index
    %c0_241 = arith.constant 0 : index
    %c0_242 = arith.constant 0 : index
    %649 = vector.load %arg9[%c4_240, %c0_241, %c0_242] : memref<8x32x32xf32, #tpu.memory_space<vmem>>, vector<1x32x32xf32>
    %650 = vector.shape_cast %649 : vector<1x32x32xf32> to vector<32x32xf32>
    %cst_243 = arith.constant dense<0.000000e+00> : vector<16x32xf32>
    %651 = tpu.matmul %623, %650, %cst_243 {dimension_numbers = #tpu.dot_dimension_numbers<[1], [0], [0], [1], [0, 0, 1, 1], [], []>} : vector<16x32xf32>, vector<32x32xf32>, vector<16x32xf32> -> vector<16x32xf32>
    %652 = arith.addf %648, %651 : vector<16x32xf32>
    %c5_244 = arith.constant 5 : index
    %c0_245 = arith.constant 0 : index
    %c0_246 = arith.constant 0 : index
    %653 = vector.load %arg9[%c5_244, %c0_245, %c0_246] : memref<8x32x32xf32, #tpu.memory_space<vmem>>, vector<1x32x32xf32>
    %654 = vector.shape_cast %653 : vector<1x32x32xf32> to vector<32x32xf32>
    %cst_247 = arith.constant dense<0.000000e+00> : vector<16x32xf32>
    %655 = tpu.matmul %626, %654, %cst_247 {dimension_numbers = #tpu.dot_dimension_numbers<[1], [0], [0], [1], [0, 0, 1, 1], [], []>} : vector<16x32xf32>, vector<32x32xf32>, vector<16x32xf32> -> vector<16x32xf32>
    %656 = arith.addf %652, %655 : vector<16x32xf32>
    %c6_248 = arith.constant 6 : index
    %c0_249 = arith.constant 0 : index
    %c0_250 = arith.constant 0 : index
    %657 = vector.load %arg9[%c6_248, %c0_249, %c0_250] : memref<8x32x32xf32, #tpu.memory_space<vmem>>, vector<1x32x32xf32>
    %658 = vector.shape_cast %657 : vector<1x32x32xf32> to vector<32x32xf32>
    %cst_251 = arith.constant dense<0.000000e+00> : vector<16x32xf32>
    %659 = tpu.matmul %629, %658, %cst_251 {dimension_numbers = #tpu.dot_dimension_numbers<[1], [0], [0], [1], [0, 0, 1, 1], [], []>} : vector<16x32xf32>, vector<32x32xf32>, vector<16x32xf32> -> vector<16x32xf32>
    %660 = arith.addf %656, %659 : vector<16x32xf32>
    %c7_252 = arith.constant 7 : index
    %c0_253 = arith.constant 0 : index
    %c0_254 = arith.constant 0 : index
    %661 = vector.load %arg9[%c7_252, %c0_253, %c0_254] : memref<8x32x32xf32, #tpu.memory_space<vmem>>, vector<1x32x32xf32>
    %662 = vector.shape_cast %661 : vector<1x32x32xf32> to vector<32x32xf32>
    %cst_255 = arith.constant dense<0.000000e+00> : vector<16x32xf32>
    %663 = tpu.matmul %632, %662, %cst_255 {dimension_numbers = #tpu.dot_dimension_numbers<[1], [0], [0], [1], [0, 0, 1, 1], [], []>} : vector<16x32xf32>, vector<32x32xf32>, vector<16x32xf32> -> vector<16x32xf32>
    %664 = arith.addf %660, %663 : vector<16x32xf32>
    %665 = arith.negf %664 : vector<16x32xf32>
    %666 = math.exp %665 : vector<16x32xf32>
    %cst_256 = arith.constant 1.000000e+00 : f32
    %667 = vector.broadcast %cst_256 : f32 to vector<16x32xf32>
    %668 = arith.addf %667, %666 : vector<16x32xf32>
    %669 = arith.divf %667, %668 : vector<16x32xf32>
    %670 = arith.mulf %664, %669 : vector<16x32xf32>
    %c0_257 = arith.constant 0 : index
    %c0_258 = arith.constant 0 : index
    %671 = vector.load %arg10[%c0_257, %c0_258] : memref<32x32xf32, #tpu.memory_space<vmem>>, vector<32x32xf32>
    %cst_259 = arith.constant dense<0.000000e+00> : vector<16x32xf32>
    %672 = tpu.matmul %670, %671, %cst_259 {dimension_numbers = #tpu.dot_dimension_numbers<[1], [0], [0], [1], [0, 0, 1, 1], [], []>} : vector<16x32xf32>, vector<32x32xf32>, vector<16x32xf32> -> vector<16x32xf32>
    %cst_260 = arith.constant -2.200000e+00 : f32
    %673 = vector.broadcast %cst_260 : f32 to vector<16x32xf32>
    %674 = arith.subf %664, %673 : vector<16x32xf32>
    %cst_261 = arith.constant 2.500000e+00 : f32
    %675 = vector.broadcast %cst_261 : f32 to vector<16x32xf32>
    %676 = arith.mulf %674, %675 : vector<16x32xf32>
    %cst_262 = arith.constant 1.000000e+00 : f32
    %677 = vector.broadcast %cst_262 : f32 to vector<16x32xf32>
    %678 = arith.subf %676, %677 : vector<16x32xf32>
    %cst_263 = arith.constant 1.000000e+00 : f32
    %679 = vector.broadcast %cst_263 : f32 to vector<16x32xf32>
    %680 = arith.subf %678, %679 : vector<16x32xf32>
    %cst_264 = arith.constant 1.000000e+00 : f32
    %681 = vector.broadcast %cst_264 : f32 to vector<16x32xf32>
    %682 = arith.subf %680, %681 : vector<16x32xf32>
    %cst_265 = arith.constant 1.000000e+00 : f32
    %683 = vector.broadcast %cst_265 : f32 to vector<16x32xf32>
    %684 = arith.subf %682, %683 : vector<16x32xf32>
    %cst_266 = arith.constant 1.000000e+00 : f32
    %685 = vector.broadcast %cst_266 : f32 to vector<16x32xf32>
    %686 = arith.subf %684, %685 : vector<16x32xf32>
    %cst_267 = arith.constant 1.000000e+00 : f32
    %687 = vector.broadcast %cst_267 : f32 to vector<16x32xf32>
    %688 = arith.subf %686, %687 : vector<16x32xf32>
    %cst_268 = arith.constant 1.000000e+00 : f32
    %689 = vector.broadcast %cst_268 : f32 to vector<16x32xf32>
    %690 = arith.subf %688, %689 : vector<16x32xf32>
    %cst_269 = arith.constant 1.000000e+00 : f32
    %691 = vector.broadcast %cst_269 : f32 to vector<16x32xf32>
    %692 = arith.subf %690, %691 : vector<16x32xf32>
    %cst_270 = arith.constant 1.000000e+00 : f32
    %693 = vector.broadcast %cst_270 : f32 to vector<16x32xf32>
    %694 = arith.subf %692, %693 : vector<16x32xf32>
    %cst_271 = arith.constant 1.000000e+00 : f32
    %695 = vector.broadcast %cst_271 : f32 to vector<16x32xf32>
    %696 = arith.subf %694, %695 : vector<16x32xf32>
    %cst_272 = arith.constant 1.000000e+00 : f32
    %697 = vector.broadcast %cst_272 : f32 to vector<16x32xf32>
    %698 = arith.subf %696, %697 : vector<16x32xf32>
    %cst_273 = arith.constant 0.000000e+00 : f32
    %699 = vector.broadcast %cst_273 : f32 to vector<16x32xf32>
    %700 = arith.cmpf oge, %676, %699 : vector<16x32xf32>
    %cst_274 = arith.constant 1.000000e+00 : f32
    %cst_275 = arith.constant 0.000000e+00 : f32
    %701 = vector.broadcast %cst_274 : f32 to vector<16x32xf32>
    %702 = vector.broadcast %cst_275 : f32 to vector<16x32xf32>
    %703 = arith.select %700, %701, %702 : vector<16x32xi1>, vector<16x32xf32>
    %cst_276 = arith.constant 0.000000e+00 : f32
    %704 = vector.broadcast %cst_276 : f32 to vector<16x32xf32>
    %705 = arith.cmpf oge, %678, %704 : vector<16x32xf32>
    %cst_277 = arith.constant 1.000000e+00 : f32
    %cst_278 = arith.constant 0.000000e+00 : f32
    %706 = vector.broadcast %cst_277 : f32 to vector<16x32xf32>
    %707 = vector.broadcast %cst_278 : f32 to vector<16x32xf32>
    %708 = arith.select %705, %706, %707 : vector<16x32xi1>, vector<16x32xf32>
    %cst_279 = arith.constant 0.000000e+00 : f32
    %709 = vector.broadcast %cst_279 : f32 to vector<16x32xf32>
    %710 = arith.cmpf oge, %680, %709 : vector<16x32xf32>
    %cst_280 = arith.constant 1.000000e+00 : f32
    %cst_281 = arith.constant 0.000000e+00 : f32
    %711 = vector.broadcast %cst_280 : f32 to vector<16x32xf32>
    %712 = vector.broadcast %cst_281 : f32 to vector<16x32xf32>
    %713 = arith.select %710, %711, %712 : vector<16x32xi1>, vector<16x32xf32>
    %cst_282 = arith.constant 0.000000e+00 : f32
    %714 = vector.broadcast %cst_282 : f32 to vector<16x32xf32>
    %715 = arith.cmpf oge, %682, %714 : vector<16x32xf32>
    %cst_283 = arith.constant 1.000000e+00 : f32
    %cst_284 = arith.constant 0.000000e+00 : f32
    %716 = vector.broadcast %cst_283 : f32 to vector<16x32xf32>
    %717 = vector.broadcast %cst_284 : f32 to vector<16x32xf32>
    %718 = arith.select %715, %716, %717 : vector<16x32xi1>, vector<16x32xf32>
    %cst_285 = arith.constant 0.000000e+00 : f32
    %719 = vector.broadcast %cst_285 : f32 to vector<16x32xf32>
    %720 = arith.cmpf oge, %684, %719 : vector<16x32xf32>
    %cst_286 = arith.constant 1.000000e+00 : f32
    %cst_287 = arith.constant 0.000000e+00 : f32
    %721 = vector.broadcast %cst_286 : f32 to vector<16x32xf32>
    %722 = vector.broadcast %cst_287 : f32 to vector<16x32xf32>
    %723 = arith.select %720, %721, %722 : vector<16x32xi1>, vector<16x32xf32>
    %cst_288 = arith.constant 0.000000e+00 : f32
    %724 = vector.broadcast %cst_288 : f32 to vector<16x32xf32>
    %725 = arith.cmpf oge, %686, %724 : vector<16x32xf32>
    %cst_289 = arith.constant 1.000000e+00 : f32
    %cst_290 = arith.constant 0.000000e+00 : f32
    %726 = vector.broadcast %cst_289 : f32 to vector<16x32xf32>
    %727 = vector.broadcast %cst_290 : f32 to vector<16x32xf32>
    %728 = arith.select %725, %726, %727 : vector<16x32xi1>, vector<16x32xf32>
    %cst_291 = arith.constant 0.000000e+00 : f32
    %729 = vector.broadcast %cst_291 : f32 to vector<16x32xf32>
    %730 = arith.cmpf oge, %688, %729 : vector<16x32xf32>
    %cst_292 = arith.constant 1.000000e+00 : f32
    %cst_293 = arith.constant 0.000000e+00 : f32
    %731 = vector.broadcast %cst_292 : f32 to vector<16x32xf32>
    %732 = vector.broadcast %cst_293 : f32 to vector<16x32xf32>
    %733 = arith.select %730, %731, %732 : vector<16x32xi1>, vector<16x32xf32>
    %cst_294 = arith.constant 0.000000e+00 : f32
    %734 = vector.broadcast %cst_294 : f32 to vector<16x32xf32>
    %735 = arith.cmpf oge, %690, %734 : vector<16x32xf32>
    %cst_295 = arith.constant 1.000000e+00 : f32
    %cst_296 = arith.constant 0.000000e+00 : f32
    %736 = vector.broadcast %cst_295 : f32 to vector<16x32xf32>
    %737 = vector.broadcast %cst_296 : f32 to vector<16x32xf32>
    %738 = arith.select %735, %736, %737 : vector<16x32xi1>, vector<16x32xf32>
    %cst_297 = arith.constant 0.000000e+00 : f32
    %739 = vector.broadcast %cst_297 : f32 to vector<16x32xf32>
    %740 = arith.cmpf oge, %692, %739 : vector<16x32xf32>
    %cst_298 = arith.constant 1.000000e+00 : f32
    %cst_299 = arith.constant 0.000000e+00 : f32
    %741 = vector.broadcast %cst_298 : f32 to vector<16x32xf32>
    %742 = vector.broadcast %cst_299 : f32 to vector<16x32xf32>
    %743 = arith.select %740, %741, %742 : vector<16x32xi1>, vector<16x32xf32>
    %cst_300 = arith.constant 0.000000e+00 : f32
    %744 = vector.broadcast %cst_300 : f32 to vector<16x32xf32>
    %745 = arith.cmpf oge, %694, %744 : vector<16x32xf32>
    %cst_301 = arith.constant 1.000000e+00 : f32
    %cst_302 = arith.constant 0.000000e+00 : f32
    %746 = vector.broadcast %cst_301 : f32 to vector<16x32xf32>
    %747 = vector.broadcast %cst_302 : f32 to vector<16x32xf32>
    %748 = arith.select %745, %746, %747 : vector<16x32xi1>, vector<16x32xf32>
    %cst_303 = arith.constant 0.000000e+00 : f32
    %749 = vector.broadcast %cst_303 : f32 to vector<16x32xf32>
    %750 = arith.cmpf oge, %696, %749 : vector<16x32xf32>
    %cst_304 = arith.constant 1.000000e+00 : f32
    %cst_305 = arith.constant 0.000000e+00 : f32
    %751 = vector.broadcast %cst_304 : f32 to vector<16x32xf32>
    %752 = vector.broadcast %cst_305 : f32 to vector<16x32xf32>
    %753 = arith.select %750, %751, %752 : vector<16x32xi1>, vector<16x32xf32>
    %cst_306 = arith.constant 0.000000e+00 : f32
    %754 = vector.broadcast %cst_306 : f32 to vector<16x32xf32>
    %755 = arith.cmpf oge, %698, %754 : vector<16x32xf32>
    %cst_307 = arith.constant 1.000000e+00 : f32
    %cst_308 = arith.constant 0.000000e+00 : f32
    %756 = vector.broadcast %cst_307 : f32 to vector<16x32xf32>
    %757 = vector.broadcast %cst_308 : f32 to vector<16x32xf32>
    %758 = arith.select %755, %756, %757 : vector<16x32xi1>, vector<16x32xf32>
    %759 = arith.subf %703, %708 : vector<16x32xf32>
    %760 = arith.subf %708, %713 : vector<16x32xf32>
    %761 = arith.subf %713, %718 : vector<16x32xf32>
    %762 = arith.subf %718, %723 : vector<16x32xf32>
    %763 = arith.subf %723, %728 : vector<16x32xf32>
    %764 = arith.subf %728, %733 : vector<16x32xf32>
    %765 = arith.subf %733, %738 : vector<16x32xf32>
    %766 = arith.subf %738, %743 : vector<16x32xf32>
    %767 = arith.subf %743, %748 : vector<16x32xf32>
    %768 = arith.subf %748, %753 : vector<16x32xf32>
    %769 = arith.subf %753, %758 : vector<16x32xf32>
    %770 = arith.mulf %676, %759 : vector<16x32xf32>
    %771 = arith.mulf %680, %760 : vector<16x32xf32>
    %772 = arith.subf %770, %771 : vector<16x32xf32>
    %773 = arith.mulf %678, %760 : vector<16x32xf32>
    %774 = arith.mulf %682, %761 : vector<16x32xf32>
    %775 = arith.subf %773, %774 : vector<16x32xf32>
    %776 = arith.mulf %680, %761 : vector<16x32xf32>
    %777 = arith.mulf %684, %762 : vector<16x32xf32>
    %778 = arith.subf %776, %777 : vector<16x32xf32>
    %779 = arith.mulf %682, %762 : vector<16x32xf32>
    %780 = arith.mulf %686, %763 : vector<16x32xf32>
    %781 = arith.subf %779, %780 : vector<16x32xf32>
    %782 = arith.mulf %684, %763 : vector<16x32xf32>
    %783 = arith.mulf %688, %764 : vector<16x32xf32>
    %784 = arith.subf %782, %783 : vector<16x32xf32>
    %785 = arith.mulf %686, %764 : vector<16x32xf32>
    %786 = arith.mulf %690, %765 : vector<16x32xf32>
    %787 = arith.subf %785, %786 : vector<16x32xf32>
    %788 = arith.mulf %688, %765 : vector<16x32xf32>
    %789 = arith.mulf %692, %766 : vector<16x32xf32>
    %790 = arith.subf %788, %789 : vector<16x32xf32>
    %791 = arith.mulf %690, %766 : vector<16x32xf32>
    %792 = arith.mulf %694, %767 : vector<16x32xf32>
    %793 = arith.subf %791, %792 : vector<16x32xf32>
    %794 = arith.mulf %692, %767 : vector<16x32xf32>
    %795 = arith.mulf %696, %768 : vector<16x32xf32>
    %796 = arith.subf %794, %795 : vector<16x32xf32>
    %797 = arith.mulf %694, %768 : vector<16x32xf32>
    %798 = arith.mulf %698, %769 : vector<16x32xf32>
    %799 = arith.subf %797, %798 : vector<16x32xf32>
    %800 = arith.mulf %676, %772 : vector<16x32xf32>
    %801 = arith.mulf %682, %775 : vector<16x32xf32>
    %802 = arith.subf %800, %801 : vector<16x32xf32>
    %803 = arith.mulf %678, %775 : vector<16x32xf32>
    %804 = arith.mulf %684, %778 : vector<16x32xf32>
    %805 = arith.subf %803, %804 : vector<16x32xf32>
    %806 = arith.mulf %680, %778 : vector<16x32xf32>
    %807 = arith.mulf %686, %781 : vector<16x32xf32>
    %808 = arith.subf %806, %807 : vector<16x32xf32>
    %809 = arith.mulf %682, %781 : vector<16x32xf32>
    %810 = arith.mulf %688, %784 : vector<16x32xf32>
    %811 = arith.subf %809, %810 : vector<16x32xf32>
    %812 = arith.mulf %684, %784 : vector<16x32xf32>
    %813 = arith.mulf %690, %787 : vector<16x32xf32>
    %814 = arith.subf %812, %813 : vector<16x32xf32>
    %815 = arith.mulf %686, %787 : vector<16x32xf32>
    %816 = arith.mulf %692, %790 : vector<16x32xf32>
    %817 = arith.subf %815, %816 : vector<16x32xf32>
    %818 = arith.mulf %688, %790 : vector<16x32xf32>
    %819 = arith.mulf %694, %793 : vector<16x32xf32>
    %820 = arith.subf %818, %819 : vector<16x32xf32>
    %821 = arith.mulf %690, %793 : vector<16x32xf32>
    %822 = arith.mulf %696, %796 : vector<16x32xf32>
    %823 = arith.subf %821, %822 : vector<16x32xf32>
    %824 = arith.mulf %692, %796 : vector<16x32xf32>
    %825 = arith.mulf %698, %799 : vector<16x32xf32>
    %826 = arith.subf %824, %825 : vector<16x32xf32>
    %827 = arith.mulf %676, %802 : vector<16x32xf32>
    %828 = arith.mulf %684, %805 : vector<16x32xf32>
    %829 = arith.subf %827, %828 : vector<16x32xf32>
    %830 = arith.mulf %678, %805 : vector<16x32xf32>
    %831 = arith.mulf %686, %808 : vector<16x32xf32>
    %832 = arith.subf %830, %831 : vector<16x32xf32>
    %833 = arith.mulf %680, %808 : vector<16x32xf32>
    %834 = arith.mulf %688, %811 : vector<16x32xf32>
    %835 = arith.subf %833, %834 : vector<16x32xf32>
    %836 = arith.mulf %682, %811 : vector<16x32xf32>
    %837 = arith.mulf %690, %814 : vector<16x32xf32>
    %838 = arith.subf %836, %837 : vector<16x32xf32>
    %839 = arith.mulf %684, %814 : vector<16x32xf32>
    %840 = arith.mulf %692, %817 : vector<16x32xf32>
    %841 = arith.subf %839, %840 : vector<16x32xf32>
    %842 = arith.mulf %686, %817 : vector<16x32xf32>
    %843 = arith.mulf %694, %820 : vector<16x32xf32>
    %844 = arith.subf %842, %843 : vector<16x32xf32>
    %845 = arith.mulf %688, %820 : vector<16x32xf32>
    %846 = arith.mulf %696, %823 : vector<16x32xf32>
    %847 = arith.subf %845, %846 : vector<16x32xf32>
    %848 = arith.mulf %690, %823 : vector<16x32xf32>
    %849 = arith.mulf %698, %826 : vector<16x32xf32>
    %850 = arith.subf %848, %849 : vector<16x32xf32>
    %c0_309 = arith.constant 0 : index
    %c0_310 = arith.constant 0 : index
    %c0_311 = arith.constant 0 : index
    %851 = vector.load %arg11[%c0_309, %c0_310, %c0_311] : memref<8x32x32xf32, #tpu.memory_space<vmem>>, vector<1x32x32xf32>
    %852 = vector.shape_cast %851 : vector<1x32x32xf32> to vector<32x32xf32>
    %cst_312 = arith.constant dense<0.000000e+00> : vector<16x32xf32>
    %853 = tpu.matmul %829, %852, %cst_312 {dimension_numbers = #tpu.dot_dimension_numbers<[1], [0], [0], [1], [0, 0, 1, 1], [], []>} : vector<16x32xf32>, vector<32x32xf32>, vector<16x32xf32> -> vector<16x32xf32>
    %854 = arith.addf %672, %853 : vector<16x32xf32>
    %c1_313 = arith.constant 1 : index
    %c0_314 = arith.constant 0 : index
    %c0_315 = arith.constant 0 : index
    %855 = vector.load %arg11[%c1_313, %c0_314, %c0_315] : memref<8x32x32xf32, #tpu.memory_space<vmem>>, vector<1x32x32xf32>
    %856 = vector.shape_cast %855 : vector<1x32x32xf32> to vector<32x32xf32>
    %cst_316 = arith.constant dense<0.000000e+00> : vector<16x32xf32>
    %857 = tpu.matmul %832, %856, %cst_316 {dimension_numbers = #tpu.dot_dimension_numbers<[1], [0], [0], [1], [0, 0, 1, 1], [], []>} : vector<16x32xf32>, vector<32x32xf32>, vector<16x32xf32> -> vector<16x32xf32>
    %858 = arith.addf %854, %857 : vector<16x32xf32>
    %c2_317 = arith.constant 2 : index
    %c0_318 = arith.constant 0 : index
    %c0_319 = arith.constant 0 : index
    %859 = vector.load %arg11[%c2_317, %c0_318, %c0_319] : memref<8x32x32xf32, #tpu.memory_space<vmem>>, vector<1x32x32xf32>
    %860 = vector.shape_cast %859 : vector<1x32x32xf32> to vector<32x32xf32>
    %cst_320 = arith.constant dense<0.000000e+00> : vector<16x32xf32>
    %861 = tpu.matmul %835, %860, %cst_320 {dimension_numbers = #tpu.dot_dimension_numbers<[1], [0], [0], [1], [0, 0, 1, 1], [], []>} : vector<16x32xf32>, vector<32x32xf32>, vector<16x32xf32> -> vector<16x32xf32>
    %862 = arith.addf %858, %861 : vector<16x32xf32>
    %c3_321 = arith.constant 3 : index
    %c0_322 = arith.constant 0 : index
    %c0_323 = arith.constant 0 : index
    %863 = vector.load %arg11[%c3_321, %c0_322, %c0_323] : memref<8x32x32xf32, #tpu.memory_space<vmem>>, vector<1x32x32xf32>
    %864 = vector.shape_cast %863 : vector<1x32x32xf32> to vector<32x32xf32>
    %cst_324 = arith.constant dense<0.000000e+00> : vector<16x32xf32>
    %865 = tpu.matmul %838, %864, %cst_324 {dimension_numbers = #tpu.dot_dimension_numbers<[1], [0], [0], [1], [0, 0, 1, 1], [], []>} : vector<16x32xf32>, vector<32x32xf32>, vector<16x32xf32> -> vector<16x32xf32>
    %866 = arith.addf %862, %865 : vector<16x32xf32>
    %c4_325 = arith.constant 4 : index
    %c0_326 = arith.constant 0 : index
    %c0_327 = arith.constant 0 : index
    %867 = vector.load %arg11[%c4_325, %c0_326, %c0_327] : memref<8x32x32xf32, #tpu.memory_space<vmem>>, vector<1x32x32xf32>
    %868 = vector.shape_cast %867 : vector<1x32x32xf32> to vector<32x32xf32>
    %cst_328 = arith.constant dense<0.000000e+00> : vector<16x32xf32>
    %869 = tpu.matmul %841, %868, %cst_328 {dimension_numbers = #tpu.dot_dimension_numbers<[1], [0], [0], [1], [0, 0, 1, 1], [], []>} : vector<16x32xf32>, vector<32x32xf32>, vector<16x32xf32> -> vector<16x32xf32>
    %870 = arith.addf %866, %869 : vector<16x32xf32>
    %c5_329 = arith.constant 5 : index
    %c0_330 = arith.constant 0 : index
    %c0_331 = arith.constant 0 : index
    %871 = vector.load %arg11[%c5_329, %c0_330, %c0_331] : memref<8x32x32xf32, #tpu.memory_space<vmem>>, vector<1x32x32xf32>
    %872 = vector.shape_cast %871 : vector<1x32x32xf32> to vector<32x32xf32>
    %cst_332 = arith.constant dense<0.000000e+00> : vector<16x32xf32>
    %873 = tpu.matmul %844, %872, %cst_332 {dimension_numbers = #tpu.dot_dimension_numbers<[1], [0], [0], [1], [0, 0, 1, 1], [], []>} : vector<16x32xf32>, vector<32x32xf32>, vector<16x32xf32> -> vector<16x32xf32>
    %874 = arith.addf %870, %873 : vector<16x32xf32>
    %c6_333 = arith.constant 6 : index
    %c0_334 = arith.constant 0 : index
    %c0_335 = arith.constant 0 : index
    %875 = vector.load %arg11[%c6_333, %c0_334, %c0_335] : memref<8x32x32xf32, #tpu.memory_space<vmem>>, vector<1x32x32xf32>
    %876 = vector.shape_cast %875 : vector<1x32x32xf32> to vector<32x32xf32>
    %cst_336 = arith.constant dense<0.000000e+00> : vector<16x32xf32>
    %877 = tpu.matmul %847, %876, %cst_336 {dimension_numbers = #tpu.dot_dimension_numbers<[1], [0], [0], [1], [0, 0, 1, 1], [], []>} : vector<16x32xf32>, vector<32x32xf32>, vector<16x32xf32> -> vector<16x32xf32>
    %878 = arith.addf %874, %877 : vector<16x32xf32>
    %c7_337 = arith.constant 7 : index
    %c0_338 = arith.constant 0 : index
    %c0_339 = arith.constant 0 : index
    %879 = vector.load %arg11[%c7_337, %c0_338, %c0_339] : memref<8x32x32xf32, #tpu.memory_space<vmem>>, vector<1x32x32xf32>
    %880 = vector.shape_cast %879 : vector<1x32x32xf32> to vector<32x32xf32>
    %cst_340 = arith.constant dense<0.000000e+00> : vector<16x32xf32>
    %881 = tpu.matmul %850, %880, %cst_340 {dimension_numbers = #tpu.dot_dimension_numbers<[1], [0], [0], [1], [0, 0, 1, 1], [], []>} : vector<16x32xf32>, vector<32x32xf32>, vector<16x32xf32> -> vector<16x32xf32>
    %882 = arith.addf %878, %881 : vector<16x32xf32>
    %c0_341 = arith.constant 0 : index
    %c0_342 = arith.constant 0 : index
    %883 = vector.load %arg12[%c0_341, %c0_342] : memref<1x32xf32, #tpu.memory_space<vmem>>, vector<1x32xf32>
    %884 = vector.broadcast %883 : vector<1x32xf32> to vector<16x32xf32>
    %885 = arith.addf %882, %884 : vector<16x32xf32>
    %886 = arith.negf %885 : vector<16x32xf32>
    %887 = math.exp %886 : vector<16x32xf32>
    %cst_343 = arith.constant 1.000000e+00 : f32
    %888 = vector.broadcast %cst_343 : f32 to vector<16x32xf32>
    %889 = arith.addf %888, %887 : vector<16x32xf32>
    %890 = arith.divf %888, %889 : vector<16x32xf32>
    %891 = arith.mulf %885, %890 : vector<16x32xf32>
    %c0_344 = arith.constant 0 : index
    %c0_345 = arith.constant 0 : index
    %892 = vector.load %arg13[%c0_344, %c0_345] : memref<32x32xf32, #tpu.memory_space<vmem>>, vector<32x32xf32>
    %cst_346 = arith.constant dense<0.000000e+00> : vector<16x32xf32>
    %893 = tpu.matmul %891, %892, %cst_346 {dimension_numbers = #tpu.dot_dimension_numbers<[1], [0], [0], [1], [0, 0, 1, 1], [], []>} : vector<16x32xf32>, vector<32x32xf32>, vector<16x32xf32> -> vector<16x32xf32>
    %cst_347 = arith.constant -2.200000e+00 : f32
    %894 = vector.broadcast %cst_347 : f32 to vector<16x32xf32>
    %895 = arith.subf %885, %894 : vector<16x32xf32>
    %cst_348 = arith.constant 2.500000e+00 : f32
    %896 = vector.broadcast %cst_348 : f32 to vector<16x32xf32>
    %897 = arith.mulf %895, %896 : vector<16x32xf32>
    %cst_349 = arith.constant 1.000000e+00 : f32
    %898 = vector.broadcast %cst_349 : f32 to vector<16x32xf32>
    %899 = arith.subf %897, %898 : vector<16x32xf32>
    %cst_350 = arith.constant 1.000000e+00 : f32
    %900 = vector.broadcast %cst_350 : f32 to vector<16x32xf32>
    %901 = arith.subf %899, %900 : vector<16x32xf32>
    %cst_351 = arith.constant 1.000000e+00 : f32
    %902 = vector.broadcast %cst_351 : f32 to vector<16x32xf32>
    %903 = arith.subf %901, %902 : vector<16x32xf32>
    %cst_352 = arith.constant 1.000000e+00 : f32
    %904 = vector.broadcast %cst_352 : f32 to vector<16x32xf32>
    %905 = arith.subf %903, %904 : vector<16x32xf32>
    %cst_353 = arith.constant 1.000000e+00 : f32
    %906 = vector.broadcast %cst_353 : f32 to vector<16x32xf32>
    %907 = arith.subf %905, %906 : vector<16x32xf32>
    %cst_354 = arith.constant 1.000000e+00 : f32
    %908 = vector.broadcast %cst_354 : f32 to vector<16x32xf32>
    %909 = arith.subf %907, %908 : vector<16x32xf32>
    %cst_355 = arith.constant 1.000000e+00 : f32
    %910 = vector.broadcast %cst_355 : f32 to vector<16x32xf32>
    %911 = arith.subf %909, %910 : vector<16x32xf32>
    %cst_356 = arith.constant 1.000000e+00 : f32
    %912 = vector.broadcast %cst_356 : f32 to vector<16x32xf32>
    %913 = arith.subf %911, %912 : vector<16x32xf32>
    %cst_357 = arith.constant 1.000000e+00 : f32
    %914 = vector.broadcast %cst_357 : f32 to vector<16x32xf32>
    %915 = arith.subf %913, %914 : vector<16x32xf32>
    %cst_358 = arith.constant 1.000000e+00 : f32
    %916 = vector.broadcast %cst_358 : f32 to vector<16x32xf32>
    %917 = arith.subf %915, %916 : vector<16x32xf32>
    %cst_359 = arith.constant 1.000000e+00 : f32
    %918 = vector.broadcast %cst_359 : f32 to vector<16x32xf32>
    %919 = arith.subf %917, %918 : vector<16x32xf32>
    %cst_360 = arith.constant 0.000000e+00 : f32
    %920 = vector.broadcast %cst_360 : f32 to vector<16x32xf32>
    %921 = arith.cmpf oge, %897, %920 : vector<16x32xf32>
    %cst_361 = arith.constant 1.000000e+00 : f32
    %cst_362 = arith.constant 0.000000e+00 : f32
    %922 = vector.broadcast %cst_361 : f32 to vector<16x32xf32>
    %923 = vector.broadcast %cst_362 : f32 to vector<16x32xf32>
    %924 = arith.select %921, %922, %923 : vector<16x32xi1>, vector<16x32xf32>
    %cst_363 = arith.constant 0.000000e+00 : f32
    %925 = vector.broadcast %cst_363 : f32 to vector<16x32xf32>
    %926 = arith.cmpf oge, %899, %925 : vector<16x32xf32>
    %cst_364 = arith.constant 1.000000e+00 : f32
    %cst_365 = arith.constant 0.000000e+00 : f32
    %927 = vector.broadcast %cst_364 : f32 to vector<16x32xf32>
    %928 = vector.broadcast %cst_365 : f32 to vector<16x32xf32>
    %929 = arith.select %926, %927, %928 : vector<16x32xi1>, vector<16x32xf32>
    %cst_366 = arith.constant 0.000000e+00 : f32
    %930 = vector.broadcast %cst_366 : f32 to vector<16x32xf32>
    %931 = arith.cmpf oge, %901, %930 : vector<16x32xf32>
    %cst_367 = arith.constant 1.000000e+00 : f32
    %cst_368 = arith.constant 0.000000e+00 : f32
    %932 = vector.broadcast %cst_367 : f32 to vector<16x32xf32>
    %933 = vector.broadcast %cst_368 : f32 to vector<16x32xf32>
    %934 = arith.select %931, %932, %933 : vector<16x32xi1>, vector<16x32xf32>
    %cst_369 = arith.constant 0.000000e+00 : f32
    %935 = vector.broadcast %cst_369 : f32 to vector<16x32xf32>
    %936 = arith.cmpf oge, %903, %935 : vector<16x32xf32>
    %cst_370 = arith.constant 1.000000e+00 : f32
    %cst_371 = arith.constant 0.000000e+00 : f32
    %937 = vector.broadcast %cst_370 : f32 to vector<16x32xf32>
    %938 = vector.broadcast %cst_371 : f32 to vector<16x32xf32>
    %939 = arith.select %936, %937, %938 : vector<16x32xi1>, vector<16x32xf32>
    %cst_372 = arith.constant 0.000000e+00 : f32
    %940 = vector.broadcast %cst_372 : f32 to vector<16x32xf32>
    %941 = arith.cmpf oge, %905, %940 : vector<16x32xf32>
    %cst_373 = arith.constant 1.000000e+00 : f32
    %cst_374 = arith.constant 0.000000e+00 : f32
    %942 = vector.broadcast %cst_373 : f32 to vector<16x32xf32>
    %943 = vector.broadcast %cst_374 : f32 to vector<16x32xf32>
    %944 = arith.select %941, %942, %943 : vector<16x32xi1>, vector<16x32xf32>
    %cst_375 = arith.constant 0.000000e+00 : f32
    %945 = vector.broadcast %cst_375 : f32 to vector<16x32xf32>
    %946 = arith.cmpf oge, %907, %945 : vector<16x32xf32>
    %cst_376 = arith.constant 1.000000e+00 : f32
    %cst_377 = arith.constant 0.000000e+00 : f32
    %947 = vector.broadcast %cst_376 : f32 to vector<16x32xf32>
    %948 = vector.broadcast %cst_377 : f32 to vector<16x32xf32>
    %949 = arith.select %946, %947, %948 : vector<16x32xi1>, vector<16x32xf32>
    %cst_378 = arith.constant 0.000000e+00 : f32
    %950 = vector.broadcast %cst_378 : f32 to vector<16x32xf32>
    %951 = arith.cmpf oge, %909, %950 : vector<16x32xf32>
    %cst_379 = arith.constant 1.000000e+00 : f32
    %cst_380 = arith.constant 0.000000e+00 : f32
    %952 = vector.broadcast %cst_379 : f32 to vector<16x32xf32>
    %953 = vector.broadcast %cst_380 : f32 to vector<16x32xf32>
    %954 = arith.select %951, %952, %953 : vector<16x32xi1>, vector<16x32xf32>
    %cst_381 = arith.constant 0.000000e+00 : f32
    %955 = vector.broadcast %cst_381 : f32 to vector<16x32xf32>
    %956 = arith.cmpf oge, %911, %955 : vector<16x32xf32>
    %cst_382 = arith.constant 1.000000e+00 : f32
    %cst_383 = arith.constant 0.000000e+00 : f32
    %957 = vector.broadcast %cst_382 : f32 to vector<16x32xf32>
    %958 = vector.broadcast %cst_383 : f32 to vector<16x32xf32>
    %959 = arith.select %956, %957, %958 : vector<16x32xi1>, vector<16x32xf32>
    %cst_384 = arith.constant 0.000000e+00 : f32
    %960 = vector.broadcast %cst_384 : f32 to vector<16x32xf32>
    %961 = arith.cmpf oge, %913, %960 : vector<16x32xf32>
    %cst_385 = arith.constant 1.000000e+00 : f32
    %cst_386 = arith.constant 0.000000e+00 : f32
    %962 = vector.broadcast %cst_385 : f32 to vector<16x32xf32>
    %963 = vector.broadcast %cst_386 : f32 to vector<16x32xf32>
    %964 = arith.select %961, %962, %963 : vector<16x32xi1>, vector<16x32xf32>
    %cst_387 = arith.constant 0.000000e+00 : f32
    %965 = vector.broadcast %cst_387 : f32 to vector<16x32xf32>
    %966 = arith.cmpf oge, %915, %965 : vector<16x32xf32>
    %cst_388 = arith.constant 1.000000e+00 : f32
    %cst_389 = arith.constant 0.000000e+00 : f32
    %967 = vector.broadcast %cst_388 : f32 to vector<16x32xf32>
    %968 = vector.broadcast %cst_389 : f32 to vector<16x32xf32>
    %969 = arith.select %966, %967, %968 : vector<16x32xi1>, vector<16x32xf32>
    %cst_390 = arith.constant 0.000000e+00 : f32
    %970 = vector.broadcast %cst_390 : f32 to vector<16x32xf32>
    %971 = arith.cmpf oge, %917, %970 : vector<16x32xf32>
    %cst_391 = arith.constant 1.000000e+00 : f32
    %cst_392 = arith.constant 0.000000e+00 : f32
    %972 = vector.broadcast %cst_391 : f32 to vector<16x32xf32>
    %973 = vector.broadcast %cst_392 : f32 to vector<16x32xf32>
    %974 = arith.select %971, %972, %973 : vector<16x32xi1>, vector<16x32xf32>
    %cst_393 = arith.constant 0.000000e+00 : f32
    %975 = vector.broadcast %cst_393 : f32 to vector<16x32xf32>
    %976 = arith.cmpf oge, %919, %975 : vector<16x32xf32>
    %cst_394 = arith.constant 1.000000e+00 : f32
    %cst_395 = arith.constant 0.000000e+00 : f32
    %977 = vector.broadcast %cst_394 : f32 to vector<16x32xf32>
    %978 = vector.broadcast %cst_395 : f32 to vector<16x32xf32>
    %979 = arith.select %976, %977, %978 : vector<16x32xi1>, vector<16x32xf32>
    %980 = arith.subf %924, %929 : vector<16x32xf32>
    %981 = arith.subf %929, %934 : vector<16x32xf32>
    %982 = arith.subf %934, %939 : vector<16x32xf32>
    %983 = arith.subf %939, %944 : vector<16x32xf32>
    %984 = arith.subf %944, %949 : vector<16x32xf32>
    %985 = arith.subf %949, %954 : vector<16x32xf32>
    %986 = arith.subf %954, %959 : vector<16x32xf32>
    %987 = arith.subf %959, %964 : vector<16x32xf32>
    %988 = arith.subf %964, %969 : vector<16x32xf32>
    %989 = arith.subf %969, %974 : vector<16x32xf32>
    %990 = arith.subf %974, %979 : vector<16x32xf32>
    %991 = arith.mulf %897, %980 : vector<16x32xf32>
    %992 = arith.mulf %901, %981 : vector<16x32xf32>
    %993 = arith.subf %991, %992 : vector<16x32xf32>
    %994 = arith.mulf %899, %981 : vector<16x32xf32>
    %995 = arith.mulf %903, %982 : vector<16x32xf32>
    %996 = arith.subf %994, %995 : vector<16x32xf32>
    %997 = arith.mulf %901, %982 : vector<16x32xf32>
    %998 = arith.mulf %905, %983 : vector<16x32xf32>
    %999 = arith.subf %997, %998 : vector<16x32xf32>
    %1000 = arith.mulf %903, %983 : vector<16x32xf32>
    %1001 = arith.mulf %907, %984 : vector<16x32xf32>
    %1002 = arith.subf %1000, %1001 : vector<16x32xf32>
    %1003 = arith.mulf %905, %984 : vector<16x32xf32>
    %1004 = arith.mulf %909, %985 : vector<16x32xf32>
    %1005 = arith.subf %1003, %1004 : vector<16x32xf32>
    %1006 = arith.mulf %907, %985 : vector<16x32xf32>
    %1007 = arith.mulf %911, %986 : vector<16x32xf32>
    %1008 = arith.subf %1006, %1007 : vector<16x32xf32>
    %1009 = arith.mulf %909, %986 : vector<16x32xf32>
    %1010 = arith.mulf %913, %987 : vector<16x32xf32>
    %1011 = arith.subf %1009, %1010 : vector<16x32xf32>
    %1012 = arith.mulf %911, %987 : vector<16x32xf32>
    %1013 = arith.mulf %915, %988 : vector<16x32xf32>
    %1014 = arith.subf %1012, %1013 : vector<16x32xf32>
    %1015 = arith.mulf %913, %988 : vector<16x32xf32>
    %1016 = arith.mulf %917, %989 : vector<16x32xf32>
    %1017 = arith.subf %1015, %1016 : vector<16x32xf32>
    %1018 = arith.mulf %915, %989 : vector<16x32xf32>
    %1019 = arith.mulf %919, %990 : vector<16x32xf32>
    %1020 = arith.subf %1018, %1019 : vector<16x32xf32>
    %1021 = arith.mulf %897, %993 : vector<16x32xf32>
    %1022 = arith.mulf %903, %996 : vector<16x32xf32>
    %1023 = arith.subf %1021, %1022 : vector<16x32xf32>
    %1024 = arith.mulf %899, %996 : vector<16x32xf32>
    %1025 = arith.mulf %905, %999 : vector<16x32xf32>
    %1026 = arith.subf %1024, %1025 : vector<16x32xf32>
    %1027 = arith.mulf %901, %999 : vector<16x32xf32>
    %1028 = arith.mulf %907, %1002 : vector<16x32xf32>
    %1029 = arith.subf %1027, %1028 : vector<16x32xf32>
    %1030 = arith.mulf %903, %1002 : vector<16x32xf32>
    %1031 = arith.mulf %909, %1005 : vector<16x32xf32>
    %1032 = arith.subf %1030, %1031 : vector<16x32xf32>
    %1033 = arith.mulf %905, %1005 : vector<16x32xf32>
    %1034 = arith.mulf %911, %1008 : vector<16x32xf32>
    %1035 = arith.subf %1033, %1034 : vector<16x32xf32>
    %1036 = arith.mulf %907, %1008 : vector<16x32xf32>
    %1037 = arith.mulf %913, %1011 : vector<16x32xf32>
    %1038 = arith.subf %1036, %1037 : vector<16x32xf32>
    %1039 = arith.mulf %909, %1011 : vector<16x32xf32>
    %1040 = arith.mulf %915, %1014 : vector<16x32xf32>
    %1041 = arith.subf %1039, %1040 : vector<16x32xf32>
    %1042 = arith.mulf %911, %1014 : vector<16x32xf32>
    %1043 = arith.mulf %917, %1017 : vector<16x32xf32>
    %1044 = arith.subf %1042, %1043 : vector<16x32xf32>
    %1045 = arith.mulf %913, %1017 : vector<16x32xf32>
    %1046 = arith.mulf %919, %1020 : vector<16x32xf32>
    %1047 = arith.subf %1045, %1046 : vector<16x32xf32>
    %1048 = arith.mulf %897, %1023 : vector<16x32xf32>
    %1049 = arith.mulf %905, %1026 : vector<16x32xf32>
    %1050 = arith.subf %1048, %1049 : vector<16x32xf32>
    %1051 = arith.mulf %899, %1026 : vector<16x32xf32>
    %1052 = arith.mulf %907, %1029 : vector<16x32xf32>
    %1053 = arith.subf %1051, %1052 : vector<16x32xf32>
    %1054 = arith.mulf %901, %1029 : vector<16x32xf32>
    %1055 = arith.mulf %909, %1032 : vector<16x32xf32>
    %1056 = arith.subf %1054, %1055 : vector<16x32xf32>
    %1057 = arith.mulf %903, %1032 : vector<16x32xf32>
    %1058 = arith.mulf %911, %1035 : vector<16x32xf32>
    %1059 = arith.subf %1057, %1058 : vector<16x32xf32>
    %1060 = arith.mulf %905, %1035 : vector<16x32xf32>
    %1061 = arith.mulf %913, %1038 : vector<16x32xf32>
    %1062 = arith.subf %1060, %1061 : vector<16x32xf32>
    %1063 = arith.mulf %907, %1038 : vector<16x32xf32>
    %1064 = arith.mulf %915, %1041 : vector<16x32xf32>
    %1065 = arith.subf %1063, %1064 : vector<16x32xf32>
    %1066 = arith.mulf %909, %1041 : vector<16x32xf32>
    %1067 = arith.mulf %917, %1044 : vector<16x32xf32>
    %1068 = arith.subf %1066, %1067 : vector<16x32xf32>
    %1069 = arith.mulf %911, %1044 : vector<16x32xf32>
    %1070 = arith.mulf %919, %1047 : vector<16x32xf32>
    %1071 = arith.subf %1069, %1070 : vector<16x32xf32>
    %c0_396 = arith.constant 0 : index
    %c0_397 = arith.constant 0 : index
    %c0_398 = arith.constant 0 : index
    %1072 = vector.load %arg14[%c0_396, %c0_397, %c0_398] : memref<8x32x32xf32, #tpu.memory_space<vmem>>, vector<1x32x32xf32>
    %1073 = vector.shape_cast %1072 : vector<1x32x32xf32> to vector<32x32xf32>
    %cst_399 = arith.constant dense<0.000000e+00> : vector<16x32xf32>
    %1074 = tpu.matmul %1050, %1073, %cst_399 {dimension_numbers = #tpu.dot_dimension_numbers<[1], [0], [0], [1], [0, 0, 1, 1], [], []>} : vector<16x32xf32>, vector<32x32xf32>, vector<16x32xf32> -> vector<16x32xf32>
    %1075 = arith.addf %893, %1074 : vector<16x32xf32>
    %c1_400 = arith.constant 1 : index
    %c0_401 = arith.constant 0 : index
    %c0_402 = arith.constant 0 : index
    %1076 = vector.load %arg14[%c1_400, %c0_401, %c0_402] : memref<8x32x32xf32, #tpu.memory_space<vmem>>, vector<1x32x32xf32>
    %1077 = vector.shape_cast %1076 : vector<1x32x32xf32> to vector<32x32xf32>
    %cst_403 = arith.constant dense<0.000000e+00> : vector<16x32xf32>
    %1078 = tpu.matmul %1053, %1077, %cst_403 {dimension_numbers = #tpu.dot_dimension_numbers<[1], [0], [0], [1], [0, 0, 1, 1], [], []>} : vector<16x32xf32>, vector<32x32xf32>, vector<16x32xf32> -> vector<16x32xf32>
    %1079 = arith.addf %1075, %1078 : vector<16x32xf32>
    %c2_404 = arith.constant 2 : index
    %c0_405 = arith.constant 0 : index
    %c0_406 = arith.constant 0 : index
    %1080 = vector.load %arg14[%c2_404, %c0_405, %c0_406] : memref<8x32x32xf32, #tpu.memory_space<vmem>>, vector<1x32x32xf32>
    %1081 = vector.shape_cast %1080 : vector<1x32x32xf32> to vector<32x32xf32>
    %cst_407 = arith.constant dense<0.000000e+00> : vector<16x32xf32>
    %1082 = tpu.matmul %1056, %1081, %cst_407 {dimension_numbers = #tpu.dot_dimension_numbers<[1], [0], [0], [1], [0, 0, 1, 1], [], []>} : vector<16x32xf32>, vector<32x32xf32>, vector<16x32xf32> -> vector<16x32xf32>
    %1083 = arith.addf %1079, %1082 : vector<16x32xf32>
    %c3_408 = arith.constant 3 : index
    %c0_409 = arith.constant 0 : index
    %c0_410 = arith.constant 0 : index
    %1084 = vector.load %arg14[%c3_408, %c0_409, %c0_410] : memref<8x32x32xf32, #tpu.memory_space<vmem>>, vector<1x32x32xf32>
    %1085 = vector.shape_cast %1084 : vector<1x32x32xf32> to vector<32x32xf32>
    %cst_411 = arith.constant dense<0.000000e+00> : vector<16x32xf32>
    %1086 = tpu.matmul %1059, %1085, %cst_411 {dimension_numbers = #tpu.dot_dimension_numbers<[1], [0], [0], [1], [0, 0, 1, 1], [], []>} : vector<16x32xf32>, vector<32x32xf32>, vector<16x32xf32> -> vector<16x32xf32>
    %1087 = arith.addf %1083, %1086 : vector<16x32xf32>
    %c4_412 = arith.constant 4 : index
    %c0_413 = arith.constant 0 : index
    %c0_414 = arith.constant 0 : index
    %1088 = vector.load %arg14[%c4_412, %c0_413, %c0_414] : memref<8x32x32xf32, #tpu.memory_space<vmem>>, vector<1x32x32xf32>
    %1089 = vector.shape_cast %1088 : vector<1x32x32xf32> to vector<32x32xf32>
    %cst_415 = arith.constant dense<0.000000e+00> : vector<16x32xf32>
    %1090 = tpu.matmul %1062, %1089, %cst_415 {dimension_numbers = #tpu.dot_dimension_numbers<[1], [0], [0], [1], [0, 0, 1, 1], [], []>} : vector<16x32xf32>, vector<32x32xf32>, vector<16x32xf32> -> vector<16x32xf32>
    %1091 = arith.addf %1087, %1090 : vector<16x32xf32>
    %c5_416 = arith.constant 5 : index
    %c0_417 = arith.constant 0 : index
    %c0_418 = arith.constant 0 : index
    %1092 = vector.load %arg14[%c5_416, %c0_417, %c0_418] : memref<8x32x32xf32, #tpu.memory_space<vmem>>, vector<1x32x32xf32>
    %1093 = vector.shape_cast %1092 : vector<1x32x32xf32> to vector<32x32xf32>
    %cst_419 = arith.constant dense<0.000000e+00> : vector<16x32xf32>
    %1094 = tpu.matmul %1065, %1093, %cst_419 {dimension_numbers = #tpu.dot_dimension_numbers<[1], [0], [0], [1], [0, 0, 1, 1], [], []>} : vector<16x32xf32>, vector<32x32xf32>, vector<16x32xf32> -> vector<16x32xf32>
    %1095 = arith.addf %1091, %1094 : vector<16x32xf32>
    %c6_420 = arith.constant 6 : index
    %c0_421 = arith.constant 0 : index
    %c0_422 = arith.constant 0 : index
    %1096 = vector.load %arg14[%c6_420, %c0_421, %c0_422] : memref<8x32x32xf32, #tpu.memory_space<vmem>>, vector<1x32x32xf32>
    %1097 = vector.shape_cast %1096 : vector<1x32x32xf32> to vector<32x32xf32>
    %cst_423 = arith.constant dense<0.000000e+00> : vector<16x32xf32>
    %1098 = tpu.matmul %1068, %1097, %cst_423 {dimension_numbers = #tpu.dot_dimension_numbers<[1], [0], [0], [1], [0, 0, 1, 1], [], []>} : vector<16x32xf32>, vector<32x32xf32>, vector<16x32xf32> -> vector<16x32xf32>
    %1099 = arith.addf %1095, %1098 : vector<16x32xf32>
    %c7_424 = arith.constant 7 : index
    %c0_425 = arith.constant 0 : index
    %c0_426 = arith.constant 0 : index
    %1100 = vector.load %arg14[%c7_424, %c0_425, %c0_426] : memref<8x32x32xf32, #tpu.memory_space<vmem>>, vector<1x32x32xf32>
    %1101 = vector.shape_cast %1100 : vector<1x32x32xf32> to vector<32x32xf32>
    %cst_427 = arith.constant dense<0.000000e+00> : vector<16x32xf32>
    %1102 = tpu.matmul %1071, %1101, %cst_427 {dimension_numbers = #tpu.dot_dimension_numbers<[1], [0], [0], [1], [0, 0, 1, 1], [], []>} : vector<16x32xf32>, vector<32x32xf32>, vector<16x32xf32> -> vector<16x32xf32>
    %1103 = arith.addf %1099, %1102 : vector<16x32xf32>
    %1104 = arith.negf %1103 : vector<16x32xf32>
    %1105 = math.exp %1104 : vector<16x32xf32>
    %cst_428 = arith.constant 1.000000e+00 : f32
    %1106 = vector.broadcast %cst_428 : f32 to vector<16x32xf32>
    %1107 = arith.addf %1106, %1105 : vector<16x32xf32>
    %1108 = arith.divf %1106, %1107 : vector<16x32xf32>
    %1109 = arith.mulf %1103, %1108 : vector<16x32xf32>
    %c0_429 = arith.constant 0 : index
    %c0_430 = arith.constant 0 : index
    %1110 = vector.load %arg15[%c0_429, %c0_430] : memref<32x4xf32, #tpu.memory_space<vmem>>, vector<32x4xf32>
    %cst_431 = arith.constant dense<0.000000e+00> : vector<16x4xf32>
    %1111 = tpu.matmul %1109, %1110, %cst_431 {dimension_numbers = #tpu.dot_dimension_numbers<[1], [0], [0], [1], [0, 0, 1, 1], [], []>} : vector<16x32xf32>, vector<32x4xf32>, vector<16x4xf32> -> vector<16x4xf32>
    %cst_432 = arith.constant -2.200000e+00 : f32
    %1112 = vector.broadcast %cst_432 : f32 to vector<16x32xf32>
    %1113 = arith.subf %1103, %1112 : vector<16x32xf32>
    %cst_433 = arith.constant 2.500000e+00 : f32
    %1114 = vector.broadcast %cst_433 : f32 to vector<16x32xf32>
    %1115 = arith.mulf %1113, %1114 : vector<16x32xf32>
    %cst_434 = arith.constant 1.000000e+00 : f32
    %1116 = vector.broadcast %cst_434 : f32 to vector<16x32xf32>
    %1117 = arith.subf %1115, %1116 : vector<16x32xf32>
    %cst_435 = arith.constant 1.000000e+00 : f32
    %1118 = vector.broadcast %cst_435 : f32 to vector<16x32xf32>
    %1119 = arith.subf %1117, %1118 : vector<16x32xf32>
    %cst_436 = arith.constant 1.000000e+00 : f32
    %1120 = vector.broadcast %cst_436 : f32 to vector<16x32xf32>
    %1121 = arith.subf %1119, %1120 : vector<16x32xf32>
    %cst_437 = arith.constant 1.000000e+00 : f32
    %1122 = vector.broadcast %cst_437 : f32 to vector<16x32xf32>
    %1123 = arith.subf %1121, %1122 : vector<16x32xf32>
    %cst_438 = arith.constant 1.000000e+00 : f32
    %1124 = vector.broadcast %cst_438 : f32 to vector<16x32xf32>
    %1125 = arith.subf %1123, %1124 : vector<16x32xf32>
    %cst_439 = arith.constant 1.000000e+00 : f32
    %1126 = vector.broadcast %cst_439 : f32 to vector<16x32xf32>
    %1127 = arith.subf %1125, %1126 : vector<16x32xf32>
    %cst_440 = arith.constant 1.000000e+00 : f32
    %1128 = vector.broadcast %cst_440 : f32 to vector<16x32xf32>
    %1129 = arith.subf %1127, %1128 : vector<16x32xf32>
    %cst_441 = arith.constant 1.000000e+00 : f32
    %1130 = vector.broadcast %cst_441 : f32 to vector<16x32xf32>
    %1131 = arith.subf %1129, %1130 : vector<16x32xf32>
    %cst_442 = arith.constant 1.000000e+00 : f32
    %1132 = vector.broadcast %cst_442 : f32 to vector<16x32xf32>
    %1133 = arith.subf %1131, %1132 : vector<16x32xf32>
    %cst_443 = arith.constant 1.000000e+00 : f32
    %1134 = vector.broadcast %cst_443 : f32 to vector<16x32xf32>
    %1135 = arith.subf %1133, %1134 : vector<16x32xf32>
    %cst_444 = arith.constant 1.000000e+00 : f32
    %1136 = vector.broadcast %cst_444 : f32 to vector<16x32xf32>
    %1137 = arith.subf %1135, %1136 : vector<16x32xf32>
    %cst_445 = arith.constant 0.000000e+00 : f32
    %1138 = vector.broadcast %cst_445 : f32 to vector<16x32xf32>
    %1139 = arith.cmpf oge, %1115, %1138 : vector<16x32xf32>
    %cst_446 = arith.constant 1.000000e+00 : f32
    %cst_447 = arith.constant 0.000000e+00 : f32
    %1140 = vector.broadcast %cst_446 : f32 to vector<16x32xf32>
    %1141 = vector.broadcast %cst_447 : f32 to vector<16x32xf32>
    %1142 = arith.select %1139, %1140, %1141 : vector<16x32xi1>, vector<16x32xf32>
    %cst_448 = arith.constant 0.000000e+00 : f32
    %1143 = vector.broadcast %cst_448 : f32 to vector<16x32xf32>
    %1144 = arith.cmpf oge, %1117, %1143 : vector<16x32xf32>
    %cst_449 = arith.constant 1.000000e+00 : f32
    %cst_450 = arith.constant 0.000000e+00 : f32
    %1145 = vector.broadcast %cst_449 : f32 to vector<16x32xf32>
    %1146 = vector.broadcast %cst_450 : f32 to vector<16x32xf32>
    %1147 = arith.select %1144, %1145, %1146 : vector<16x32xi1>, vector<16x32xf32>
    %cst_451 = arith.constant 0.000000e+00 : f32
    %1148 = vector.broadcast %cst_451 : f32 to vector<16x32xf32>
    %1149 = arith.cmpf oge, %1119, %1148 : vector<16x32xf32>
    %cst_452 = arith.constant 1.000000e+00 : f32
    %cst_453 = arith.constant 0.000000e+00 : f32
    %1150 = vector.broadcast %cst_452 : f32 to vector<16x32xf32>
    %1151 = vector.broadcast %cst_453 : f32 to vector<16x32xf32>
    %1152 = arith.select %1149, %1150, %1151 : vector<16x32xi1>, vector<16x32xf32>
    %cst_454 = arith.constant 0.000000e+00 : f32
    %1153 = vector.broadcast %cst_454 : f32 to vector<16x32xf32>
    %1154 = arith.cmpf oge, %1121, %1153 : vector<16x32xf32>
    %cst_455 = arith.constant 1.000000e+00 : f32
    %cst_456 = arith.constant 0.000000e+00 : f32
    %1155 = vector.broadcast %cst_455 : f32 to vector<16x32xf32>
    %1156 = vector.broadcast %cst_456 : f32 to vector<16x32xf32>
    %1157 = arith.select %1154, %1155, %1156 : vector<16x32xi1>, vector<16x32xf32>
    %cst_457 = arith.constant 0.000000e+00 : f32
    %1158 = vector.broadcast %cst_457 : f32 to vector<16x32xf32>
    %1159 = arith.cmpf oge, %1123, %1158 : vector<16x32xf32>
    %cst_458 = arith.constant 1.000000e+00 : f32
    %cst_459 = arith.constant 0.000000e+00 : f32
    %1160 = vector.broadcast %cst_458 : f32 to vector<16x32xf32>
    %1161 = vector.broadcast %cst_459 : f32 to vector<16x32xf32>
    %1162 = arith.select %1159, %1160, %1161 : vector<16x32xi1>, vector<16x32xf32>
    %cst_460 = arith.constant 0.000000e+00 : f32
    %1163 = vector.broadcast %cst_460 : f32 to vector<16x32xf32>
    %1164 = arith.cmpf oge, %1125, %1163 : vector<16x32xf32>
    %cst_461 = arith.constant 1.000000e+00 : f32
    %cst_462 = arith.constant 0.000000e+00 : f32
    %1165 = vector.broadcast %cst_461 : f32 to vector<16x32xf32>
    %1166 = vector.broadcast %cst_462 : f32 to vector<16x32xf32>
    %1167 = arith.select %1164, %1165, %1166 : vector<16x32xi1>, vector<16x32xf32>
    %cst_463 = arith.constant 0.000000e+00 : f32
    %1168 = vector.broadcast %cst_463 : f32 to vector<16x32xf32>
    %1169 = arith.cmpf oge, %1127, %1168 : vector<16x32xf32>
    %cst_464 = arith.constant 1.000000e+00 : f32
    %cst_465 = arith.constant 0.000000e+00 : f32
    %1170 = vector.broadcast %cst_464 : f32 to vector<16x32xf32>
    %1171 = vector.broadcast %cst_465 : f32 to vector<16x32xf32>
    %1172 = arith.select %1169, %1170, %1171 : vector<16x32xi1>, vector<16x32xf32>
    %cst_466 = arith.constant 0.000000e+00 : f32
    %1173 = vector.broadcast %cst_466 : f32 to vector<16x32xf32>
    %1174 = arith.cmpf oge, %1129, %1173 : vector<16x32xf32>
    %cst_467 = arith.constant 1.000000e+00 : f32
    %cst_468 = arith.constant 0.000000e+00 : f32
    %1175 = vector.broadcast %cst_467 : f32 to vector<16x32xf32>
    %1176 = vector.broadcast %cst_468 : f32 to vector<16x32xf32>
    %1177 = arith.select %1174, %1175, %1176 : vector<16x32xi1>, vector<16x32xf32>
    %cst_469 = arith.constant 0.000000e+00 : f32
    %1178 = vector.broadcast %cst_469 : f32 to vector<16x32xf32>
    %1179 = arith.cmpf oge, %1131, %1178 : vector<16x32xf32>
    %cst_470 = arith.constant 1.000000e+00 : f32
    %cst_471 = arith.constant 0.000000e+00 : f32
    %1180 = vector.broadcast %cst_470 : f32 to vector<16x32xf32>
    %1181 = vector.broadcast %cst_471 : f32 to vector<16x32xf32>
    %1182 = arith.select %1179, %1180, %1181 : vector<16x32xi1>, vector<16x32xf32>
    %cst_472 = arith.constant 0.000000e+00 : f32
    %1183 = vector.broadcast %cst_472 : f32 to vector<16x32xf32>
    %1184 = arith.cmpf oge, %1133, %1183 : vector<16x32xf32>
    %cst_473 = arith.constant 1.000000e+00 : f32
    %cst_474 = arith.constant 0.000000e+00 : f32
    %1185 = vector.broadcast %cst_473 : f32 to vector<16x32xf32>
    %1186 = vector.broadcast %cst_474 : f32 to vector<16x32xf32>
    %1187 = arith.select %1184, %1185, %1186 : vector<16x32xi1>, vector<16x32xf32>
    %cst_475 = arith.constant 0.000000e+00 : f32
    %1188 = vector.broadcast %cst_475 : f32 to vector<16x32xf32>
    %1189 = arith.cmpf oge, %1135, %1188 : vector<16x32xf32>
    %cst_476 = arith.constant 1.000000e+00 : f32
    %cst_477 = arith.constant 0.000000e+00 : f32
    %1190 = vector.broadcast %cst_476 : f32 to vector<16x32xf32>
    %1191 = vector.broadcast %cst_477 : f32 to vector<16x32xf32>
    %1192 = arith.select %1189, %1190, %1191 : vector<16x32xi1>, vector<16x32xf32>
    %cst_478 = arith.constant 0.000000e+00 : f32
    %1193 = vector.broadcast %cst_478 : f32 to vector<16x32xf32>
    %1194 = arith.cmpf oge, %1137, %1193 : vector<16x32xf32>
    %cst_479 = arith.constant 1.000000e+00 : f32
    %cst_480 = arith.constant 0.000000e+00 : f32
    %1195 = vector.broadcast %cst_479 : f32 to vector<16x32xf32>
    %1196 = vector.broadcast %cst_480 : f32 to vector<16x32xf32>
    %1197 = arith.select %1194, %1195, %1196 : vector<16x32xi1>, vector<16x32xf32>
    %1198 = arith.subf %1142, %1147 : vector<16x32xf32>
    %1199 = arith.subf %1147, %1152 : vector<16x32xf32>
    %1200 = arith.subf %1152, %1157 : vector<16x32xf32>
    %1201 = arith.subf %1157, %1162 : vector<16x32xf32>
    %1202 = arith.subf %1162, %1167 : vector<16x32xf32>
    %1203 = arith.subf %1167, %1172 : vector<16x32xf32>
    %1204 = arith.subf %1172, %1177 : vector<16x32xf32>
    %1205 = arith.subf %1177, %1182 : vector<16x32xf32>
    %1206 = arith.subf %1182, %1187 : vector<16x32xf32>
    %1207 = arith.subf %1187, %1192 : vector<16x32xf32>
    %1208 = arith.subf %1192, %1197 : vector<16x32xf32>
    %1209 = arith.mulf %1115, %1198 : vector<16x32xf32>
    %1210 = arith.mulf %1119, %1199 : vector<16x32xf32>
    %1211 = arith.subf %1209, %1210 : vector<16x32xf32>
    %1212 = arith.mulf %1117, %1199 : vector<16x32xf32>
    %1213 = arith.mulf %1121, %1200 : vector<16x32xf32>
    %1214 = arith.subf %1212, %1213 : vector<16x32xf32>
    %1215 = arith.mulf %1119, %1200 : vector<16x32xf32>
    %1216 = arith.mulf %1123, %1201 : vector<16x32xf32>
    %1217 = arith.subf %1215, %1216 : vector<16x32xf32>
    %1218 = arith.mulf %1121, %1201 : vector<16x32xf32>
    %1219 = arith.mulf %1125, %1202 : vector<16x32xf32>
    %1220 = arith.subf %1218, %1219 : vector<16x32xf32>
    %1221 = arith.mulf %1123, %1202 : vector<16x32xf32>
    %1222 = arith.mulf %1127, %1203 : vector<16x32xf32>
    %1223 = arith.subf %1221, %1222 : vector<16x32xf32>
    %1224 = arith.mulf %1125, %1203 : vector<16x32xf32>
    %1225 = arith.mulf %1129, %1204 : vector<16x32xf32>
    %1226 = arith.subf %1224, %1225 : vector<16x32xf32>
    %1227 = arith.mulf %1127, %1204 : vector<16x32xf32>
    %1228 = arith.mulf %1131, %1205 : vector<16x32xf32>
    %1229 = arith.subf %1227, %1228 : vector<16x32xf32>
    %1230 = arith.mulf %1129, %1205 : vector<16x32xf32>
    %1231 = arith.mulf %1133, %1206 : vector<16x32xf32>
    %1232 = arith.subf %1230, %1231 : vector<16x32xf32>
    %1233 = arith.mulf %1131, %1206 : vector<16x32xf32>
    %1234 = arith.mulf %1135, %1207 : vector<16x32xf32>
    %1235 = arith.subf %1233, %1234 : vector<16x32xf32>
    %1236 = arith.mulf %1133, %1207 : vector<16x32xf32>
    %1237 = arith.mulf %1137, %1208 : vector<16x32xf32>
    %1238 = arith.subf %1236, %1237 : vector<16x32xf32>
    %1239 = arith.mulf %1115, %1211 : vector<16x32xf32>
    %1240 = arith.mulf %1121, %1214 : vector<16x32xf32>
    %1241 = arith.subf %1239, %1240 : vector<16x32xf32>
    %1242 = arith.mulf %1117, %1214 : vector<16x32xf32>
    %1243 = arith.mulf %1123, %1217 : vector<16x32xf32>
    %1244 = arith.subf %1242, %1243 : vector<16x32xf32>
    %1245 = arith.mulf %1119, %1217 : vector<16x32xf32>
    %1246 = arith.mulf %1125, %1220 : vector<16x32xf32>
    %1247 = arith.subf %1245, %1246 : vector<16x32xf32>
    %1248 = arith.mulf %1121, %1220 : vector<16x32xf32>
    %1249 = arith.mulf %1127, %1223 : vector<16x32xf32>
    %1250 = arith.subf %1248, %1249 : vector<16x32xf32>
    %1251 = arith.mulf %1123, %1223 : vector<16x32xf32>
    %1252 = arith.mulf %1129, %1226 : vector<16x32xf32>
    %1253 = arith.subf %1251, %1252 : vector<16x32xf32>
    %1254 = arith.mulf %1125, %1226 : vector<16x32xf32>
    %1255 = arith.mulf %1131, %1229 : vector<16x32xf32>
    %1256 = arith.subf %1254, %1255 : vector<16x32xf32>
    %1257 = arith.mulf %1127, %1229 : vector<16x32xf32>
    %1258 = arith.mulf %1133, %1232 : vector<16x32xf32>
    %1259 = arith.subf %1257, %1258 : vector<16x32xf32>
    %1260 = arith.mulf %1129, %1232 : vector<16x32xf32>
    %1261 = arith.mulf %1135, %1235 : vector<16x32xf32>
    %1262 = arith.subf %1260, %1261 : vector<16x32xf32>
    %1263 = arith.mulf %1131, %1235 : vector<16x32xf32>
    %1264 = arith.mulf %1137, %1238 : vector<16x32xf32>
    %1265 = arith.subf %1263, %1264 : vector<16x32xf32>
    %1266 = arith.mulf %1115, %1241 : vector<16x32xf32>
    %1267 = arith.mulf %1123, %1244 : vector<16x32xf32>
    %1268 = arith.subf %1266, %1267 : vector<16x32xf32>
    %1269 = arith.mulf %1117, %1244 : vector<16x32xf32>
    %1270 = arith.mulf %1125, %1247 : vector<16x32xf32>
    %1271 = arith.subf %1269, %1270 : vector<16x32xf32>
    %1272 = arith.mulf %1119, %1247 : vector<16x32xf32>
    %1273 = arith.mulf %1127, %1250 : vector<16x32xf32>
    %1274 = arith.subf %1272, %1273 : vector<16x32xf32>
    %1275 = arith.mulf %1121, %1250 : vector<16x32xf32>
    %1276 = arith.mulf %1129, %1253 : vector<16x32xf32>
    %1277 = arith.subf %1275, %1276 : vector<16x32xf32>
    %1278 = arith.mulf %1123, %1253 : vector<16x32xf32>
    %1279 = arith.mulf %1131, %1256 : vector<16x32xf32>
    %1280 = arith.subf %1278, %1279 : vector<16x32xf32>
    %1281 = arith.mulf %1125, %1256 : vector<16x32xf32>
    %1282 = arith.mulf %1133, %1259 : vector<16x32xf32>
    %1283 = arith.subf %1281, %1282 : vector<16x32xf32>
    %1284 = arith.mulf %1127, %1259 : vector<16x32xf32>
    %1285 = arith.mulf %1135, %1262 : vector<16x32xf32>
    %1286 = arith.subf %1284, %1285 : vector<16x32xf32>
    %1287 = arith.mulf %1129, %1262 : vector<16x32xf32>
    %1288 = arith.mulf %1137, %1265 : vector<16x32xf32>
    %1289 = arith.subf %1287, %1288 : vector<16x32xf32>
    %c0_481 = arith.constant 0 : index
    %c0_482 = arith.constant 0 : index
    %c0_483 = arith.constant 0 : index
    %1290 = vector.load %arg16[%c0_481, %c0_482, %c0_483] : memref<8x32x4xf32, #tpu.memory_space<vmem>>, vector<1x32x4xf32>
    %1291 = vector.shape_cast %1290 : vector<1x32x4xf32> to vector<32x4xf32>
    %cst_484 = arith.constant dense<0.000000e+00> : vector<16x4xf32>
    %1292 = tpu.matmul %1268, %1291, %cst_484 {dimension_numbers = #tpu.dot_dimension_numbers<[1], [0], [0], [1], [0, 0, 1, 1], [], []>} : vector<16x32xf32>, vector<32x4xf32>, vector<16x4xf32> -> vector<16x4xf32>
    %1293 = arith.addf %1111, %1292 : vector<16x4xf32>
    %c1_485 = arith.constant 1 : index
    %c0_486 = arith.constant 0 : index
    %c0_487 = arith.constant 0 : index
    %1294 = vector.load %arg16[%c1_485, %c0_486, %c0_487] : memref<8x32x4xf32, #tpu.memory_space<vmem>>, vector<1x32x4xf32>
    %1295 = vector.shape_cast %1294 : vector<1x32x4xf32> to vector<32x4xf32>
    %cst_488 = arith.constant dense<0.000000e+00> : vector<16x4xf32>
    %1296 = tpu.matmul %1271, %1295, %cst_488 {dimension_numbers = #tpu.dot_dimension_numbers<[1], [0], [0], [1], [0, 0, 1, 1], [], []>} : vector<16x32xf32>, vector<32x4xf32>, vector<16x4xf32> -> vector<16x4xf32>
    %1297 = arith.addf %1293, %1296 : vector<16x4xf32>
    %c2_489 = arith.constant 2 : index
    %c0_490 = arith.constant 0 : index
    %c0_491 = arith.constant 0 : index
    %1298 = vector.load %arg16[%c2_489, %c0_490, %c0_491] : memref<8x32x4xf32, #tpu.memory_space<vmem>>, vector<1x32x4xf32>
    %1299 = vector.shape_cast %1298 : vector<1x32x4xf32> to vector<32x4xf32>
    %cst_492 = arith.constant dense<0.000000e+00> : vector<16x4xf32>
    %1300 = tpu.matmul %1274, %1299, %cst_492 {dimension_numbers = #tpu.dot_dimension_numbers<[1], [0], [0], [1], [0, 0, 1, 1], [], []>} : vector<16x32xf32>, vector<32x4xf32>, vector<16x4xf32> -> vector<16x4xf32>
    %1301 = arith.addf %1297, %1300 : vector<16x4xf32>
    %c3_493 = arith.constant 3 : index
    %c0_494 = arith.constant 0 : index
    %c0_495 = arith.constant 0 : index
    %1302 = vector.load %arg16[%c3_493, %c0_494, %c0_495] : memref<8x32x4xf32, #tpu.memory_space<vmem>>, vector<1x32x4xf32>
    %1303 = vector.shape_cast %1302 : vector<1x32x4xf32> to vector<32x4xf32>
    %cst_496 = arith.constant dense<0.000000e+00> : vector<16x4xf32>
    %1304 = tpu.matmul %1277, %1303, %cst_496 {dimension_numbers = #tpu.dot_dimension_numbers<[1], [0], [0], [1], [0, 0, 1, 1], [], []>} : vector<16x32xf32>, vector<32x4xf32>, vector<16x4xf32> -> vector<16x4xf32>
    %1305 = arith.addf %1301, %1304 : vector<16x4xf32>
    %c4_497 = arith.constant 4 : index
    %c0_498 = arith.constant 0 : index
    %c0_499 = arith.constant 0 : index
    %1306 = vector.load %arg16[%c4_497, %c0_498, %c0_499] : memref<8x32x4xf32, #tpu.memory_space<vmem>>, vector<1x32x4xf32>
    %1307 = vector.shape_cast %1306 : vector<1x32x4xf32> to vector<32x4xf32>
    %cst_500 = arith.constant dense<0.000000e+00> : vector<16x4xf32>
    %1308 = tpu.matmul %1280, %1307, %cst_500 {dimension_numbers = #tpu.dot_dimension_numbers<[1], [0], [0], [1], [0, 0, 1, 1], [], []>} : vector<16x32xf32>, vector<32x4xf32>, vector<16x4xf32> -> vector<16x4xf32>
    %1309 = arith.addf %1305, %1308 : vector<16x4xf32>
    %c5_501 = arith.constant 5 : index
    %c0_502 = arith.constant 0 : index
    %c0_503 = arith.constant 0 : index
    %1310 = vector.load %arg16[%c5_501, %c0_502, %c0_503] : memref<8x32x4xf32, #tpu.memory_space<vmem>>, vector<1x32x4xf32>
    %1311 = vector.shape_cast %1310 : vector<1x32x4xf32> to vector<32x4xf32>
    %cst_504 = arith.constant dense<0.000000e+00> : vector<16x4xf32>
    %1312 = tpu.matmul %1283, %1311, %cst_504 {dimension_numbers = #tpu.dot_dimension_numbers<[1], [0], [0], [1], [0, 0, 1, 1], [], []>} : vector<16x32xf32>, vector<32x4xf32>, vector<16x4xf32> -> vector<16x4xf32>
    %1313 = arith.addf %1309, %1312 : vector<16x4xf32>
    %c6_505 = arith.constant 6 : index
    %c0_506 = arith.constant 0 : index
    %c0_507 = arith.constant 0 : index
    %1314 = vector.load %arg16[%c6_505, %c0_506, %c0_507] : memref<8x32x4xf32, #tpu.memory_space<vmem>>, vector<1x32x4xf32>
    %1315 = vector.shape_cast %1314 : vector<1x32x4xf32> to vector<32x4xf32>
    %cst_508 = arith.constant dense<0.000000e+00> : vector<16x4xf32>
    %1316 = tpu.matmul %1286, %1315, %cst_508 {dimension_numbers = #tpu.dot_dimension_numbers<[1], [0], [0], [1], [0, 0, 1, 1], [], []>} : vector<16x32xf32>, vector<32x4xf32>, vector<16x4xf32> -> vector<16x4xf32>
    %1317 = arith.addf %1313, %1316 : vector<16x4xf32>
    %c7_509 = arith.constant 7 : index
    %c0_510 = arith.constant 0 : index
    %c0_511 = arith.constant 0 : index
    %1318 = vector.load %arg16[%c7_509, %c0_510, %c0_511] : memref<8x32x4xf32, #tpu.memory_space<vmem>>, vector<1x32x4xf32>
    %1319 = vector.shape_cast %1318 : vector<1x32x4xf32> to vector<32x4xf32>
    %cst_512 = arith.constant dense<0.000000e+00> : vector<16x4xf32>
    %1320 = tpu.matmul %1289, %1319, %cst_512 {dimension_numbers = #tpu.dot_dimension_numbers<[1], [0], [0], [1], [0, 0, 1, 1], [], []>} : vector<16x32xf32>, vector<32x4xf32>, vector<16x4xf32> -> vector<16x4xf32>
    %1321 = arith.addf %1317, %1320 : vector<16x4xf32>
    %cst_513 = arith.constant dense<0xFF800000> : vector<16xf32>
    %1322 = vector.multi_reduction <maximumf>, %1321, %cst_513 [1] : vector<16x4xf32> to vector<16xf32>
    %1323 = vector.shape_cast %1322 : vector<16xf32> to vector<16x1xf32>
    %1324 = vector.broadcast %1323 : vector<16x1xf32> to vector<16x4xf32>
    %1325 = arith.subf %1321, %1324 : vector<16x4xf32>
    %1326 = math.exp %1325 : vector<16x4xf32>
    %cst_514 = arith.constant dense<0.000000e+00> : vector<16xf32>
    %1327 = vector.multi_reduction <add>, %1326, %cst_514 [1] : vector<16x4xf32> to vector<16xf32>
    %1328 = vector.shape_cast %1327 : vector<16xf32> to vector<16x1xf32>
    %1329 = math.log %1328 : vector<16x1xf32>
    %1330 = vector.broadcast %1329 : vector<16x1xf32> to vector<16x4xf32>
    %1331 = arith.subf %1325, %1330 : vector<16x4xf32>
    %c0_515 = arith.constant 0 : index
    %c0_516 = arith.constant 0 : index
    %c0_517 = arith.constant 0 : index
    %1332 = vector.load %arg17[%c0_515, %c0_516, %c0_517] : memref<1x16x4xf32, #tpu.memory_space<vmem>>, vector<1x16x4xf32>
    %1333 = vector.shape_cast %1332 : vector<1x16x4xf32> to vector<16x4xf32>
    %1334 = vector.shape_cast %1331 : vector<16x4xf32> to vector<1x16x4xf32>
    tpu.vector_store %arg17[%c0_515, %c0_516, %c0_517], %1334 {strides = array<i32>} : memref<1x16x4xf32, #tpu.memory_space<vmem>>, vector<1x16x4xf32>,
    return
  }
  func.func @transform_0(%arg0: i32) -> (i32, i32, i32) {
    %c0_i32 = arith.constant 0 : i32
    %c0_i32_0 = arith.constant 0 : i32
    %c0_i32_1 = arith.constant 0 : i32
    return %arg0, %c0_i32, %c0_i32_0 : i32, i32, i32
  }
  func.func @transform_1(%arg0: i32) -> (i32, i32, i32) {
    %c0_i32 = arith.constant 0 : i32
    %c0_i32_0 = arith.constant 0 : i32
    %c0_i32_1 = arith.constant 0 : i32
    return %arg0, %c0_i32, %c0_i32_0 : i32, i32, i32
  }
  func.func @transform_2(%arg0: i32) -> (i32, i32) {
    %c0_i32 = arith.constant 0 : i32
    %c0_i32_0 = arith.constant 0 : i32
    %c0_i32_1 = arith.constant 0 : i32
    return %c0_i32, %c0_i32_0 : i32, i32
  }
  func.func @transform_3(%arg0: i32) -> (i32, i32, i32) {
    %c0_i32 = arith.constant 0 : i32
    %c0_i32_0 = arith.constant 0 : i32
    %c0_i32_1 = arith.constant 0 : i32
    %c0_i32_2 = arith.constant 0 : i32
    return %c0_i32, %c0_i32_0, %c0_i32_1 : i32, i32, i32
  }
  func.func @transform_4(%arg0: i32) -> (i32, i32) {
    %c0_i32 = arith.constant 0 : i32
    %c0_i32_0 = arith.constant 0 : i32
    %c0_i32_1 = arith.constant 0 : i32
    return %c0_i32, %c0_i32_0 : i32, i32
  }
  func.func @transform_5(%arg0: i32) -> (i32, i32, i32) {
    %c0_i32 = arith.constant 0 : i32
    %c0_i32_0 = arith.constant 0 : i32
    %c0_i32_1 = arith.constant 0 : i32
    %c0_i32_2 = arith.constant 0 : i32
    return %c0_i32, %c0_i32_0, %c0_i32_1 : i32, i32, i32
  }
  func.func @transform_6(%arg0: i32) -> (i32, i32) {
    %c0_i32 = arith.constant 0 : i32
    %c0_i32_0 = arith.constant 0 : i32
    %c0_i32_1 = arith.constant 0 : i32
    return %c0_i32, %c0_i32_0 : i32, i32
  }
  func.func @transform_7(%arg0: i32) -> (i32, i32) {
    %c0_i32 = arith.constant 0 : i32
    %c0_i32_0 = arith.constant 0 : i32
    %c0_i32_1 = arith.constant 0 : i32
    return %c0_i32, %c0_i32_0 : i32, i32
  }
  func.func @transform_8(%arg0: i32) -> (i32, i32, i32) {
    %c0_i32 = arith.constant 0 : i32
    %c0_i32_0 = arith.constant 0 : i32
    %c0_i32_1 = arith.constant 0 : i32
    %c0_i32_2 = arith.constant 0 : i32
    return %c0_i32, %c0_i32_0, %c0_i32_1 : i32, i32, i32
  }
  func.func @transform_9(%arg0: i32) -> (i32, i32) {
    %c0_i32 = arith.constant 0 : i32
    %c0_i32_0 = arith.constant 0 : i32
    %c0_i32_1 = arith.constant 0 : i32
    return %c0_i32, %c0_i32_0 : i32, i32
  }
  func.func @transform_10(%arg0: i32) -> (i32, i32, i32) {
    %c0_i32 = arith.constant 0 : i32
    %c0_i32_0 = arith.constant 0 : i32
    %c0_i32_1 = arith.constant 0 : i32
    %c0_i32_2 = arith.constant 0 : i32
    return %c0_i32, %c0_i32_0, %c0_i32_1 : i32, i32, i32
  }
  func.func @transform_11(%arg0: i32) -> (i32, i32) {
    %c0_i32 = arith.constant 0 : i32
    %c0_i32_0 = arith.constant 0 : i32
    %c0_i32_1 = arith.constant 0 : i32
    return %c0_i32, %c0_i32_0 : i32, i32
  }
  func.func @transform_12(%arg0: i32) -> (i32, i32) {
    %c0_i32 = arith.constant 0 : i32
    %c0_i32_0 = arith.constant 0 : i32
    %c0_i32_1 = arith.constant 0 : i32
    return %c0_i32, %c0_i32_0 : i32, i32
  }
  func.func @transform_13(%arg0: i32) -> (i32, i32, i32) {
    %c0_i32 = arith.constant 0 : i32
    %c0_i32_0 = arith.constant 0 : i32
    %c0_i32_1 = arith.constant 0 : i32
    %c0_i32_2 = arith.constant 0 : i32
    return %c0_i32, %c0_i32_0, %c0_i32_1 : i32, i32, i32
  }
  func.func @transform_14(%arg0: i32) -> (i32, i32) {
    %c0_i32 = arith.constant 0 : i32
    %c0_i32_0 = arith.constant 0 : i32
    %c0_i32_1 = arith.constant 0 : i32
    return %c0_i32, %c0_i32_0 : i32, i32
  }
  func.func @transform_15(%arg0: i32) -> (i32, i32, i32) {
    %c0_i32 = arith.constant 0 : i32
    %c0_i32_0 = arith.constant 0 : i32
    %c0_i32_1 = arith.constant 0 : i32
    %c0_i32_2 = arith.constant 0 : i32
    return %c0_i32, %c0_i32_0, %c0_i32_1 : i32, i32, i32
  }
  func.func @transform_16(%arg0: i32) -> (i32, i32, i32) {
    %c0_i32 = arith.constant 0 : i32
    %c0_i32_0 = arith.constant 0 : i32
    %c0_i32_1 = arith.constant 0 : i32
    return %arg0, %c0_i32, %c0_i32_0 : i32, i32, i32
  }
}

</mosaic_0001>

<llo_original>
// kernel: kagin_forward.1
$region0: #{kagin_forward.1}
  #allocation0 [shape = 'u32[]', space=smem, size = 0x4, offset = 0x4, fixed_abs, tag = 'smem constant byte address 0x4 - core index']
  #allocation1 [shape = 'u32[144,128]{1,0:T(1,128)}', space=vmem, size = 0x12000, scoped, tag = 'internal scratch']
  %s0 = inlined_call_operand.vmem [shape: f32[2,16,16], index: 0, kind: input, shape index: {}]
  %s1 = inlined_call_operand.vmem [shape: f32[2,16,8], index: 1, kind: input, shape index: {}]
  %s2 = inlined_call_operand.hbm [shape: f32[8,32], index: 2, kind: input, shape index: {}]
  %s3 = inlined_call_operand.vmem [shape: f32[8,8,32], index: 3, kind: input, shape index: {}]
  %s4 = inlined_call_operand.hbm [shape: f32[32,32], index: 4, kind: input, shape index: {}]
  %s5 = inlined_call_operand.vmem [shape: f32[8,32,32], index: 5, kind: input, shape index: {}]
  %s6 = inlined_call_operand.vmem [shape: f32[1,32], index: 6, kind: input, shape index: {}]
  %s7 = inlined_call_operand.hbm [shape: f32[32,32], index: 7, kind: input, shape index: {}]
  %s8 = inlined_call_operand.hbm [shape: f32[8,32,32], index: 8, kind: input, shape index: {}]
  %s9 = inlined_call_operand.hbm [shape: f32[32,32], index: 9, kind: input, shape index: {}]
  %s10 = inlined_call_operand.hbm [shape: f32[8,32,32], index: 10, kind: input, shape index: {}]
  %s11 = inlined_call_operand.hbm [shape: f32[1,32], index: 11, kind: input, shape index: {}]
  %s12 = inlined_call_operand.vmem [shape: f32[32,32], index: 12, kind: input, shape index: {}]
  %s13 = inlined_call_operand.hbm [shape: f32[8,32,32], index: 13, kind: input, shape index: {}]
  %s14 = inlined_call_operand.vmem [shape: f32[32,4], index: 14, kind: input, shape index: {}]
  %s15 = inlined_call_operand.vmem [shape: f32[8,32,4], index: 15, kind: input, shape index: {}]
  %s16 = inlined_call_operand.vmem [shape: f32[2,16,4], index: 16, kind: output, shape index: {}]
  %s17 = sld [smem:[#allocation0]]
  $region129: #{kagin_forward.1} parent=0
    _
  %s19 = ssub.s32 1, %s17
  %s20 = scalar_select 0, %s19, %s17
  $region1: #{kagin_forward.1} parent=0
    #allocation2 [shape = 'u8[4096]{0}', space=vmem, size = 0x1000, scoped, tag = 'input window, operand 2, single buffered']
    #allocation3 [shape = 's32[2]{0}', space=sflag, size = 0x8, scoped, tag = 'scoped memory for kagin_forward.1']
    #allocation4 [shape = 'u8[16384]{0}', space=vmem, size = 0x4000, scoped, tag = 'input window, operand 4, single buffered']
    #allocation5 [shape = 's32[1]{0}', space=sflag, size = 0x4, scoped, tag = 'scoped memory for kagin_forward.1']
    #allocation6 [shape = 'u8[16384]{0}', space=vmem, size = 0x4000, scoped, tag = 'input window, operand 7, single buffered']
    #allocation7 [shape = 'u8[131072]{0}', space=vmem, size = 0x20000, scoped, tag = 'input window, operand 8, single buffered']
    #allocation8 [shape = 's32[1]{0}', space=sflag, size = 0x4, scoped, tag = 'scoped memory for kagin_forward.1']
    #allocation9 [shape = 'u8[16384]{0}', space=vmem, size = 0x4000, scoped, tag = 'input window, operand 9, single buffered']
    #allocation10 [shape = 'u8[131072]{0}', space=vmem, size = 0x20000, scoped, tag = 'input window, operand 10, single buffered']
    #allocation11 [shape = 's32[1]{0}', space=sflag, size = 0x4, scoped, tag = 'scoped memory for kagin_forward.1']
    #allocation12 [shape = 'u8[512]{0}', space=vmem, size = 0x400, scoped, tag = 'input window, operand 11, single buffered']
    #allocation13 [shape = 'u8[131072]{0}', space=vmem, size = 0x20000, scoped, tag = 'input window, operand 13, single buffered']
    #allocation14 [shape = 's32[1]{0}', space=sflag, size = 0x4, scoped, tag = 'scoped memory for kagin_forward.1']
    %21 = vsyncpa [#allocation3], 0
    %22 = vsyncpa [#allocation5], 0
    %23 = vsyncpa [#allocation8], 0
    %24 = vsyncpa [#allocation11], 0
    %25 = vsyncpa [#allocation14], 0
    loop: start=0, step=1, limit=4
    $region2: #{kagin_forward.1} parent=1 // loop_pre_header
      _
    $region3: #{kagin_forward.1} parent=1 // loop_header
      %s27 = sphi 0, %s31
      %p28 = scmp.ge.s32.totalorder %s27, 4
      %s37 = sphi 0, %s39
      %s40 = sphi 0, %s37
      %s41 = sphi 0, %s40
      %s57 = sphi 0, %s41
      %s63 = sphi 0, %s65
      %s66 = sphi 0, %s63
      %s67 = sphi 0, %s66
      %s83 = sphi 0, %s67
      %s87 = sphi 0, %s87
      %s89 = sphi 0, %s87
      %s90 = sphi 0, %s89
      %s104 = sphi 0, %s90
      %s108 = sphi 0, %s108
      %s110 = sphi 0, %s108
      %s111 = sphi 0, %s110
      %s125 = sphi 0, %s111
      %s129 = sphi 0, %s129
      %s131 = sphi 0, %s129
      %s132 = sphi 0, %s131
      %s146 = sphi 0, %s132
      %s150 = sphi 0, %s150
      %s152 = sphi 0, %s150
      %s153 = sphi 0, %s152
      %s167 = sphi 0, %s153
      %s171 = sphi 0, %s171
      %s173 = sphi 0, %s171
      %s174 = sphi 0, %s173
      %s188 = sphi 0, %s174
      %s192 = sphi 0, %s192
      %s194 = sphi 0, %s192
      %s195 = sphi 0, %s194
      %s209 = sphi 0, %s195
      %s213 = sphi 0, %s213
      %s215 = sphi 0, %s213
      %s216 = sphi 0, %s215
      %s230 = sphi 0, %s216
      %s234 = sphi 0, %s234
      %s236 = sphi 0, %s234
      %s237 = sphi 0, %s236
      %s251 = sphi 0, %s237
      %s255 = sphi 0, %s255
      %s257 = sphi 0, %s255
      %s258 = sphi 0, %s257
      %s272 = sphi 0, %s258
      %s276 = sphi 0, %s276
      %s278 = sphi 0, %s276
      %s279 = sphi 0, %s278
      %s293 = sphi 0, %s279
      %s297 = sphi 0, %s297
      %s299 = sphi 0, %s297
      %s300 = sphi 0, %s299
      %s314 = sphi 0, %s300
      %s318 = sphi 0, %s318
      %s320 = sphi 0, %s318
      %s321 = sphi 0, %s320
      %s335 = sphi 0, %s321
      %s339 = sphi 0, %s339
      %s341 = sphi 0, %s339
      %s342 = sphi 0, %s341
      %s356 = sphi 0, %s342
      %s360 = sphi 0, %s360
      %s362 = sphi 0, %s360
      %s363 = sphi 0, %s362
      %s377 = sphi 0, %s363
      %s383 = sphi 0, %s385
      %s386 = sphi 0, %s383
      %s387 = sphi 0, %s386
      %s403 = sphi 0, %s387
    $region4: #{kagin_forward.1} parent=1 // loop_header_branch
      %30 = sbr.rel (%p28) target = $region8
    $region5: #{kagin_forward.1} parent=1 // loop_body
      %s32 = ssub.s32 %s27, 1
      %s33 = ssub.s32 %s27, 2
      %s34 = sadd.s32 %s27, 1
      %s35 = ssub.s32 %s27, %s34
      %p36 = scmp.eq.s32.totalorder %s35, 0
      %s38 = sadd.s32 %s37, 1
      %s39 = scalar_select %p36, %s37, %s38
      %p42 = pneg %p36
      %p43 = scmp.eq.s32.totalorder %s27, 1
      %p44 = por %p42, %p43
      %p45 = scmp.ne.s32.totalorder %s37, %s40
      %p46 = scmp.eq.s32.totalorder %s27, 0
      %p47 = por %p45, %p46
      %p48 = scmp.ne.s32.totalorder %s37, %s40
      %p49 = scmp.eq.s32.totalorder %s32, 1
      %p50 = por %p48, %p49
      %p51 = scmp.ne.s32.totalorder %s40, %s41
      %p52 = scmp.eq.s32.totalorder %s32, 0
      %p53 = por %p51, %p52
      %p54 = scmp.ne.s32.totalorder %s40, %s41
      %p55 = scmp.eq.s32.totalorder %s33, 1
      %p56 = por %p54, %p55
      %p58 = scmp.ne.s32.totalorder %s41, %s57
      %p59 = scmp.eq.s32.totalorder %s33, 0
      %p60 = por %p58, %p59
      %s61 = ssub.s32 %s27, %s34
      %p62 = scmp.eq.s32.totalorder %s61, 0
      %s64 = sadd.s32 %s63, 1
      %s65 = scalar_select %p62, %s63, %s64
      %p68 = pneg %p62
      %p69 = scmp.eq.s32.totalorder %s27, 1
      %p70 = por %p68, %p69
      %p71 = scmp.ne.s32.totalorder %s63, %s66
      %p72 = scmp.eq.s32.totalorder %s27, 0
      %p73 = por %p71, %p72
      %p74 = scmp.ne.s32.totalorder %s63, %s66
      %p75 = scmp.eq.s32.totalorder %s32, 1
      %p76 = por %p74, %p75
      %p77 = scmp.ne.s32.totalorder %s66, %s67
      %p78 = scmp.eq.s32.totalorder %s32, 0
      %p79 = por %p77, %p78
      %p80 = scmp.ne.s32.totalorder %s66, %s67
      %p81 = scmp.eq.s32.totalorder %s33, 1
      %p82 = por %p80, %p81
      %p84 = scmp.ne.s32.totalorder %s67, %s83
      %p85 = scmp.eq.s32.totalorder %s33, 0
      %p86 = por %p84, %p85
      %s88 = sadd.s32 %s87, 1
      %p91 = scmp.eq.s32.totalorder %s27, 1
      %p92 = scmp.ne.s32.totalorder %s87, %s89
      %p93 = scmp.eq.s32.totalorder %s27, 0
      %p94 = por %p92, %p93
      %p95 = scmp.ne.s32.totalorder %s87, %s89
      %p96 = scmp.eq.s32.totalorder %s32, 1
      %p97 = por %p95, %p96
      %p98 = scmp.ne.s32.totalorder %s89, %s90
      %p99 = scmp.eq.s32.totalorder %s32, 0
      %p100 = por %p98, %p99
      %p101 = scmp.ne.s32.totalorder %s89, %s90
      %p102 = scmp.eq.s32.totalorder %s33, 1
      %p103 = por %p101, %p102
      %p105 = scmp.ne.s32.totalorder %s90, %s104
      %p106 = scmp.eq.s32.totalorder %s33, 0
      %p107 = por %p105, %p106
      %s109 = sadd.s32 %s108, 1
      %p112 = scmp.eq.s32.totalorder %s27, 1
      %p113 = scmp.ne.s32.totalorder %s108, %s110
      %p114 = scmp.eq.s32.totalorder %s27, 0
      %p115 = por %p113, %p114
      %p116 = scmp.ne.s32.totalorder %s108, %s110
      %p117 = scmp.eq.s32.totalorder %s32, 1
      %p118 = por %p116, %p117
      %p119 = scmp.ne.s32.totalorder %s110, %s111
      %p120 = scmp.eq.s32.totalorder %s32, 0
      %p121 = por %p119, %p120
      %p122 = scmp.ne.s32.totalorder %s110, %s111
      %p123 = scmp.eq.s32.totalorder %s33, 1
      %p124 = por %p122, %p123
      %p126 = scmp.ne.s32.totalorder %s111, %s125
      %p127 = scmp.eq.s32.totalorder %s33, 0
      %p128 = por %p126, %p127
      %s130 = sadd.s32 %s129, 1
      %p133 = scmp.eq.s32.totalorder %s27, 1
      %p134 = scmp.ne.s32.totalorder %s129, %s131
      %p135 = scmp.eq.s32.totalorder %s27, 0
      %p136 = por %p134, %p135
      %p137 = scmp.ne.s32.totalorder %s129, %s131
      %p138 = scmp.eq.s32.totalorder %s32, 1
      %p139 = por %p137, %p138
      %p140 = scmp.ne.s32.totalorder %s131, %s132
      %p141 = scmp.eq.s32.totalorder %s32, 0
      %p142 = por %p140, %p141
      %p143 = scmp.ne.s32.totalorder %s131, %s132
      %p144 = scmp.eq.s32.totalorder %s33, 1
      %p145 = por %p143, %p144
      %p147 = scmp.ne.s32.totalorder %s132, %s146
      %p148 = scmp.eq.s32.totalorder %s33, 0
      %p149 = por %p147, %p148
      %s151 = sadd.s32 %s150, 1
      %p154 = scmp.eq.s32.totalorder %s27, 1
      %p155 = scmp.ne.s32.totalorder %s150, %s152
      %p156 = scmp.eq.s32.totalorder %s27, 0
      %p157 = por %p155, %p156
      %p158 = scmp.ne.s32.totalorder %s150, %s152
      %p159 = scmp.eq.s32.totalorder %s32, 1
      %p160 = por %p158, %p159
      %p161 = scmp.ne.s32.totalorder %s152, %s153
      %p162 = scmp.eq.s32.totalorder %s32, 0
      %p163 = por %p161, %p162
      %p164 = scmp.ne.s32.totalorder %s152, %s153
      %p165 = scmp.eq.s32.totalorder %s33, 1
      %p166 = por %p164, %p165
      %p168 = scmp.ne.s32.totalorder %s153, %s167
      %p169 = scmp.eq.s32.totalorder %s33, 0
      %p170 = por %p168, %p169
      %s172 = sadd.s32 %s171, 1
      %p175 = scmp.eq.s32.totalorder %s27, 1
      %p176 = scmp.ne.s32.totalorder %s171, %s173
      %p177 = scmp.eq.s32.totalorder %s27, 0
      %p178 = por %p176, %p177
      %p179 = scmp.ne.s32.totalorder %s171, %s173
      %p180 = scmp.eq.s32.totalorder %s32, 1
      %p181 = por %p179, %p180
      %p182 = scmp.ne.s32.totalorder %s173, %s174
      %p183 = scmp.eq.s32.totalorder %s32, 0
      %p184 = por %p182, %p183
      %p185 = scmp.ne.s32.totalorder %s173, %s174
      %p186 = scmp.eq.s32.totalorder %s33, 1
      %p187 = por %p185, %p186
      %p189 = scmp.ne.s32.totalorder %s174, %s188
      %p190 = scmp.eq.s32.totalorder %s33, 0
      %p191 = por %p189, %p190
      %s193 = sadd.s32 %s192, 1
      %p196 = scmp.eq.s32.totalorder %s27, 1
      %p197 = scmp.ne.s32.totalorder %s192, %s194
      %p198 = scmp.eq.s32.totalorder %s27, 0
      %p199 = por %p197, %p198
      %p200 = scmp.ne.s32.totalorder %s192, %s194
      %p201 = scmp.eq.s32.totalorder %s32, 1
      %p202 = por %p200, %p201
      %p203 = scmp.ne.s32.totalorder %s194, %s195
      %p204 = scmp.eq.s32.totalorder %s32, 0
      %p205 = por %p203, %p204
      %p206 = scmp.ne.s32.totalorder %s194, %s195
      %p207 = scmp.eq.s32.totalorder %s33, 1
      %p208 = por %p206, %p207
      %p210 = scmp.ne.s32.totalorder %s195, %s209
      %p211 = scmp.eq.s32.totalorder %s33, 0
      %p212 = por %p210, %p211
      %s214 = sadd.s32 %s213, 1
      %p217 = scmp.eq.s32.totalorder %s27, 1
      %p218 = scmp.ne.s32.totalorder %s213, %s215
      %p219 = scmp.eq.s32.totalorder %s27, 0
      %p220 = por %p218, %p219
      %p221 = scmp.ne.s32.totalorder %s213, %s215
      %p222 = scmp.eq.s32.totalorder %s32, 1
      %p223 = por %p221, %p222
      %p224 = scmp.ne.s32.totalorder %s215, %s216
      %p225 = scmp.eq.s32.totalorder %s32, 0
      %p226 = por %p224, %p225
      %p227 = scmp.ne.s32.totalorder %s215, %s216
      %p228 = scmp.eq.s32.totalorder %s33, 1
      %p229 = por %p227, %p228
      %p231 = scmp.ne.s32.totalorder %s216, %s230
      %p232 = scmp.eq.s32.totalorder %s33, 0
      %p233 = por %p231, %p232
      %s235 = sadd.s32 %s234, 1
      %p238 = scmp.eq.s32.totalorder %s27, 1
      %p239 = scmp.ne.s32.totalorder %s234, %s236
      %p240 = scmp.eq.s32.totalorder %s27, 0
      %p241 = por %p239, %p240
      %p242 = scmp.ne.s32.totalorder %s234, %s236
      %p243 = scmp.eq.s32.totalorder %s32, 1
      %p244 = por %p242, %p243
      %p245 = scmp.ne.s32.totalorder %s236, %s237
      %p246 = scmp.eq.s32.totalorder %s32, 0
      %p247 = por %p245, %p246
      %p248 = scmp.ne.s32.totalorder %s236, %s237
      %p249 = scmp.eq.s32.totalorder %s33, 1
      %p250 = por %p248, %p249
      %p252 = scmp.ne.s32.totalorder %s237, %s251
      %p253 = scmp.eq.s32.totalorder %s33, 0
      %p254 = por %p252, %p253
      %s256 = sadd.s32 %s255, 1
      %p259 = scmp.eq.s32.totalorder %s27, 1
      %p260 = scmp.ne.s32.totalorder %s255, %s257
      %p261 = scmp.eq.s32.totalorder %s27, 0
      %p262 = por %p260, %p261
      %p263 = scmp.ne.s32.totalorder %s255, %s257
      %p264 = scmp.eq.s32.totalorder %s32, 1
      %p265 = por %p263, %p264
      %p266 = scmp.ne.s32.totalorder %s257, %s258
      %p267 = scmp.eq.s32.totalorder %s32, 0
      %p268 = por %p266, %p267
      %p269 = scmp.ne.s32.totalorder %s257, %s258
      %p270 = scmp.eq.s32.totalorder %s33, 1
      %p271 = por %p269, %p270
      %p273 = scmp.ne.s32.totalorder %s258, %s272
      %p274 = scmp.eq.s32.totalorder %s33, 0
      %p275 = por %p273, %p274
      %s277 = sadd.s32 %s276, 1
      %p280 = scmp.eq.s32.totalorder %s27, 1
      %p281 = scmp.ne.s32.totalorder %s276, %s278
      %p282 = scmp.eq.s32.totalorder %s27, 0
      %p283 = por %p281, %p282
      %p284 = scmp.ne.s32.totalorder %s276, %s278
      %p285 = scmp.eq.s32.totalorder %s32, 1
      %p286 = por %p284, %p285
      %p287 = scmp.ne.s32.totalorder %s278, %s279
      %p288 = scmp.eq.s32.totalorder %s32, 0
      %p289 = por %p287, %p288
      %p290 = scmp.ne.s32.totalorder %s278, %s279
      %p291 = scmp.eq.s32.totalorder %s33, 1
      %p292 = por %p290, %p291
      %p294 = scmp.ne.s32.totalorder %s279, %s293
      %p295 = scmp.eq.s32.totalorder %s33, 0
      %p296 = por %p294, %p295
      %s298 = sadd.s32 %s297, 1
      %p301 = scmp.eq.s32.totalorder %s27, 1
      %p302 = scmp.ne.s32.totalorder %s297, %s299
      %p303 = scmp.eq.s32.totalorder %s27, 0
      %p304 = por %p302, %p303
      %p305 = scmp.ne.s32.totalorder %s297, %s299
      %p306 = scmp.eq.s32.totalorder %s32, 1
      %p307 = por %p305, %p306
      %p308 = scmp.ne.s32.totalorder %s299, %s300
      %p309 = scmp.eq.s32.totalorder %s32, 0
      %p310 = por %p308, %p309
      %p311 = scmp.ne.s32.totalorder %s299, %s300
      %p312 = scmp.eq.s32.totalorder %s33, 1
      %p313 = por %p311, %p312
      %p315 = scmp.ne.s32.totalorder %s300, %s314
      %p316 = scmp.eq.s32.totalorder %s33, 0
      %p317 = por %p315, %p316
      %s319 = sadd.s32 %s318, 1
      %p322 = scmp.eq.s32.totalorder %s27, 1
      %p323 = scmp.ne.s32.totalorder %s318, %s320
      %p324 = scmp.eq.s32.totalorder %s27, 0
      %p325 = por %p323, %p324
      %p326 = scmp.ne.s32.totalorder %s318, %s320
      %p327 = scmp.eq.s32.totalorder %s32, 1
      %p328 = por %p326, %p327
      %p329 = scmp.ne.s32.totalorder %s320, %s321
      %p330 = scmp.eq.s32.totalorder %s32, 0
      %p331 = por %p329, %p330
      %p332 = scmp.ne.s32.totalorder %s320, %s321
      %p333 = scmp.eq.s32.totalorder %s33, 1
      %p334 = por %p332, %p333
      %p336 = scmp.ne.s32.totalorder %s321, %s335
      %p337 = scmp.eq.s32.totalorder %s33, 0
      %p338 = por %p336, %p337
      %s340 = sadd.s32 %s339, 1
      %p343 = scmp.eq.s32.totalorder %s27, 1
      %p344 = scmp.ne.s32.totalorder %s339, %s341
      %p345 = scmp.eq.s32.totalorder %s27, 0
      %p346 = por %p344, %p345
      %p347 = scmp.ne.s32.totalorder %s339, %s341
      %p348 = scmp.eq.s32.totalorder %s32, 1
      %p349 = por %p347, %p348
      %p350 = scmp.ne.s32.totalorder %s341, %s342
      %p351 = scmp.eq.s32.totalorder %s32, 0
      %p352 = por %p350, %p351
      %p353 = scmp.ne.s32.totalorder %s341, %s342
      %p354 = scmp.eq.s32.totalorder %s33, 1
      %p355 = por %p353, %p354
      %p357 = scmp.ne.s32.totalorder %s342, %s356
      %p358 = scmp.eq.s32.totalorder %s33, 0
      %p359 = por %p357, %p358
      %s361 = sadd.s32 %s360, 1
      %p364 = scmp.eq.s32.totalorder %s27, 1
      %p365 = scmp.ne.s32.totalorder %s360, %s362
      %p366 = scmp.eq.s32.totalorder %s27, 0
      %p367 = por %p365, %p366
      %p368 = scmp.ne.s32.totalorder %s360, %s362
      %p369 = scmp.eq.s32.totalorder %s32, 1
      %p370 = por %p368, %p369
      %p371 = scmp.ne.s32.totalorder %s362, %s363
      %p372 = scmp.eq.s32.totalorder %s32, 0
      %p373 = por %p371, %p372
      %p374 = scmp.ne.s32.totalorder %s362, %s363
      %p375 = scmp.eq.s32.totalorder %s33, 1
      %p376 = por %p374, %p375
      %p378 = scmp.ne.s32.totalorder %s363, %s377
      %p379 = scmp.eq.s32.totalorder %s33, 0
      %p380 = por %p378, %p379
      %s381 = ssub.s32 %s27, %s34
      %p382 = scmp.eq.s32.totalorder %s381, 0
      %s384 = sadd.s32 %s383, 1
      %s385 = scalar_select %p382, %s383, %s384
      %p388 = pneg %p382
      %p389 = scmp.eq.s32.totalorder %s27, 1
      %p390 = por %p388, %p389
      %p391 = scmp.ne.s32.totalorder %s383, %s386
      %p392 = scmp.eq.s32.totalorder %s27, 0
      %p393 = por %p391, %p392
      %p394 = scmp.ne.s32.totalorder %s383, %s386
      %p395 = scmp.eq.s32.totalorder %s32, 1
      %p396 = por %p394, %p395
      %p397 = scmp.ne.s32.totalorder %s386, %s387
      %p398 = scmp.eq.s32.totalorder %s32, 0
      %p399 = por %p397, %p398
      %p400 = scmp.ne.s32.totalorder %s386, %s387
      %p401 = scmp.eq.s32.totalorder %s33, 1
      %p402 = por %p400, %p401
      %p404 = scmp.ne.s32.totalorder %s387, %s403
      %p405 = scmp.eq.s32.totalorder %s33, 0
      %p406 = por %p404, %p405
      %p407 = scmp.le.s32.totalorder 1, %s27
      %p408 = scmp.lt.s32.totalorder %s27, 3
      %p409 = pnand %p407, %p408
      %p410 = pneg %p409
      // Predicated region
      $region9: #{kagin_forward.1} parent=5 // pred_check
        _
      $region10: #{kagin_forward.1} parent=5 // pred_check_branch
        %412 = sbr.rel (%p409) target = $region12
      $region11: #{kagin_forward.1} parent=5 // pred_region
        %s413 = ssub.s32 %s27, 1
        // Predicated region
        $region13: #{kagin_forward.1} parent=11 // pred_check
          %p414 = pneg %p100
        $region14: #{kagin_forward.1} parent=11 // pred_check_branch
          %416 = sbr.rel (%p414) target = $region16
        $region15: #{kagin_forward.1} parent=11 // pred_region
          %s418 = ssub.s32 128, 128
          %419 = vsyncadd [#allocation3], %s418
          %s421 = sshll.u32 [#allocation2], 4
          %s422 = int_to_ptr.vmem [resolvable:$true] %s421
          %424 = dma.hbm_to_vmem [thread:$0]  %s2, 128, %s422, [#allocation3]
        $region16: #{kagin_forward.1} parent=11 // pred_fallthru
          _
        // Predicated region
        $region17: #{kagin_forward.1} parent=11 // pred_check
          %p425 = pneg %p121
        $region18: #{kagin_forward.1} parent=11 // pred_check_branch
          %427 = sbr.rel (%p425) target = $region20
        $region19: #{kagin_forward.1} parent=11 // pred_region
          _
        $region20: #{kagin_forward.1} parent=11 // pred_fallthru
          _
        // Predicated region
        $region21: #{kagin_forward.1} parent=11 // pred_check
          %p428 = pneg %p142
        $region22: #{kagin_forward.1} parent=11 // pred_check_branch
          %430 = sbr.rel (%p428) target = $region24
        $region23: #{kagin_forward.1} parent=11 // pred_region
          %s432 = ssub.s32 512, 512
          %433 = vsyncadd [#allocation5], %s432
          %s434 = sshll.u32 [#allocation4], 4
          %s435 = int_to_ptr.vmem [resolvable:$true] %s434
          %440 = dma.hbm_to_vmem [thread:$0]  %s4, 512, %s435, [#allocation5], 128, 128, 8
        $region24: #{kagin_forward.1} parent=11 // pred_fallthru
          _
        // Predicated region
        $region25: #{kagin_forward.1} parent=11 // pred_check
          %p441 = pneg %p163
        $region26: #{kagin_forward.1} parent=11 // pred_check_branch
          %443 = sbr.rel (%p441) target = $region28
        $region27: #{kagin_forward.1} parent=11 // pred_region
          _
        $region28: #{kagin_forward.1} parent=11 // pred_fallthru
          _
        // Predicated region
        $region29: #{kagin_forward.1} parent=11 // pred_check
          %p444 = pneg %p184
        $region30: #{kagin_forward.1} parent=11 // pred_check_branch
          %446 = sbr.rel (%p444) target = $region32
        $region31: #{kagin_forward.1} parent=11 // pred_region
          _
        $region32: #{kagin_forward.1} parent=11 // pred_fallthru
          _
        // Predicated region
        $region33: #{kagin_forward.1} parent=11 // pred_check
          %p447 = pneg %p205
        $region34: #{kagin_forward.1} parent=11 // pred_check_branch
          %449 = sbr.rel (%p447) target = $region36
        $region35: #{kagin_forward.1} parent=11 // pred_region
          %s451 = ssub.s32 512, 512
          %452 = vsyncadd [#allocation5], %s451
          %s453 = sshll.u32 [#allocation6], 4
          %s454 = int_to_ptr.vmem [resolvable:$true] %s453
          %459 = dma.hbm_to_vmem [thread:$0]  %s7, 512, %s454, [#allocation5], 128, 128, 8
        $region36: #{kagin_forward.1} parent=11 // pred_fallthru
          _
        // Predicated region
        $region37: #{kagin_forward.1} parent=11 // pred_check
          %p460 = pneg %p226
        $region38: #{kagin_forward.1} parent=11 // pred_check_branch
          %462 = sbr.rel (%p460) target = $region40
        $region39: #{kagin_forward.1} parent=11 // pred_region
          %s464 = ssub.s32 4096, 4096
          %465 = vsyncadd [#allocation8], %s464
          %s466 = sshll.u32 [#allocation7], 4
          %s467 = int_to_ptr.vmem [resolvable:$true] %s466
          %472 = dma.hbm_to_vmem [thread:$0]  %s8, 4096, %s467, [#allocation8], 128, 128, 8
        $region40: #{kagin_forward.1} parent=11 // pred_fallthru
          _
        // Predicated region
        $region41: #{kagin_forward.1} parent=11 // pred_check
          %p473 = pneg %p247
        $region42: #{kagin_forward.1} parent=11 // pred_check_branch
          %475 = sbr.rel (%p473) target = $region44
        $region43: #{kagin_forward.1} parent=11 // pred_region
          %s477 = ssub.s32 512, 512
          %478 = vsyncadd [#allocation8], %s477
          %s479 = sshll.u32 [#allocation9], 4
          %s480 = int_to_ptr.vmem [resolvable:$true] %s479
          %485 = dma.hbm_to_vmem [thread:$0]  %s9, 512, %s480, [#allocation8], 128, 128, 8
        $region44: #{kagin_forward.1} parent=11 // pred_fallthru
          _
        // Predicated region
        $region45: #{kagin_forward.1} parent=11 // pred_check
          %p486 = pneg %p268
        $region46: #{kagin_forward.1} parent=11 // pred_check_branch
          %488 = sbr.rel (%p486) target = $region48
        $region47: #{kagin_forward.1} parent=11 // pred_region
          %s490 = ssub.s32 4096, 4096
          %491 = vsyncadd [#allocation11], %s490
          %s492 = sshll.u32 [#allocation10], 4
          %s493 = int_to_ptr.vmem [resolvable:$true] %s492
          %498 = dma.hbm_to_vmem [thread:$0]  %s10, 4096, %s493, [#allocation11], 128, 128, 8
        $region48: #{kagin_forward.1} parent=11 // pred_fallthru
          _
        // Predicated region
        $region49: #{kagin_forward.1} parent=11 // pred_check
          %p499 = pneg %p289
        $region50: #{kagin_forward.1} parent=11 // pred_check_branch
          %501 = sbr.rel (%p499) target = $region52
        $region51: #{kagin_forward.1} parent=11 // pred_region
          %s503 = ssub.s32 16, 16
          %504 = vsyncadd [#allocation11], %s503
          %s506 = sshll.u32 [#allocation12], 4
          %s507 = int_to_ptr.vmem [resolvable:$true] %s506
          %509 = dma.hbm_to_vmem [thread:$0]  %s11, 16, %s507, [#allocation11]
        $region52: #{kagin_forward.1} parent=11 // pred_fallthru
          _
        // Predicated region
        $region53: #{kagin_forward.1} parent=11 // pred_check
          %p510 = pneg %p310
        $region54: #{kagin_forward.1} parent=11 // pred_check_branch
          %512 = sbr.rel (%p510) target = $region56
        $region55: #{kagin_forward.1} parent=11 // pred_region
          _
        $region56: #{kagin_forward.1} parent=11 // pred_fallthru
          _
        // Predicated region
        $region57: #{kagin_forward.1} parent=11 // pred_check
          %p513 = pneg %p331
        $region58: #{kagin_forward.1} parent=11 // pred_check_branch
          %515 = sbr.rel (%p513) target = $region60
        $region59: #{kagin_forward.1} parent=11 // pred_region
          %s517 = ssub.s32 4096, 4096
          %518 = vsyncadd [#allocation14], %s517
          %s519 = sshll.u32 [#allocation13], 4
          %s520 = int_to_ptr.vmem [resolvable:$true] %s519
          %525 = dma.hbm_to_vmem [thread:$0]  %s13, 4096, %s520, [#allocation14], 128, 128, 8
        $region60: #{kagin_forward.1} parent=11 // pred_fallthru
          _
        // Predicated region
        $region61: #{kagin_forward.1} parent=11 // pred_check
          %p526 = pneg %p352
        $region62: #{kagin_forward.1} parent=11 // pred_check_branch
          %528 = sbr.rel (%p526) target = $region64
        $region63: #{kagin_forward.1} parent=11 // pred_region
          _
        $region64: #{kagin_forward.1} parent=11 // pred_fallthru
          _
        // Predicated region
        $region65: #{kagin_forward.1} parent=11 // pred_check
          %p529 = pneg %p373
        $region66: #{kagin_forward.1} parent=11 // pred_check_branch
          %531 = sbr.rel (%p529) target = $region68
        $region67: #{kagin_forward.1} parent=11 // pred_region
          _
        $region68: #{kagin_forward.1} parent=11 // pred_fallthru
          _
      $region12: #{kagin_forward.1} parent=5 // pred_fallthru
        _
      %p532 = scmp.lt.s32.totalorder %s27, 2
      // Predicated region
      $region69: #{kagin_forward.1} parent=5 // pred_check
        %p533 = pneg %p532
      $region70: #{kagin_forward.1} parent=5 // pred_check_branch
        %535 = sbr.rel (%p533) target = $region72
      $region71: #{kagin_forward.1} parent=5 // pred_region
        // Predicated region
        $region73: #{kagin_forward.1} parent=71 // pred_check
          %p536 = pneg %p47
        $region74: #{kagin_forward.1} parent=71 // pred_check_branch
          %538 = sbr.rel (%p536) target = $region76
        $region75: #{kagin_forward.1} parent=71 // pred_region
          %p539 = scmp.lt.s32.totalorder %s27, 1
          %s540 = scalar_select %p539, %s27, 1
          %s541 = smul.addr %s540, 2
          %s542 = smul.addr %s541, 8
          %s543 = scalar_lea.vmem %s0, %s542
        $region76: #{kagin_forward.1} parent=71 // pred_fallthru
          _
        // Predicated region
        $region77: #{kagin_forward.1} parent=71 // pred_check
          %p544 = pneg %p73
        $region78: #{kagin_forward.1} parent=71 // pred_check_branch
          %546 = sbr.rel (%p544) target = $region80
        $region79: #{kagin_forward.1} parent=71 // pred_region
          %p547 = scmp.lt.s32.totalorder %s27, 1
          %s548 = scalar_select %p547, %s27, 1
          %s549 = smul.addr %s548, 2
          %s550 = smul.addr %s549, 8
          %s551 = scalar_lea.vmem %s1, %s550
        $region80: #{kagin_forward.1} parent=71 // pred_fallthru
          _
      $region72: #{kagin_forward.1} parent=5 // pred_fallthru
        _
      %p552 = scmp.le.s32.totalorder 1, %s27
      %p553 = scmp.lt.s32.totalorder %s27, 3
      %p554 = pnand %p552, %p553
      %p555 = pneg %p554
      // Predicated region
      $region81: #{kagin_forward.1} parent=5 // pred_check
        _
      $region82: #{kagin_forward.1} parent=5 // pred_check_branch
        %557 = sbr.rel (%p554) target = $region84
      $region83: #{kagin_forward.1} parent=5 // pred_region
        %s558 = ssub.s32 %s27, 1
        // Predicated region
        $region85: #{kagin_forward.1} parent=83 // pred_check
          %p559 = pneg %p100
        $region86: #{kagin_forward.1} parent=83 // pred_check_branch
          %561 = sbr.rel (%p559) target = $region88
        $region87: #{kagin_forward.1} parent=83 // pred_region
          %562 = dma.done [#allocation3], 128
        $region88: #{kagin_forward.1} parent=83 // pred_fallthru
          _
        // Predicated region
        $region89: #{kagin_forward.1} parent=83 // pred_check
          %p563 = pneg %p142
        $region90: #{kagin_forward.1} parent=83 // pred_check_branch
          %565 = sbr.rel (%p563) target = $region92
        $region91: #{kagin_forward.1} parent=83 // pred_region
          %566 = dma.done [#allocation5], 512
        $region92: #{kagin_forward.1} parent=83 // pred_fallthru
          _
        // Predicated region
        $region93: #{kagin_forward.1} parent=83 // pred_check
          %p567 = pneg %p205
        $region94: #{kagin_forward.1} parent=83 // pred_check_branch
          %569 = sbr.rel (%p567) target = $region96
        $region95: #{kagin_forward.1} parent=83 // pred_region
          %570 = dma.done [#allocation5], 512
        $region96: #{kagin_forward.1} parent=83 // pred_fallthru
          _
        // Predicated region
        $region97: #{kagin_forward.1} parent=83 // pred_check
          %p571 = pneg %p226
        $region98: #{kagin_forward.1} parent=83 // pred_check_branch
          %573 = sbr.rel (%p571) target = $region100
        $region99: #{kagin_forward.1} parent=83 // pred_region
          %574 = dma.done [#allocation8], 4096
        $region100: #{kagin_forward.1} parent=83 // pred_fallthru
          _
        // Predicated region
        $region101: #{kagin_forward.1} parent=83 // pred_check
          %p575 = pneg %p247
        $region102: #{kagin_forward.1} parent=83 // pred_check_branch
          %577 = sbr.rel (%p575) target = $region104
        $region103: #{kagin_forward.1} parent=83 // pred_region
          %578 = dma.done [#allocation8], 512
        $region104: #{kagin_forward.1} parent=83 // pred_fallthru
          _
        // Predicated region
        $region105: #{kagin_forward.1} parent=83 // pred_check
          %p579 = pneg %p268
        $region106: #{kagin_forward.1} parent=83 // pred_check_branch
          %581 = sbr.rel (%p579) target = $region108
        $region107: #{kagin_forward.1} parent=83 // pred_region
          %582 = dma.done [#allocation11], 4096
        $region108: #{kagin_forward.1} parent=83 // pred_fallthru
          _
        // Predicated region
        $region109: #{kagin_forward.1} parent=83 // pred_check
          %p583 = pneg %p289
        $region110: #{kagin_forward.1} parent=83 // pred_check_branch
          %585 = sbr.rel (%p583) target = $region112
        $region111: #{kagin_forward.1} parent=83 // pred_region
          %586 = dma.done [#allocation11], 16
        $region112: #{kagin_forward.1} parent=83 // pred_fallthru
          _
        // Predicated region
        $region113: #{kagin_forward.1} parent=83 // pred_check
          %p587 = pneg %p331
        $region114: #{kagin_forward.1} parent=83 // pred_check_branch
          %589 = sbr.rel (%p587) target = $region116
        $region115: #{kagin_forward.1} parent=83 // pred_region
          %590 = dma.done [#allocation14], 4096
        $region116: #{kagin_forward.1} parent=83 // pred_fallthru
          _
        %p591 = scmp.lt.s32.totalorder %s32, 1
        %s592 = scalar_select %p591, %s32, 1
        %s593 = smul.addr %s592, 2
        %s594 = smul.addr %s593, 8
        %s595 = scalar_lea.vmem %s0, %s594
        %p596 = pneg %p53
        %p597 = pneg %p50
        %p598 = scmp.lt.s32.totalorder %s32, 1
        %s599 = scalar_select %p598, %s32, 1
        %s600 = smul.addr %s599, 2
        %s601 = smul.addr %s600, 8
        %s602 = scalar_lea.vmem %s1, %s601
        %p603 = pneg %p79
        %p604 = pneg %p76
        %p605 = pneg %p100
        %p606 = pneg %p97
        %p607 = pneg %p121
        %p608 = pneg %p118
        %p609 = pneg %p142
        %p610 = pneg %p139
        %p611 = pneg %p163
        %p612 = pneg %p160
        %p613 = pneg %p184
        %p614 = pneg %p181
        %p615 = pneg %p205
        %p616 = pneg %p202
        %p617 = pneg %p226
        %p618 = pneg %p223
        %p619 = pneg %p247
        %p620 = pneg %p244
        %p621 = pneg %p268
        %p622 = pneg %p265
        %p623 = pneg %p289
        %p624 = pneg %p286
        %p625 = pneg %p310
        %p626 = pneg %p307
        %p627 = pneg %p331
        %p628 = pneg %p328
        %p629 = pneg %p352
        %p630 = pneg %p349
        %p631 = pneg %p373
        %p632 = pneg %p370
        %p633 = pneg %p399
        %p634 = pneg %p396
        %p635 = scmp.lt.s32.totalorder %s32, 1
        %s636 = scalar_select %p635, %s32, 1
        %s637 = smul.addr %s636, 2
        %s638 = smul.addr %s637, 8
        %s639 = scalar_lea.vmem %s16, %s638
        %p640 = scmp.lt.s32.totalorder %s32, 1
        %s641 = scalar_select %p640, %s32, 1
        %s642 = smul.addr %s641, 2
        %s643 = smul.addr %s642, 8
        %s644 = scalar_lea.vmem %s0, %s643
        %p645 = scmp.lt.s32.totalorder %s32, 1
        %s646 = scalar_select %p645, %s32, 1
        %s647 = smul.addr %s646, 2
        %s648 = smul.addr %s647, 8
        %s649 = scalar_lea.vmem %s1, %s648
        %p650 = scmp.lt.s32.totalorder %s32, 1
        %s651 = scalar_select %p650, %s32, 1
        %s652 = smul.addr %s651, 2
        %s653 = smul.addr %s652, 8
        %s654 = scalar_lea.vmem %s16, %s653
        %v655 = vld [vmem:[%s644] sm:$0xff]
        %v656 = vld [vmem:[%s644 + $0x8] sm:$0xff]
        %v657 = vld [vmem:[%s649] sm:$0xff]
        %v658 = vld [vmem:[%s649 + $0x8] sm:$0xff]
        %vm659 = vcmask 130048
        %v661 = vsel %vm659, %v655, 0
        %v664 = vsel %vm659, %v656, 0
        %666 = vmatprep.subr.mxu0 0.0
        %667 = vmatpush1.msra.mxu0 %v657
        %668 = vmatprep.subr.mxu0 0.0
        %669 = vmatpush1.msra.mxu0 %v658
        %670 = vmatprep.subr.mxu0 0.0
        %671 = vmatpush1.msra.mxu0 0.0
        %672 = vmatprep.subr.mxu0 0.0
        %673 = vmatpush1.msra.mxu0 0.0
        %674 = vmatprep.subr.mxu0 0.0
        %675 = vmatpush1.msra.mxu0 0.0
        %676 = vmatprep.subr.mxu0 0.0
        %677 = vmatpush1.msra.mxu0 0.0
        %678 = vmatprep.subr.mxu0 0.0
        %679 = vmatpush1.msra.mxu0 0.0
        %680 = vmatprep.subr.mxu0 0.0
        %681 = vmatpush1.msra.mxu0 0.0
        %682 = vmatprep.subr.mxu0 0.0
        %683 = vmatpush1.msra.mxu0 0.0
        %684 = vmatprep.subr.mxu0 0.0
        %685 = vmatpush1.msra.mxu0 0.0
        %686 = vmatprep.subr.mxu0 0.0
        %687 = vmatpush1.msra.mxu0 0.0
        %688 = vmatprep.subr.mxu0 0.0
        %689 = vmatpush1.msra.mxu0 0.0
        %690 = vmatprep.subr.mxu0 0.0
        %691 = vmatpush1.msra.mxu0 0.0
        %692 = vmatprep.subr.mxu0 0.0
        %693 = vmatpush1.msra.mxu0 0.0
        %694 = vmatprep.subr.mxu0 0.0
        %695 = vmatpush1.msra.mxu0 0.0
        %696 = vmatprep.subr.mxu0 0.0
        %697 = vmatpush1.msra.mxu0 0.0
        %698 = vmatprep.subr.mxu0 0.0
        %699 = vmatpush1.msra.mxu0 0.0
        %700 = vmatprep.subr.mxu0 0.0
        %701 = vmatpush1.msra.mxu0 0.0
        %702 = vmatprep.subr.mxu0 0.0
        %703 = vmatpush1.msra.mxu0 0.0
        %704 = vmatprep.subr.mxu0 0.0
        %705 = vmatpush1.msra.mxu0 0.0
        %706 = vmatprep.subr.mxu0 0.0
        %707 = vmatpush1.msra.mxu0 0.0
        %708 = vmatprep.subr.mxu0 0.0
        %709 = vmatpush1.msra.mxu0 0.0
        %710 = vmatprep.subr.mxu0 0.0
        %711 = vmatpush1.msra.mxu0 0.0
        %712 = vmatprep.subr.mxu0 0.0
        %713 = vmatpush1.msra.mxu0 0.0
        %714 = vmatprep.subr.mxu0 0.0
        %715 = vmatpush1.msra.mxu0 0.0
        %716 = vmatprep.subr.mxu0 0.0
        %717 = vmatpush1.msra.mxu0 0.0
        %718 = vmatprep.subr.mxu0 0.0
        %719 = vmatpush1.msra.mxu0 0.0
        %720 = vmatprep.subr.mxu0 0.0
        %721 = vmatpush1.msra.mxu0 0.0
        %722 = vmatprep.subr.mxu0 0.0
        %723 = vmatpush1.msra.mxu0 0.0
        %724 = vmatprep.subr.mxu0 0.0
        %725 = vmatpush1.msra.mxu0 0.0
        %726 = vmatprep.subr.mxu0 0.0
        %727 = vmatpush1.msra.mxu0 0.0
        %728 = vmatprep.subr.mxu0 0.0
        %729 = vmatpush1.msra.mxu0 0.0
        %730 = vmatprep.mubr.f32.mxu0 0.0
        %731 = vmatmul.mubr.f32.gmra.mrb[0].mxu0 %v661
        %v732 = vpop.f32.mrb[0].mxu0
        %v733 = vadd.f32 0.0, %v732
        %v734 = vpop.f32.mrb[0].mxu0
        %735 = vmatprep.mubr.f32.mxu0 0.0
        %736 = vmatmul.mubr.f32.gmra.mrb[0].mxu0 %v664
        %v737 = vpop.f32.mrb[0].mxu0
        %v738 = vadd.f32 0.0, %v737
        %v739 = vpop.f32.mrb[0].mxu0
        %740 = vdwg.mxu0
        %v741 = vadd.f32 %v657, %v733
        %v742 = vadd.f32 %v658, %v738
        %v743 = vxor.u32 %v741, 2147483648
        %v744 = vxor.u32 %v742, 2147483648
        %v745 = vmul.f32 %v743, 1.442695
        %v746 = vpow.pop %v745
        %v747 = vmul.f32 %v744, 1.442695
        %v748 = vpow.pop %v747
        %v749 = vadd.f32 %v746, 1.0
        %v750 = vadd.f32 %v748, 1.0
        %v751 = vrcp.pop %v749
        %v752 = vmul.f32 1.0, %v751
        %v753 = vrcp.pop %v750
        %v754 = vmul.f32 1.0, %v753
        %v755 = vmul.f32 %v741, %v752
        %v756 = vmul.f32 %v742, %v754
        %v757 = vld [vmem:[#allocation2] sm:$0xff]
        %v758 = vsub.f32 %v741, -2.2
        %v759 = vsub.f32 %v742, -2.2
        %v760 = vmul.f32 %v758, 2.5
        %v761 = vmul.f32 %v759, 2.5
        %v762 = vsub.f32 %v760, 1.0
        %v763 = vsub.f32 %v761, 1.0
        %v764 = vsub.f32 %v762, 1.0
        %v765 = vsub.f32 %v763, 1.0
        %v766 = vsub.f32 %v764, 1.0
        %v767 = vsub.f32 %v765, 1.0
        %v768 = vsub.f32 %v766, 1.0
        %v769 = vsub.f32 %v767, 1.0
        %v770 = vsub.f32 %v768, 1.0
        %v771 = vsub.f32 %v769, 1.0
        %v772 = vsub.f32 %v770, 1.0
        %v773 = vsub.f32 %v771, 1.0
        %v774 = vsub.f32 %v772, 1.0
        %v775 = vsub.f32 %v773, 1.0
        %v776 = vsub.f32 %v774, 1.0
        %v777 = vsub.f32 %v775, 1.0
        %v778 = vsub.f32 %v776, 1.0
        %v779 = vsub.f32 %v777, 1.0
        %v780 = vsub.f32 %v778, 1.0
        %v781 = vsub.f32 %v779, 1.0
        %v782 = vsub.f32 %v780, 1.0
        %v783 = vsub.f32 %v781, 1.0
        %vm784 = vcmp.ge.f32.partialorder %v760, 0.0
        %vm785 = vcmp.ge.f32.partialorder %v761, 0.0
        %v786 = vsel %vm784, 1.0, 0.0
        %v787 = vsel %vm785, 1.0, 0.0
        %vm788 = vcmp.ge.f32.partialorder %v762, 0.0
        %vm789 = vcmp.ge.f32.partialorder %v763, 0.0
        %v790 = vsel %vm788, 1.0, 0.0
        %v791 = vsel %vm789, 1.0, 0.0
        %vm792 = vcmp.ge.f32.partialorder %v764, 0.0
        %vm793 = vcmp.ge.f32.partialorder %v765, 0.0
        %v794 = vsel %vm792, 1.0, 0.0
        %v795 = vsel %vm793, 1.0, 0.0
        %vm796 = vcmp.ge.f32.partialorder %v766, 0.0
        %vm797 = vcmp.ge.f32.partialorder %v767, 0.0
        %v798 = vsel %vm796, 1.0, 0.0
        %v799 = vsel %vm797, 1.0, 0.0
        %vm800 = vcmp.ge.f32.partialorder %v768, 0.0
        %vm801 = vcmp.ge.f32.partialorder %v769, 0.0
        %v802 = vsel %vm800, 1.0, 0.0
        %v803 = vsel %vm801, 1.0, 0.0
        %vm804 = vcmp.ge.f32.partialorder %v770, 0.0
        %vm805 = vcmp.ge.f32.partialorder %v771, 0.0
        %v806 = vsel %vm804, 1.0, 0.0
        %v807 = vsel %vm805, 1.0, 0.0
        %vm808 = vcmp.ge.f32.partialorder %v772, 0.0
        %vm809 = vcmp.ge.f32.partialorder %v773, 0.0
        %v810 = vsel %vm808, 1.0, 0.0
        %v811 = vsel %vm809, 1.0, 0.0
        %vm812 = vcmp.ge.f32.partialorder %v774, 0.0
        %vm813 = vcmp.ge.f32.partialorder %v775, 0.0
        %v814 = vsel %vm812, 1.0, 0.0
        %v815 = vsel %vm813, 1.0, 0.0
        %vm816 = vcmp.ge.f32.partialorder %v776, 0.0
        %vm817 = vcmp.ge.f32.partialorder %v777, 0.0
        %v818 = vsel %vm816, 1.0, 0.0
        %v819 = vsel %vm817, 1.0, 0.0
        %vm820 = vcmp.ge.f32.partialorder %v778, 0.0
        %vm821 = vcmp.ge.f32.partialorder %v779, 0.0
        %v822 = vsel %vm820, 1.0, 0.0
        %v823 = vsel %vm821, 1.0, 0.0
        %vm824 = vcmp.ge.f32.partialorder %v780, 0.0
        %vm825 = vcmp.ge.f32.partialorder %v781, 0.0
        %v826 = vsel %vm824, 1.0, 0.0
        %v827 = vsel %vm825, 1.0, 0.0
        %vm828 = vcmp.ge.f32.partialorder %v782, 0.0
        %vm829 = vcmp.ge.f32.partialorder %v783, 0.0
        %v830 = vsel %vm828, 1.0, 0.0
        %v831 = vsel %vm829, 1.0, 0.0
        %v832 = vsub.f32 %v786, %v790
        %v833 = vsub.f32 %v787, %v791
        %v834 = vsub.f32 %v790, %v794
        %v835 = vsub.f32 %v791, %v795
        %v836 = vsub.f32 %v794, %v798
        %v837 = vsub.f32 %v795, %v799
        %v838 = vsub.f32 %v798, %v802
        %v839 = vsub.f32 %v799, %v803
        %v840 = vsub.f32 %v802, %v806
        %v841 = vsub.f32 %v803, %v807
        %v842 = vsub.f32 %v806, %v810
        %v843 = vsub.f32 %v807, %v811
        %v844 = vsub.f32 %v810, %v814
        %v845 = vsub.f32 %v811, %v815
        %v846 = vsub.f32 %v814, %v818
        %v847 = vsub.f32 %v815, %v819
        %v848 = vsub.f32 %v818, %v822
        %v849 = vsub.f32 %v819, %v823
        %v850 = vsub.f32 %v822, %v826
        %v851 = vsub.f32 %v823, %v827
        %v852 = vsub.f32 %v826, %v830
        %v853 = vsub.f32 %v827, %v831
        %v854 = vmul.f32 %v760, %v832
        %v855 = vmul.f32 %v761, %v833
        %v856 = vmul.f32 %v764, %v834
        %v857 = vmul.f32 %v765, %v835
        %v858 = vsub.f32 %v854, %v856
        %v859 = vsub.f32 %v855, %v857
        %v860 = vmul.f32 %v762, %v834
        %v861 = vmul.f32 %v763, %v835
        %v862 = vmul.f32 %v766, %v836
        %v863 = vmul.f32 %v767, %v837
        %v864 = vsub.f32 %v860, %v862
        %v865 = vsub.f32 %v861, %v863
        %v866 = vmul.f32 %v764, %v836
        %v867 = vmul.f32 %v765, %v837
        %v868 = vmul.f32 %v768, %v838
        %v869 = vmul.f32 %v769, %v839
        %v870 = vsub.f32 %v866, %v868
        %v871 = vsub.f32 %v867, %v869
        %v872 = vmul.f32 %v766, %v838
        %v873 = vmul.f32 %v767, %v839
        %v874 = vmul.f32 %v770, %v840
        %v875 = vmul.f32 %v771, %v841
        %v876 = vsub.f32 %v872, %v874
        %v877 = vsub.f32 %v873, %v875
        %v878 = vmul.f32 %v768, %v840
        %v879 = vmul.f32 %v769, %v841
        %v880 = vmul.f32 %v772, %v842
        %v881 = vmul.f32 %v773, %v843
        %v882 = vsub.f32 %v878, %v880
        %v883 = vsub.f32 %v879, %v881
        %v884 = vmul.f32 %v770, %v842
        %v885 = vmul.f32 %v771, %v843
        %v886 = vmul.f32 %v774, %v844
        %v887 = vmul.f32 %v775, %v845
        %v888 = vsub.f32 %v884, %v886
        %v889 = vsub.f32 %v885, %v887
        %v890 = vmul.f32 %v772, %v844
        %v891 = vmul.f32 %v773, %v845
        %v892 = vmul.f32 %v776, %v846
        %v893 = vmul.f32 %v777, %v847
        %v894 = vsub.f32 %v890, %v892
        %v895 = vsub.f32 %v891, %v893
        %v896 = vmul.f32 %v774, %v846
        %v897 = vmul.f32 %v775, %v847
        %v898 = vmul.f32 %v778, %v848
        %v899 = vmul.f32 %v779, %v849
        %v900 = vsub.f32 %v896, %v898
        %v901 = vsub.f32 %v897, %v899
        %v902 = vmul.f32 %v776, %v848
        %v903 = vmul.f32 %v777, %v849
        %v904 = vmul.f32 %v780, %v850
        %v905 = vmul.f32 %v781, %v851
        %v906 = vsub.f32 %v902, %v904
        %v907 = vsub.f32 %v903, %v905
        %v908 = vmul.f32 %v778, %v850
        %v909 = vmul.f32 %v779, %v851
        %v910 = vmul.f32 %v782, %v852
        %v911 = vmul.f32 %v783, %v853
        %v912 = vsub.f32 %v908, %v910
        %v913 = vsub.f32 %v909, %v911
        %v914 = vmul.f32 %v760, %v858
        %v915 = vmul.f32 %v761, %v859
        %v916 = vmul.f32 %v766, %v864
        %v917 = vmul.f32 %v767, %v865
        %v918 = vsub.f32 %v914, %v916
        %v919 = vsub.f32 %v915, %v917
        %v920 = vmul.f32 %v762, %v864
        %v921 = vmul.f32 %v763, %v865
        %v922 = vmul.f32 %v768, %v870
        %v923 = vmul.f32 %v769, %v871
        %v924 = vsub.f32 %v920, %v922
        %v925 = vsub.f32 %v921, %v923
        %v926 = vmul.f32 %v764, %v870
        %v927 = vmul.f32 %v765, %v871
        %v928 = vmul.f32 %v770, %v876
        %v929 = vmul.f32 %v771, %v877
        %v930 = vsub.f32 %v926, %v928
        %v931 = vsub.f32 %v927, %v929
        %v932 = vmul.f32 %v766, %v876
        %v933 = vmul.f32 %v767, %v877
        %v934 = vmul.f32 %v772, %v882
        %v935 = vmul.f32 %v773, %v883
        %v936 = vsub.f32 %v932, %v934
        %v937 = vsub.f32 %v933, %v935
        %v938 = vmul.f32 %v768, %v882
        %v939 = vmul.f32 %v769, %v883
        %v940 = vmul.f32 %v774, %v888
        %v941 = vmul.f32 %v775, %v889
        %v942 = vsub.f32 %v938, %v940
        %v943 = vsub.f32 %v939, %v941
        %v944 = vmul.f32 %v770, %v888
        %v945 = vmul.f32 %v771, %v889
        %v946 = vmul.f32 %v776, %v894
        %v947 = vmul.f32 %v777, %v895
        %v948 = vsub.f32 %v944, %v946
        %v949 = vsub.f32 %v945, %v947
        %v950 = vmul.f32 %v772, %v894
        %v951 = vmul.f32 %v773, %v895
        %v952 = vmul.f32 %v778, %v900
        %v953 = vmul.f32 %v779, %v901
        %v954 = vsub.f32 %v950, %v952
        %v955 = vsub.f32 %v951, %v953
        %v956 = vmul.f32 %v774, %v900
        %v957 = vmul.f32 %v775, %v901
        %v958 = vmul.f32 %v780, %v906
        %v959 = vmul.f32 %v781, %v907
        %v960 = vsub.f32 %v956, %v958
        %v961 = vsub.f32 %v957, %v959
        %v962 = vmul.f32 %v776, %v906
        %v963 = vmul.f32 %v777, %v907
        %v964 = vmul.f32 %v782, %v912
        %v965 = vmul.f32 %v783, %v913
        %v966 = vsub.f32 %v962, %v964
        %v967 = vsub.f32 %v963, %v965
        %v968 = vmul.f32 %v760, %v918
        %v969 = vmul.f32 %v761, %v919
        %v970 = vmul.f32 %v768, %v924
        %v971 = vmul.f32 %v769, %v925
        %v972 = vsub.f32 %v968, %v970
        %v973 = vsub.f32 %v969, %v971
        %v974 = vmul.f32 %v762, %v924
        %v975 = vmul.f32 %v763, %v925
        %v976 = vmul.f32 %v770, %v930
        %v977 = vmul.f32 %v771, %v931
        %v978 = vsub.f32 %v974, %v976
        %v979 = vsub.f32 %v975, %v977
        %v980 = vmul.f32 %v764, %v930
        %v981 = vmul.f32 %v765, %v931
        %v982 = vmul.f32 %v772, %v936
        %v983 = vmul.f32 %v773, %v937
        %v984 = vsub.f32 %v980, %v982
        %v985 = vsub.f32 %v981, %v983
        %v986 = vmul.f32 %v766, %v936
        %v987 = vmul.f32 %v767, %v937
        %v988 = vmul.f32 %v774, %v942
        %v989 = vmul.f32 %v775, %v943
        %v990 = vsub.f32 %v986, %v988
        %v991 = vsub.f32 %v987, %v989
        %v992 = vmul.f32 %v768, %v942
        %v993 = vmul.f32 %v769, %v943
        %v994 = vmul.f32 %v776, %v948
        %v995 = vmul.f32 %v777, %v949
        %v996 = vsub.f32 %v992, %v994
        %v997 = vsub.f32 %v993, %v995
        %v998 = vmul.f32 %v770, %v948
        %v999 = vmul.f32 %v771, %v949
        %v1000 = vmul.f32 %v778, %v954
        %v1001 = vmul.f32 %v779, %v955
        %v1002 = vsub.f32 %v998, %v1000
        %v1003 = vsub.f32 %v999, %v1001
        %v1004 = vmul.f32 %v772, %v954
        %v1005 = vmul.f32 %v773, %v955
        %v1006 = vmul.f32 %v780, %v960
        %v1007 = vmul.f32 %v781, %v961
        %v1008 = vsub.f32 %v1004, %v1006
        %v1009 = vsub.f32 %v1005, %v1007
        %v1010 = vmul.f32 %v774, %v960
        %v1011 = vmul.f32 %v775, %v961
        %v1012 = vmul.f32 %v782, %v966
        %v1013 = vmul.f32 %v783, %v967
        %v1014 = vsub.f32 %v1010, %v1012
        %v1015 = vsub.f32 %v1011, %v1013
        %v1016 = vld [vmem:[%s3] sm:$0xff]
        %vm1017 = vcmask 64512
        %v1019 = vsel %vm1017, %v972, 0
        %v1022 = vsel %vm1017, %v973, 0
        %1024 = vmatprep.subr.mxu0 0.0
        %1025 = vmatpush1.msra.mxu0 %v1016
        %1026 = vmatprep.subr.mxu0 0.0
        %1027 = vmatpush1.msra.mxu0 0.0
        %1028 = vmatprep.subr.mxu0 0.0
        %1029 = vmatpush1.msra.mxu0 0.0
        %1030 = vmatprep.subr.mxu0 0.0
        %1031 = vmatpush1.msra.mxu0 0.0
        %1032 = vmatprep.subr.mxu0 0.0
        %1033 = vmatpush1.msra.mxu0 0.0
        %1034 = vmatprep.subr.mxu0 0.0
        %1035 = vmatpush1.msra.mxu0 0.0
        %1036 = vmatprep.subr.mxu0 0.0
        %1037 = vmatpush1.msra.mxu0 0.0
        %1038 = vmatprep.subr.mxu0 0.0
        %1039 = vmatpush1.msra.mxu0 0.0
        %1040 = vmatprep.subr.mxu0 0.0
        %1041 = vmatpush1.msra.mxu0 0.0
        %1042 = vmatprep.subr.mxu0 0.0
        %1043 = vmatpush1.msra.mxu0 0.0
        %1044 = vmatprep.subr.mxu0 0.0
        %1045 = vmatpush1.msra.mxu0 0.0
        %1046 = vmatprep.subr.mxu0 0.0
        %1047 = vmatpush1.msra.mxu0 0.0
        %1048 = vmatprep.subr.mxu0 0.0
        %1049 = vmatpush1.msra.mxu0 0.0
        %1050 = vmatprep.subr.mxu0 0.0
        %1051 = vmatpush1.msra.mxu0 0.0
        %1052 = vmatprep.subr.mxu0 0.0
        %1053 = vmatpush1.msra.mxu0 0.0
        %1054 = vmatprep.subr.mxu0 0.0
        %1055 = vmatpush1.msra.mxu0 0.0
        %1056 = vmatprep.subr.mxu0 0.0
        %1057 = vmatpush1.msra.mxu0 0.0
        %1058 = vmatprep.subr.mxu0 0.0
        %1059 = vmatpush1.msra.mxu0 0.0
        %1060 = vmatprep.subr.mxu0 0.0
        %1061 = vmatpush1.msra.mxu0 0.0
        %1062 = vmatprep.subr.mxu0 0.0
        %1063 = vmatpush1.msra.mxu0 0.0
        %1064 = vmatprep.subr.mxu0 0.0
        %1065 = vmatpush1.msra.mxu0 0.0
        %1066 = vmatprep.subr.mxu0 0.0
        %1067 = vmatpush1.msra.mxu0 0.0
        %1068 = vmatprep.subr.mxu0 0.0
        %1069 = vmatpush1.msra.mxu0 0.0
        %1070 = vmatprep.subr.mxu0 0.0
        %1071 = vmatpush1.msra.mxu0 0.0
        %1072 = vmatprep.subr.mxu0 0.0
        %1073 = vmatpush1.msra.mxu0 0.0
        %1074 = vmatprep.subr.mxu0 0.0
        %1075 = vmatpush1.msra.mxu0 0.0
        %1076 = vmatprep.subr.mxu0 0.0
        %1077 = vmatpush1.msra.mxu0 0.0
        %1078 = vmatprep.subr.mxu0 0.0
        %1079 = vmatpush1.msra.mxu0 0.0
        %1080 = vmatprep.subr.mxu0 0.0
        %1081 = vmatpush1.msra.mxu0 0.0
        %1082 = vmatprep.subr.mxu0 0.0
        %1083 = vmatpush1.msra.mxu0 0.0
        %1084 = vmatprep.subr.mxu0 0.0
        %1085 = vmatpush1.msra.mxu0 0.0
        %1086 = vmatprep.subr.mxu0 0.0
        %1087 = vmatpush1.msra.mxu0 0.0
        %1088 = vmatprep.mubr.f32.mxu0 0.0
        %1089 = vmatmul.mubr.f32.gmra.mrb[0].mxu0 %v1019
        %v1090 = vpop.f32.mrb[0].mxu0
        %v1091 = vadd.f32 0.0, %v1090
        %v1092 = vpop.f32.mrb[0].mxu0
        %1093 = vmatprep.mubr.f32.mxu0 0.0
        %1094 = vmatmul.mubr.f32.gmra.mrb[0].mxu0 %v1022
        %v1095 = vpop.f32.mrb[0].mxu0
        %v1096 = vadd.f32 0.0, %v1095
        %v1097 = vpop.f32.mrb[0].mxu0
        %1098 = vdwg.mxu0
        %v1100 = vsel %vm1017, %v755, 0
        %v1103 = vsel %vm1017, %v756, 0
        %1105 = vmatprep.subr.mxu0 0.0
        %1106 = vmatpush1.msra.mxu0 %v757
        %1107 = vmatprep.subr.mxu0 0.0
        %1108 = vmatpush1.msra.mxu0 0.0
        %1109 = vmatprep.subr.mxu0 0.0
        %1110 = vmatpush1.msra.mxu0 0.0
        %1111 = vmatprep.subr.mxu0 0.0
        %1112 = vmatpush1.msra.mxu0 0.0
        %1113 = vmatprep.subr.mxu0 0.0
        %1114 = vmatpush1.msra.mxu0 0.0
        %1115 = vmatprep.subr.mxu0 0.0
        %1116 = vmatpush1.msra.mxu0 0.0
        %1117 = vmatprep.subr.mxu0 0.0
        %1118 = vmatpush1.msra.mxu0 0.0
        %1119 = vmatprep.subr.mxu0 0.0
        %1120 = vmatpush1.msra.mxu0 0.0
        %1121 = vmatprep.subr.mxu0 0.0
        %1122 = vmatpush1.msra.mxu0 0.0
        %1123 = vmatprep.subr.mxu0 0.0
        %1124 = vmatpush1.msra.mxu0 0.0
        %1125 = vmatprep.subr.mxu0 0.0
        %1126 = vmatpush1.msra.mxu0 0.0
        %1127 = vmatprep.subr.mxu0 0.0
        %1128 = vmatpush1.msra.mxu0 0.0
        %1129 = vmatprep.subr.mxu0 0.0
        %1130 = vmatpush1.msra.mxu0 0.0
        %1131 = vmatprep.subr.mxu0 0.0
        %1132 = vmatpush1.msra.mxu0 0.0
        %1133 = vmatprep.subr.mxu0 0.0
        %1134 = vmatpush1.msra.mxu0 0.0
        %1135 = vmatprep.subr.mxu0 0.0
        %1136 = vmatpush1.msra.mxu0 0.0
        %1137 = vmatprep.subr.mxu0 0.0
        %1138 = vmatpush1.msra.mxu0 0.0
        %1139 = vmatprep.subr.mxu0 0.0
        %1140 = vmatpush1.msra.mxu0 0.0
        %1141 = vmatprep.subr.mxu0 0.0
        %1142 = vmatpush1.msra.mxu0 0.0
        %1143 = vmatprep.subr.mxu0 0.0
        %1144 = vmatpush1.msra.mxu0 0.0
        %1145 = vmatprep.subr.mxu0 0.0
        %1146 = vmatpush1.msra.mxu0 0.0
        %1147 = vmatprep.subr.mxu0 0.0
        %1148 = vmatpush1.msra.mxu0 0.0
        %1149 = vmatprep.subr.mxu0 0.0
        %1150 = vmatpush1.msra.mxu0 0.0
        %1151 = vmatprep.subr.mxu0 0.0
        %1152 = vmatpush1.msra.mxu0 0.0
        %1153 = vmatprep.subr.mxu0 0.0
        %1154 = vmatpush1.msra.mxu0 0.0
        %1155 = vmatprep.subr.mxu0 0.0
        %1156 = vmatpush1.msra.mxu0 0.0
        %1157 = vmatprep.subr.mxu0 0.0
        %1158 = vmatpush1.msra.mxu0 0.0
        %1159 = vmatprep.subr.mxu0 0.0
        %1160 = vmatpush1.msra.mxu0 0.0
        %1161 = vmatprep.subr.mxu0 0.0
        %1162 = vmatpush1.msra.mxu0 0.0
        %1163 = vmatprep.subr.mxu0 0.0
        %1164 = vmatpush1.msra.mxu0 0.0
        %1165 = vmatprep.subr.mxu0 0.0
        %1166 = vmatpush1.msra.mxu0 0.0
        %1167 = vmatprep.subr.mxu0 0.0
        %1168 = vmatpush1.msra.mxu0 0.0
        %1169 = vmatprep.mubr.f32.mxu0 0.0
        %1170 = vmatmul.mubr.f32.gmra.mrb[0].mxu0 %v1100
        %v1171 = vpop.f32.mrb[0].mxu0
        %v1172 = vadd.f32 %v1091, %v1171
        %v1173 = vpop.f32.mrb[0].mxu0
        %1174 = vmatprep.mubr.f32.mxu0 0.0
        %1175 = vmatmul.mubr.f32.gmra.mrb[0].mxu0 %v1103
        %v1176 = vpop.f32.mrb[0].mxu0
        %v1177 = vadd.f32 %v1096, %v1176
        %v1178 = vpop.f32.mrb[0].mxu0
        %1179 = vdwg.mxu0
        %s1180 = scalar_lea.vmem %s3, 8
        %v1181 = vld [vmem:[%s1180] sm:$0xff]
        %v1183 = vsel %vm1017, %v978, 0
        %v1186 = vsel %vm1017, %v979, 0
        %1188 = vmatprep.subr.mxu0 0.0
        %1189 = vmatpush1.msra.mxu0 %v1181
        %1190 = vmatprep.subr.mxu0 0.0
        %1191 = vmatpush1.msra.mxu0 0.0
        %1192 = vmatprep.subr.mxu0 0.0
        %1193 = vmatpush1.msra.mxu0 0.0
        %1194 = vmatprep.subr.mxu0 0.0
        %1195 = vmatpush1.msra.mxu0 0.0
        %1196 = vmatprep.subr.mxu0 0.0
        %1197 = vmatpush1.msra.mxu0 0.0
        %1198 = vmatprep.subr.mxu0 0.0
        %1199 = vmatpush1.msra.mxu0 0.0
        %1200 = vmatprep.subr.mxu0 0.0
        %1201 = vmatpush1.msra.mxu0 0.0
        %1202 = vmatprep.subr.mxu0 0.0
        %1203 = vmatpush1.msra.mxu0 0.0
        %1204 = vmatprep.subr.mxu0 0.0
        %1205 = vmatpush1.msra.mxu0 0.0
        %1206 = vmatprep.subr.mxu0 0.0
        %1207 = vmatpush1.msra.mxu0 0.0
        %1208 = vmatprep.subr.mxu0 0.0
        %1209 = vmatpush1.msra.mxu0 0.0
        %1210 = vmatprep.subr.mxu0 0.0
        %1211 = vmatpush1.msra.mxu0 0.0
        %1212 = vmatprep.subr.mxu0 0.0
        %1213 = vmatpush1.msra.mxu0 0.0
        %1214 = vmatprep.subr.mxu0 0.0
        %1215 = vmatpush1.msra.mxu0 0.0
        %1216 = vmatprep.subr.mxu0 0.0
        %1217 = vmatpush1.msra.mxu0 0.0
        %1218 = vmatprep.subr.mxu0 0.0
        %1219 = vmatpush1.msra.mxu0 0.0
        %1220 = vmatprep.subr.mxu0 0.0
        %1221 = vmatpush1.msra.mxu0 0.0
        %1222 = vmatprep.subr.mxu0 0.0
        %1223 = vmatpush1.msra.mxu0 0.0
        %1224 = vmatprep.subr.mxu0 0.0
        %1225 = vmatpush1.msra.mxu0 0.0
        %1226 = vmatprep.subr.mxu0 0.0
        %1227 = vmatpush1.msra.mxu0 0.0
        %1228 = vmatprep.subr.mxu0 0.0
        %1229 = vmatpush1.msra.mxu0 0.0
        %1230 = vmatprep.subr.mxu0 0.0
        %1231 = vmatpush1.msra.mxu0 0.0
        %1232 = vmatprep.subr.mxu0 0.0
        %1233 = vmatpush1.msra.mxu0 0.0
        %1234 = vmatprep.subr.mxu0 0.0
        %1235 = vmatpush1.msra.mxu0 0.0
        %1236 = vmatprep.subr.mxu0 0.0
        %1237 = vmatpush1.msra.mxu0 0.0
        %1238 = vmatprep.subr.mxu0 0.0
        %1239 = vmatpush1.msra.mxu0 0.0
        %1240 = vmatprep.subr.mxu0 0.0
        %1241 = vmatpush1.msra.mxu0 0.0
        %1242 = vmatprep.subr.mxu0 0.0
        %1243 = vmatpush1.msra.mxu0 0.0
        %1244 = vmatprep.subr.mxu0 0.0
        %1245 = vmatpush1.msra.mxu0 0.0
        %1246 = vmatprep.subr.mxu0 0.0
        %1247 = vmatpush1.msra.mxu0 0.0
        %1248 = vmatprep.subr.mxu0 0.0
        %1249 = vmatpush1.msra.mxu0 0.0
        %1250 = vmatprep.subr.mxu0 0.0
        %1251 = vmatpush1.msra.mxu0 0.0
        %1252 = vmatprep.mubr.f32.mxu0 0.0
        %1253 = vmatmul.mubr.f32.gmra.mrb[0].mxu0 %v1183
        %v1254 = vpop.f32.mrb[0].mxu0
        %v1255 = vadd.f32 0.0, %v1254
        %v1256 = vpop.f32.mrb[0].mxu0
        %1257 = vmatprep.mubr.f32.mxu0 0.0
        %1258 = vmatmul.mubr.f32.gmra.mrb[0].mxu0 %v1186
        %v1259 = vpop.f32.mrb[0].mxu0
        %v1260 = vadd.f32 0.0, %v1259
        %v1261 = vpop.f32.mrb[0].mxu0
        %1262 = vdwg.mxu0
        %v1263 = vadd.f32 %v1172, %v1255
        %v1264 = vadd.f32 %v1177, %v1260
        %s1265 = scalar_lea.vmem %s3, 16
        %v1266 = vld [vmem:[%s1265] sm:$0xff]
        %v1268 = vsel %vm1017, %v984, 0
        %v1271 = vsel %vm1017, %v985, 0
        %1273 = vmatprep.subr.mxu0 0.0
        %1274 = vmatpush1.msra.mxu0 %v1266
        %1275 = vmatprep.subr.mxu0 0.0
        %1276 = vmatpush1.msra.mxu0 0.0
        %1277 = vmatprep.subr.mxu0 0.0
        %1278 = vmatpush1.msra.mxu0 0.0
        %1279 = vmatprep.subr.mxu0 0.0
        %1280 = vmatpush1.msra.mxu0 0.0
        %1281 = vmatprep.subr.mxu0 0.0
        %1282 = vmatpush1.msra.mxu0 0.0
        %1283 = vmatprep.subr.mxu0 0.0
        %1284 = vmatpush1.msra.mxu0 0.0
        %1285 = vmatprep.subr.mxu0 0.0
        %1286 = vmatpush1.msra.mxu0 0.0
        %1287 = vmatprep.subr.mxu0 0.0
        %1288 = vmatpush1.msra.mxu0 0.0
        %1289 = vmatprep.subr.mxu0 0.0
        %1290 = vmatpush1.msra.mxu0 0.0
        %1291 = vmatprep.subr.mxu0 0.0
        %1292 = vmatpush1.msra.mxu0 0.0
        %1293 = vmatprep.subr.mxu0 0.0
        %1294 = vmatpush1.msra.mxu0 0.0
        %1295 = vmatprep.subr.mxu0 0.0
        %1296 = vmatpush1.msra.mxu0 0.0
        %1297 = vmatprep.subr.mxu0 0.0
        %1298 = vmatpush1.msra.mxu0 0.0
        %1299 = vmatprep.subr.mxu0 0.0
        %1300 = vmatpush1.msra.mxu0 0.0
        %1301 = vmatprep.subr.mxu0 0.0
        %1302 = vmatpush1.msra.mxu0 0.0
        %1303 = vmatprep.subr.mxu0 0.0
        %1304 = vmatpush1.msra.mxu0 0.0
        %1305 = vmatprep.subr.mxu0 0.0
        %1306 = vmatpush1.msra.mxu0 0.0
        %1307 = vmatprep.subr.mxu0 0.0
        %1308 = vmatpush1.msra.mxu0 0.0
        %1309 = vmatprep.subr.mxu0 0.0
        %1310 = vmatpush1.msra.mxu0 0.0
        %1311 = vmatprep.subr.mxu0 0.0
        %1312 = vmatpush1.msra.mxu0 0.0
        %1313 = vmatprep.subr.mxu0 0.0
        %1314 = vmatpush1.msra.mxu0 0.0
        %1315 = vmatprep.subr.mxu0 0.0
        %1316 = vmatpush1.msra.mxu0 0.0
        %1317 = vmatprep.subr.mxu0 0.0
        %1318 = vmatpush1.msra.mxu0 0.0
        %1319 = vmatprep.subr.mxu0 0.0
        %1320 = vmatpush1.msra.mxu0 0.0
        %1321 = vmatprep.subr.mxu0 0.0
        %1322 = vmatpush1.msra.mxu0 0.0
        %1323 = vmatprep.subr.mxu0 0.0
        %1324 = vmatpush1.msra.mxu0 0.0
        %1325 = vmatprep.subr.mxu0 0.0
        %1326 = vmatpush1.msra.mxu0 0.0
        %1327 = vmatprep.subr.mxu0 0.0
        %1328 = vmatpush1.msra.mxu0 0.0
        %1329 = vmatprep.subr.mxu0 0.0
        %1330 = vmatpush1.msra.mxu0 0.0
        %1331 = vmatprep.subr.mxu0 0.0
        %1332 = vmatpush1.msra.mxu0 0.0
        %1333 = vmatprep.subr.mxu0 0.0
        %1334 = vmatpush1.msra.mxu0 0.0
        %1335 = vmatprep.subr.mxu0 0.0
        %1336 = vmatpush1.msra.mxu0 0.0
        %1337 = vmatprep.mubr.f32.mxu0 0.0
        %1338 = vmatmul.mubr.f32.gmra.mrb[0].mxu0 %v1268
        %v1339 = vpop.f32.mrb[0].mxu0
        %v1340 = vadd.f32 0.0, %v1339
        %v1341 = vpop.f32.mrb[0].mxu0
        %1342 = vmatprep.mubr.f32.mxu0 0.0
        %1343 = vmatmul.mubr.f32.gmra.mrb[0].mxu0 %v1271
        %v1344 = vpop.f32.mrb[0].mxu0
        %v1345 = vadd.f32 0.0, %v1344
        %v1346 = vpop.f32.mrb[0].mxu0
        %1347 = vdwg.mxu0
        %v1348 = vadd.f32 %v1263, %v1340
        %v1349 = vadd.f32 %v1264, %v1345
        %s1350 = scalar_lea.vmem %s3, 24
        %v1351 = vld [vmem:[%s1350] sm:$0xff]
        %v1353 = vsel %vm1017, %v990, 0
        %v1356 = vsel %vm1017, %v991, 0
        %1358 = vmatprep.subr.mxu0 0.0
        %1359 = vmatpush1.msra.mxu0 %v1351
        %1360 = vmatprep.subr.mxu0 0.0
        %1361 = vmatpush1.msra.mxu0 0.0
        %1362 = vmatprep.subr.mxu0 0.0
        %1363 = vmatpush1.msra.mxu0 0.0
        %1364 = vmatprep.subr.mxu0 0.0
        %1365 = vmatpush1.msra.mxu0 0.0
        %1366 = vmatprep.subr.mxu0 0.0
        %1367 = vmatpush1.msra.mxu0 0.0
        %1368 = vmatprep.subr.mxu0 0.0
        %1369 = vmatpush1.msra.mxu0 0.0
        %1370 = vmatprep.subr.mxu0 0.0
        %1371 = vmatpush1.msra.mxu0 0.0
        %1372 = vmatprep.subr.mxu0 0.0
        %1373 = vmatpush1.msra.mxu0 0.0
        %1374 = vmatprep.subr.mxu0 0.0
        %1375 = vmatpush1.msra.mxu0 0.0
        %1376 = vmatprep.subr.mxu0 0.0
        %1377 = vmatpush1.msra.mxu0 0.0
        %1378 = vmatprep.subr.mxu0 0.0
        %1379 = vmatpush1.msra.mxu0 0.0
        %1380 = vmatprep.subr.mxu0 0.0
        %1381 = vmatpush1.msra.mxu0 0.0
        %1382 = vmatprep.subr.mxu0 0.0
        %1383 = vmatpush1.msra.mxu0 0.0
        %1384 = vmatprep.subr.mxu0 0.0
        %1385 = vmatpush1.msra.mxu0 0.0
        %1386 = vmatprep.subr.mxu0 0.0
        %1387 = vmatpush1.msra.mxu0 0.0
        %1388 = vmatprep.subr.mxu0 0.0
        %1389 = vmatpush1.msra.mxu0 0.0
        %1390 = vmatprep.subr.mxu0 0.0
        %1391 = vmatpush1.msra.mxu0 0.0
        %1392 = vmatprep.subr.mxu0 0.0
        %1393 = vmatpush1.msra.mxu0 0.0
        %1394 = vmatprep.subr.mxu0 0.0
        %1395 = vmatpush1.msra.mxu0 0.0
        %1396 = vmatprep.subr.mxu0 0.0
        %1397 = vmatpush1.msra.mxu0 0.0
        %1398 = vmatprep.subr.mxu0 0.0
        %1399 = vmatpush1.msra.mxu0 0.0
        %1400 = vmatprep.subr.mxu0 0.0
        %1401 = vmatpush1.msra.mxu0 0.0
        %1402 = vmatprep.subr.mxu0 0.0
        %1403 = vmatpush1.msra.mxu0 0.0
        %1404 = vmatprep.subr.mxu0 0.0
        %1405 = vmatpush1.msra.mxu0 0.0
        %1406 = vmatprep.subr.mxu0 0.0
        %1407 = vmatpush1.msra.mxu0 0.0
        %1408 = vmatprep.subr.mxu0 0.0
        %1409 = vmatpush1.msra.mxu0 0.0
        %1410 = vmatprep.subr.mxu0 0.0
        %1411 = vmatpush1.msra.mxu0 0.0
        %1412 = vmatprep.subr.mxu0 0.0
        %1413 = vmatpush1.msra.mxu0 0.0
        %1414 = vmatprep.subr.mxu0 0.0
        %1415 = vmatpush1.msra.mxu0 0.0
        %1416 = vmatprep.subr.mxu0 0.0
        %1417 = vmatpush1.msra.mxu0 0.0
        %1418 = vmatprep.subr.mxu0 0.0
        %1419 = vmatpush1.msra.mxu0 0.0
        %1420 = vmatprep.subr.mxu0 0.0
        %1421 = vmatpush1.msra.mxu0 0.0
        %1422 = vmatprep.mubr.f32.mxu0 0.0
        %1423 = vmatmul.mubr.f32.gmra.mrb[0].mxu0 %v1353
        %v1424 = vpop.f32.mrb[0].mxu0
        %v1425 = vadd.f32 0.0, %v1424
        %v1426 = vpop.f32.mrb[0].mxu0
        %1427 = vmatprep.mubr.f32.mxu0 0.0
        %1428 = vmatmul.mubr.f32.gmra.mrb[0].mxu0 %v1356
        %v1429 = vpop.f32.mrb[0].mxu0
        %v1430 = vadd.f32 0.0, %v1429
        %v1431 = vpop.f32.mrb[0].mxu0
        %1432 = vdwg.mxu0
        %v1433 = vadd.f32 %v1348, %v1425
        %v1434 = vadd.f32 %v1349, %v1430
        %s1435 = scalar_lea.vmem %s3, 32
        %v1436 = vld [vmem:[%s1435] sm:$0xff]
        %v1438 = vsel %vm1017, %v996, 0
        %v1441 = vsel %vm1017, %v997, 0
        %1443 = vmatprep.subr.mxu0 0.0
        %1444 = vmatpush1.msra.mxu0 %v1436
        %1445 = vmatprep.subr.mxu0 0.0
        %1446 = vmatpush1.msra.mxu0 0.0
        %1447 = vmatprep.subr.mxu0 0.0
        %1448 = vmatpush1.msra.mxu0 0.0
        %1449 = vmatprep.subr.mxu0 0.0
        %1450 = vmatpush1.msra.mxu0 0.0
        %1451 = vmatprep.subr.mxu0 0.0
        %1452 = vmatpush1.msra.mxu0 0.0
        %1453 = vmatprep.subr.mxu0 0.0
        %1454 = vmatpush1.msra.mxu0 0.0
        %1455 = vmatprep.subr.mxu0 0.0
        %1456 = vmatpush1.msra.mxu0 0.0
        %1457 = vmatprep.subr.mxu0 0.0
        %1458 = vmatpush1.msra.mxu0 0.0
        %1459 = vmatprep.subr.mxu0 0.0
        %1460 = vmatpush1.msra.mxu0 0.0
        %1461 = vmatprep.subr.mxu0 0.0
        %1462 = vmatpush1.msra.mxu0 0.0
        %1463 = vmatprep.subr.mxu0 0.0
        %1464 = vmatpush1.msra.mxu0 0.0
        %1465 = vmatprep.subr.mxu0 0.0
        %1466 = vmatpush1.msra.mxu0 0.0
        %1467 = vmatprep.subr.mxu0 0.0
        %1468 = vmatpush1.msra.mxu0 0.0
        %1469 = vmatprep.subr.mxu0 0.0
        %1470 = vmatpush1.msra.mxu0 0.0
        %1471 = vmatprep.subr.mxu0 0.0
        %1472 = vmatpush1.msra.mxu0 0.0
        %1473 = vmatprep.subr.mxu0 0.0
        %1474 = vmatpush1.msra.mxu0 0.0
        %1475 = vmatprep.subr.mxu0 0.0
        %1476 = vmatpush1.msra.mxu0 0.0
        %1477 = vmatprep.subr.mxu0 0.0
        %1478 = vmatpush1.msra.mxu0 0.0
        %1479 = vmatprep.subr.mxu0 0.0
        %1480 = vmatpush1.msra.mxu0 0.0
        %1481 = vmatprep.subr.mxu0 0.0
        %1482 = vmatpush1.msra.mxu0 0.0
        %1483 = vmatprep.subr.mxu0 0.0
        %1484 = vmatpush1.msra.mxu0 0.0
        %1485 = vmatprep.subr.mxu0 0.0
        %1486 = vmatpush1.msra.mxu0 0.0
        %1487 = vmatprep.subr.mxu0 0.0
        %1488 = vmatpush1.msra.mxu0 0.0
        %1489 = vmatprep.subr.mxu0 0.0
        %1490 = vmatpush1.msra.mxu0 0.0
        %1491 = vmatprep.subr.mxu0 0.0
        %1492 = vmatpush1.msra.mxu0 0.0
        %1493 = vmatprep.subr.mxu0 0.0
        %1494 = vmatpush1.msra.mxu0 0.0
        %1495 = vmatprep.subr.mxu0 0.0
        %1496 = vmatpush1.msra.mxu0 0.0
        %1497 = vmatprep.subr.mxu0 0.0
        %1498 = vmatpush1.msra.mxu0 0.0
        %1499 = vmatprep.subr.mxu0 0.0
        %1500 = vmatpush1.msra.mxu0 0.0
        %1501 = vmatprep.subr.mxu0 0.0
        %1502 = vmatpush1.msra.mxu0 0.0
        %1503 = vmatprep.subr.mxu0 0.0
        %1504 = vmatpush1.msra.mxu0 0.0
        %1505 = vmatprep.subr.mxu0 0.0
        %1506 = vmatpush1.msra.mxu0 0.0
        %1507 = vmatprep.mubr.f32.mxu0 0.0
        %1508 = vmatmul.mubr.f32.gmra.mrb[0].mxu0 %v1438
        %v1509 = vpop.f32.mrb[0].mxu0
        %v1510 = vadd.f32 0.0, %v1509
        %v1511 = vpop.f32.mrb[0].mxu0
        %1512 = vmatprep.mubr.f32.mxu0 0.0
        %1513 = vmatmul.mubr.f32.gmra.mrb[0].mxu0 %v1441
        %v1514 = vpop.f32.mrb[0].mxu0
        %v1515 = vadd.f32 0.0, %v1514
        %v1516 = vpop.f32.mrb[0].mxu0
        %1517 = vdwg.mxu0
        %v1518 = vadd.f32 %v1433, %v1510
        %v1519 = vadd.f32 %v1434, %v1515
        %s1520 = scalar_lea.vmem %s3, 40
        %v1521 = vld [vmem:[%s1520] sm:$0xff]
        %v1523 = vsel %vm1017, %v1002, 0
        %v1526 = vsel %vm1017, %v1003, 0
        %1528 = vmatprep.subr.mxu0 0.0
        %1529 = vmatpush1.msra.mxu0 %v1521
        %1530 = vmatprep.subr.mxu0 0.0
        %1531 = vmatpush1.msra.mxu0 0.0
        %1532 = vmatprep.subr.mxu0 0.0
        %1533 = vmatpush1.msra.mxu0 0.0
        %1534 = vmatprep.subr.mxu0 0.0
        %1535 = vmatpush1.msra.mxu0 0.0
        %1536 = vmatprep.subr.mxu0 0.0
        %1537 = vmatpush1.msra.mxu0 0.0
        %1538 = vmatprep.subr.mxu0 0.0
        %1539 = vmatpush1.msra.mxu0 0.0
        %1540 = vmatprep.subr.mxu0 0.0
        %1541 = vmatpush1.msra.mxu0 0.0
        %1542 = vmatprep.subr.mxu0 0.0
        %1543 = vmatpush1.msra.mxu0 0.0
        %1544 = vmatprep.subr.mxu0 0.0
        %1545 = vmatpush1.msra.mxu0 0.0
        %1546 = vmatprep.subr.mxu0 0.0
        %1547 = vmatpush1.msra.mxu0 0.0
        %1548 = vmatprep.subr.mxu0 0.0
        %1549 = vmatpush1.msra.mxu0 0.0
        %1550 = vmatprep.subr.mxu0 0.0
        %1551 = vmatpush1.msra.mxu0 0.0
        %1552 = vmatprep.subr.mxu0 0.0
        %1553 = vmatpush1.msra.mxu0 0.0
        %1554 = vmatprep.subr.mxu0 0.0
        %1555 = vmatpush1.msra.mxu0 0.0
        %1556 = vmatprep.subr.mxu0 0.0
        %1557 = vmatpush1.msra.mxu0 0.0
        %1558 = vmatprep.subr.mxu0 0.0
        %1559 = vmatpush1.msra.mxu0 0.0
        %1560 = vmatprep.subr.mxu0 0.0
        %1561 = vmatpush1.msra.mxu0 0.0
        %1562 = vmatprep.subr.mxu0 0.0
        %1563 = vmatpush1.msra.mxu0 0.0
        %1564 = vmatprep.subr.mxu0 0.0
        %1565 = vmatpush1.msra.mxu0 0.0
        %1566 = vmatprep.subr.mxu0 0.0
        %1567 = vmatpush1.msra.mxu0 0.0
        %1568 = vmatprep.subr.mxu0 0.0
        %1569 = vmatpush1.msra.mxu0 0.0
        %1570 = vmatprep.subr.mxu0 0.0
        %1571 = vmatpush1.msra.mxu0 0.0
        %1572 = vmatprep.subr.mxu0 0.0
        %1573 = vmatpush1.msra.mxu0 0.0
        %1574 = vmatprep.subr.mxu0 0.0
        %1575 = vmatpush1.msra.mxu0 0.0
        %1576 = vmatprep.subr.mxu0 0.0
        %1577 = vmatpush1.msra.mxu0 0.0
        %1578 = vmatprep.subr.mxu0 0.0
        %1579 = vmatpush1.msra.mxu0 0.0
        %1580 = vmatprep.subr.mxu0 0.0
        %1581 = vmatpush1.msra.mxu0 0.0
        %1582 = vmatprep.subr.mxu0 0.0
        %1583 = vmatpush1.msra.mxu0 0.0
        %1584 = vmatprep.subr.mxu0 0.0
        %1585 = vmatpush1.msra.mxu0 0.0
        %1586 = vmatprep.subr.mxu0 0.0
        %1587 = vmatpush1.msra.mxu0 0.0
        %1588 = vmatprep.subr.mxu0 0.0
        %1589 = vmatpush1.msra.mxu0 0.0
        %1590 = vmatprep.subr.mxu0 0.0
        %1591 = vmatpush1.msra.mxu0 0.0
        %1592 = vmatprep.mubr.f32.mxu0 0.0
        %1593 = vmatmul.mubr.f32.gmra.mrb[0].mxu0 %v1523
        %v1594 = vpop.f32.mrb[0].mxu0
        %v1595 = vadd.f32 0.0, %v1594
        %v1596 = vpop.f32.mrb[0].mxu0
        %1597 = vmatprep.mubr.f32.mxu0 0.0
        %1598 = vmatmul.mubr.f32.gmra.mrb[0].mxu0 %v1526
        %v1599 = vpop.f32.mrb[0].mxu0
        %v1600 = vadd.f32 0.0, %v1599
        %v1601 = vpop.f32.mrb[0].mxu0
        %1602 = vdwg.mxu0
        %v1603 = vadd.f32 %v1518, %v1595
        %v1604 = vadd.f32 %v1519, %v1600
        %s1605 = scalar_lea.vmem %s3, 48
        %v1606 = vld [vmem:[%s1605] sm:$0xff]
        %v1608 = vsel %vm1017, %v1008, 0
        %v1611 = vsel %vm1017, %v1009, 0
        %1613 = vmatprep.subr.mxu0 0.0
        %1614 = vmatpush1.msra.mxu0 %v1606
        %1615 = vmatprep.subr.mxu0 0.0
        %1616 = vmatpush1.msra.mxu0 0.0
        %1617 = vmatprep.subr.mxu0 0.0
        %1618 = vmatpush1.msra.mxu0 0.0
        %1619 = vmatprep.subr.mxu0 0.0
        %1620 = vmatpush1.msra.mxu0 0.0
        %1621 = vmatprep.subr.mxu0 0.0
        %1622 = vmatpush1.msra.mxu0 0.0
        %1623 = vmatprep.subr.mxu0 0.0
        %1624 = vmatpush1.msra.mxu0 0.0
        %1625 = vmatprep.subr.mxu0 0.0
        %1626 = vmatpush1.msra.mxu0 0.0
        %1627 = vmatprep.subr.mxu0 0.0
        %1628 = vmatpush1.msra.mxu0 0.0
        %1629 = vmatprep.subr.mxu0 0.0
        %1630 = vmatpush1.msra.mxu0 0.0
        %1631 = vmatprep.subr.mxu0 0.0
        %1632 = vmatpush1.msra.mxu0 0.0
        %1633 = vmatprep.subr.mxu0 0.0
        %1634 = vmatpush1.msra.mxu0 0.0
        %1635 = vmatprep.subr.mxu0 0.0
        %1636 = vmatpush1.msra.mxu0 0.0
        %1637 = vmatprep.subr.mxu0 0.0
        %1638 = vmatpush1.msra.mxu0 0.0
        %1639 = vmatprep.subr.mxu0 0.0
        %1640 = vmatpush1.msra.mxu0 0.0
        %1641 = vmatprep.subr.mxu0 0.0
        %1642 = vmatpush1.msra.mxu0 0.0
        %1643 = vmatprep.subr.mxu0 0.0
        %1644 = vmatpush1.msra.mxu0 0.0
        %1645 = vmatprep.subr.mxu0 0.0
        %1646 = vmatpush1.msra.mxu0 0.0
        %1647 = vmatprep.subr.mxu0 0.0
        %1648 = vmatpush1.msra.mxu0 0.0
        %1649 = vmatprep.subr.mxu0 0.0
        %1650 = vmatpush1.msra.mxu0 0.0
        %1651 = vmatprep.subr.mxu0 0.0
        %1652 = vmatpush1.msra.mxu0 0.0
        %1653 = vmatprep.subr.mxu0 0.0
        %1654 = vmatpush1.msra.mxu0 0.0
        %1655 = vmatprep.subr.mxu0 0.0
        %1656 = vmatpush1.msra.mxu0 0.0
        %1657 = vmatprep.subr.mxu0 0.0
        %1658 = vmatpush1.msra.mxu0 0.0
        %1659 = vmatprep.subr.mxu0 0.0
        %1660 = vmatpush1.msra.mxu0 0.0
        %1661 = vmatprep.subr.mxu0 0.0
        %1662 = vmatpush1.msra.mxu0 0.0
        %1663 = vmatprep.subr.mxu0 0.0
        %1664 = vmatpush1.msra.mxu0 0.0
        %1665 = vmatprep.subr.mxu0 0.0
        %1666 = vmatpush1.msra.mxu0 0.0
        %1667 = vmatprep.subr.mxu0 0.0
        %1668 = vmatpush1.msra.mxu0 0.0
        %1669 = vmatprep.subr.mxu0 0.0
        %1670 = vmatpush1.msra.mxu0 0.0
        %1671 = vmatprep.subr.mxu0 0.0
        %1672 = vmatpush1.msra.mxu0 0.0
        %1673 = vmatprep.subr.mxu0 0.0
        %1674 = vmatpush1.msra.mxu0 0.0
        %1675 = vmatprep.subr.mxu0 0.0
        %1676 = vmatpush1.msra.mxu0 0.0
        %1677 = vmatprep.mubr.f32.mxu0 0.0
        %1678 = vmatmul.mubr.f32.gmra.mrb[0].mxu0 %v1608
        %v1679 = vpop.f32.mrb[0].mxu0
        %v1680 = vadd.f32 0.0, %v1679
        %v1681 = vpop.f32.mrb[0].mxu0
        %1682 = vmatprep.mubr.f32.mxu0 0.0
        %1683 = vmatmul.mubr.f32.gmra.mrb[0].mxu0 %v1611
        %v1684 = vpop.f32.mrb[0].mxu0
        %v1685 = vadd.f32 0.0, %v1684
        %v1686 = vpop.f32.mrb[0].mxu0
        %1687 = vdwg.mxu0
        %v1688 = vadd.f32 %v1603, %v1680
        %v1689 = vadd.f32 %v1604, %v1685
        %s1690 = scalar_lea.vmem %s3, 56
        %v1691 = vld [vmem:[%s1690] sm:$0xff]
        %v1693 = vsel %vm1017, %v1014, 0
        %v1696 = vsel %vm1017, %v1015, 0
        %1698 = vmatprep.subr.mxu0 0.0
        %1699 = vmatpush1.msra.mxu0 %v1691
        %1700 = vmatprep.subr.mxu0 0.0
        %1701 = vmatpush1.msra.mxu0 0.0
        %1702 = vmatprep.subr.mxu0 0.0
        %1703 = vmatpush1.msra.mxu0 0.0
        %1704 = vmatprep.subr.mxu0 0.0
        %1705 = vmatpush1.msra.mxu0 0.0
        %1706 = vmatprep.subr.mxu0 0.0
        %1707 = vmatpush1.msra.mxu0 0.0
        %1708 = vmatprep.subr.mxu0 0.0
        %1709 = vmatpush1.msra.mxu0 0.0
        %1710 = vmatprep.subr.mxu0 0.0
        %1711 = vmatpush1.msra.mxu0 0.0
        %1712 = vmatprep.subr.mxu0 0.0
        %1713 = vmatpush1.msra.mxu0 0.0
        %1714 = vmatprep.subr.mxu0 0.0
        %1715 = vmatpush1.msra.mxu0 0.0
        %1716 = vmatprep.subr.mxu0 0.0
        %1717 = vmatpush1.msra.mxu0 0.0
        %1718 = vmatprep.subr.mxu0 0.0
        %1719 = vmatpush1.msra.mxu0 0.0
        %1720 = vmatprep.subr.mxu0 0.0
        %1721 = vmatpush1.msra.mxu0 0.0
        %1722 = vmatprep.subr.mxu0 0.0
        %1723 = vmatpush1.msra.mxu0 0.0
        %1724 = vmatprep.subr.mxu0 0.0
        %1725 = vmatpush1.msra.mxu0 0.0
        %1726 = vmatprep.subr.mxu0 0.0
        %1727 = vmatpush1.msra.mxu0 0.0
        %1728 = vmatprep.subr.mxu0 0.0
        %1729 = vmatpush1.msra.mxu0 0.0
        %1730 = vmatprep.subr.mxu0 0.0
        %1731 = vmatpush1.msra.mxu0 0.0
        %1732 = vmatprep.subr.mxu0 0.0
        %1733 = vmatpush1.msra.mxu0 0.0
        %1734 = vmatprep.subr.mxu0 0.0
        %1735 = vmatpush1.msra.mxu0 0.0
        %1736 = vmatprep.subr.mxu0 0.0
        %1737 = vmatpush1.msra.mxu0 0.0
        %1738 = vmatprep.subr.mxu0 0.0
        %1739 = vmatpush1.msra.mxu0 0.0
        %1740 = vmatprep.subr.mxu0 0.0
        %1741 = vmatpush1.msra.mxu0 0.0
        %1742 = vmatprep.subr.mxu0 0.0
        %1743 = vmatpush1.msra.mxu0 0.0
        %1744 = vmatprep.subr.mxu0 0.0
        %1745 = vmatpush1.msra.mxu0 0.0
        %1746 = vmatprep.subr.mxu0 0.0
        %1747 = vmatpush1.msra.mxu0 0.0
        %1748 = vmatprep.subr.mxu0 0.0
        %1749 = vmatpush1.msra.mxu0 0.0
        %1750 = vmatprep.subr.mxu0 0.0
        %1751 = vmatpush1.msra.mxu0 0.0
        %1752 = vmatprep.subr.mxu0 0.0
        %1753 = vmatpush1.msra.mxu0 0.0
        %1754 = vmatprep.subr.mxu0 0.0
        %1755 = vmatpush1.msra.mxu0 0.0
        %1756 = vmatprep.subr.mxu0 0.0
        %1757 = vmatpush1.msra.mxu0 0.0
        %1758 = vmatprep.subr.mxu0 0.0
        %1759 = vmatpush1.msra.mxu0 0.0
        %1760 = vmatprep.subr.mxu0 0.0
        %1761 = vmatpush1.msra.mxu0 0.0
        %1762 = vmatprep.mubr.f32.mxu0 0.0
        %1763 = vmatmul.mubr.f32.gmra.mrb[0].mxu0 %v1693
        %v1764 = vpop.f32.mrb[0].mxu0
        %v1765 = vadd.f32 0.0, %v1764
        %v1766 = vpop.f32.mrb[0].mxu0
        %1767 = vmatprep.mubr.f32.mxu0 0.0
        %1768 = vmatmul.mubr.f32.gmra.mrb[0].mxu0 %v1696
        %v1769 = vpop.f32.mrb[0].mxu0
        %v1770 = vadd.f32 0.0, %v1769
        %v1771 = vpop.f32.mrb[0].mxu0
        %1772 = vdwg.mxu0
        %v1773 = vadd.f32 %v1688, %v1765
        %v1774 = vadd.f32 %v1689, %v1770
        %v1775 = vxor.u32 %v1773, 2147483648
        %v1776 = vxor.u32 %v1774, 2147483648
        %v1777 = vmul.f32 %v1775, 1.442695
        %v1778 = vpow.pop %v1777
        %v1779 = vmul.f32 %v1776, 1.442695
        %v1780 = vpow.pop %v1779
        %v1781 = vadd.f32 %v1778, 1.0
        %v1782 = vadd.f32 %v1780, 1.0
        %v1783 = vrcp.pop %v1781
        %v1784 = vmul.f32 1.0, %v1783
        %v1785 = vrcp.pop %v1782
        %v1786 = vmul.f32 1.0, %v1785
        %v1787 = vmul.f32 %v1773, %v1784
        %v1788 = vmul.f32 %v1774, %v1786
        %v1789 = vld [vmem:[#allocation4] sm:$0xff]
        %v1790 = vld [vmem:[#allocation4 + $0x8] sm:$0xff]
        %v1791 = vld [vmem:[#allocation4 + $0x10] sm:$0xff]
        %v1792 = vld [vmem:[#allocation4 + $0x18] sm:$0xff]
        %v1793 = vsub.f32 %v1773, -2.2
        %v1794 = vsub.f32 %v1774, -2.2
        %v1795 = vmul.f32 %v1793, 2.5
        %v1796 = vmul.f32 %v1794, 2.5
        %v1797 = vsub.f32 %v1795, 1.0
        %v1798 = vsub.f32 %v1796, 1.0
        %v1799 = vsub.f32 %v1797, 1.0
        %v1800 = vsub.f32 %v1798, 1.0
        %v1801 = vsub.f32 %v1799, 1.0
        %v1802 = vsub.f32 %v1800, 1.0
        %v1803 = vsub.f32 %v1801, 1.0
        %v1804 = vsub.f32 %v1802, 1.0
        %v1805 = vsub.f32 %v1803, 1.0
        %v1806 = vsub.f32 %v1804, 1.0
        %v1807 = vsub.f32 %v1805, 1.0
        %v1808 = vsub.f32 %v1806, 1.0
        %v1809 = vsub.f32 %v1807, 1.0
        %v1810 = vsub.f32 %v1808, 1.0
        %v1811 = vsub.f32 %v1809, 1.0
        %v1812 = vsub.f32 %v1810, 1.0
        %v1813 = vsub.f32 %v1811, 1.0
        %v1814 = vsub.f32 %v1812, 1.0
        %v1815 = vsub.f32 %v1813, 1.0
        %v1816 = vsub.f32 %v1814, 1.0
        %v1817 = vsub.f32 %v1815, 1.0
        %v1818 = vsub.f32 %v1816, 1.0
        %vm1819 = vcmp.ge.f32.partialorder %v1795, 0.0
        %vm1820 = vcmp.ge.f32.partialorder %v1796, 0.0
        %v1821 = vsel %vm1819, 1.0, 0.0
        %v1822 = vsel %vm1820, 1.0, 0.0
        %vm1823 = vcmp.ge.f32.partialorder %v1797, 0.0
        %vm1824 = vcmp.ge.f32.partialorder %v1798, 0.0
        %v1825 = vsel %vm1823, 1.0, 0.0
        %v1826 = vsel %vm1824, 1.0, 0.0
        %vm1827 = vcmp.ge.f32.partialorder %v1799, 0.0
        %vm1828 = vcmp.ge.f32.partialorder %v1800, 0.0
        %v1829 = vsel %vm1827, 1.0, 0.0
        %v1830 = vsel %vm1828, 1.0, 0.0
        %vm1831 = vcmp.ge.f32.partialorder %v1801, 0.0
        %vm1832 = vcmp.ge.f32.partialorder %v1802, 0.0
        %v1833 = vsel %vm1831, 1.0, 0.0
        %v1834 = vsel %vm1832, 1.0, 0.0
        %vm1835 = vcmp.ge.f32.partialorder %v1803, 0.0
        %vm1836 = vcmp.ge.f32.partialorder %v1804, 0.0
        %v1837 = vsel %vm1835, 1.0, 0.0
        %v1838 = vsel %vm1836, 1.0, 0.0
        %vm1839 = vcmp.ge.f32.partialorder %v1805, 0.0
        %vm1840 = vcmp.ge.f32.partialorder %v1806, 0.0
        %v1841 = vsel %vm1839, 1.0, 0.0
        %v1842 = vsel %vm1840, 1.0, 0.0
        %vm1843 = vcmp.ge.f32.partialorder %v1807, 0.0
        %vm1844 = vcmp.ge.f32.partialorder %v1808, 0.0
        %v1845 = vsel %vm1843, 1.0, 0.0
        %v1846 = vsel %vm1844, 1.0, 0.0
        %vm1847 = vcmp.ge.f32.partialorder %v1809, 0.0
        %vm1848 = vcmp.ge.f32.partialorder %v1810, 0.0
        %v1849 = vsel %vm1847, 1.0, 0.0
        %v1850 = vsel %vm1848, 1.0, 0.0
        %vm1851 = vcmp.ge.f32.partialorder %v1811, 0.0
        %vm1852 = vcmp.ge.f32.partialorder %v1812, 0.0
        %v1853 = vsel %vm1851, 1.0, 0.0
        %v1854 = vsel %vm1852, 1.0, 0.0
        %vm1855 = vcmp.ge.f32.partialorder %v1813, 0.0
        %vm1856 = vcmp.ge.f32.partialorder %v1814, 0.0
        %v1857 = vsel %vm1855, 1.0, 0.0
        %v1858 = vsel %vm1856, 1.0, 0.0
        %vm1859 = vcmp.ge.f32.partialorder %v1815, 0.0
        %vm1860 = vcmp.ge.f32.partialorder %v1816, 0.0
        %v1861 = vsel %vm1859, 1.0, 0.0
        %v1862 = vsel %vm1860, 1.0, 0.0
        %vm1863 = vcmp.ge.f32.partialorder %v1817, 0.0
        %vm1864 = vcmp.ge.f32.partialorder %v1818, 0.0
        %v1865 = vsel %vm1863, 1.0, 0.0
        %v1866 = vsel %vm1864, 1.0, 0.0
        %v1867 = vsub.f32 %v1821, %v1825
        %v1868 = vsub.f32 %v1822, %v1826
        %v1869 = vsub.f32 %v1825, %v1829
        %v1870 = vsub.f32 %v1826, %v1830
        %v1871 = vsub.f32 %v1829, %v1833
        %v1872 = vsub.f32 %v1830, %v1834
        %v1873 = vsub.f32 %v1833, %v1837
        %v1874 = vsub.f32 %v1834, %v1838
        %v1875 = vsub.f32 %v1837, %v1841
        %v1876 = vsub.f32 %v1838, %v1842
        %v1877 = vsub.f32 %v1841, %v1845
        %v1878 = vsub.f32 %v1842, %v1846
        %v1879 = vsub.f32 %v1845, %v1849
        %v1880 = vsub.f32 %v1846, %v1850
        %v1881 = vsub.f32 %v1849, %v1853
        %v1882 = vsub.f32 %v1850, %v1854
        %v1883 = vsub.f32 %v1853, %v1857
        %v1884 = vsub.f32 %v1854, %v1858
        %v1885 = vsub.f32 %v1857, %v1861
        %v1886 = vsub.f32 %v1858, %v1862
        %v1887 = vsub.f32 %v1861, %v1865
        %v1888 = vsub.f32 %v1862, %v1866
        %v1889 = vmul.f32 %v1795, %v1867
        %v1890 = vmul.f32 %v1796, %v1868
        %v1891 = vmul.f32 %v1799, %v1869
        %v1892 = vmul.f32 %v1800, %v1870
        %v1893 = vsub.f32 %v1889, %v1891
        %v1894 = vsub.f32 %v1890, %v1892
        %v1895 = vmul.f32 %v1797, %v1869
        %v1896 = vmul.f32 %v1798, %v1870
        %v1897 = vmul.f32 %v1801, %v1871
        %v1898 = vmul.f32 %v1802, %v1872
        %v1899 = vsub.f32 %v1895, %v1897
        %v1900 = vsub.f32 %v1896, %v1898
        %v1901 = vmul.f32 %v1799, %v1871
        %v1902 = vmul.f32 %v1800, %v1872
        %v1903 = vmul.f32 %v1803, %v1873
        %v1904 = vmul.f32 %v1804, %v1874
        %v1905 = vsub.f32 %v1901, %v1903
        %v1906 = vsub.f32 %v1902, %v1904
        %v1907 = vmul.f32 %v1801, %v1873
        %v1908 = vmul.f32 %v1802, %v1874
        %v1909 = vmul.f32 %v1805, %v1875
        %v1910 = vmul.f32 %v1806, %v1876
        %v1911 = vsub.f32 %v1907, %v1909
        %v1912 = vsub.f32 %v1908, %v1910
        %v1913 = vmul.f32 %v1803, %v1875
        %v1914 = vmul.f32 %v1804, %v1876
        %v1915 = vmul.f32 %v1807, %v1877
        %v1916 = vmul.f32 %v1808, %v1878
        %v1917 = vsub.f32 %v1913, %v1915
        %v1918 = vsub.f32 %v1914, %v1916
        %v1919 = vmul.f32 %v1805, %v1877
        %v1920 = vmul.f32 %v1806, %v1878
        %v1921 = vmul.f32 %v1809, %v1879
        %v1922 = vmul.f32 %v1810, %v1880
        %v1923 = vsub.f32 %v1919, %v1921
        %v1924 = vsub.f32 %v1920, %v1922
        %v1925 = vmul.f32 %v1807, %v1879
        %v1926 = vmul.f32 %v1808, %v1880
        %v1927 = vmul.f32 %v1811, %v1881
        %v1928 = vmul.f32 %v1812, %v1882
        %v1929 = vsub.f32 %v1925, %v1927
        %v1930 = vsub.f32 %v1926, %v1928
        %v1931 = vmul.f32 %v1809, %v1881
        %v1932 = vmul.f32 %v1810, %v1882
        %v1933 = vmul.f32 %v1813, %v1883
        %v1934 = vmul.f32 %v1814, %v1884
        %v1935 = vsub.f32 %v1931, %v1933
        %v1936 = vsub.f32 %v1932, %v1934
        %v1937 = vmul.f32 %v1811, %v1883
        %v1938 = vmul.f32 %v1812, %v1884
        %v1939 = vmul.f32 %v1815, %v1885
        %v1940 = vmul.f32 %v1816, %v1886
        %v1941 = vsub.f32 %v1937, %v1939
        %v1942 = vsub.f32 %v1938, %v1940
        %v1943 = vmul.f32 %v1813, %v1885
        %v1944 = vmul.f32 %v1814, %v1886
        %v1945 = vmul.f32 %v1817, %v1887
        %v1946 = vmul.f32 %v1818, %v1888
        %v1947 = vsub.f32 %v1943, %v1945
        %v1948 = vsub.f32 %v1944, %v1946
        %v1949 = vmul.f32 %v1795, %v1893
        %v1950 = vmul.f32 %v1796, %v1894
        %v1951 = vmul.f32 %v1801, %v1899
        %v1952 = vmul.f32 %v1802, %v1900
        %v1953 = vsub.f32 %v1949, %v1951
        %v1954 = vsub.f32 %v1950, %v1952
        %v1955 = vmul.f32 %v1797, %v1899
        %v1956 = vmul.f32 %v1798, %v1900
        %v1957 = vmul.f32 %v1803, %v1905
        %v1958 = vmul.f32 %v1804, %v1906
        %v1959 = vsub.f32 %v1955, %v1957
        %v1960 = vsub.f32 %v1956, %v1958
        %v1961 = vmul.f32 %v1799, %v1905
        %v1962 = vmul.f32 %v1800, %v1906
        %v1963 = vmul.f32 %v1805, %v1911
        %v1964 = vmul.f32 %v1806, %v1912
        %v1965 = vsub.f32 %v1961, %v1963
        %v1966 = vsub.f32 %v1962, %v1964
        %v1967 = vmul.f32 %v1801, %v1911
        %v1968 = vmul.f32 %v1802, %v1912
        %v1969 = vmul.f32 %v1807, %v1917
        %v1970 = vmul.f32 %v1808, %v1918
        %v1971 = vsub.f32 %v1967, %v1969
        %v1972 = vsub.f32 %v1968, %v1970
        %v1973 = vmul.f32 %v1803, %v1917
        %v1974 = vmul.f32 %v1804, %v1918
        %v1975 = vmul.f32 %v1809, %v1923
        %v1976 = vmul.f32 %v1810, %v1924
        %v1977 = vsub.f32 %v1973, %v1975
        %v1978 = vsub.f32 %v1974, %v1976
        %v1979 = vmul.f32 %v1805, %v1923
        %v1980 = vmul.f32 %v1806, %v1924
        %v1981 = vmul.f32 %v1811, %v1929
        %v1982 = vmul.f32 %v1812, %v1930
        %v1983 = vsub.f32 %v1979, %v1981
        %v1984 = vsub.f32 %v1980, %v1982
        %v1985 = vmul.f32 %v1807, %v1929
        %v1986 = vmul.f32 %v1808, %v1930
        %v1987 = vmul.f32 %v1813, %v1935
        %v1988 = vmul.f32 %v1814, %v1936
        %v1989 = vsub.f32 %v1985, %v1987
        %v1990 = vsub.f32 %v1986, %v1988
        %v1991 = vmul.f32 %v1809, %v1935
        %v1992 = vmul.f32 %v1810, %v1936
        %v1993 = vmul.f32 %v1815, %v1941
        %v1994 = vmul.f32 %v1816, %v1942
        %v1995 = vsub.f32 %v1991, %v1993
        %v1996 = vsub.f32 %v1992, %v1994
        %v1997 = vmul.f32 %v1811, %v1941
        %v1998 = vmul.f32 %v1812, %v1942
        %v1999 = vmul.f32 %v1817, %v1947
        %v2000 = vmul.f32 %v1818, %v1948
        %v2001 = vsub.f32 %v1997, %v1999
        %v2002 = vsub.f32 %v1998, %v2000
        %v2003 = vmul.f32 %v1795, %v1953
        %v2004 = vmul.f32 %v1796, %v1954
        %v2005 = vmul.f32 %v1803, %v1959
        %v2006 = vmul.f32 %v1804, %v1960
        %v2007 = vsub.f32 %v2003, %v2005
        %v2008 = vsub.f32 %v2004, %v2006
        %v2009 = vmul.f32 %v1797, %v1959
        %v2010 = vmul.f32 %v1798, %v1960
        %v2011 = vmul.f32 %v1805, %v1965
        %v2012 = vmul.f32 %v1806, %v1966
        %v2013 = vsub.f32 %v2009, %v2011
        %v2014 = vsub.f32 %v2010, %v2012
        %v2015 = vmul.f32 %v1799, %v1965
        %v2016 = vmul.f32 %v1800, %v1966
        %v2017 = vmul.f32 %v1807, %v1971
        %v2018 = vmul.f32 %v1808, %v1972
        %v2019 = vsub.f32 %v2015, %v2017
        %v2020 = vsub.f32 %v2016, %v2018
        %v2021 = vmul.f32 %v1801, %v1971
        %v2022 = vmul.f32 %v1802, %v1972
        %v2023 = vmul.f32 %v1809, %v1977
        %v2024 = vmul.f32 %v1810, %v1978
        %v2025 = vsub.f32 %v2021, %v2023
        %v2026 = vsub.f32 %v2022, %v2024
        %v2027 = vmul.f32 %v1803, %v1977
        %v2028 = vmul.f32 %v1804, %v1978
        %v2029 = vmul.f32 %v1811, %v1983
        %v2030 = vmul.f32 %v1812, %v1984
        %v2031 = vsub.f32 %v2027, %v2029
        %v2032 = vsub.f32 %v2028, %v2030
        %v2033 = vmul.f32 %v1805, %v1983
        %v2034 = vmul.f32 %v1806, %v1984
        %v2035 = vmul.f32 %v1813, %v1989
        %v2036 = vmul.f32 %v1814, %v1990
        %v2037 = vsub.f32 %v2033, %v2035
        %v2038 = vsub.f32 %v2034, %v2036
        %v2039 = vmul.f32 %v1807, %v1989
        %v2040 = vmul.f32 %v1808, %v1990
        %v2041 = vmul.f32 %v1815, %v1995
        %v2042 = vmul.f32 %v1816, %v1996
        %v2043 = vsub.f32 %v2039, %v2041
        %v2044 = vsub.f32 %v2040, %v2042
        %v2045 = vmul.f32 %v1809, %v1995
        %v2046 = vmul.f32 %v1810, %v1996
        %v2047 = vmul.f32 %v1817, %v2001
        %v2048 = vmul.f32 %v1818, %v2002
        %v2049 = vsub.f32 %v2045, %v2047
        %v2050 = vsub.f32 %v2046, %v2048
        %v2051 = vld [vmem:[%s5] sm:$0xff]
        %v2052 = vld [vmem:[%s5 + $0x8] sm:$0xff]
        %v2053 = vld [vmem:[%s5 + $0x10] sm:$0xff]
        %v2054 = vld [vmem:[%s5 + $0x18] sm:$0xff]
        %vm2055 = vcmask 261120
        %v2057 = vsel %vm2055, %v2007, 0
        %v2060 = vsel %vm2055, %v2008, 0
        %2062 = vmatprep.subr.mxu0 0.0
        %2063 = vmatpush1.msra.mxu0 %v2051
        %2064 = vmatprep.subr.mxu0 0.0
        %2065 = vmatpush1.msra.mxu0 %v2052
        %2066 = vmatprep.subr.mxu0 0.0
        %2067 = vmatpush1.msra.mxu0 %v2053
        %2068 = vmatprep.subr.mxu0 0.0
        %2069 = vmatpush1.msra.mxu0 %v2054
        %2070 = vmatprep.subr.mxu0 0.0
        %2071 = vmatpush1.msra.mxu0 0.0
        %2072 = vmatprep.subr.mxu0 0.0
        %2073 = vmatpush1.msra.mxu0 0.0
        %2074 = vmatprep.subr.mxu0 0.0
        %2075 = vmatpush1.msra.mxu0 0.0
        %2076 = vmatprep.subr.mxu0 0.0
        %2077 = vmatpush1.msra.mxu0 0.0
        %2078 = vmatprep.subr.mxu0 0.0
        %2079 = vmatpush1.msra.mxu0 0.0
        %2080 = vmatprep.subr.mxu0 0.0
        %2081 = vmatpush1.msra.mxu0 0.0
        %2082 = vmatprep.subr.mxu0 0.0
        %2083 = vmatpush1.msra.mxu0 0.0
        %2084 = vmatprep.subr.mxu0 0.0
        %2085 = vmatpush1.msra.mxu0 0.0
        %2086 = vmatprep.subr.mxu0 0.0
        %2087 = vmatpush1.msra.mxu0 0.0
        %2088 = vmatprep.subr.mxu0 0.0
        %2089 = vmatpush1.msra.mxu0 0.0
        %2090 = vmatprep.subr.mxu0 0.0
        %2091 = vmatpush1.msra.mxu0 0.0
        %2092 = vmatprep.subr.mxu0 0.0
        %2093 = vmatpush1.msra.mxu0 0.0
        %2094 = vmatprep.subr.mxu0 0.0
        %2095 = vmatpush1.msra.mxu0 0.0
        %2096 = vmatprep.subr.mxu0 0.0
        %2097 = vmatpush1.msra.mxu0 0.0
        %2098 = vmatprep.subr.mxu0 0.0
        %2099 = vmatpush1.msra.mxu0 0.0
        %2100 = vmatprep.subr.mxu0 0.0
        %2101 = vmatpush1.msra.mxu0 0.0
        %2102 = vmatprep.subr.mxu0 0.0
        %2103 = vmatpush1.msra.mxu0 0.0
        %2104 = vmatprep.subr.mxu0 0.0
        %2105 = vmatpush1.msra.mxu0 0.0
        %2106 = vmatprep.subr.mxu0 0.0
        %2107 = vmatpush1.msra.mxu0 0.0
        %2108 = vmatprep.subr.mxu0 0.0
        %2109 = vmatpush1.msra.mxu0 0.0
        %2110 = vmatprep.subr.mxu0 0.0
        %2111 = vmatpush1.msra.mxu0 0.0
        %2112 = vmatprep.subr.mxu0 0.0
        %2113 = vmatpush1.msra.mxu0 0.0
        %2114 = vmatprep.subr.mxu0 0.0
        %2115 = vmatpush1.msra.mxu0 0.0
        %2116 = vmatprep.subr.mxu0 0.0
        %2117 = vmatpush1.msra.mxu0 0.0
        %2118 = vmatprep.subr.mxu0 0.0
        %2119 = vmatpush1.msra.mxu0 0.0
        %2120 = vmatprep.subr.mxu0 0.0
        %2121 = vmatpush1.msra.mxu0 0.0
        %2122 = vmatprep.subr.mxu0 0.0
        %2123 = vmatpush1.msra.mxu0 0.0
        %2124 = vmatprep.subr.mxu0 0.0
        %2125 = vmatpush1.msra.mxu0 0.0
        %2126 = vmatprep.mubr.f32.mxu0 0.0
        %2127 = vmatmul.mubr.f32.gmra.mrb[0].mxu0 %v2057
        %v2128 = vpop.f32.mrb[0].mxu0
        %v2129 = vadd.f32 0.0, %v2128
        %v2130 = vpop.f32.mrb[0].mxu0
        %2131 = vmatprep.mubr.f32.mxu0 0.0
        %2132 = vmatmul.mubr.f32.gmra.mrb[0].mxu0 %v2060
        %v2133 = vpop.f32.mrb[0].mxu0
        %v2134 = vadd.f32 0.0, %v2133
        %v2135 = vpop.f32.mrb[0].mxu0
        %2136 = vdwg.mxu0
        %v2138 = vsel %vm2055, %v1787, 0
        %v2141 = vsel %vm2055, %v1788, 0
        %2143 = vmatprep.subr.mxu0 0.0
        %2144 = vmatpush1.msra.mxu0 %v1789
        %2145 = vmatprep.subr.mxu0 0.0
        %2146 = vmatpush1.msra.mxu0 %v1790
        %2147 = vmatprep.subr.mxu0 0.0
        %2148 = vmatpush1.msra.mxu0 %v1791
        %2149 = vmatprep.subr.mxu0 0.0
        %2150 = vmatpush1.msra.mxu0 %v1792
        %2151 = vmatprep.subr.mxu0 0.0
        %2152 = vmatpush1.msra.mxu0 0.0
        %2153 = vmatprep.subr.mxu0 0.0
        %2154 = vmatpush1.msra.mxu0 0.0
        %2155 = vmatprep.subr.mxu0 0.0
        %2156 = vmatpush1.msra.mxu0 0.0
        %2157 = vmatprep.subr.mxu0 0.0
        %2158 = vmatpush1.msra.mxu0 0.0
        %2159 = vmatprep.subr.mxu0 0.0
        %2160 = vmatpush1.msra.mxu0 0.0
        %2161 = vmatprep.subr.mxu0 0.0
        %2162 = vmatpush1.msra.mxu0 0.0
        %2163 = vmatprep.subr.mxu0 0.0
        %2164 = vmatpush1.msra.mxu0 0.0
        %2165 = vmatprep.subr.mxu0 0.0
        %2166 = vmatpush1.msra.mxu0 0.0
        %2167 = vmatprep.subr.mxu0 0.0
        %2168 = vmatpush1.msra.mxu0 0.0
        %2169 = vmatprep.subr.mxu0 0.0
        %2170 = vmatpush1.msra.mxu0 0.0
        %2171 = vmatprep.subr.mxu0 0.0
        %2172 = vmatpush1.msra.mxu0 0.0
        %2173 = vmatprep.subr.mxu0 0.0
        %2174 = vmatpush1.msra.mxu0 0.0
        %2175 = vmatprep.subr.mxu0 0.0
        %2176 = vmatpush1.msra.mxu0 0.0
        %2177 = vmatprep.subr.mxu0 0.0
        %2178 = vmatpush1.msra.mxu0 0.0
        %2179 = vmatprep.subr.mxu0 0.0
        %2180 = vmatpush1.msra.mxu0 0.0
        %2181 = vmatprep.subr.mxu0 0.0
        %2182 = vmatpush1.msra.mxu0 0.0
        %2183 = vmatprep.subr.mxu0 0.0
        %2184 = vmatpush1.msra.mxu0 0.0
        %2185 = vmatprep.subr.mxu0 0.0
        %2186 = vmatpush1.msra.mxu0 0.0
        %2187 = vmatprep.subr.mxu0 0.0
        %2188 = vmatpush1.msra.mxu0 0.0
        %2189 = vmatprep.subr.mxu0 0.0
        %2190 = vmatpush1.msra.mxu0 0.0
        %2191 = vmatprep.subr.mxu0 0.0
        %2192 = vmatpush1.msra.mxu0 0.0
        %2193 = vmatprep.subr.mxu0 0.0
        %2194 = vmatpush1.msra.mxu0 0.0
        %2195 = vmatprep.subr.mxu0 0.0
        %2196 = vmatpush1.msra.mxu0 0.0
        %2197 = vmatprep.subr.mxu0 0.0
        %2198 = vmatpush1.msra.mxu0 0.0
        %2199 = vmatprep.subr.mxu0 0.0
        %2200 = vmatpush1.msra.mxu0 0.0
        %2201 = vmatprep.subr.mxu0 0.0
        %2202 = vmatpush1.msra.mxu0 0.0
        %2203 = vmatprep.subr.mxu0 0.0
        %2204 = vmatpush1.msra.mxu0 0.0
        %2205 = vmatprep.subr.mxu0 0.0
        %2206 = vmatpush1.msra.mxu0 0.0
        %2207 = vmatprep.mubr.f32.mxu0 0.0
        %2208 = vmatmul.mubr.f32.gmra.mrb[0].mxu0 %v2138
        %v2209 = vpop.f32.mrb[0].mxu0
        %v2210 = vadd.f32 %v2129, %v2209
        %v2211 = vpop.f32.mrb[0].mxu0
        %2212 = vmatprep.mubr.f32.mxu0 0.0
        %2213 = vmatmul.mubr.f32.gmra.mrb[0].mxu0 %v2141
        %v2214 = vpop.f32.mrb[0].mxu0
        %v2215 = vadd.f32 %v2134, %v2214
        %v2216 = vpop.f32.mrb[0].mxu0
        %2217 = vdwg.mxu0
        %s2218 = scalar_lea.vmem %s5, 32
        %v2219 = vld [vmem:[%s2218] sm:$0xff]
        %v2220 = vld [vmem:[%s2218 + $0x8] sm:$0xff]
        %v2221 = vld [vmem:[%s2218 + $0x10] sm:$0xff]
        %v2222 = vld [vmem:[%s2218 + $0x18] sm:$0xff]
        %v2224 = vsel %vm2055, %v2013, 0
        %v2227 = vsel %vm2055, %v2014, 0
        %2229 = vmatprep.subr.mxu0 0.0
        %2230 = vmatpush1.msra.mxu0 %v2219
        %2231 = vmatprep.subr.mxu0 0.0
        %2232 = vmatpush1.msra.mxu0 %v2220
        %2233 = vmatprep.subr.mxu0 0.0
        %2234 = vmatpush1.msra.mxu0 %v2221
        %2235 = vmatprep.subr.mxu0 0.0
        %2236 = vmatpush1.msra.mxu0 %v2222
        %2237 = vmatprep.subr.mxu0 0.0
        %2238 = vmatpush1.msra.mxu0 0.0
        %2239 = vmatprep.subr.mxu0 0.0
        %2240 = vmatpush1.msra.mxu0 0.0
        %2241 = vmatprep.subr.mxu0 0.0
        %2242 = vmatpush1.msra.mxu0 0.0
        %2243 = vmatprep.subr.mxu0 0.0
        %2244 = vmatpush1.msra.mxu0 0.0
        %2245 = vmatprep.subr.mxu0 0.0
        %2246 = vmatpush1.msra.mxu0 0.0
        %2247 = vmatprep.subr.mxu0 0.0
        %2248 = vmatpush1.msra.mxu0 0.0
        %2249 = vmatprep.subr.mxu0 0.0
        %2250 = vmatpush1.msra.mxu0 0.0
        %2251 = vmatprep.subr.mxu0 0.0
        %2252 = vmatpush1.msra.mxu0 0.0
        %2253 = vmatprep.subr.mxu0 0.0
        %2254 = vmatpush1.msra.mxu0 0.0
        %2255 = vmatprep.subr.mxu0 0.0
        %2256 = vmatpush1.msra.mxu0 0.0
        %2257 = vmatprep.subr.mxu0 0.0
        %2258 = vmatpush1.msra.mxu0 0.0
        %2259 = vmatprep.subr.mxu0 0.0
        %2260 = vmatpush1.msra.mxu0 0.0
        %2261 = vmatprep.subr.mxu0 0.0
        %2262 = vmatpush1.msra.mxu0 0.0
        %2263 = vmatprep.subr.mxu0 0.0
        %2264 = vmatpush1.msra.mxu0 0.0
        %2265 = vmatprep.subr.mxu0 0.0
        %2266 = vmatpush1.msra.mxu0 0.0
        %2267 = vmatprep.subr.mxu0 0.0
        %2268 = vmatpush1.msra.mxu0 0.0
        %2269 = vmatprep.subr.mxu0 0.0
        %2270 = vmatpush1.msra.mxu0 0.0
        %2271 = vmatprep.subr.mxu0 0.0
        %2272 = vmatpush1.msra.mxu0 0.0
        %2273 = vmatprep.subr.mxu0 0.0
        %2274 = vmatpush1.msra.mxu0 0.0
        %2275 = vmatprep.subr.mxu0 0.0
        %2276 = vmatpush1.msra.mxu0 0.0
        %2277 = vmatprep.subr.mxu0 0.0
        %2278 = vmatpush1.msra.mxu0 0.0
        %2279 = vmatprep.subr.mxu0 0.0
        %2280 = vmatpush1.msra.mxu0 0.0
        %2281 = vmatprep.subr.mxu0 0.0
        %2282 = vmatpush1.msra.mxu0 0.0
        %2283 = vmatprep.subr.mxu0 0.0
        %2284 = vmatpush1.msra.mxu0 0.0
        %2285 = vmatprep.subr.mxu0 0.0
        %2286 = vmatpush1.msra.mxu0 0.0
        %2287 = vmatprep.subr.mxu0 0.0
        %2288 = vmatpush1.msra.mxu0 0.0
        %2289 = vmatprep.subr.mxu0 0.0
        %2290 = vmatpush1.msra.mxu0 0.0
        %2291 = vmatprep.subr.mxu0 0.0
        %2292 = vmatpush1.msra.mxu0 0.0
        %2293 = vmatprep.mubr.f32.mxu0 0.0
        %2294 = vmatmul.mubr.f32.gmra.mrb[0].mxu0 %v2224
        %v2295 = vpop.f32.mrb[0].mxu0
        %v2296 = vadd.f32 0.0, %v2295
        %v2297 = vpop.f32.mrb[0].mxu0
        %2298 = vmatprep.mubr.f32.mxu0 0.0
        %2299 = vmatmul.mubr.f32.gmra.mrb[0].mxu0 %v2227
        %v2300 = vpop.f32.mrb[0].mxu0
        %v2301 = vadd.f32 0.0, %v2300
        %v2302 = vpop.f32.mrb[0].mxu0
        %2303 = vdwg.mxu0
        %v2304 = vadd.f32 %v2210, %v2296
        %v2305 = vadd.f32 %v2215, %v2301
        %s2306 = scalar_lea.vmem %s5, 64
        %v2307 = vld [vmem:[%s2306] sm:$0xff]
        %v2308 = vld [vmem:[%s2306 + $0x8] sm:$0xff]
        %v2309 = vld [vmem:[%s2306 + $0x10] sm:$0xff]
        %v2310 = vld [vmem:[%s2306 + $0x18] sm:$0xff]
        %v2312 = vsel %vm2055, %v2019, 0
        %v2315 = vsel %vm2055, %v2020, 0
        %2317 = vmatprep.subr.mxu0 0.0
        %2318 = vmatpush1.msra.mxu0 %v2307
        %2319 = vmatprep.subr.mxu0 0.0
        %2320 = vmatpush1.msra.mxu0 %v2308
        %2321 = vmatprep.subr.mxu0 0.0
        %2322 = vmatpush1.msra.mxu0 %v2309
        %2323 = vmatprep.subr.mxu0 0.0
        %2324 = vmatpush1.msra.mxu0 %v2310
        %2325 = vmatprep.subr.mxu0 0.0
        %2326 = vmatpush1.msra.mxu0 0.0
        %2327 = vmatprep.subr.mxu0 0.0
        %2328 = vmatpush1.msra.mxu0 0.0
        %2329 = vmatprep.subr.mxu0 0.0
        %2330 = vmatpush1.msra.mxu0 0.0
        %2331 = vmatprep.subr.mxu0 0.0
        %2332 = vmatpush1.msra.mxu0 0.0
        %2333 = vmatprep.subr.mxu0 0.0
        %2334 = vmatpush1.msra.mxu0 0.0
        %2335 = vmatprep.subr.mxu0 0.0
        %2336 = vmatpush1.msra.mxu0 0.0
        %2337 = vmatprep.subr.mxu0 0.0
        %2338 = vmatpush1.msra.mxu0 0.0
        %2339 = vmatprep.subr.mxu0 0.0
        %2340 = vmatpush1.msra.mxu0 0.0
        %2341 = vmatprep.subr.mxu0 0.0
        %2342 = vmatpush1.msra.mxu0 0.0
        %2343 = vmatprep.subr.mxu0 0.0
        %2344 = vmatpush1.msra.mxu0 0.0
        %2345 = vmatprep.subr.mxu0 0.0
        %2346 = vmatpush1.msra.mxu0 0.0
        %2347 = vmatprep.subr.mxu0 0.0
        %2348 = vmatpush1.msra.mxu0 0.0
        %2349 = vmatprep.subr.mxu0 0.0
        %2350 = vmatpush1.msra.mxu0 0.0
        %2351 = vmatprep.subr.mxu0 0.0
        %2352 = vmatpush1.msra.mxu0 0.0
        %2353 = vmatprep.subr.mxu0 0.0
        %2354 = vmatpush1.msra.mxu0 0.0
        %2355 = vmatprep.subr.mxu0 0.0
        %2356 = vmatpush1.msra.mxu0 0.0
        %2357 = vmatprep.subr.mxu0 0.0
        %2358 = vmatpush1.msra.mxu0 0.0
        %2359 = vmatprep.subr.mxu0 0.0
        %2360 = vmatpush1.msra.mxu0 0.0
        %2361 = vmatprep.subr.mxu0 0.0
        %2362 = vmatpush1.msra.mxu0 0.0
        %2363 = vmatprep.subr.mxu0 0.0
        %2364 = vmatpush1.msra.mxu0 0.0
        %2365 = vmatprep.subr.mxu0 0.0
        %2366 = vmatpush1.msra.mxu0 0.0
        %2367 = vmatprep.subr.mxu0 0.0
        %2368 = vmatpush1.msra.mxu0 0.0
        %2369 = vmatprep.subr.mxu0 0.0
        %2370 = vmatpush1.msra.mxu0 0.0
        %2371 = vmatprep.subr.mxu0 0.0
        %2372 = vmatpush1.msra.mxu0 0.0
        %2373 = vmatprep.subr.mxu0 0.0
        %2374 = vmatpush1.msra.mxu0 0.0
        %2375 = vmatprep.subr.mxu0 0.0
        %2376 = vmatpush1.msra.mxu0 0.0
        %2377 = vmatprep.subr.mxu0 0.0
        %2378 = vmatpush1.msra.mxu0 0.0
        %2379 = vmatprep.subr.mxu0 0.0
        %2380 = vmatpush1.msra.mxu0 0.0
        %2381 = vmatprep.mubr.f32.mxu0 0.0
        %2382 = vmatmul.mubr.f32.gmra.mrb[0].mxu0 %v2312
        %v2383 = vpop.f32.mrb[0].mxu0
        %v2384 = vadd.f32 0.0, %v2383
        %v2385 = vpop.f32.mrb[0].mxu0
        %2386 = vmatprep.mubr.f32.mxu0 0.0
        %2387 = vmatmul.mubr.f32.gmra.mrb[0].mxu0 %v2315
        %v2388 = vpop.f32.mrb[0].mxu0
        %v2389 = vadd.f32 0.0, %v2388
        %v2390 = vpop.f32.mrb[0].mxu0
        %2391 = vdwg.mxu0
        %v2392 = vadd.f32 %v2304, %v2384
        %v2393 = vadd.f32 %v2305, %v2389
        %s2394 = scalar_lea.vmem %s5, 96
        %v2395 = vld [vmem:[%s2394] sm:$0xff]
        %v2396 = vld [vmem:[%s2394 + $0x8] sm:$0xff]
        %v2397 = vld [vmem:[%s2394 + $0x10] sm:$0xff]
        %v2398 = vld [vmem:[%s2394 + $0x18] sm:$0xff]
        %v2400 = vsel %vm2055, %v2025, 0
        %v2403 = vsel %vm2055, %v2026, 0
        %2405 = vmatprep.subr.mxu0 0.0
        %2406 = vmatpush1.msra.mxu0 %v2395
        %2407 = vmatprep.subr.mxu0 0.0
        %2408 = vmatpush1.msra.mxu0 %v2396
        %2409 = vmatprep.subr.mxu0 0.0
        %2410 = vmatpush1.msra.mxu0 %v2397
        %2411 = vmatprep.subr.mxu0 0.0
        %2412 = vmatpush1.msra.mxu0 %v2398
        %2413 = vmatprep.subr.mxu0 0.0
        %2414 = vmatpush1.msra.mxu0 0.0
        %2415 = vmatprep.subr.mxu0 0.0
        %2416 = vmatpush1.msra.mxu0 0.0
        %2417 = vmatprep.subr.mxu0 0.0
        %2418 = vmatpush1.msra.mxu0 0.0
        %2419 = vmatprep.subr.mxu0 0.0
        %2420 = vmatpush1.msra.mxu0 0.0
        %2421 = vmatprep.subr.mxu0 0.0
        %2422 = vmatpush1.msra.mxu0 0.0
        %2423 = vmatprep.subr.mxu0 0.0
        %2424 = vmatpush1.msra.mxu0 0.0
        %2425 = vmatprep.subr.mxu0 0.0
        %2426 = vmatpush1.msra.mxu0 0.0
        %2427 = vmatprep.subr.mxu0 0.0
        %2428 = vmatpush1.msra.mxu0 0.0
        %2429 = vmatprep.subr.mxu0 0.0
        %2430 = vmatpush1.msra.mxu0 0.0
        %2431 = vmatprep.subr.mxu0 0.0
        %2432 = vmatpush1.msra.mxu0 0.0
        %2433 = vmatprep.subr.mxu0 0.0
        %2434 = vmatpush1.msra.mxu0 0.0
        %2435 = vmatprep.subr.mxu0 0.0
        %2436 = vmatpush1.msra.mxu0 0.0
        %2437 = vmatprep.subr.mxu0 0.0
        %2438 = vmatpush1.msra.mxu0 0.0
        %2439 = vmatprep.subr.mxu0 0.0
        %2440 = vmatpush1.msra.mxu0 0.0
        %2441 = vmatprep.subr.mxu0 0.0
        %2442 = vmatpush1.msra.mxu0 0.0
        %2443 = vmatprep.subr.mxu0 0.0
        %2444 = vmatpush1.msra.mxu0 0.0
        %2445 = vmatprep.subr.mxu0 0.0
        %2446 = vmatpush1.msra.mxu0 0.0
        %2447 = vmatprep.subr.mxu0 0.0
        %2448 = vmatpush1.msra.mxu0 0.0
        %2449 = vmatprep.subr.mxu0 0.0
        %2450 = vmatpush1.msra.mxu0 0.0
        %2451 = vmatprep.subr.mxu0 0.0
        %2452 = vmatpush1.msra.mxu0 0.0
        %2453 = vmatprep.subr.mxu0 0.0
        %2454 = vmatpush1.msra.mxu0 0.0
        %2455 = vmatprep.subr.mxu0 0.0
        %2456 = vmatpush1.msra.mxu0 0.0
        %2457 = vmatprep.subr.mxu0 0.0
        %2458 = vmatpush1.msra.mxu0 0.0
        %2459 = vmatprep.subr.mxu0 0.0
        %2460 = vmatpush1.msra.mxu0 0.0
        %2461 = vmatprep.subr.mxu0 0.0
        %2462 = vmatpush1.msra.mxu0 0.0
        %2463 = vmatprep.subr.mxu0 0.0
        %2464 = vmatpush1.msra.mxu0 0.0
        %2465 = vmatprep.subr.mxu0 0.0
        %2466 = vmatpush1.msra.mxu0 0.0
        %2467 = vmatprep.subr.mxu0 0.0
        %2468 = vmatpush1.msra.mxu0 0.0
        %2469 = vmatprep.mubr.f32.mxu0 0.0
        %2470 = vmatmul.mubr.f32.gmra.mrb[0].mxu0 %v2400
        %v2471 = vpop.f32.mrb[0].mxu0
        %v2472 = vadd.f32 0.0, %v2471
        %v2473 = vpop.f32.mrb[0].mxu0
        %2474 = vmatprep.mubr.f32.mxu0 0.0
        %2475 = vmatmul.mubr.f32.gmra.mrb[0].mxu0 %v2403
        %v2476 = vpop.f32.mrb[0].mxu0
        %v2477 = vadd.f32 0.0, %v2476
        %v2478 = vpop.f32.mrb[0].mxu0
        %2479 = vdwg.mxu0
        %v2480 = vadd.f32 %v2392, %v2472
        %v2481 = vadd.f32 %v2393, %v2477
        %s2482 = scalar_lea.vmem %s5, 128
        %v2483 = vld [vmem:[%s2482] sm:$0xff]
        %v2484 = vld [vmem:[%s2482 + $0x8] sm:$0xff]
        %v2485 = vld [vmem:[%s2482 + $0x10] sm:$0xff]
        %v2486 = vld [vmem:[%s2482 + $0x18] sm:$0xff]
        %v2488 = vsel %vm2055, %v2031, 0
        %v2491 = vsel %vm2055, %v2032, 0
        %2493 = vmatprep.subr.mxu0 0.0
        %2494 = vmatpush1.msra.mxu0 %v2483
        %2495 = vmatprep.subr.mxu0 0.0
        %2496 = vmatpush1.msra.mxu0 %v2484
        %2497 = vmatprep.subr.mxu0 0.0
        %2498 = vmatpush1.msra.mxu0 %v2485
        %2499 = vmatprep.subr.mxu0 0.0
        %2500 = vmatpush1.msra.mxu0 %v2486
        %2501 = vmatprep.subr.mxu0 0.0
        %2502 = vmatpush1.msra.mxu0 0.0
        %2503 = vmatprep.subr.mxu0 0.0
        %2504 = vmatpush1.msra.mxu0 0.0
        %2505 = vmatprep.subr.mxu0 0.0
        %2506 = vmatpush1.msra.mxu0 0.0
        %2507 = vmatprep.subr.mxu0 0.0
        %2508 = vmatpush1.msra.mxu0 0.0
        %2509 = vmatprep.subr.mxu0 0.0
        %2510 = vmatpush1.msra.mxu0 0.0
        %2511 = vmatprep.subr.mxu0 0.0
        %2512 = vmatpush1.msra.mxu0 0.0
        %2513 = vmatprep.subr.mxu0 0.0
        %2514 = vmatpush1.msra.mxu0 0.0
        %2515 = vmatprep.subr.mxu0 0.0
        %2516 = vmatpush1.msra.mxu0 0.0
        %2517 = vmatprep.subr.mxu0 0.0
        %2518 = vmatpush1.msra.mxu0 0.0
        %2519 = vmatprep.subr.mxu0 0.0
        %2520 = vmatpush1.msra.mxu0 0.0
        %2521 = vmatprep.subr.mxu0 0.0
        %2522 = vmatpush1.msra.mxu0 0.0
        %2523 = vmatprep.subr.mxu0 0.0
        %2524 = vmatpush1.msra.mxu0 0.0
        %2525 = vmatprep.subr.mxu0 0.0
        %2526 = vmatpush1.msra.mxu0 0.0
        %2527 = vmatprep.subr.mxu0 0.0
        %2528 = vmatpush1.msra.mxu0 0.0
        %2529 = vmatprep.subr.mxu0 0.0
        %2530 = vmatpush1.msra.mxu0 0.0
        %2531 = vmatprep.subr.mxu0 0.0
        %2532 = vmatpush1.msra.mxu0 0.0
        %2533 = vmatprep.subr.mxu0 0.0
        %2534 = vmatpush1.msra.mxu0 0.0
        %2535 = vmatprep.subr.mxu0 0.0
        %2536 = vmatpush1.msra.mxu0 0.0
        %2537 = vmatprep.subr.mxu0 0.0
        %2538 = vmatpush1.msra.mxu0 0.0
        %2539 = vmatprep.subr.mxu0 0.0
        %2540 = vmatpush1.msra.mxu0 0.0
        %2541 = vmatprep.subr.mxu0 0.0
        %2542 = vmatpush1.msra.mxu0 0.0
        %2543 = vmatprep.subr.mxu0 0.0
        %2544 = vmatpush1.msra.mxu0 0.0
        %2545 = vmatprep.subr.mxu0 0.0
        %2546 = vmatpush1.msra.mxu0 0.0
        %2547 = vmatprep.subr.mxu0 0.0
        %2548 = vmatpush1.msra.mxu0 0.0
        %2549 = vmatprep.subr.mxu0 0.0
        %2550 = vmatpush1.msra.mxu0 0.0
        %2551 = vmatprep.subr.mxu0 0.0
        %2552 = vmatpush1.msra.mxu0 0.0
        %2553 = vmatprep.subr.mxu0 0.0
        %2554 = vmatpush1.msra.mxu0 0.0
        %2555 = vmatprep.subr.mxu0 0.0
        %2556 = vmatpush1.msra.mxu0 0.0
        %2557 = vmatprep.mubr.f32.mxu0 0.0
        %2558 = vmatmul.mubr.f32.gmra.mrb[0].mxu0 %v2488
        %v2559 = vpop.f32.mrb[0].mxu0
        %v2560 = vadd.f32 0.0, %v2559
        %v2561 = vpop.f32.mrb[0].mxu0
        %2562 = vmatprep.mubr.f32.mxu0 0.0
        %2563 = vmatmul.mubr.f32.gmra.mrb[0].mxu0 %v2491
        %v2564 = vpop.f32.mrb[0].mxu0
        %v2565 = vadd.f32 0.0, %v2564
        %v2566 = vpop.f32.mrb[0].mxu0
        %2567 = vdwg.mxu0
        %v2568 = vadd.f32 %v2480, %v2560
        %v2569 = vadd.f32 %v2481, %v2565
        %s2570 = scalar_lea.vmem %s5, 160
        %v2571 = vld [vmem:[%s2570] sm:$0xff]
        %v2572 = vld [vmem:[%s2570 + $0x8] sm:$0xff]
        %v2573 = vld [vmem:[%s2570 + $0x10] sm:$0xff]
        %v2574 = vld [vmem:[%s2570 + $0x18] sm:$0xff]
        %v2576 = vsel %vm2055, %v2037, 0
        %v2579 = vsel %vm2055, %v2038, 0
        %2581 = vmatprep.subr.mxu0 0.0
        %2582 = vmatpush1.msra.mxu0 %v2571
        %2583 = vmatprep.subr.mxu0 0.0
        %2584 = vmatpush1.msra.mxu0 %v2572
        %2585 = vmatprep.subr.mxu0 0.0
        %2586 = vmatpush1.msra.mxu0 %v2573
        %2587 = vmatprep.subr.mxu0 0.0
        %2588 = vmatpush1.msra.mxu0 %v2574
        %2589 = vmatprep.subr.mxu0 0.0
        %2590 = vmatpush1.msra.mxu0 0.0
        %2591 = vmatprep.subr.mxu0 0.0
        %2592 = vmatpush1.msra.mxu0 0.0
        %2593 = vmatprep.subr.mxu0 0.0
        %2594 = vmatpush1.msra.mxu0 0.0
        %2595 = vmatprep.subr.mxu0 0.0
        %2596 = vmatpush1.msra.mxu0 0.0
        %2597 = vmatprep.subr.mxu0 0.0
        %2598 = vmatpush1.msra.mxu0 0.0
        %2599 = vmatprep.subr.mxu0 0.0
        %2600 = vmatpush1.msra.mxu0 0.0
        %2601 = vmatprep.subr.mxu0 0.0
        %2602 = vmatpush1.msra.mxu0 0.0
        %2603 = vmatprep.subr.mxu0 0.0
        %2604 = vmatpush1.msra.mxu0 0.0
        %2605 = vmatprep.subr.mxu0 0.0
        %2606 = vmatpush1.msra.mxu0 0.0
        %2607 = vmatprep.subr.mxu0 0.0
        %2608 = vmatpush1.msra.mxu0 0.0
        %2609 = vmatprep.subr.mxu0 0.0
        %2610 = vmatpush1.msra.mxu0 0.0
        %2611 = vmatprep.subr.mxu0 0.0
        %2612 = vmatpush1.msra.mxu0 0.0
        %2613 = vmatprep.subr.mxu0 0.0
        %2614 = vmatpush1.msra.mxu0 0.0
        %2615 = vmatprep.subr.mxu0 0.0
        %2616 = vmatpush1.msra.mxu0 0.0
        %2617 = vmatprep.subr.mxu0 0.0
        %2618 = vmatpush1.msra.mxu0 0.0
        %2619 = vmatprep.subr.mxu0 0.0
        %2620 = vmatpush1.msra.mxu0 0.0
        %2621 = vmatprep.subr.mxu0 0.0
        %2622 = vmatpush1.msra.mxu0 0.0
        %2623 = vmatprep.subr.mxu0 0.0
        %2624 = vmatpush1.msra.mxu0 0.0
        %2625 = vmatprep.subr.mxu0 0.0
        %2626 = vmatpush1.msra.mxu0 0.0
        %2627 = vmatprep.subr.mxu0 0.0
        %2628 = vmatpush1.msra.mxu0 0.0
        %2629 = vmatprep.subr.mxu0 0.0
        %2630 = vmatpush1.msra.mxu0 0.0
        %2631 = vmatprep.subr.mxu0 0.0
        %2632 = vmatpush1.msra.mxu0 0.0
        %2633 = vmatprep.subr.mxu0 0.0
        %2634 = vmatpush1.msra.mxu0 0.0
        %2635 = vmatprep.subr.mxu0 0.0
        %2636 = vmatpush1.msra.mxu0 0.0
        %2637 = vmatprep.subr.mxu0 0.0
        %2638 = vmatpush1.msra.mxu0 0.0
        %2639 = vmatprep.subr.mxu0 0.0
        %2640 = vmatpush1.msra.mxu0 0.0
        %2641 = vmatprep.subr.mxu0 0.0
        %2642 = vmatpush1.msra.mxu0 0.0
        %2643 = vmatprep.subr.mxu0 0.0
        %2644 = vmatpush1.msra.mxu0 0.0
        %2645 = vmatprep.mubr.f32.mxu0 0.0
        %2646 = vmatmul.mubr.f32.gmra.mrb[0].mxu0 %v2576
        %v2647 = vpop.f32.mrb[0].mxu0
        %v2648 = vadd.f32 0.0, %v2647
        %v2649 = vpop.f32.mrb[0].mxu0
        %2650 = vmatprep.mubr.f32.mxu0 0.0
        %2651 = vmatmul.mubr.f32.gmra.mrb[0].mxu0 %v2579
        %v2652 = vpop.f32.mrb[0].mxu0
        %v2653 = vadd.f32 0.0, %v2652
        %v2654 = vpop.f32.mrb[0].mxu0
        %2655 = vdwg.mxu0
        %v2656 = vadd.f32 %v2568, %v2648
        %v2657 = vadd.f32 %v2569, %v2653
        %s2658 = scalar_lea.vmem %s5, 192
        %v2659 = vld [vmem:[%s2658] sm:$0xff]
        %v2660 = vld [vmem:[%s2658 + $0x8] sm:$0xff]
        %v2661 = vld [vmem:[%s2658 + $0x10] sm:$0xff]
        %v2662 = vld [vmem:[%s2658 + $0x18] sm:$0xff]
        %v2664 = vsel %vm2055, %v2043, 0
        %v2667 = vsel %vm2055, %v2044, 0
        %2669 = vmatprep.subr.mxu0 0.0
        %2670 = vmatpush1.msra.mxu0 %v2659
        %2671 = vmatprep.subr.mxu0 0.0
        %2672 = vmatpush1.msra.mxu0 %v2660
        %2673 = vmatprep.subr.mxu0 0.0
        %2674 = vmatpush1.msra.mxu0 %v2661
        %2675 = vmatprep.subr.mxu0 0.0
        %2676 = vmatpush1.msra.mxu0 %v2662
        %2677 = vmatprep.subr.mxu0 0.0
        %2678 = vmatpush1.msra.mxu0 0.0
        %2679 = vmatprep.subr.mxu0 0.0
        %2680 = vmatpush1.msra.mxu0 0.0
        %2681 = vmatprep.subr.mxu0 0.0
        %2682 = vmatpush1.msra.mxu0 0.0
        %2683 = vmatprep.subr.mxu0 0.0
        %2684 = vmatpush1.msra.mxu0 0.0
        %2685 = vmatprep.subr.mxu0 0.0
        %2686 = vmatpush1.msra.mxu0 0.0
        %2687 = vmatprep.subr.mxu0 0.0
        %2688 = vmatpush1.msra.mxu0 0.0
        %2689 = vmatprep.subr.mxu0 0.0
        %2690 = vmatpush1.msra.mxu0 0.0
        %2691 = vmatprep.subr.mxu0 0.0
        %2692 = vmatpush1.msra.mxu0 0.0
        %2693 = vmatprep.subr.mxu0 0.0
        %2694 = vmatpush1.msra.mxu0 0.0
        %2695 = vmatprep.subr.mxu0 0.0
        %2696 = vmatpush1.msra.mxu0 0.0
        %2697 = vmatprep.subr.mxu0 0.0
        %2698 = vmatpush1.msra.mxu0 0.0
        %2699 = vmatprep.subr.mxu0 0.0
        %2700 = vmatpush1.msra.mxu0 0.0
        %2701 = vmatprep.subr.mxu0 0.0
        %2702 = vmatpush1.msra.mxu0 0.0
        %2703 = vmatprep.subr.mxu0 0.0
        %2704 = vmatpush1.msra.mxu0 0.0
        %2705 = vmatprep.subr.mxu0 0.0
        %2706 = vmatpush1.msra.mxu0 0.0
        %2707 = vmatprep.subr.mxu0 0.0
        %2708 = vmatpush1.msra.mxu0 0.0
        %2709 = vmatprep.subr.mxu0 0.0
        %2710 = vmatpush1.msra.mxu0 0.0
        %2711 = vmatprep.subr.mxu0 0.0
        %2712 = vmatpush1.msra.mxu0 0.0
        %2713 = vmatprep.subr.mxu0 0.0
        %2714 = vmatpush1.msra.mxu0 0.0
        %2715 = vmatprep.subr.mxu0 0.0
        %2716 = vmatpush1.msra.mxu0 0.0
        %2717 = vmatprep.subr.mxu0 0.0
        %2718 = vmatpush1.msra.mxu0 0.0
        %2719 = vmatprep.subr.mxu0 0.0
        %2720 = vmatpush1.msra.mxu0 0.0
        %2721 = vmatprep.subr.mxu0 0.0
        %2722 = vmatpush1.msra.mxu0 0.0
        %2723 = vmatprep.subr.mxu0 0.0
        %2724 = vmatpush1.msra.mxu0 0.0
        %2725 = vmatprep.subr.mxu0 0.0
        %2726 = vmatpush1.msra.mxu0 0.0
        %2727 = vmatprep.subr.mxu0 0.0
        %2728 = vmatpush1.msra.mxu0 0.0
        %2729 = vmatprep.subr.mxu0 0.0
        %2730 = vmatpush1.msra.mxu0 0.0
        %2731 = vmatprep.subr.mxu0 0.0
        %2732 = vmatpush1.msra.mxu0 0.0
        %2733 = vmatprep.mubr.f32.mxu0 0.0
        %2734 = vmatmul.mubr.f32.gmra.mrb[0].mxu0 %v2664
        %v2735 = vpop.f32.mrb[0].mxu0
        %v2736 = vadd.f32 0.0, %v2735
        %v2737 = vpop.f32.mrb[0].mxu0
        %2738 = vmatprep.mubr.f32.mxu0 0.0
        %2739 = vmatmul.mubr.f32.gmra.mrb[0].mxu0 %v2667
        %v2740 = vpop.f32.mrb[0].mxu0
        %v2741 = vadd.f32 0.0, %v2740
        %v2742 = vpop.f32.mrb[0].mxu0
        %2743 = vdwg.mxu0
        %v2744 = vadd.f32 %v2656, %v2736
        %v2745 = vadd.f32 %v2657, %v2741
        %s2746 = scalar_lea.vmem %s5, 224
        %v2747 = vld [vmem:[%s2746] sm:$0xff]
        %v2748 = vld [vmem:[%s2746 + $0x8] sm:$0xff]
        %v2749 = vld [vmem:[%s2746 + $0x10] sm:$0xff]
        %v2750 = vld [vmem:[%s2746 + $0x18] sm:$0xff]
        %v2752 = vsel %vm2055, %v2049, 0
        %v2755 = vsel %vm2055, %v2050, 0
        %2757 = vmatprep.subr.mxu0 0.0
        %2758 = vmatpush1.msra.mxu0 %v2747
        %2759 = vmatprep.subr.mxu0 0.0
        %2760 = vmatpush1.msra.mxu0 %v2748
        %2761 = vmatprep.subr.mxu0 0.0
        %2762 = vmatpush1.msra.mxu0 %v2749
        %2763 = vmatprep.subr.mxu0 0.0
        %2764 = vmatpush1.msra.mxu0 %v2750
        %2765 = vmatprep.subr.mxu0 0.0
        %2766 = vmatpush1.msra.mxu0 0.0
        %2767 = vmatprep.subr.mxu0 0.0
        %2768 = vmatpush1.msra.mxu0 0.0
        %2769 = vmatprep.subr.mxu0 0.0
        %2770 = vmatpush1.msra.mxu0 0.0
        %2771 = vmatprep.subr.mxu0 0.0
        %2772 = vmatpush1.msra.mxu0 0.0
        %2773 = vmatprep.subr.mxu0 0.0
        %2774 = vmatpush1.msra.mxu0 0.0
        %2775 = vmatprep.subr.mxu0 0.0
        %2776 = vmatpush1.msra.mxu0 0.0
        %2777 = vmatprep.subr.mxu0 0.0
        %2778 = vmatpush1.msra.mxu0 0.0
        %2779 = vmatprep.subr.mxu0 0.0
        %2780 = vmatpush1.msra.mxu0 0.0
        %2781 = vmatprep.subr.mxu0 0.0
        %2782 = vmatpush1.msra.mxu0 0.0
        %2783 = vmatprep.subr.mxu0 0.0
        %2784 = vmatpush1.msra.mxu0 0.0
        %2785 = vmatprep.subr.mxu0 0.0
        %2786 = vmatpush1.msra.mxu0 0.0
        %2787 = vmatprep.subr.mxu0 0.0
        %2788 = vmatpush1.msra.mxu0 0.0
        %2789 = vmatprep.subr.mxu0 0.0
        %2790 = vmatpush1.msra.mxu0 0.0
        %2791 = vmatprep.subr.mxu0 0.0
        %2792 = vmatpush1.msra.mxu0 0.0
        %2793 = vmatprep.subr.mxu0 0.0
        %2794 = vmatpush1.msra.mxu0 0.0
        %2795 = vmatprep.subr.mxu0 0.0
        %2796 = vmatpush1.msra.mxu0 0.0
        %2797 = vmatprep.subr.mxu0 0.0
        %2798 = vmatpush1.msra.mxu0 0.0
        %2799 = vmatprep.subr.mxu0 0.0
        %2800 = vmatpush1.msra.mxu0 0.0
        %2801 = vmatprep.subr.mxu0 0.0
        %2802 = vmatpush1.msra.mxu0 0.0
        %2803 = vmatprep.subr.mxu0 0.0
        %2804 = vmatpush1.msra.mxu0 0.0
        %2805 = vmatprep.subr.mxu0 0.0
        %2806 = vmatpush1.msra.mxu0 0.0
        %2807 = vmatprep.subr.mxu0 0.0
        %2808 = vmatpush1.msra.mxu0 0.0
        %2809 = vmatprep.subr.mxu0 0.0
        %2810 = vmatpush1.msra.mxu0 0.0
        %2811 = vmatprep.subr.mxu0 0.0
        %2812 = vmatpush1.msra.mxu0 0.0
        %2813 = vmatprep.subr.mxu0 0.0
        %2814 = vmatpush1.msra.mxu0 0.0
        %2815 = vmatprep.subr.mxu0 0.0
        %2816 = vmatpush1.msra.mxu0 0.0
        %2817 = vmatprep.subr.mxu0 0.0
        %2818 = vmatpush1.msra.mxu0 0.0
        %2819 = vmatprep.subr.mxu0 0.0
        %2820 = vmatpush1.msra.mxu0 0.0
        %2821 = vmatprep.mubr.f32.mxu0 0.0
        %2822 = vmatmul.mubr.f32.gmra.mrb[0].mxu0 %v2752
        %v2823 = vpop.f32.mrb[0].mxu0
        %v2824 = vadd.f32 0.0, %v2823
        %v2825 = vpop.f32.mrb[0].mxu0
        %2826 = vmatprep.mubr.f32.mxu0 0.0
        %2827 = vmatmul.mubr.f32.gmra.mrb[0].mxu0 %v2755
        %v2828 = vpop.f32.mrb[0].mxu0
        %v2829 = vadd.f32 0.0, %v2828
        %v2830 = vpop.f32.mrb[0].mxu0
        %2831 = vdwg.mxu0
        %v2832 = vadd.f32 %v2744, %v2824
        %v2833 = vadd.f32 %v2745, %v2829
        %v2834 = vld [vmem:[%s6] sm:$0x1]
        %v2836 = vlaneseq
        %v2837 = vshrl.u32 %v2836, 7
        %v2838 = vsub.s32 0, %v2837
        %v2839 = vrot.slane %v2834, %v2838
        %v2841 = vadd.f32 %v2832, %v2839
        %v2842 = vadd.f32 %v2833, %v2839
        %2843 = vmatprep.subr.mxu0 0.0
        %2844 = vmatpush1.msra.mxu0 %v2841
        %2845 = vmatprep.subr.mxu0 0.0
        %2846 = vmatpush1.msra.mxu0 %v2842
        %2847 = vmatprep.subr.mxu0 0.0
        %2848 = vmatpush1.msra.mxu0 0.0
        %2849 = vmatprep.subr.mxu0 0.0
        %2850 = vmatpush1.msra.mxu0 0.0
        %2851 = vmatprep.subr.mxu0 0.0
        %2852 = vmatpush1.msra.mxu0 0.0
        %2853 = vmatprep.subr.mxu0 0.0
        %2854 = vmatpush1.msra.mxu0 0.0
        %2855 = vmatprep.subr.mxu0 0.0
        %2856 = vmatpush1.msra.mxu0 0.0
        %2857 = vmatprep.subr.mxu0 0.0
        %2858 = vmatpush1.msra.mxu0 0.0
        %2859 = vmatprep.subr.mxu0 0.0
        %2860 = vmatpush1.msra.mxu0 0.0
        %2861 = vmatprep.subr.mxu0 0.0
        %2862 = vmatpush1.msra.mxu0 0.0
        %2863 = vmatprep.subr.mxu0 0.0
        %2864 = vmatpush1.msra.mxu0 0.0
        %2865 = vmatprep.subr.mxu0 0.0
        %2866 = vmatpush1.msra.mxu0 0.0
        %2867 = vmatprep.subr.mxu0 0.0
        %2868 = vmatpush1.msra.mxu0 0.0
        %2869 = vmatprep.subr.mxu0 0.0
        %2870 = vmatpush1.msra.mxu0 0.0
        %2871 = vmatprep.subr.mxu0 0.0
        %2872 = vmatpush1.msra.mxu0 0.0
        %2873 = vmatprep.subr.mxu0 0.0
        %2874 = vmatpush1.msra.mxu0 0.0
        %2875 = vmatprep.subr.mxu0 0.0
        %2876 = vmatpush1.msra.mxu0 0.0
        %2877 = vmatprep.subr.mxu0 0.0
        %2878 = vmatpush1.msra.mxu0 0.0
        %2879 = vmatprep.subr.mxu0 0.0
        %2880 = vmatpush1.msra.mxu0 0.0
        %2881 = vmatprep.subr.mxu0 0.0
        %2882 = vmatpush1.msra.mxu0 0.0
        %2883 = vmatprep.subr.mxu0 0.0
        %2884 = vmatpush1.msra.mxu0 0.0
        %2885 = vmatprep.subr.mxu0 0.0
        %2886 = vmatpush1.msra.mxu0 0.0
        %2887 = vmatprep.subr.mxu0 0.0
        %2888 = vmatpush1.msra.mxu0 0.0
        %2889 = vmatprep.subr.mxu0 0.0
        %2890 = vmatpush1.msra.mxu0 0.0
        %2891 = vmatprep.subr.mxu0 0.0
        %2892 = vmatpush1.msra.mxu0 0.0
        %2893 = vmatprep.subr.mxu0 0.0
        %2894 = vmatpush1.msra.mxu0 0.0
        %2895 = vmatprep.subr.mxu0 0.0
        %2896 = vmatpush1.msra.mxu0 0.0
        %2897 = vmatprep.subr.mxu0 0.0
        %2898 = vmatpush1.msra.mxu0 0.0
        %2899 = vmatprep.subr.mxu0 0.0
        %2900 = vmatpush1.msra.mxu0 0.0
        %2901 = vmatprep.subr.mxu0 0.0
        %2902 = vmatpush1.msra.mxu0 0.0
        %2903 = vmatprep.subr.mxu0 0.0
        %2904 = vmatpush1.msra.mxu0 0.0
        %2905 = vmatprep.subr.mxu0 0.0
        %2906 = vmatpush1.msra.mxu0 0.0
        %2907 = vmatprep.mubr.f32.mxu0 0.0
        %2908 = vmatmul.mubr.f32.gmra.mrb[0].mxu0 %v661
        %v2909 = vpop.f32.mrb[0].mxu0
        %v2910 = vadd.f32 0.0, %v2909
        %v2911 = vpop.f32.mrb[0].mxu0
        %2912 = vmatprep.mubr.f32.mxu0 0.0
        %2913 = vmatmul.mubr.f32.gmra.mrb[0].mxu0 %v664
        %v2914 = vpop.f32.mrb[0].mxu0
        %v2915 = vadd.f32 0.0, %v2914
        %v2916 = vpop.f32.mrb[0].mxu0
        %2917 = vdwg.mxu0
        %v2918 = vadd.f32 %v2841, %v2910
        %v2919 = vadd.f32 %v2842, %v2915
        %v2920 = vxor.u32 %v2918, 2147483648
        %v2921 = vxor.u32 %v2919, 2147483648
        %v2922 = vmul.f32 %v2920, 1.442695
        %v2923 = vpow.pop %v2922
        %v2924 = vmul.f32 %v2921, 1.442695
        %v2925 = vpow.pop %v2924
        %v2926 = vadd.f32 %v2923, 1.0
        %v2927 = vadd.f32 %v2925, 1.0
        %v2928 = vrcp.pop %v2926
        %v2929 = vmul.f32 1.0, %v2928
        %v2930 = vrcp.pop %v2927
        %v2931 = vmul.f32 1.0, %v2930
        %v2932 = vmul.f32 %v2918, %v2929
        %v2933 = vmul.f32 %v2919, %v2931
        %v2934 = vld [vmem:[#allocation6] sm:$0xff]
        %v2935 = vld [vmem:[#allocation6 + $0x8] sm:$0xff]
        %v2936 = vld [vmem:[#allocation6 + $0x10] sm:$0xff]
        %v2937 = vld [vmem:[#allocation6 + $0x18] sm:$0xff]
        %v2938 = vsub.f32 %v2918, -2.2
        %v2939 = vsub.f32 %v2919, -2.2
        %v2940 = vmul.f32 %v2938, 2.5
        %v2941 = vmul.f32 %v2939, 2.5
        %v2942 = vsub.f32 %v2940, 1.0
        %v2943 = vsub.f32 %v2941, 1.0
        %v2944 = vsub.f32 %v2942, 1.0
        %v2945 = vsub.f32 %v2943, 1.0
        %v2946 = vsub.f32 %v2944, 1.0
        %v2947 = vsub.f32 %v2945, 1.0
        %v2948 = vsub.f32 %v2946, 1.0
        %v2949 = vsub.f32 %v2947, 1.0
        %v2950 = vsub.f32 %v2948, 1.0
        %v2951 = vsub.f32 %v2949, 1.0
        %v2952 = vsub.f32 %v2950, 1.0
        %v2953 = vsub.f32 %v2951, 1.0
        %v2954 = vsub.f32 %v2952, 1.0
        %v2955 = vsub.f32 %v2953, 1.0
        %v2956 = vsub.f32 %v2954, 1.0
        %v2957 = vsub.f32 %v2955, 1.0
        %v2958 = vsub.f32 %v2956, 1.0
        %v2959 = vsub.f32 %v2957, 1.0
        %v2960 = vsub.f32 %v2958, 1.0
        %v2961 = vsub.f32 %v2959, 1.0
        %v2962 = vsub.f32 %v2960, 1.0
        %v2963 = vsub.f32 %v2961, 1.0
        %vm2964 = vcmp.ge.f32.partialorder %v2940, 0.0
        %vm2965 = vcmp.ge.f32.partialorder %v2941, 0.0
        %v2966 = vsel %vm2964, 1.0, 0.0
        %v2967 = vsel %vm2965, 1.0, 0.0
        %vm2968 = vcmp.ge.f32.partialorder %v2942, 0.0
        %vm2969 = vcmp.ge.f32.partialorder %v2943, 0.0
        %v2970 = vsel %vm2968, 1.0, 0.0
        %v2971 = vsel %vm2969, 1.0, 0.0
        %vm2972 = vcmp.ge.f32.partialorder %v2944, 0.0
        %vm2973 = vcmp.ge.f32.partialorder %v2945, 0.0
        %v2974 = vsel %vm2972, 1.0, 0.0
        %v2975 = vsel %vm2973, 1.0, 0.0
        %vm2976 = vcmp.ge.f32.partialorder %v2946, 0.0
        %vm2977 = vcmp.ge.f32.partialorder %v2947, 0.0
        %v2978 = vsel %vm2976, 1.0, 0.0
        %v2979 = vsel %vm2977, 1.0, 0.0
        %vm2980 = vcmp.ge.f32.partialorder %v2948, 0.0
        %vm2981 = vcmp.ge.f32.partialorder %v2949, 0.0
        %v2982 = vsel %vm2980, 1.0, 0.0
        %v2983 = vsel %vm2981, 1.0, 0.0
        %vm2984 = vcmp.ge.f32.partialorder %v2950, 0.0
        %vm2985 = vcmp.ge.f32.partialorder %v2951, 0.0
        %v2986 = vsel %vm2984, 1.0, 0.0
        %v2987 = vsel %vm2985, 1.0, 0.0
        %vm2988 = vcmp.ge.f32.partialorder %v2952, 0.0
        %vm2989 = vcmp.ge.f32.partialorder %v2953, 0.0
        %v2990 = vsel %vm2988, 1.0, 0.0
        %v2991 = vsel %vm2989, 1.0, 0.0
        %vm2992 = vcmp.ge.f32.partialorder %v2954, 0.0
        %vm2993 = vcmp.ge.f32.partialorder %v2955, 0.0
        %v2994 = vsel %vm2992, 1.0, 0.0
        %v2995 = vsel %vm2993, 1.0, 0.0
        %vm2996 = vcmp.ge.f32.partialorder %v2956, 0.0
        %vm2997 = vcmp.ge.f32.partialorder %v2957, 0.0
        %v2998 = vsel %vm2996, 1.0, 0.0
        %v2999 = vsel %vm2997, 1.0, 0.0
        %vm3000 = vcmp.ge.f32.partialorder %v2958, 0.0
        %vm3001 = vcmp.ge.f32.partialorder %v2959, 0.0
        %v3002 = vsel %vm3000, 1.0, 0.0
        %v3003 = vsel %vm3001, 1.0, 0.0
        %vm3004 = vcmp.ge.f32.partialorder %v2960, 0.0
        %vm3005 = vcmp.ge.f32.partialorder %v2961, 0.0
        %v3006 = vsel %vm3004, 1.0, 0.0
        %v3007 = vsel %vm3005, 1.0, 0.0
        %vm3008 = vcmp.ge.f32.partialorder %v2962, 0.0
        %vm3009 = vcmp.ge.f32.partialorder %v2963, 0.0
        %v3010 = vsel %vm3008, 1.0, 0.0
        %v3011 = vsel %vm3009, 1.0, 0.0
        %v3012 = vsub.f32 %v2966, %v2970
        %v3013 = vsub.f32 %v2967, %v2971
        %v3014 = vsub.f32 %v2970, %v2974
        %v3015 = vsub.f32 %v2971, %v2975
        %v3016 = vsub.f32 %v2974, %v2978
        %v3017 = vsub.f32 %v2975, %v2979
        %v3018 = vsub.f32 %v2978, %v2982
        %v3019 = vsub.f32 %v2979, %v2983
        %v3020 = vsub.f32 %v2982, %v2986
        %v3021 = vsub.f32 %v2983, %v2987
        %v3022 = vsub.f32 %v2986, %v2990
        %v3023 = vsub.f32 %v2987, %v2991
        %v3024 = vsub.f32 %v2990, %v2994
        %v3025 = vsub.f32 %v2991, %v2995
        %v3026 = vsub.f32 %v2994, %v2998
        %v3027 = vsub.f32 %v2995, %v2999
        %v3028 = vsub.f32 %v2998, %v3002
        %v3029 = vsub.f32 %v2999, %v3003
        %v3030 = vsub.f32 %v3002, %v3006
        %v3031 = vsub.f32 %v3003, %v3007
        %v3032 = vsub.f32 %v3006, %v3010
        %v3033 = vsub.f32 %v3007, %v3011
        %v3034 = vmul.f32 %v2940, %v3012
        %v3035 = vmul.f32 %v2941, %v3013
        %v3036 = vmul.f32 %v2944, %v3014
        %v3037 = vmul.f32 %v2945, %v3015
        %v3038 = vsub.f32 %v3034, %v3036
        %v3039 = vsub.f32 %v3035, %v3037
        %v3040 = vmul.f32 %v2942, %v3014
        %v3041 = vmul.f32 %v2943, %v3015
        %v3042 = vmul.f32 %v2946, %v3016
        %v3043 = vmul.f32 %v2947, %v3017
        %v3044 = vsub.f32 %v3040, %v3042
        %v3045 = vsub.f32 %v3041, %v3043
        %v3046 = vmul.f32 %v2944, %v3016
        %v3047 = vmul.f32 %v2945, %v3017
        %v3048 = vmul.f32 %v2948, %v3018
        %v3049 = vmul.f32 %v2949, %v3019
        %v3050 = vsub.f32 %v3046, %v3048
        %v3051 = vsub.f32 %v3047, %v3049
        %v3052 = vmul.f32 %v2946, %v3018
        %v3053 = vmul.f32 %v2947, %v3019
        %v3054 = vmul.f32 %v2950, %v3020
        %v3055 = vmul.f32 %v2951, %v3021
        %v3056 = vsub.f32 %v3052, %v3054
        %v3057 = vsub.f32 %v3053, %v3055
        %v3058 = vmul.f32 %v2948, %v3020
        %v3059 = vmul.f32 %v2949, %v3021
        %v3060 = vmul.f32 %v2952, %v3022
        %v3061 = vmul.f32 %v2953, %v3023
        %v3062 = vsub.f32 %v3058, %v3060
        %v3063 = vsub.f32 %v3059, %v3061
        %v3064 = vmul.f32 %v2950, %v3022
        %v3065 = vmul.f32 %v2951, %v3023
        %v3066 = vmul.f32 %v2954, %v3024
        %v3067 = vmul.f32 %v2955, %v3025
        %v3068 = vsub.f32 %v3064, %v3066
        %v3069 = vsub.f32 %v3065, %v3067
        %v3070 = vmul.f32 %v2952, %v3024
        %v3071 = vmul.f32 %v2953, %v3025
        %v3072 = vmul.f32 %v2956, %v3026
        %v3073 = vmul.f32 %v2957, %v3027
        %v3074 = vsub.f32 %v3070, %v3072
        %v3075 = vsub.f32 %v3071, %v3073
        %v3076 = vmul.f32 %v2954, %v3026
        %v3077 = vmul.f32 %v2955, %v3027
        %v3078 = vmul.f32 %v2958, %v3028
        %v3079 = vmul.f32 %v2959, %v3029
        %v3080 = vsub.f32 %v3076, %v3078
        %v3081 = vsub.f32 %v3077, %v3079
        %v3082 = vmul.f32 %v2956, %v3028
        %v3083 = vmul.f32 %v2957, %v3029
        %v3084 = vmul.f32 %v2960, %v3030
        %v3085 = vmul.f32 %v2961, %v3031
        %v3086 = vsub.f32 %v3082, %v3084
        %v3087 = vsub.f32 %v3083, %v3085
        %v3088 = vmul.f32 %v2958, %v3030
        %v3089 = vmul.f32 %v2959, %v3031
        %v3090 = vmul.f32 %v2962, %v3032
        %v3091 = vmul.f32 %v2963, %v3033
        %v3092 = vsub.f32 %v3088, %v3090
        %v3093 = vsub.f32 %v3089, %v3091
        %v3094 = vmul.f32 %v2940, %v3038
        %v3095 = vmul.f32 %v2941, %v3039
        %v3096 = vmul.f32 %v2946, %v3044
        %v3097 = vmul.f32 %v2947, %v3045
        %v3098 = vsub.f32 %v3094, %v3096
        %v3099 = vsub.f32 %v3095, %v3097
        %v3100 = vmul.f32 %v2942, %v3044
        %v3101 = vmul.f32 %v2943, %v3045
        %v3102 = vmul.f32 %v2948, %v3050
        %v3103 = vmul.f32 %v2949, %v3051
        %v3104 = vsub.f32 %v3100, %v3102
        %v3105 = vsub.f32 %v3101, %v3103
        %v3106 = vmul.f32 %v2944, %v3050
        %v3107 = vmul.f32 %v2945, %v3051
        %v3108 = vmul.f32 %v2950, %v3056
        %v3109 = vmul.f32 %v2951, %v3057
        %v3110 = vsub.f32 %v3106, %v3108
        %v3111 = vsub.f32 %v3107, %v3109
        %v3112 = vmul.f32 %v2946, %v3056
        %v3113 = vmul.f32 %v2947, %v3057
        %v3114 = vmul.f32 %v2952, %v3062
        %v3115 = vmul.f32 %v2953, %v3063
        %v3116 = vsub.f32 %v3112, %v3114
        %v3117 = vsub.f32 %v3113, %v3115
        %v3118 = vmul.f32 %v2948, %v3062
        %v3119 = vmul.f32 %v2949, %v3063
        %v3120 = vmul.f32 %v2954, %v3068
        %v3121 = vmul.f32 %v2955, %v3069
        %v3122 = vsub.f32 %v3118, %v3120
        %v3123 = vsub.f32 %v3119, %v3121
        %v3124 = vmul.f32 %v2950, %v3068
        %v3125 = vmul.f32 %v2951, %v3069
        %v3126 = vmul.f32 %v2956, %v3074
        %v3127 = vmul.f32 %v2957, %v3075
        %v3128 = vsub.f32 %v3124, %v3126
        %v3129 = vsub.f32 %v3125, %v3127
        %v3130 = vmul.f32 %v2952, %v3074
        %v3131 = vmul.f32 %v2953, %v3075
        %v3132 = vmul.f32 %v2958, %v3080
        %v3133 = vmul.f32 %v2959, %v3081
        %v3134 = vsub.f32 %v3130, %v3132
        %v3135 = vsub.f32 %v3131, %v3133
        %v3136 = vmul.f32 %v2954, %v3080
        %v3137 = vmul.f32 %v2955, %v3081
        %v3138 = vmul.f32 %v2960, %v3086
        %v3139 = vmul.f32 %v2961, %v3087
        %v3140 = vsub.f32 %v3136, %v3138
        %v3141 = vsub.f32 %v3137, %v3139
        %v3142 = vmul.f32 %v2956, %v3086
        %v3143 = vmul.f32 %v2957, %v3087
        %v3144 = vmul.f32 %v2962, %v3092
        %v3145 = vmul.f32 %v2963, %v3093
        %v3146 = vsub.f32 %v3142, %v3144
        %v3147 = vsub.f32 %v3143, %v3145
        %v3148 = vmul.f32 %v2940, %v3098
        %v3149 = vmul.f32 %v2941, %v3099
        %v3150 = vmul.f32 %v2948, %v3104
        %v3151 = vmul.f32 %v2949, %v3105
        %v3152 = vsub.f32 %v3148, %v3150
        %v3153 = vsub.f32 %v3149, %v3151
        %v3154 = vmul.f32 %v2942, %v3104
        %v3155 = vmul.f32 %v2943, %v3105
        %v3156 = vmul.f32 %v2950, %v3110
        %v3157 = vmul.f32 %v2951, %v3111
        %v3158 = vsub.f32 %v3154, %v3156
        %v3159 = vsub.f32 %v3155, %v3157
        %v3160 = vmul.f32 %v2944, %v3110
        %v3161 = vmul.f32 %v2945, %v3111
        %v3162 = vmul.f32 %v2952, %v3116
        %v3163 = vmul.f32 %v2953, %v3117
        %v3164 = vsub.f32 %v3160, %v3162
        %v3165 = vsub.f32 %v3161, %v3163
        %v3166 = vmul.f32 %v2946, %v3116
        %v3167 = vmul.f32 %v2947, %v3117
        %v3168 = vmul.f32 %v2954, %v3122
        %v3169 = vmul.f32 %v2955, %v3123
        %v3170 = vsub.f32 %v3166, %v3168
        %v3171 = vsub.f32 %v3167, %v3169
        %v3172 = vmul.f32 %v2948, %v3122
        %v3173 = vmul.f32 %v2949, %v3123
        %v3174 = vmul.f32 %v2956, %v3128
        %v3175 = vmul.f32 %v2957, %v3129
        %v3176 = vsub.f32 %v3172, %v3174
        %v3177 = vsub.f32 %v3173, %v3175
        %v3178 = vmul.f32 %v2950, %v3128
        %v3179 = vmul.f32 %v2951, %v3129
        %v3180 = vmul.f32 %v2958, %v3134
        %v3181 = vmul.f32 %v2959, %v3135
        %v3182 = vsub.f32 %v3178, %v3180
        %v3183 = vsub.f32 %v3179, %v3181
        %v3184 = vmul.f32 %v2952, %v3134
        %v3185 = vmul.f32 %v2953, %v3135
        %v3186 = vmul.f32 %v2960, %v3140
        %v3187 = vmul.f32 %v2961, %v3141
        %v3188 = vsub.f32 %v3184, %v3186
        %v3189 = vsub.f32 %v3185, %v3187
        %v3190 = vmul.f32 %v2954, %v3140
        %v3191 = vmul.f32 %v2955, %v3141
        %v3192 = vmul.f32 %v2962, %v3146
        %v3193 = vmul.f32 %v2963, %v3147
        %v3194 = vsub.f32 %v3190, %v3192
        %v3195 = vsub.f32 %v3191, %v3193
        %v3196 = vld [vmem:[#allocation7] sm:$0xff]
        %v3197 = vld [vmem:[#allocation7 + $0x8] sm:$0xff]
        %v3198 = vld [vmem:[#allocation7 + $0x10] sm:$0xff]
        %v3199 = vld [vmem:[#allocation7 + $0x18] sm:$0xff]
        %v3201 = vsel %vm2055, %v3152, 0
        %v3204 = vsel %vm2055, %v3153, 0
        %3206 = vmatprep.subr.mxu0 0.0
        %3207 = vmatpush1.msra.mxu0 %v3196
        %3208 = vmatprep.subr.mxu0 0.0
        %3209 = vmatpush1.msra.mxu0 %v3197
        %3210 = vmatprep.subr.mxu0 0.0
        %3211 = vmatpush1.msra.mxu0 %v3198
        %3212 = vmatprep.subr.mxu0 0.0
        %3213 = vmatpush1.msra.mxu0 %v3199
        %3214 = vmatprep.subr.mxu0 0.0
        %3215 = vmatpush1.msra.mxu0 0.0
        %3216 = vmatprep.subr.mxu0 0.0
        %3217 = vmatpush1.msra.mxu0 0.0
        %3218 = vmatprep.subr.mxu0 0.0
        %3219 = vmatpush1.msra.mxu0 0.0
        %3220 = vmatprep.subr.mxu0 0.0
        %3221 = vmatpush1.msra.mxu0 0.0
        %3222 = vmatprep.subr.mxu0 0.0
        %3223 = vmatpush1.msra.mxu0 0.0
        %3224 = vmatprep.subr.mxu0 0.0
        %3225 = vmatpush1.msra.mxu0 0.0
        %3226 = vmatprep.subr.mxu0 0.0
        %3227 = vmatpush1.msra.mxu0 0.0
        %3228 = vmatprep.subr.mxu0 0.0
        %3229 = vmatpush1.msra.mxu0 0.0
        %3230 = vmatprep.subr.mxu0 0.0
        %3231 = vmatpush1.msra.mxu0 0.0
        %3232 = vmatprep.subr.mxu0 0.0
        %3233 = vmatpush1.msra.mxu0 0.0
        %3234 = vmatprep.subr.mxu0 0.0
        %3235 = vmatpush1.msra.mxu0 0.0
        %3236 = vmatprep.subr.mxu0 0.0
        %3237 = vmatpush1.msra.mxu0 0.0
        %3238 = vmatprep.subr.mxu0 0.0
        %3239 = vmatpush1.msra.mxu0 0.0
        %3240 = vmatprep.subr.mxu0 0.0
        %3241 = vmatpush1.msra.mxu0 0.0
        %3242 = vmatprep.subr.mxu0 0.0
        %3243 = vmatpush1.msra.mxu0 0.0
        %3244 = vmatprep.subr.mxu0 0.0
        %3245 = vmatpush1.msra.mxu0 0.0
        %3246 = vmatprep.subr.mxu0 0.0
        %3247 = vmatpush1.msra.mxu0 0.0
        %3248 = vmatprep.subr.mxu0 0.0
        %3249 = vmatpush1.msra.mxu0 0.0
        %3250 = vmatprep.subr.mxu0 0.0
        %3251 = vmatpush1.msra.mxu0 0.0
        %3252 = vmatprep.subr.mxu0 0.0
        %3253 = vmatpush1.msra.mxu0 0.0
        %3254 = vmatprep.subr.mxu0 0.0
        %3255 = vmatpush1.msra.mxu0 0.0
        %3256 = vmatprep.subr.mxu0 0.0
        %3257 = vmatpush1.msra.mxu0 0.0
        %3258 = vmatprep.subr.mxu0 0.0
        %3259 = vmatpush1.msra.mxu0 0.0
        %3260 = vmatprep.subr.mxu0 0.0
        %3261 = vmatpush1.msra.mxu0 0.0
        %3262 = vmatprep.subr.mxu0 0.0
        %3263 = vmatpush1.msra.mxu0 0.0
        %3264 = vmatprep.subr.mxu0 0.0
        %3265 = vmatpush1.msra.mxu0 0.0
        %3266 = vmatprep.subr.mxu0 0.0
        %3267 = vmatpush1.msra.mxu0 0.0
        %3268 = vmatprep.subr.mxu0 0.0
        %3269 = vmatpush1.msra.mxu0 0.0
        %3270 = vmatprep.mubr.f32.mxu0 0.0
        %3271 = vmatmul.mubr.f32.gmra.mrb[0].mxu0 %v3201
        %v3272 = vpop.f32.mrb[0].mxu0
        %v3273 = vadd.f32 0.0, %v3272
        %v3274 = vpop.f32.mrb[0].mxu0
        %3275 = vmatprep.mubr.f32.mxu0 0.0
        %3276 = vmatmul.mubr.f32.gmra.mrb[0].mxu0 %v3204
        %v3277 = vpop.f32.mrb[0].mxu0
        %v3278 = vadd.f32 0.0, %v3277
        %v3279 = vpop.f32.mrb[0].mxu0
        %3280 = vdwg.mxu0
        %v3282 = vsel %vm2055, %v2932, 0
        %v3285 = vsel %vm2055, %v2933, 0
        %3287 = vmatprep.subr.mxu0 0.0
        %3288 = vmatpush1.msra.mxu0 %v2934
        %3289 = vmatprep.subr.mxu0 0.0
        %3290 = vmatpush1.msra.mxu0 %v2935
        %3291 = vmatprep.subr.mxu0 0.0
        %3292 = vmatpush1.msra.mxu0 %v2936
        %3293 = vmatprep.subr.mxu0 0.0
        %3294 = vmatpush1.msra.mxu0 %v2937
        %3295 = vmatprep.subr.mxu0 0.0
        %3296 = vmatpush1.msra.mxu0 0.0
        %3297 = vmatprep.subr.mxu0 0.0
        %3298 = vmatpush1.msra.mxu0 0.0
        %3299 = vmatprep.subr.mxu0 0.0
        %3300 = vmatpush1.msra.mxu0 0.0
        %3301 = vmatprep.subr.mxu0 0.0
        %3302 = vmatpush1.msra.mxu0 0.0
        %3303 = vmatprep.subr.mxu0 0.0
        %3304 = vmatpush1.msra.mxu0 0.0
        %3305 = vmatprep.subr.mxu0 0.0
        %3306 = vmatpush1.msra.mxu0 0.0
        %3307 = vmatprep.subr.mxu0 0.0
        %3308 = vmatpush1.msra.mxu0 0.0
        %3309 = vmatprep.subr.mxu0 0.0
        %3310 = vmatpush1.msra.mxu0 0.0
        %3311 = vmatprep.subr.mxu0 0.0
        %3312 = vmatpush1.msra.mxu0 0.0
        %3313 = vmatprep.subr.mxu0 0.0
        %3314 = vmatpush1.msra.mxu0 0.0
        %3315 = vmatprep.subr.mxu0 0.0
        %3316 = vmatpush1.msra.mxu0 0.0
        %3317 = vmatprep.subr.mxu0 0.0
        %3318 = vmatpush1.msra.mxu0 0.0
        %3319 = vmatprep.subr.mxu0 0.0
        %3320 = vmatpush1.msra.mxu0 0.0
        %3321 = vmatprep.subr.mxu0 0.0
        %3322 = vmatpush1.msra.mxu0 0.0
        %3323 = vmatprep.subr.mxu0 0.0
        %3324 = vmatpush1.msra.mxu0 0.0
        %3325 = vmatprep.subr.mxu0 0.0
        %3326 = vmatpush1.msra.mxu0 0.0
        %3327 = vmatprep.subr.mxu0 0.0
        %3328 = vmatpush1.msra.mxu0 0.0
        %3329 = vmatprep.subr.mxu0 0.0
        %3330 = vmatpush1.msra.mxu0 0.0
        %3331 = vmatprep.subr.mxu0 0.0
        %3332 = vmatpush1.msra.mxu0 0.0
        %3333 = vmatprep.subr.mxu0 0.0
        %3334 = vmatpush1.msra.mxu0 0.0
        %3335 = vmatprep.subr.mxu0 0.0
        %3336 = vmatpush1.msra.mxu0 0.0
        %3337 = vmatprep.subr.mxu0 0.0
        %3338 = vmatpush1.msra.mxu0 0.0
        %3339 = vmatprep.subr.mxu0 0.0
        %3340 = vmatpush1.msra.mxu0 0.0
        %3341 = vmatprep.subr.mxu0 0.0
        %3342 = vmatpush1.msra.mxu0 0.0
        %3343 = vmatprep.subr.mxu0 0.0
        %3344 = vmatpush1.msra.mxu0 0.0
        %3345 = vmatprep.subr.mxu0 0.0
        %3346 = vmatpush1.msra.mxu0 0.0
        %3347 = vmatprep.subr.mxu0 0.0
        %3348 = vmatpush1.msra.mxu0 0.0
        %3349 = vmatprep.subr.mxu0 0.0
        %3350 = vmatpush1.msra.mxu0 0.0
        %3351 = vmatprep.mubr.f32.mxu0 0.0
        %3352 = vmatmul.mubr.f32.gmra.mrb[0].mxu0 %v3282
        %v3353 = vpop.f32.mrb[0].mxu0
        %v3354 = vadd.f32 %v3273, %v3353
        %v3355 = vpop.f32.mrb[0].mxu0
        %3356 = vmatprep.mubr.f32.mxu0 0.0
        %3357 = vmatmul.mubr.f32.gmra.mrb[0].mxu0 %v3285
        %v3358 = vpop.f32.mrb[0].mxu0
        %v3359 = vadd.f32 %v3278, %v3358
        %v3360 = vpop.f32.mrb[0].mxu0
        %3361 = vdwg.mxu0
        %s3362 = scalar_lea.vmem [#allocation7], 32
        %v3363 = vld [vmem:[%s3362] sm:$0xff]
        %v3364 = vld [vmem:[%s3362 + $0x8] sm:$0xff]
        %v3365 = vld [vmem:[%s3362 + $0x10] sm:$0xff]
        %v3366 = vld [vmem:[%s3362 + $0x18] sm:$0xff]
        %v3368 = vsel %vm2055, %v3158, 0
        %v3371 = vsel %vm2055, %v3159, 0
        %3373 = vmatprep.subr.mxu0 0.0
        %3374 = vmatpush1.msra.mxu0 %v3363
        %3375 = vmatprep.subr.mxu0 0.0
        %3376 = vmatpush1.msra.mxu0 %v3364
        %3377 = vmatprep.subr.mxu0 0.0
        %3378 = vmatpush1.msra.mxu0 %v3365
        %3379 = vmatprep.subr.mxu0 0.0
        %3380 = vmatpush1.msra.mxu0 %v3366
        %3381 = vmatprep.subr.mxu0 0.0
        %3382 = vmatpush1.msra.mxu0 0.0
        %3383 = vmatprep.subr.mxu0 0.0
        %3384 = vmatpush1.msra.mxu0 0.0
        %3385 = vmatprep.subr.mxu0 0.0
        %3386 = vmatpush1.msra.mxu0 0.0
        %3387 = vmatprep.subr.mxu0 0.0
        %3388 = vmatpush1.msra.mxu0 0.0
        %3389 = vmatprep.subr.mxu0 0.0
        %3390 = vmatpush1.msra.mxu0 0.0
        %3391 = vmatprep.subr.mxu0 0.0
        %3392 = vmatpush1.msra.mxu0 0.0
        %3393 = vmatprep.subr.mxu0 0.0
        %3394 = vmatpush1.msra.mxu0 0.0
        %3395 = vmatprep.subr.mxu0 0.0
        %3396 = vmatpush1.msra.mxu0 0.0
        %3397 = vmatprep.subr.mxu0 0.0
        %3398 = vmatpush1.msra.mxu0 0.0
        %3399 = vmatprep.subr.mxu0 0.0
        %3400 = vmatpush1.msra.mxu0 0.0
        %3401 = vmatprep.subr.mxu0 0.0
        %3402 = vmatpush1.msra.mxu0 0.0
        %3403 = vmatprep.subr.mxu0 0.0
        %3404 = vmatpush1.msra.mxu0 0.0
        %3405 = vmatprep.subr.mxu0 0.0
        %3406 = vmatpush1.msra.mxu0 0.0
        %3407 = vmatprep.subr.mxu0 0.0
        %3408 = vmatpush1.msra.mxu0 0.0
        %3409 = vmatprep.subr.mxu0 0.0
        %3410 = vmatpush1.msra.mxu0 0.0
        %3411 = vmatprep.subr.mxu0 0.0
        %3412 = vmatpush1.msra.mxu0 0.0
        %3413 = vmatprep.subr.mxu0 0.0
        %3414 = vmatpush1.msra.mxu0 0.0
        %3415 = vmatprep.subr.mxu0 0.0
        %3416 = vmatpush1.msra.mxu0 0.0
        %3417 = vmatprep.subr.mxu0 0.0
        %3418 = vmatpush1.msra.mxu0 0.0
        %3419 = vmatprep.subr.mxu0 0.0
        %3420 = vmatpush1.msra.mxu0 0.0
        %3421 = vmatprep.subr.mxu0 0.0
        %3422 = vmatpush1.msra.mxu0 0.0
        %3423 = vmatprep.subr.mxu0 0.0
        %3424 = vmatpush1.msra.mxu0 0.0
        %3425 = vmatprep.subr.mxu0 0.0
        %3426 = vmatpush1.msra.mxu0 0.0
        %3427 = vmatprep.subr.mxu0 0.0
        %3428 = vmatpush1.msra.mxu0 0.0
        %3429 = vmatprep.subr.mxu0 0.0
        %3430 = vmatpush1.msra.mxu0 0.0
        %3431 = vmatprep.subr.mxu0 0.0
        %3432 = vmatpush1.msra.mxu0 0.0
        %3433 = vmatprep.subr.mxu0 0.0
        %3434 = vmatpush1.msra.mxu0 0.0
        %3435 = vmatprep.subr.mxu0 0.0
        %3436 = vmatpush1.msra.mxu0 0.0
        %3437 = vmatprep.mubr.f32.mxu0 0.0
        %3438 = vmatmul.mubr.f32.gmra.mrb[0].mxu0 %v3368
        %v3439 = vpop.f32.mrb[0].mxu0
        %v3440 = vadd.f32 0.0, %v3439
        %v3441 = vpop.f32.mrb[0].mxu0
        %3442 = vmatprep.mubr.f32.mxu0 0.0
        %3443 = vmatmul.mubr.f32.gmra.mrb[0].mxu0 %v3371
        %v3444 = vpop.f32.mrb[0].mxu0
        %v3445 = vadd.f32 0.0, %v3444
        %v3446 = vpop.f32.mrb[0].mxu0
        %3447 = vdwg.mxu0
        %v3448 = vadd.f32 %v3354, %v3440
        %v3449 = vadd.f32 %v3359, %v3445
        %s3450 = scalar_lea.vmem [#allocation7], 64
        %v3451 = vld [vmem:[%s3450] sm:$0xff]
        %v3452 = vld [vmem:[%s3450 + $0x8] sm:$0xff]
        %v3453 = vld [vmem:[%s3450 + $0x10] sm:$0xff]
        %v3454 = vld [vmem:[%s3450 + $0x18] sm:$0xff]
        %v3456 = vsel %vm2055, %v3164, 0
        %v3459 = vsel %vm2055, %v3165, 0
        %3461 = vmatprep.subr.mxu0 0.0
        %3462 = vmatpush1.msra.mxu0 %v3451
        %3463 = vmatprep.subr.mxu0 0.0
        %3464 = vmatpush1.msra.mxu0 %v3452
        %3465 = vmatprep.subr.mxu0 0.0
        %3466 = vmatpush1.msra.mxu0 %v3453
        %3467 = vmatprep.subr.mxu0 0.0
        %3468 = vmatpush1.msra.mxu0 %v3454
        %3469 = vmatprep.subr.mxu0 0.0
        %3470 = vmatpush1.msra.mxu0 0.0
        %3471 = vmatprep.subr.mxu0 0.0
        %3472 = vmatpush1.msra.mxu0 0.0
        %3473 = vmatprep.subr.mxu0 0.0
        %3474 = vmatpush1.msra.mxu0 0.0
        %3475 = vmatprep.subr.mxu0 0.0
        %3476 = vmatpush1.msra.mxu0 0.0
        %3477 = vmatprep.subr.mxu0 0.0
        %3478 = vmatpush1.msra.mxu0 0.0
        %3479 = vmatprep.subr.mxu0 0.0
        %3480 = vmatpush1.msra.mxu0 0.0
        %3481 = vmatprep.subr.mxu0 0.0
        %3482 = vmatpush1.msra.mxu0 0.0
        %3483 = vmatprep.subr.mxu0 0.0
        %3484 = vmatpush1.msra.mxu0 0.0
        %3485 = vmatprep.subr.mxu0 0.0
        %3486 = vmatpush1.msra.mxu0 0.0
        %3487 = vmatprep.subr.mxu0 0.0
        %3488 = vmatpush1.msra.mxu0 0.0
        %3489 = vmatprep.subr.mxu0 0.0
        %3490 = vmatpush1.msra.mxu0 0.0
        %3491 = vmatprep.subr.mxu0 0.0
        %3492 = vmatpush1.msra.mxu0 0.0
        %3493 = vmatprep.subr.mxu0 0.0
        %3494 = vmatpush1.msra.mxu0 0.0
        %3495 = vmatprep.subr.mxu0 0.0
        %3496 = vmatpush1.msra.mxu0 0.0
        %3497 = vmatprep.subr.mxu0 0.0
        %3498 = vmatpush1.msra.mxu0 0.0
        %3499 = vmatprep.subr.mxu0 0.0
        %3500 = vmatpush1.msra.mxu0 0.0
        %3501 = vmatprep.subr.mxu0 0.0
        %3502 = vmatpush1.msra.mxu0 0.0
        %3503 = vmatprep.subr.mxu0 0.0
        %3504 = vmatpush1.msra.mxu0 0.0
        %3505 = vmatprep.subr.mxu0 0.0
        %3506 = vmatpush1.msra.mxu0 0.0
        %3507 = vmatprep.subr.mxu0 0.0
        %3508 = vmatpush1.msra.mxu0 0.0
        %3509 = vmatprep.subr.mxu0 0.0
        %3510 = vmatpush1.msra.mxu0 0.0
        %3511 = vmatprep.subr.mxu0 0.0
        %3512 = vmatpush1.msra.mxu0 0.0
        %3513 = vmatprep.subr.mxu0 0.0
        %3514 = vmatpush1.msra.mxu0 0.0
        %3515 = vmatprep.subr.mxu0 0.0
        %3516 = vmatpush1.msra.mxu0 0.0
        %3517 = vmatprep.subr.mxu0 0.0
        %3518 = vmatpush1.msra.mxu0 0.0
        %3519 = vmatprep.subr.mxu0 0.0
        %3520 = vmatpush1.msra.mxu0 0.0
        %3521 = vmatprep.subr.mxu0 0.0
        %3522 = vmatpush1.msra.mxu0 0.0
        %3523 = vmatprep.subr.mxu0 0.0
        %3524 = vmatpush1.msra.mxu0 0.0
        %3525 = vmatprep.mubr.f32.mxu0 0.0
        %3526 = vmatmul.mubr.f32.gmra.mrb[0].mxu0 %v3456
        %v3527 = vpop.f32.mrb[0].mxu0
        %v3528 = vadd.f32 0.0, %v3527
        %v3529 = vpop.f32.mrb[0].mxu0
        %3530 = vmatprep.mubr.f32.mxu0 0.0
        %3531 = vmatmul.mubr.f32.gmra.mrb[0].mxu0 %v3459
        %v3532 = vpop.f32.mrb[0].mxu0
        %v3533 = vadd.f32 0.0, %v3532
        %v3534 = vpop.f32.mrb[0].mxu0
        %3535 = vdwg.mxu0
        %v3536 = vadd.f32 %v3448, %v3528
        %v3537 = vadd.f32 %v3449, %v3533
        %s3538 = scalar_lea.vmem [#allocation7], 96
        %v3539 = vld [vmem:[%s3538] sm:$0xff]
        %v3540 = vld [vmem:[%s3538 + $0x8] sm:$0xff]
        %v3541 = vld [vmem:[%s3538 + $0x10] sm:$0xff]
        %v3542 = vld [vmem:[%s3538 + $0x18] sm:$0xff]
        %v3544 = vsel %vm2055, %v3170, 0
        %v3547 = vsel %vm2055, %v3171, 0
        %3549 = vmatprep.subr.mxu0 0.0
        %3550 = vmatpush1.msra.mxu0 %v3539
        %3551 = vmatprep.subr.mxu0 0.0
        %3552 = vmatpush1.msra.mxu0 %v3540
        %3553 = vmatprep.subr.mxu0 0.0
        %3554 = vmatpush1.msra.mxu0 %v3541
        %3555 = vmatprep.subr.mxu0 0.0
        %3556 = vmatpush1.msra.mxu0 %v3542
        %3557 = vmatprep.subr.mxu0 0.0
        %3558 = vmatpush1.msra.mxu0 0.0
        %3559 = vmatprep.subr.mxu0 0.0
        %3560 = vmatpush1.msra.mxu0 0.0
        %3561 = vmatprep.subr.mxu0 0.0
        %3562 = vmatpush1.msra.mxu0 0.0
        %3563 = vmatprep.subr.mxu0 0.0
        %3564 = vmatpush1.msra.mxu0 0.0
        %3565 = vmatprep.subr.mxu0 0.0
        %3566 = vmatpush1.msra.mxu0 0.0
        %3567 = vmatprep.subr.mxu0 0.0
        %3568 = vmatpush1.msra.mxu0 0.0
        %3569 = vmatprep.subr.mxu0 0.0
        %3570 = vmatpush1.msra.mxu0 0.0
        %3571 = vmatprep.subr.mxu0 0.0
        %3572 = vmatpush1.msra.mxu0 0.0
        %3573 = vmatprep.subr.mxu0 0.0
        %3574 = vmatpush1.msra.mxu0 0.0
        %3575 = vmatprep.subr.mxu0 0.0
        %3576 = vmatpush1.msra.mxu0 0.0
        %3577 = vmatprep.subr.mxu0 0.0
        %3578 = vmatpush1.msra.mxu0 0.0
        %3579 = vmatprep.subr.mxu0 0.0
        %3580 = vmatpush1.msra.mxu0 0.0
        %3581 = vmatprep.subr.mxu0 0.0
        %3582 = vmatpush1.msra.mxu0 0.0
        %3583 = vmatprep.subr.mxu0 0.0
        %3584 = vmatpush1.msra.mxu0 0.0
        %3585 = vmatprep.subr.mxu0 0.0
        %3586 = vmatpush1.msra.mxu0 0.0
        %3587 = vmatprep.subr.mxu0 0.0
        %3588 = vmatpush1.msra.mxu0 0.0
        %3589 = vmatprep.subr.mxu0 0.0
        %3590 = vmatpush1.msra.mxu0 0.0
        %3591 = vmatprep.subr.mxu0 0.0
        %3592 = vmatpush1.msra.mxu0 0.0
        %3593 = vmatprep.subr.mxu0 0.0
        %3594 = vmatpush1.msra.mxu0 0.0
        %3595 = vmatprep.subr.mxu0 0.0
        %3596 = vmatpush1.msra.mxu0 0.0
        %3597 = vmatprep.subr.mxu0 0.0
        %3598 = vmatpush1.msra.mxu0 0.0
        %3599 = vmatprep.subr.mxu0 0.0
        %3600 = vmatpush1.msra.mxu0 0.0
        %3601 = vmatprep.subr.mxu0 0.0
        %3602 = vmatpush1.msra.mxu0 0.0
        %3603 = vmatprep.subr.mxu0 0.0
        %3604 = vmatpush1.msra.mxu0 0.0
        %3605 = vmatprep.subr.mxu0 0.0
        %3606 = vmatpush1.msra.mxu0 0.0
        %3607 = vmatprep.subr.mxu0 0.0
        %3608 = vmatpush1.msra.mxu0 0.0
        %3609 = vmatprep.subr.mxu0 0.0
        %3610 = vmatpush1.msra.mxu0 0.0
        %3611 = vmatprep.subr.mxu0 0.0
        %3612 = vmatpush1.msra.mxu0 0.0
        %3613 = vmatprep.mubr.f32.mxu0 0.0
        %3614 = vmatmul.mubr.f32.gmra.mrb[0].mxu0 %v3544
        %v3615 = vpop.f32.mrb[0].mxu0
        %v3616 = vadd.f32 0.0, %v3615
        %v3617 = vpop.f32.mrb[0].mxu0
        %3618 = vmatprep.mubr.f32.mxu0 0.0
        %3619 = vmatmul.mubr.f32.gmra.mrb[0].mxu0 %v3547
        %v3620 = vpop.f32.mrb[0].mxu0
        %v3621 = vadd.f32 0.0, %v3620
        %v3622 = vpop.f32.mrb[0].mxu0
        %3623 = vdwg.mxu0
        %v3624 = vadd.f32 %v3536, %v3616
        %v3625 = vadd.f32 %v3537, %v3621
        %s3626 = scalar_lea.vmem [#allocation7], 128
        %v3627 = vld [vmem:[%s3626] sm:$0xff]
        %v3628 = vld [vmem:[%s3626 + $0x8] sm:$0xff]
        %v3629 = vld [vmem:[%s3626 + $0x10] sm:$0xff]
        %v3630 = vld [vmem:[%s3626 + $0x18] sm:$0xff]
        %v3632 = vsel %vm2055, %v3176, 0
        %v3635 = vsel %vm2055, %v3177, 0
        %3637 = vmatprep.subr.mxu0 0.0
        %3638 = vmatpush1.msra.mxu0 %v3627
        %3639 = vmatprep.subr.mxu0 0.0
        %3640 = vmatpush1.msra.mxu0 %v3628
        %3641 = vmatprep.subr.mxu0 0.0
        %3642 = vmatpush1.msra.mxu0 %v3629
        %3643 = vmatprep.subr.mxu0 0.0
        %3644 = vmatpush1.msra.mxu0 %v3630
        %3645 = vmatprep.subr.mxu0 0.0
        %3646 = vmatpush1.msra.mxu0 0.0
        %3647 = vmatprep.subr.mxu0 0.0
        %3648 = vmatpush1.msra.mxu0 0.0
        %3649 = vmatprep.subr.mxu0 0.0
        %3650 = vmatpush1.msra.mxu0 0.0
        %3651 = vmatprep.subr.mxu0 0.0
        %3652 = vmatpush1.msra.mxu0 0.0
        %3653 = vmatprep.subr.mxu0 0.0
        %3654 = vmatpush1.msra.mxu0 0.0
        %3655 = vmatprep.subr.mxu0 0.0
        %3656 = vmatpush1.msra.mxu0 0.0
        %3657 = vmatprep.subr.mxu0 0.0
        %3658 = vmatpush1.msra.mxu0 0.0
        %3659 = vmatprep.subr.mxu0 0.0
        %3660 = vmatpush1.msra.mxu0 0.0
        %3661 = vmatprep.subr.mxu0 0.0
        %3662 = vmatpush1.msra.mxu0 0.0
        %3663 = vmatprep.subr.mxu0 0.0
        %3664 = vmatpush1.msra.mxu0 0.0
        %3665 = vmatprep.subr.mxu0 0.0
        %3666 = vmatpush1.msra.mxu0 0.0
        %3667 = vmatprep.subr.mxu0 0.0
        %3668 = vmatpush1.msra.mxu0 0.0
        %3669 = vmatprep.subr.mxu0 0.0
        %3670 = vmatpush1.msra.mxu0 0.0
        %3671 = vmatprep.subr.mxu0 0.0
        %3672 = vmatpush1.msra.mxu0 0.0
        %3673 = vmatprep.subr.mxu0 0.0
        %3674 = vmatpush1.msra.mxu0 0.0
        %3675 = vmatprep.subr.mxu0 0.0
        %3676 = vmatpush1.msra.mxu0 0.0
        %3677 = vmatprep.subr.mxu0 0.0
        %3678 = vmatpush1.msra.mxu0 0.0
        %3679 = vmatprep.subr.mxu0 0.0
        %3680 = vmatpush1.msra.mxu0 0.0
        %3681 = vmatprep.subr.mxu0 0.0
        %3682 = vmatpush1.msra.mxu0 0.0
        %3683 = vmatprep.subr.mxu0 0.0
        %3684 = vmatpush1.msra.mxu0 0.0
        %3685 = vmatprep.subr.mxu0 0.0
        %3686 = vmatpush1.msra.mxu0 0.0
        %3687 = vmatprep.subr.mxu0 0.0
        %3688 = vmatpush1.msra.mxu0 0.0
        %3689 = vmatprep.subr.mxu0 0.0
        %3690 = vmatpush1.msra.mxu0 0.0
        %3691 = vmatprep.subr.mxu0 0.0
        %3692 = vmatpush1.msra.mxu0 0.0
        %3693 = vmatprep.subr.mxu0 0.0
        %3694 = vmatpush1.msra.mxu0 0.0
        %3695 = vmatprep.subr.mxu0 0.0
        %3696 = vmatpush1.msra.mxu0 0.0
        %3697 = vmatprep.subr.mxu0 0.0
        %3698 = vmatpush1.msra.mxu0 0.0
        %3699 = vmatprep.subr.mxu0 0.0
        %3700 = vmatpush1.msra.mxu0 0.0
        %3701 = vmatprep.mubr.f32.mxu0 0.0
        %3702 = vmatmul.mubr.f32.gmra.mrb[0].mxu0 %v3632
        %v3703 = vpop.f32.mrb[0].mxu0
        %v3704 = vadd.f32 0.0, %v3703
        %v3705 = vpop.f32.mrb[0].mxu0
        %3706 = vmatprep.mubr.f32.mxu0 0.0
        %3707 = vmatmul.mubr.f32.gmra.mrb[0].mxu0 %v3635
        %v3708 = vpop.f32.mrb[0].mxu0
        %v3709 = vadd.f32 0.0, %v3708
        %v3710 = vpop.f32.mrb[0].mxu0
        %3711 = vdwg.mxu0
        %v3712 = vadd.f32 %v3624, %v3704
        %v3713 = vadd.f32 %v3625, %v3709
        %s3714 = scalar_lea.vmem [#allocation7], 160
        %v3715 = vld [vmem:[%s3714] sm:$0xff]
        %v3716 = vld [vmem:[%s3714 + $0x8] sm:$0xff]
        %v3717 = vld [vmem:[%s3714 + $0x10] sm:$0xff]
        %v3718 = vld [vmem:[%s3714 + $0x18] sm:$0xff]
        %v3720 = vsel %vm2055, %v3182, 0
        %v3723 = vsel %vm2055, %v3183, 0
        %3725 = vmatprep.subr.mxu0 0.0
        %3726 = vmatpush1.msra.mxu0 %v3715
        %3727 = vmatprep.subr.mxu0 0.0
        %3728 = vmatpush1.msra.mxu0 %v3716
        %3729 = vmatprep.subr.mxu0 0.0
        %3730 = vmatpush1.msra.mxu0 %v3717
        %3731 = vmatprep.subr.mxu0 0.0
        %3732 = vmatpush1.msra.mxu0 %v3718
        %3733 = vmatprep.subr.mxu0 0.0
        %3734 = vmatpush1.msra.mxu0 0.0
        %3735 = vmatprep.subr.mxu0 0.0
        %3736 = vmatpush1.msra.mxu0 0.0
        %3737 = vmatprep.subr.mxu0 0.0
        %3738 = vmatpush1.msra.mxu0 0.0
        %3739 = vmatprep.subr.mxu0 0.0
        %3740 = vmatpush1.msra.mxu0 0.0
        %3741 = vmatprep.subr.mxu0 0.0
        %3742 = vmatpush1.msra.mxu0 0.0
        %3743 = vmatprep.subr.mxu0 0.0
        %3744 = vmatpush1.msra.mxu0 0.0
        %3745 = vmatprep.subr.mxu0 0.0
        %3746 = vmatpush1.msra.mxu0 0.0
        %3747 = vmatprep.subr.mxu0 0.0
        %3748 = vmatpush1.msra.mxu0 0.0
        %3749 = vmatprep.subr.mxu0 0.0
        %3750 = vmatpush1.msra.mxu0 0.0
        %3751 = vmatprep.subr.mxu0 0.0
        %3752 = vmatpush1.msra.mxu0 0.0
        %3753 = vmatprep.subr.mxu0 0.0
        %3754 = vmatpush1.msra.mxu0 0.0
        %3755 = vmatprep.subr.mxu0 0.0
        %3756 = vmatpush1.msra.mxu0 0.0
        %3757 = vmatprep.subr.mxu0 0.0
        %3758 = vmatpush1.msra.mxu0 0.0
        %3759 = vmatprep.subr.mxu0 0.0
        %3760 = vmatpush1.msra.mxu0 0.0
        %3761 = vmatprep.subr.mxu0 0.0
        %3762 = vmatpush1.msra.mxu0 0.0
        %3763 = vmatprep.subr.mxu0 0.0
        %3764 = vmatpush1.msra.mxu0 0.0
        %3765 = vmatprep.subr.mxu0 0.0
        %3766 = vmatpush1.msra.mxu0 0.0
        %3767 = vmatprep.subr.mxu0 0.0
        %3768 = vmatpush1.msra.mxu0 0.0
        %3769 = vmatprep.subr.mxu0 0.0
        %3770 = vmatpush1.msra.mxu0 0.0
        %3771 = vmatprep.subr.mxu0 0.0
        %3772 = vmatpush1.msra.mxu0 0.0
        %3773 = vmatprep.subr.mxu0 0.0
        %3774 = vmatpush1.msra.mxu0 0.0
        %3775 = vmatprep.subr.mxu0 0.0
        %3776 = vmatpush1.msra.mxu0 0.0
        %3777 = vmatprep.subr.mxu0 0.0
        %3778 = vmatpush1.msra.mxu0 0.0
        %3779 = vmatprep.subr.mxu0 0.0
        %3780 = vmatpush1.msra.mxu0 0.0
        %3781 = vmatprep.subr.mxu0 0.0
        %3782 = vmatpush1.msra.mxu0 0.0
        %3783 = vmatprep.subr.mxu0 0.0
        %3784 = vmatpush1.msra.mxu0 0.0
        %3785 = vmatprep.subr.mxu0 0.0
        %3786 = vmatpush1.msra.mxu0 0.0
        %3787 = vmatprep.subr.mxu0 0.0
        %3788 = vmatpush1.msra.mxu0 0.0
        %3789 = vmatprep.mubr.f32.mxu0 0.0
        %3790 = vmatmul.mubr.f32.gmra.mrb[0].mxu0 %v3720
        %v3791 = vpop.f32.mrb[0].mxu0
        %v3792 = vadd.f32 0.0, %v3791
        %v3793 = vpop.f32.mrb[0].mxu0
        %3794 = vmatprep.mubr.f32.mxu0 0.0
        %3795 = vmatmul.mubr.f32.gmra.mrb[0].mxu0 %v3723
        %v3796 = vpop.f32.mrb[0].mxu0
        %v3797 = vadd.f32 0.0, %v3796
        %v3798 = vpop.f32.mrb[0].mxu0
        %3799 = vdwg.mxu0
        %v3800 = vadd.f32 %v3712, %v3792
        %v3801 = vadd.f32 %v3713, %v3797
        %s3802 = scalar_lea.vmem [#allocation7], 192
        %v3803 = vld [vmem:[%s3802] sm:$0xff]
        %v3804 = vld [vmem:[%s3802 + $0x8] sm:$0xff]
        %v3805 = vld [vmem:[%s3802 + $0x10] sm:$0xff]
        %v3806 = vld [vmem:[%s3802 + $0x18] sm:$0xff]
        %v3808 = vsel %vm2055, %v3188, 0
        %v3811 = vsel %vm2055, %v3189, 0
        %3813 = vmatprep.subr.mxu0 0.0
        %3814 = vmatpush1.msra.mxu0 %v3803
        %3815 = vmatprep.subr.mxu0 0.0
        %3816 = vmatpush1.msra.mxu0 %v3804
        %3817 = vmatprep.subr.mxu0 0.0
        %3818 = vmatpush1.msra.mxu0 %v3805
        %3819 = vmatprep.subr.mxu0 0.0
        %3820 = vmatpush1.msra.mxu0 %v3806
        %3821 = vmatprep.subr.mxu0 0.0
        %3822 = vmatpush1.msra.mxu0 0.0
        %3823 = vmatprep.subr.mxu0 0.0
        %3824 = vmatpush1.msra.mxu0 0.0
        %3825 = vmatprep.subr.mxu0 0.0
        %3826 = vmatpush1.msra.mxu0 0.0
        %3827 = vmatprep.subr.mxu0 0.0
        %3828 = vmatpush1.msra.mxu0 0.0
        %3829 = vmatprep.subr.mxu0 0.0
        %3830 = vmatpush1.msra.mxu0 0.0
        %3831 = vmatprep.subr.mxu0 0.0
        %3832 = vmatpush1.msra.mxu0 0.0
        %3833 = vmatprep.subr.mxu0 0.0
        %3834 = vmatpush1.msra.mxu0 0.0
        %3835 = vmatprep.subr.mxu0 0.0
        %3836 = vmatpush1.msra.mxu0 0.0
        %3837 = vmatprep.subr.mxu0 0.0
        %3838 = vmatpush1.msra.mxu0 0.0
        %3839 = vmatprep.subr.mxu0 0.0
        %3840 = vmatpush1.msra.mxu0 0.0
        %3841 = vmatprep.subr.mxu0 0.0
        %3842 = vmatpush1.msra.mxu0 0.0
        %3843 = vmatprep.subr.mxu0 0.0
        %3844 = vmatpush1.msra.mxu0 0.0
        %3845 = vmatprep.subr.mxu0 0.0
        %3846 = vmatpush1.msra.mxu0 0.0
        %3847 = vmatprep.subr.mxu0 0.0
        %3848 = vmatpush1.msra.mxu0 0.0
        %3849 = vmatprep.subr.mxu0 0.0
        %3850 = vmatpush1.msra.mxu0 0.0
        %3851 = vmatprep.subr.mxu0 0.0
        %3852 = vmatpush1.msra.mxu0 0.0
        %3853 = vmatprep.subr.mxu0 0.0
        %3854 = vmatpush1.msra.mxu0 0.0
        %3855 = vmatprep.subr.mxu0 0.0
        %3856 = vmatpush1.msra.mxu0 0.0
        %3857 = vmatprep.subr.mxu0 0.0
        %3858 = vmatpush1.msra.mxu0 0.0
        %3859 = vmatprep.subr.mxu0 0.0
        %3860 = vmatpush1.msra.mxu0 0.0
        %3861 = vmatprep.subr.mxu0 0.0
        %3862 = vmatpush1.msra.mxu0 0.0
        %3863 = vmatprep.subr.mxu0 0.0
        %3864 = vmatpush1.msra.mxu0 0.0
        %3865 = vmatprep.subr.mxu0 0.0
        %3866 = vmatpush1.msra.mxu0 0.0
        %3867 = vmatprep.subr.mxu0 0.0
        %3868 = vmatpush1.msra.mxu0 0.0
        %3869 = vmatprep.subr.mxu0 0.0
        %3870 = vmatpush1.msra.mxu0 0.0
        %3871 = vmatprep.subr.mxu0 0.0
        %3872 = vmatpush1.msra.mxu0 0.0
        %3873 = vmatprep.subr.mxu0 0.0
        %3874 = vmatpush1.msra.mxu0 0.0
        %3875 = vmatprep.subr.mxu0 0.0
        %3876 = vmatpush1.msra.mxu0 0.0
        %3877 = vmatprep.mubr.f32.mxu0 0.0
        %3878 = vmatmul.mubr.f32.gmra.mrb[0].mxu0 %v3808
        %v3879 = vpop.f32.mrb[0].mxu0
        %v3880 = vadd.f32 0.0, %v3879
        %v3881 = vpop.f32.mrb[0].mxu0
        %3882 = vmatprep.mubr.f32.mxu0 0.0
        %3883 = vmatmul.mubr.f32.gmra.mrb[0].mxu0 %v3811
        %v3884 = vpop.f32.mrb[0].mxu0
        %v3885 = vadd.f32 0.0, %v3884
        %v3886 = vpop.f32.mrb[0].mxu0
        %3887 = vdwg.mxu0
        %v3888 = vadd.f32 %v3800, %v3880
        %v3889 = vadd.f32 %v3801, %v3885
        %s3890 = scalar_lea.vmem [#allocation7], 224
        %v3891 = vld [vmem:[%s3890] sm:$0xff]
        %v3892 = vld [vmem:[%s3890 + $0x8] sm:$0xff]
        %v3893 = vld [vmem:[%s3890 + $0x10] sm:$0xff]
        %v3894 = vld [vmem:[%s3890 + $0x18] sm:$0xff]
        %v3896 = vsel %vm2055, %v3194, 0
        %v3899 = vsel %vm2055, %v3195, 0
        %3901 = vmatprep.subr.mxu0 0.0
        %3902 = vmatpush1.msra.mxu0 %v3891
        %3903 = vmatprep.subr.mxu0 0.0
        %3904 = vmatpush1.msra.mxu0 %v3892
        %3905 = vmatprep.subr.mxu0 0.0
        %3906 = vmatpush1.msra.mxu0 %v3893
        %3907 = vmatprep.subr.mxu0 0.0
        %3908 = vmatpush1.msra.mxu0 %v3894
        %3909 = vmatprep.subr.mxu0 0.0
        %3910 = vmatpush1.msra.mxu0 0.0
        %3911 = vmatprep.subr.mxu0 0.0
        %3912 = vmatpush1.msra.mxu0 0.0
        %3913 = vmatprep.subr.mxu0 0.0
        %3914 = vmatpush1.msra.mxu0 0.0
        %3915 = vmatprep.subr.mxu0 0.0
        %3916 = vmatpush1.msra.mxu0 0.0
        %3917 = vmatprep.subr.mxu0 0.0
        %3918 = vmatpush1.msra.mxu0 0.0
        %3919 = vmatprep.subr.mxu0 0.0
        %3920 = vmatpush1.msra.mxu0 0.0
        %3921 = vmatprep.subr.mxu0 0.0
        %3922 = vmatpush1.msra.mxu0 0.0
        %3923 = vmatprep.subr.mxu0 0.0
        %3924 = vmatpush1.msra.mxu0 0.0
        %3925 = vmatprep.subr.mxu0 0.0
        %3926 = vmatpush1.msra.mxu0 0.0
        %3927 = vmatprep.subr.mxu0 0.0
        %3928 = vmatpush1.msra.mxu0 0.0
        %3929 = vmatprep.subr.mxu0 0.0
        %3930 = vmatpush1.msra.mxu0 0.0
        %3931 = vmatprep.subr.mxu0 0.0
        %3932 = vmatpush1.msra.mxu0 0.0
        %3933 = vmatprep.subr.mxu0 0.0
        %3934 = vmatpush1.msra.mxu0 0.0
        %3935 = vmatprep.subr.mxu0 0.0
        %3936 = vmatpush1.msra.mxu0 0.0
        %3937 = vmatprep.subr.mxu0 0.0
        %3938 = vmatpush1.msra.mxu0 0.0
        %3939 = vmatprep.subr.mxu0 0.0
        %3940 = vmatpush1.msra.mxu0 0.0
        %3941 = vmatprep.subr.mxu0 0.0
        %3942 = vmatpush1.msra.mxu0 0.0
        %3943 = vmatprep.subr.mxu0 0.0
        %3944 = vmatpush1.msra.mxu0 0.0
        %3945 = vmatprep.subr.mxu0 0.0
        %3946 = vmatpush1.msra.mxu0 0.0
        %3947 = vmatprep.subr.mxu0 0.0
        %3948 = vmatpush1.msra.mxu0 0.0
        %3949 = vmatprep.subr.mxu0 0.0
        %3950 = vmatpush1.msra.mxu0 0.0
        %3951 = vmatprep.subr.mxu0 0.0
        %3952 = vmatpush1.msra.mxu0 0.0
        %3953 = vmatprep.subr.mxu0 0.0
        %3954 = vmatpush1.msra.mxu0 0.0
        %3955 = vmatprep.subr.mxu0 0.0
        %3956 = vmatpush1.msra.mxu0 0.0
        %3957 = vmatprep.subr.mxu0 0.0
        %3958 = vmatpush1.msra.mxu0 0.0
        %3959 = vmatprep.subr.mxu0 0.0
        %3960 = vmatpush1.msra.mxu0 0.0
        %3961 = vmatprep.subr.mxu0 0.0
        %3962 = vmatpush1.msra.mxu0 0.0
        %3963 = vmatprep.subr.mxu0 0.0
        %3964 = vmatpush1.msra.mxu0 0.0
        %3965 = vmatprep.mubr.f32.mxu0 0.0
        %3966 = vmatmul.mubr.f32.gmra.mrb[0].mxu0 %v3896
        %v3967 = vpop.f32.mrb[0].mxu0
        %v3968 = vadd.f32 0.0, %v3967
        %v3969 = vpop.f32.mrb[0].mxu0
        %3970 = vmatprep.mubr.f32.mxu0 0.0
        %3971 = vmatmul.mubr.f32.gmra.mrb[0].mxu0 %v3899
        %v3972 = vpop.f32.mrb[0].mxu0
        %v3973 = vadd.f32 0.0, %v3972
        %v3974 = vpop.f32.mrb[0].mxu0
        %3975 = vdwg.mxu0
        %v3976 = vadd.f32 %v3888, %v3968
        %v3977 = vadd.f32 %v3889, %v3973
        %v3978 = vxor.u32 %v3976, 2147483648
        %v3979 = vxor.u32 %v3977, 2147483648
        %v3980 = vmul.f32 %v3978, 1.442695
        %v3981 = vpow.pop %v3980
        %v3982 = vmul.f32 %v3979, 1.442695
        %v3983 = vpow.pop %v3982
        %v3984 = vadd.f32 %v3981, 1.0
        %v3985 = vadd.f32 %v3983, 1.0
        %v3986 = vrcp.pop %v3984
        %v3987 = vmul.f32 1.0, %v3986
        %v3988 = vrcp.pop %v3985
        %v3989 = vmul.f32 1.0, %v3988
        %v3990 = vmul.f32 %v3976, %v3987
        %v3991 = vmul.f32 %v3977, %v3989
        %v3992 = vld [vmem:[#allocation9] sm:$0xff]
        %v3993 = vld [vmem:[#allocation9 + $0x8] sm:$0xff]
        %v3994 = vld [vmem:[#allocation9 + $0x10] sm:$0xff]
        %v3995 = vld [vmem:[#allocation9 + $0x18] sm:$0xff]
        %v3996 = vsub.f32 %v3976, -2.2
        %v3997 = vsub.f32 %v3977, -2.2
        %v3998 = vmul.f32 %v3996, 2.5
        %v3999 = vmul.f32 %v3997, 2.5
        %v4000 = vsub.f32 %v3998, 1.0
        %v4001 = vsub.f32 %v3999, 1.0
        %v4002 = vsub.f32 %v4000, 1.0
        %v4003 = vsub.f32 %v4001, 1.0
        %v4004 = vsub.f32 %v4002, 1.0
        %v4005 = vsub.f32 %v4003, 1.0
        %v4006 = vsub.f32 %v4004, 1.0
        %v4007 = vsub.f32 %v4005, 1.0
        %v4008 = vsub.f32 %v4006, 1.0
        %v4009 = vsub.f32 %v4007, 1.0
        %v4010 = vsub.f32 %v4008, 1.0
        %v4011 = vsub.f32 %v4009, 1.0
        %v4012 = vsub.f32 %v4010, 1.0
        %v4013 = vsub.f32 %v4011, 1.0
        %v4014 = vsub.f32 %v4012, 1.0
        %v4015 = vsub.f32 %v4013, 1.0
        %v4016 = vsub.f32 %v4014, 1.0
        %v4017 = vsub.f32 %v4015, 1.0
        %v4018 = vsub.f32 %v4016, 1.0
        %v4019 = vsub.f32 %v4017, 1.0
        %v4020 = vsub.f32 %v4018, 1.0
        %v4021 = vsub.f32 %v4019, 1.0
        %vm4022 = vcmp.ge.f32.partialorder %v3998, 0.0
        %vm4023 = vcmp.ge.f32.partialorder %v3999, 0.0
        %v4024 = vsel %vm4022, 1.0, 0.0
        %v4025 = vsel %vm4023, 1.0, 0.0
        %vm4026 = vcmp.ge.f32.partialorder %v4000, 0.0
        %vm4027 = vcmp.ge.f32.partialorder %v4001, 0.0
        %v4028 = vsel %vm4026, 1.0, 0.0
        %v4029 = vsel %vm4027, 1.0, 0.0
        %vm4030 = vcmp.ge.f32.partialorder %v4002, 0.0
        %vm4031 = vcmp.ge.f32.partialorder %v4003, 0.0
        %v4032 = vsel %vm4030, 1.0, 0.0
        %v4033 = vsel %vm4031, 1.0, 0.0
        %vm4034 = vcmp.ge.f32.partialorder %v4004, 0.0
        %vm4035 = vcmp.ge.f32.partialorder %v4005, 0.0
        %v4036 = vsel %vm4034, 1.0, 0.0
        %v4037 = vsel %vm4035, 1.0, 0.0
        %vm4038 = vcmp.ge.f32.partialorder %v4006, 0.0
        %vm4039 = vcmp.ge.f32.partialorder %v4007, 0.0
        %v4040 = vsel %vm4038, 1.0, 0.0
        %v4041 = vsel %vm4039, 1.0, 0.0
        %vm4042 = vcmp.ge.f32.partialorder %v4008, 0.0
        %vm4043 = vcmp.ge.f32.partialorder %v4009, 0.0
        %v4044 = vsel %vm4042, 1.0, 0.0
        %v4045 = vsel %vm4043, 1.0, 0.0
        %vm4046 = vcmp.ge.f32.partialorder %v4010, 0.0
        %vm4047 = vcmp.ge.f32.partialorder %v4011, 0.0
        %v4048 = vsel %vm4046, 1.0, 0.0
        %v4049 = vsel %vm4047, 1.0, 0.0
        %vm4050 = vcmp.ge.f32.partialorder %v4012, 0.0
        %vm4051 = vcmp.ge.f32.partialorder %v4013, 0.0
        %v4052 = vsel %vm4050, 1.0, 0.0
        %v4053 = vsel %vm4051, 1.0, 0.0
        %vm4054 = vcmp.ge.f32.partialorder %v4014, 0.0
        %vm4055 = vcmp.ge.f32.partialorder %v4015, 0.0
        %v4056 = vsel %vm4054, 1.0, 0.0
        %v4057 = vsel %vm4055, 1.0, 0.0
        %vm4058 = vcmp.ge.f32.partialorder %v4016, 0.0
        %vm4059 = vcmp.ge.f32.partialorder %v4017, 0.0
        %v4060 = vsel %vm4058, 1.0, 0.0
        %v4061 = vsel %vm4059, 1.0, 0.0
        %vm4062 = vcmp.ge.f32.partialorder %v4018, 0.0
        %vm4063 = vcmp.ge.f32.partialorder %v4019, 0.0
        %v4064 = vsel %vm4062, 1.0, 0.0
        %v4065 = vsel %vm4063, 1.0, 0.0
        %vm4066 = vcmp.ge.f32.partialorder %v4020, 0.0
        %vm4067 = vcmp.ge.f32.partialorder %v4021, 0.0
        %v4068 = vsel %vm4066, 1.0, 0.0
        %v4069 = vsel %vm4067, 1.0, 0.0
        %v4070 = vsub.f32 %v4024, %v4028
        %v4071 = vsub.f32 %v4025, %v4029
        %v4072 = vsub.f32 %v4028, %v4032
        %v4073 = vsub.f32 %v4029, %v4033
        %v4074 = vsub.f32 %v4032, %v4036
        %v4075 = vsub.f32 %v4033, %v4037
        %v4076 = vsub.f32 %v4036, %v4040
        %v4077 = vsub.f32 %v4037, %v4041
        %v4078 = vsub.f32 %v4040, %v4044
        %v4079 = vsub.f32 %v4041, %v4045
        %v4080 = vsub.f32 %v4044, %v4048
        %v4081 = vsub.f32 %v4045, %v4049
        %v4082 = vsub.f32 %v4048, %v4052
        %v4083 = vsub.f32 %v4049, %v4053
        %v4084 = vsub.f32 %v4052, %v4056
        %v4085 = vsub.f32 %v4053, %v4057
        %v4086 = vsub.f32 %v4056, %v4060
        %v4087 = vsub.f32 %v4057, %v4061
        %v4088 = vsub.f32 %v4060, %v4064
        %v4089 = vsub.f32 %v4061, %v4065
        %v4090 = vsub.f32 %v4064, %v4068
        %v4091 = vsub.f32 %v4065, %v4069
        %v4092 = vmul.f32 %v3998, %v4070
        %v4093 = vmul.f32 %v3999, %v4071
        %v4094 = vmul.f32 %v4002, %v4072
        %v4095 = vmul.f32 %v4003, %v4073
        %v4096 = vsub.f32 %v4092, %v4094
        %v4097 = vsub.f32 %v4093, %v4095
        %v4098 = vmul.f32 %v4000, %v4072
        %v4099 = vmul.f32 %v4001, %v4073
        %v4100 = vmul.f32 %v4004, %v4074
        %v4101 = vmul.f32 %v4005, %v4075
        %v4102 = vsub.f32 %v4098, %v4100
        %v4103 = vsub.f32 %v4099, %v4101
        %v4104 = vmul.f32 %v4002, %v4074
        %v4105 = vmul.f32 %v4003, %v4075
        %v4106 = vmul.f32 %v4006, %v4076
        %v4107 = vmul.f32 %v4007, %v4077
        %v4108 = vsub.f32 %v4104, %v4106
        %v4109 = vsub.f32 %v4105, %v4107
        %v4110 = vmul.f32 %v4004, %v4076
        %v4111 = vmul.f32 %v4005, %v4077
        %v4112 = vmul.f32 %v4008, %v4078
        %v4113 = vmul.f32 %v4009, %v4079
        %v4114 = vsub.f32 %v4110, %v4112
        %v4115 = vsub.f32 %v4111, %v4113
        %v4116 = vmul.f32 %v4006, %v4078
        %v4117 = vmul.f32 %v4007, %v4079
        %v4118 = vmul.f32 %v4010, %v4080
        %v4119 = vmul.f32 %v4011, %v4081
        %v4120 = vsub.f32 %v4116, %v4118
        %v4121 = vsub.f32 %v4117, %v4119
        %v4122 = vmul.f32 %v4008, %v4080
        %v4123 = vmul.f32 %v4009, %v4081
        %v4124 = vmul.f32 %v4012, %v4082
        %v4125 = vmul.f32 %v4013, %v4083
        %v4126 = vsub.f32 %v4122, %v4124
        %v4127 = vsub.f32 %v4123, %v4125
        %v4128 = vmul.f32 %v4010, %v4082
        %v4129 = vmul.f32 %v4011, %v4083
        %v4130 = vmul.f32 %v4014, %v4084
        %v4131 = vmul.f32 %v4015, %v4085
        %v4132 = vsub.f32 %v4128, %v4130
        %v4133 = vsub.f32 %v4129, %v4131
        %v4134 = vmul.f32 %v4012, %v4084
        %v4135 = vmul.f32 %v4013, %v4085
        %v4136 = vmul.f32 %v4016, %v4086
        %v4137 = vmul.f32 %v4017, %v4087
        %v4138 = vsub.f32 %v4134, %v4136
        %v4139 = vsub.f32 %v4135, %v4137
        %v4140 = vmul.f32 %v4014, %v4086
        %v4141 = vmul.f32 %v4015, %v4087
        %v4142 = vmul.f32 %v4018, %v4088
        %v4143 = vmul.f32 %v4019, %v4089
        %v4144 = vsub.f32 %v4140, %v4142
        %v4145 = vsub.f32 %v4141, %v4143
        %v4146 = vmul.f32 %v4016, %v4088
        %v4147 = vmul.f32 %v4017, %v4089
        %v4148 = vmul.f32 %v4020, %v4090
        %v4149 = vmul.f32 %v4021, %v4091
        %v4150 = vsub.f32 %v4146, %v4148
        %v4151 = vsub.f32 %v4147, %v4149
        %v4152 = vmul.f32 %v3998, %v4096
        %v4153 = vmul.f32 %v3999, %v4097
        %v4154 = vmul.f32 %v4004, %v4102
        %v4155 = vmul.f32 %v4005, %v4103
        %v4156 = vsub.f32 %v4152, %v4154
        %v4157 = vsub.f32 %v4153, %v4155
        %v4158 = vmul.f32 %v4000, %v4102
        %v4159 = vmul.f32 %v4001, %v4103
        %v4160 = vmul.f32 %v4006, %v4108
        %v4161 = vmul.f32 %v4007, %v4109
        %v4162 = vsub.f32 %v4158, %v4160
        %v4163 = vsub.f32 %v4159, %v4161
        %v4164 = vmul.f32 %v4002, %v4108
        %v4165 = vmul.f32 %v4003, %v4109
        %v4166 = vmul.f32 %v4008, %v4114
        %v4167 = vmul.f32 %v4009, %v4115
        %v4168 = vsub.f32 %v4164, %v4166
        %v4169 = vsub.f32 %v4165, %v4167
        %v4170 = vmul.f32 %v4004, %v4114
        %v4171 = vmul.f32 %v4005, %v4115
        %v4172 = vmul.f32 %v4010, %v4120
        %v4173 = vmul.f32 %v4011, %v4121
        %v4174 = vsub.f32 %v4170, %v4172
        %v4175 = vsub.f32 %v4171, %v4173
        %v4176 = vmul.f32 %v4006, %v4120
        %v4177 = vmul.f32 %v4007, %v4121
        %v4178 = vmul.f32 %v4012, %v4126
        %v4179 = vmul.f32 %v4013, %v4127
        %v4180 = vsub.f32 %v4176, %v4178
        %v4181 = vsub.f32 %v4177, %v4179
        %v4182 = vmul.f32 %v4008, %v4126
        %v4183 = vmul.f32 %v4009, %v4127
        %v4184 = vmul.f32 %v4014, %v4132
        %v4185 = vmul.f32 %v4015, %v4133
        %v4186 = vsub.f32 %v4182, %v4184
        %v4187 = vsub.f32 %v4183, %v4185
        %v4188 = vmul.f32 %v4010, %v4132
        %v4189 = vmul.f32 %v4011, %v4133
        %v4190 = vmul.f32 %v4016, %v4138
        %v4191 = vmul.f32 %v4017, %v4139
        %v4192 = vsub.f32 %v4188, %v4190
        %v4193 = vsub.f32 %v4189, %v4191
        %v4194 = vmul.f32 %v4012, %v4138
        %v4195 = vmul.f32 %v4013, %v4139
        %v4196 = vmul.f32 %v4018, %v4144
        %v4197 = vmul.f32 %v4019, %v4145
        %v4198 = vsub.f32 %v4194, %v4196
        %v4199 = vsub.f32 %v4195, %v4197
        %v4200 = vmul.f32 %v4014, %v4144
        %v4201 = vmul.f32 %v4015, %v4145
        %v4202 = vmul.f32 %v4020, %v4150
        %v4203 = vmul.f32 %v4021, %v4151
        %v4204 = vsub.f32 %v4200, %v4202
        %v4205 = vsub.f32 %v4201, %v4203
        %v4206 = vmul.f32 %v3998, %v4156
        %v4207 = vmul.f32 %v3999, %v4157
        %v4208 = vmul.f32 %v4006, %v4162
        %v4209 = vmul.f32 %v4007, %v4163
        %v4210 = vsub.f32 %v4206, %v4208
        %v4211 = vsub.f32 %v4207, %v4209
        %v4212 = vmul.f32 %v4000, %v4162
        %v4213 = vmul.f32 %v4001, %v4163
        %v4214 = vmul.f32 %v4008, %v4168
        %v4215 = vmul.f32 %v4009, %v4169
        %v4216 = vsub.f32 %v4212, %v4214
        %v4217 = vsub.f32 %v4213, %v4215
        %v4218 = vmul.f32 %v4002, %v4168
        %v4219 = vmul.f32 %v4003, %v4169
        %v4220 = vmul.f32 %v4010, %v4174
        %v4221 = vmul.f32 %v4011, %v4175
        %v4222 = vsub.f32 %v4218, %v4220
        %v4223 = vsub.f32 %v4219, %v4221
        %v4224 = vmul.f32 %v4004, %v4174
        %v4225 = vmul.f32 %v4005, %v4175
        %v4226 = vmul.f32 %v4012, %v4180
        %v4227 = vmul.f32 %v4013, %v4181
        %v4228 = vsub.f32 %v4224, %v4226
        %v4229 = vsub.f32 %v4225, %v4227
        %v4230 = vmul.f32 %v4006, %v4180
        %v4231 = vmul.f32 %v4007, %v4181
        %v4232 = vmul.f32 %v4014, %v4186
        %v4233 = vmul.f32 %v4015, %v4187
        %v4234 = vsub.f32 %v4230, %v4232
        %v4235 = vsub.f32 %v4231, %v4233
        %v4236 = vmul.f32 %v4008, %v4186
        %v4237 = vmul.f32 %v4009, %v4187
        %v4238 = vmul.f32 %v4016, %v4192
        %v4239 = vmul.f32 %v4017, %v4193
        %v4240 = vsub.f32 %v4236, %v4238
        %v4241 = vsub.f32 %v4237, %v4239
        %v4242 = vmul.f32 %v4010, %v4192
        %v4243 = vmul.f32 %v4011, %v4193
        %v4244 = vmul.f32 %v4018, %v4198
        %v4245 = vmul.f32 %v4019, %v4199
        %v4246 = vsub.f32 %v4242, %v4244
        %v4247 = vsub.f32 %v4243, %v4245
        %v4248 = vmul.f32 %v4012, %v4198
        %v4249 = vmul.f32 %v4013, %v4199
        %v4250 = vmul.f32 %v4020, %v4204
        %v4251 = vmul.f32 %v4021, %v4205
        %v4252 = vsub.f32 %v4248, %v4250
        %v4253 = vsub.f32 %v4249, %v4251
        %v4254 = vld [vmem:[#allocation10] sm:$0xff]
        %v4255 = vld [vmem:[#allocation10 + $0x8] sm:$0xff]
        %v4256 = vld [vmem:[#allocation10 + $0x10] sm:$0xff]
        %v4257 = vld [vmem:[#allocation10 + $0x18] sm:$0xff]
        %v4259 = vsel %vm2055, %v4210, 0
        %v4262 = vsel %vm2055, %v4211, 0
        %4264 = vmatprep.subr.mxu0 0.0
        %4265 = vmatpush1.msra.mxu0 %v4254
        %4266 = vmatprep.subr.mxu0 0.0
        %4267 = vmatpush1.msra.mxu0 %v4255
        %4268 = vmatprep.subr.mxu0 0.0
        %4269 = vmatpush1.msra.mxu0 %v4256
        %4270 = vmatprep.subr.mxu0 0.0
        %4271 = vmatpush1.msra.mxu0 %v4257
        %4272 = vmatprep.subr.mxu0 0.0
        %4273 = vmatpush1.msra.mxu0 0.0
        %4274 = vmatprep.subr.mxu0 0.0
        %4275 = vmatpush1.msra.mxu0 0.0
        %4276 = vmatprep.subr.mxu0 0.0
        %4277 = vmatpush1.msra.mxu0 0.0
        %4278 = vmatprep.subr.mxu0 0.0
        %4279 = vmatpush1.msra.mxu0 0.0
        %4280 = vmatprep.subr.mxu0 0.0
        %4281 = vmatpush1.msra.mxu0 0.0
        %4282 = vmatprep.subr.mxu0 0.0
        %4283 = vmatpush1.msra.mxu0 0.0
        %4284 = vmatprep.subr.mxu0 0.0
        %4285 = vmatpush1.msra.mxu0 0.0
        %4286 = vmatprep.subr.mxu0 0.0
        %4287 = vmatpush1.msra.mxu0 0.0
        %4288 = vmatprep.subr.mxu0 0.0
        %4289 = vmatpush1.msra.mxu0 0.0
        %4290 = vmatprep.subr.mxu0 0.0
        %4291 = vmatpush1.msra.mxu0 0.0
        %4292 = vmatprep.subr.mxu0 0.0
        %4293 = vmatpush1.msra.mxu0 0.0
        %4294 = vmatprep.subr.mxu0 0.0
        %4295 = vmatpush1.msra.mxu0 0.0
        %4296 = vmatprep.subr.mxu0 0.0
        %4297 = vmatpush1.msra.mxu0 0.0
        %4298 = vmatprep.subr.mxu0 0.0
        %4299 = vmatpush1.msra.mxu0 0.0
        %4300 = vmatprep.subr.mxu0 0.0
        %4301 = vmatpush1.msra.mxu0 0.0
        %4302 = vmatprep.subr.mxu0 0.0
        %4303 = vmatpush1.msra.mxu0 0.0
        %4304 = vmatprep.subr.mxu0 0.0
        %4305 = vmatpush1.msra.mxu0 0.0
        %4306 = vmatprep.subr.mxu0 0.0
        %4307 = vmatpush1.msra.mxu0 0.0
        %4308 = vmatprep.subr.mxu0 0.0
        %4309 = vmatpush1.msra.mxu0 0.0
        %4310 = vmatprep.subr.mxu0 0.0
        %4311 = vmatpush1.msra.mxu0 0.0
        %4312 = vmatprep.subr.mxu0 0.0
        %4313 = vmatpush1.msra.mxu0 0.0
        %4314 = vmatprep.subr.mxu0 0.0
        %4315 = vmatpush1.msra.mxu0 0.0
        %4316 = vmatprep.subr.mxu0 0.0
        %4317 = vmatpush1.msra.mxu0 0.0
        %4318 = vmatprep.subr.mxu0 0.0
        %4319 = vmatpush1.msra.mxu0 0.0
        %4320 = vmatprep.subr.mxu0 0.0
        %4321 = vmatpush1.msra.mxu0 0.0
        %4322 = vmatprep.subr.mxu0 0.0
        %4323 = vmatpush1.msra.mxu0 0.0
        %4324 = vmatprep.subr.mxu0 0.0
        %4325 = vmatpush1.msra.mxu0 0.0
        %4326 = vmatprep.subr.mxu0 0.0
        %4327 = vmatpush1.msra.mxu0 0.0
        %4328 = vmatprep.mubr.f32.mxu0 0.0
        %4329 = vmatmul.mubr.f32.gmra.mrb[0].mxu0 %v4259
        %v4330 = vpop.f32.mrb[0].mxu0
        %v4331 = vadd.f32 0.0, %v4330
        %v4332 = vpop.f32.mrb[0].mxu0
        %4333 = vmatprep.mubr.f32.mxu0 0.0
        %4334 = vmatmul.mubr.f32.gmra.mrb[0].mxu0 %v4262
        %v4335 = vpop.f32.mrb[0].mxu0
        %v4336 = vadd.f32 0.0, %v4335
        %v4337 = vpop.f32.mrb[0].mxu0
        %4338 = vdwg.mxu0
        %v4340 = vsel %vm2055, %v3990, 0
        %v4343 = vsel %vm2055, %v3991, 0
        %4345 = vmatprep.subr.mxu0 0.0
        %4346 = vmatpush1.msra.mxu0 %v3992
        %4347 = vmatprep.subr.mxu0 0.0
        %4348 = vmatpush1.msra.mxu0 %v3993
        %4349 = vmatprep.subr.mxu0 0.0
        %4350 = vmatpush1.msra.mxu0 %v3994
        %4351 = vmatprep.subr.mxu0 0.0
        %4352 = vmatpush1.msra.mxu0 %v3995
        %4353 = vmatprep.subr.mxu0 0.0
        %4354 = vmatpush1.msra.mxu0 0.0
        %4355 = vmatprep.subr.mxu0 0.0
        %4356 = vmatpush1.msra.mxu0 0.0
        %4357 = vmatprep.subr.mxu0 0.0
        %4358 = vmatpush1.msra.mxu0 0.0
        %4359 = vmatprep.subr.mxu0 0.0
        %4360 = vmatpush1.msra.mxu0 0.0
        %4361 = vmatprep.subr.mxu0 0.0
        %4362 = vmatpush1.msra.mxu0 0.0
        %4363 = vmatprep.subr.mxu0 0.0
        %4364 = vmatpush1.msra.mxu0 0.0
        %4365 = vmatprep.subr.mxu0 0.0
        %4366 = vmatpush1.msra.mxu0 0.0
        %4367 = vmatprep.subr.mxu0 0.0
        %4368 = vmatpush1.msra.mxu0 0.0
        %4369 = vmatprep.subr.mxu0 0.0
        %4370 = vmatpush1.msra.mxu0 0.0
        %4371 = vmatprep.subr.mxu0 0.0
        %4372 = vmatpush1.msra.mxu0 0.0
        %4373 = vmatprep.subr.mxu0 0.0
        %4374 = vmatpush1.msra.mxu0 0.0
        %4375 = vmatprep.subr.mxu0 0.0
        %4376 = vmatpush1.msra.mxu0 0.0
        %4377 = vmatprep.subr.mxu0 0.0
        %4378 = vmatpush1.msra.mxu0 0.0
        %4379 = vmatprep.subr.mxu0 0.0
        %4380 = vmatpush1.msra.mxu0 0.0
        %4381 = vmatprep.subr.mxu0 0.0
        %4382 = vmatpush1.msra.mxu0 0.0
        %4383 = vmatprep.subr.mxu0 0.0
        %4384 = vmatpush1.msra.mxu0 0.0
        %4385 = vmatprep.subr.mxu0 0.0
        %4386 = vmatpush1.msra.mxu0 0.0
        %4387 = vmatprep.subr.mxu0 0.0
        %4388 = vmatpush1.msra.mxu0 0.0
        %4389 = vmatprep.subr.mxu0 0.0
        %4390 = vmatpush1.msra.mxu0 0.0
        %4391 = vmatprep.subr.mxu0 0.0
        %4392 = vmatpush1.msra.mxu0 0.0
        %4393 = vmatprep.subr.mxu0 0.0
        %4394 = vmatpush1.msra.mxu0 0.0
        %4395 = vmatprep.subr.mxu0 0.0
        %4396 = vmatpush1.msra.mxu0 0.0
        %4397 = vmatprep.subr.mxu0 0.0
        %4398 = vmatpush1.msra.mxu0 0.0
        %4399 = vmatprep.subr.mxu0 0.0
        %4400 = vmatpush1.msra.mxu0 0.0
        %4401 = vmatprep.subr.mxu0 0.0
        %4402 = vmatpush1.msra.mxu0 0.0
        %4403 = vmatprep.subr.mxu0 0.0
        %4404 = vmatpush1.msra.mxu0 0.0
        %4405 = vmatprep.subr.mxu0 0.0
        %4406 = vmatpush1.msra.mxu0 0.0
        %4407 = vmatprep.subr.mxu0 0.0
        %4408 = vmatpush1.msra.mxu0 0.0
        %4409 = vmatprep.mubr.f32.mxu0 0.0
        %4410 = vmatmul.mubr.f32.gmra.mrb[0].mxu0 %v4340
        %v4411 = vpop.f32.mrb[0].mxu0
        %v4412 = vadd.f32 %v4331, %v4411
        %v4413 = vpop.f32.mrb[0].mxu0
        %4414 = vmatprep.mubr.f32.mxu0 0.0
        %4415 = vmatmul.mubr.f32.gmra.mrb[0].mxu0 %v4343
        %v4416 = vpop.f32.mrb[0].mxu0
        %v4417 = vadd.f32 %v4336, %v4416
        %v4418 = vpop.f32.mrb[0].mxu0
        %4419 = vdwg.mxu0
        %s4420 = scalar_lea.vmem [#allocation10], 32
        %v4421 = vld [vmem:[%s4420] sm:$0xff]
        %v4422 = vld [vmem:[%s4420 + $0x8] sm:$0xff]
        %v4423 = vld [vmem:[%s4420 + $0x10] sm:$0xff]
        %v4424 = vld [vmem:[%s4420 + $0x18] sm:$0xff]
        %v4426 = vsel %vm2055, %v4216, 0
        %v4429 = vsel %vm2055, %v4217, 0
        %4431 = vmatprep.subr.mxu0 0.0
        %4432 = vmatpush1.msra.mxu0 %v4421
        %4433 = vmatprep.subr.mxu0 0.0
        %4434 = vmatpush1.msra.mxu0 %v4422
        %4435 = vmatprep.subr.mxu0 0.0
        %4436 = vmatpush1.msra.mxu0 %v4423
        %4437 = vmatprep.subr.mxu0 0.0
        %4438 = vmatpush1.msra.mxu0 %v4424
        %4439 = vmatprep.subr.mxu0 0.0
        %4440 = vmatpush1.msra.mxu0 0.0
        %4441 = vmatprep.subr.mxu0 0.0
        %4442 = vmatpush1.msra.mxu0 0.0
        %4443 = vmatprep.subr.mxu0 0.0
        %4444 = vmatpush1.msra.mxu0 0.0
        %4445 = vmatprep.subr.mxu0 0.0
        %4446 = vmatpush1.msra.mxu0 0.0
        %4447 = vmatprep.subr.mxu0 0.0
        %4448 = vmatpush1.msra.mxu0 0.0
        %4449 = vmatprep.subr.mxu0 0.0
        %4450 = vmatpush1.msra.mxu0 0.0
        %4451 = vmatprep.subr.mxu0 0.0
        %4452 = vmatpush1.msra.mxu0 0.0
        %4453 = vmatprep.subr.mxu0 0.0
        %4454 = vmatpush1.msra.mxu0 0.0
        %4455 = vmatprep.subr.mxu0 0.0
        %4456 = vmatpush1.msra.mxu0 0.0
        %4457 = vmatprep.subr.mxu0 0.0
        %4458 = vmatpush1.msra.mxu0 0.0
        %4459 = vmatprep.subr.mxu0 0.0
        %4460 = vmatpush1.msra.mxu0 0.0
        %4461 = vmatprep.subr.mxu0 0.0
        %4462 = vmatpush1.msra.mxu0 0.0
        %4463 = vmatprep.subr.mxu0 0.0
        %4464 = vmatpush1.msra.mxu0 0.0
        %4465 = vmatprep.subr.mxu0 0.0
        %4466 = vmatpush1.msra.mxu0 0.0
        %4467 = vmatprep.subr.mxu0 0.0
        %4468 = vmatpush1.msra.mxu0 0.0
        %4469 = vmatprep.subr.mxu0 0.0
        %4470 = vmatpush1.msra.mxu0 0.0
        %4471 = vmatprep.subr.mxu0 0.0
        %4472 = vmatpush1.msra.mxu0 0.0
        %4473 = vmatprep.subr.mxu0 0.0
        %4474 = vmatpush1.msra.mxu0 0.0
        %4475 = vmatprep.subr.mxu0 0.0
        %4476 = vmatpush1.msra.mxu0 0.0
        %4477 = vmatprep.subr.mxu0 0.0
        %4478 = vmatpush1.msra.mxu0 0.0
        %4479 = vmatprep.subr.mxu0 0.0
        %4480 = vmatpush1.msra.mxu0 0.0
        %4481 = vmatprep.subr.mxu0 0.0
        %4482 = vmatpush1.msra.mxu0 0.0
        %4483 = vmatprep.subr.mxu0 0.0
        %4484 = vmatpush1.msra.mxu0 0.0
        %4485 = vmatprep.subr.mxu0 0.0
        %4486 = vmatpush1.msra.mxu0 0.0
        %4487 = vmatprep.subr.mxu0 0.0
        %4488 = vmatpush1.msra.mxu0 0.0
        %4489 = vmatprep.subr.mxu0 0.0
        %4490 = vmatpush1.msra.mxu0 0.0
        %4491 = vmatprep.subr.mxu0 0.0
        %4492 = vmatpush1.msra.mxu0 0.0
        %4493 = vmatprep.subr.mxu0 0.0
        %4494 = vmatpush1.msra.mxu0 0.0
        %4495 = vmatprep.mubr.f32.mxu0 0.0
        %4496 = vmatmul.mubr.f32.gmra.mrb[0].mxu0 %v4426
        %v4497 = vpop.f32.mrb[0].mxu0
        %v4498 = vadd.f32 0.0, %v4497
        %v4499 = vpop.f32.mrb[0].mxu0
        %4500 = vmatprep.mubr.f32.mxu0 0.0
        %4501 = vmatmul.mubr.f32.gmra.mrb[0].mxu0 %v4429
        %v4502 = vpop.f32.mrb[0].mxu0
        %v4503 = vadd.f32 0.0, %v4502
        %v4504 = vpop.f32.mrb[0].mxu0
        %4505 = vdwg.mxu0
        %v4506 = vadd.f32 %v4412, %v4498
        %v4507 = vadd.f32 %v4417, %v4503
        %s4508 = scalar_lea.vmem [#allocation10], 64
        %v4509 = vld [vmem:[%s4508] sm:$0xff]
        %v4510 = vld [vmem:[%s4508 + $0x8] sm:$0xff]
        %v4511 = vld [vmem:[%s4508 + $0x10] sm:$0xff]
        %v4512 = vld [vmem:[%s4508 + $0x18] sm:$0xff]
        %v4514 = vsel %vm2055, %v4222, 0
        %v4517 = vsel %vm2055, %v4223, 0
        %4519 = vmatprep.subr.mxu0 0.0
        %4520 = vmatpush1.msra.mxu0 %v4509
        %4521 = vmatprep.subr.mxu0 0.0
        %4522 = vmatpush1.msra.mxu0 %v4510
        %4523 = vmatprep.subr.mxu0 0.0
        %4524 = vmatpush1.msra.mxu0 %v4511
        %4525 = vmatprep.subr.mxu0 0.0
        %4526 = vmatpush1.msra.mxu0 %v4512
        %4527 = vmatprep.subr.mxu0 0.0
        %4528 = vmatpush1.msra.mxu0 0.0
        %4529 = vmatprep.subr.mxu0 0.0
        %4530 = vmatpush1.msra.mxu0 0.0
        %4531 = vmatprep.subr.mxu0 0.0
        %4532 = vmatpush1.msra.mxu0 0.0
        %4533 = vmatprep.subr.mxu0 0.0
        %4534 = vmatpush1.msra.mxu0 0.0
        %4535 = vmatprep.subr.mxu0 0.0
        %4536 = vmatpush1.msra.mxu0 0.0
        %4537 = vmatprep.subr.mxu0 0.0
        %4538 = vmatpush1.msra.mxu0 0.0
        %4539 = vmatprep.subr.mxu0 0.0
        %4540 = vmatpush1.msra.mxu0 0.0
        %4541 = vmatprep.subr.mxu0 0.0
        %4542 = vmatpush1.msra.mxu0 0.0
        %4543 = vmatprep.subr.mxu0 0.0
        %4544 = vmatpush1.msra.mxu0 0.0
        %4545 = vmatprep.subr.mxu0 0.0
        %4546 = vmatpush1.msra.mxu0 0.0
        %4547 = vmatprep.subr.mxu0 0.0
        %4548 = vmatpush1.msra.mxu0 0.0
        %4549 = vmatprep.subr.mxu0 0.0
        %4550 = vmatpush1.msra.mxu0 0.0
        %4551 = vmatprep.subr.mxu0 0.0
        %4552 = vmatpush1.msra.mxu0 0.0
        %4553 = vmatprep.subr.mxu0 0.0
        %4554 = vmatpush1.msra.mxu0 0.0
        %4555 = vmatprep.subr.mxu0 0.0
        %4556 = vmatpush1.msra.mxu0 0.0
        %4557 = vmatprep.subr.mxu0 0.0
        %4558 = vmatpush1.msra.mxu0 0.0
        %4559 = vmatprep.subr.mxu0 0.0
        %4560 = vmatpush1.msra.mxu0 0.0
        %4561 = vmatprep.subr.mxu0 0.0
        %4562 = vmatpush1.msra.mxu0 0.0
        %4563 = vmatprep.subr.mxu0 0.0
        %4564 = vmatpush1.msra.mxu0 0.0
        %4565 = vmatprep.subr.mxu0 0.0
        %4566 = vmatpush1.msra.mxu0 0.0
        %4567 = vmatprep.subr.mxu0 0.0
        %4568 = vmatpush1.msra.mxu0 0.0
        %4569 = vmatprep.subr.mxu0 0.0
        %4570 = vmatpush1.msra.mxu0 0.0
        %4571 = vmatprep.subr.mxu0 0.0
        %4572 = vmatpush1.msra.mxu0 0.0
        %4573 = vmatprep.subr.mxu0 0.0
        %4574 = vmatpush1.msra.mxu0 0.0
        %4575 = vmatprep.subr.mxu0 0.0
        %4576 = vmatpush1.msra.mxu0 0.0
        %4577 = vmatprep.subr.mxu0 0.0
        %4578 = vmatpush1.msra.mxu0 0.0
        %4579 = vmatprep.subr.mxu0 0.0
        %4580 = vmatpush1.msra.mxu0 0.0
        %4581 = vmatprep.subr.mxu0 0.0
        %4582 = vmatpush1.msra.mxu0 0.0
        %4583 = vmatprep.mubr.f32.mxu0 0.0
        %4584 = vmatmul.mubr.f32.gmra.mrb[0].mxu0 %v4514
        %v4585 = vpop.f32.mrb[0].mxu0
        %v4586 = vadd.f32 0.0, %v4585
        %v4587 = vpop.f32.mrb[0].mxu0
        %4588 = vmatprep.mubr.f32.mxu0 0.0
        %4589 = vmatmul.mubr.f32.gmra.mrb[0].mxu0 %v4517
        %v4590 = vpop.f32.mrb[0].mxu0
        %v4591 = vadd.f32 0.0, %v4590
        %v4592 = vpop.f32.mrb[0].mxu0
        %4593 = vdwg.mxu0
        %v4594 = vadd.f32 %v4506, %v4586
        %v4595 = vadd.f32 %v4507, %v4591
        %s4596 = scalar_lea.vmem [#allocation10], 96
        %v4597 = vld [vmem:[%s4596] sm:$0xff]
        %v4598 = vld [vmem:[%s4596 + $0x8] sm:$0xff]
        %v4599 = vld [vmem:[%s4596 + $0x10] sm:$0xff]
        %v4600 = vld [vmem:[%s4596 + $0x18] sm:$0xff]
        %v4602 = vsel %vm2055, %v4228, 0
        %v4605 = vsel %vm2055, %v4229, 0
        %4607 = vmatprep.subr.mxu0 0.0
        %4608 = vmatpush1.msra.mxu0 %v4597
        %4609 = vmatprep.subr.mxu0 0.0
        %4610 = vmatpush1.msra.mxu0 %v4598
        %4611 = vmatprep.subr.mxu0 0.0
        %4612 = vmatpush1.msra.mxu0 %v4599
        %4613 = vmatprep.subr.mxu0 0.0
        %4614 = vmatpush1.msra.mxu0 %v4600
        %4615 = vmatprep.subr.mxu0 0.0
        %4616 = vmatpush1.msra.mxu0 0.0
        %4617 = vmatprep.subr.mxu0 0.0
        %4618 = vmatpush1.msra.mxu0 0.0
        %4619 = vmatprep.subr.mxu0 0.0
        %4620 = vmatpush1.msra.mxu0 0.0
        %4621 = vmatprep.subr.mxu0 0.0
        %4622 = vmatpush1.msra.mxu0 0.0
        %4623 = vmatprep.subr.mxu0 0.0
        %4624 = vmatpush1.msra.mxu0 0.0
        %4625 = vmatprep.subr.mxu0 0.0
        %4626 = vmatpush1.msra.mxu0 0.0
        %4627 = vmatprep.subr.mxu0 0.0
        %4628 = vmatpush1.msra.mxu0 0.0
        %4629 = vmatprep.subr.mxu0 0.0
        %4630 = vmatpush1.msra.mxu0 0.0
        %4631 = vmatprep.subr.mxu0 0.0
        %4632 = vmatpush1.msra.mxu0 0.0
        %4633 = vmatprep.subr.mxu0 0.0
        %4634 = vmatpush1.msra.mxu0 0.0
        %4635 = vmatprep.subr.mxu0 0.0
        %4636 = vmatpush1.msra.mxu0 0.0
        %4637 = vmatprep.subr.mxu0 0.0
        %4638 = vmatpush1.msra.mxu0 0.0
        %4639 = vmatprep.subr.mxu0 0.0
        %4640 = vmatpush1.msra.mxu0 0.0
        %4641 = vmatprep.subr.mxu0 0.0
        %4642 = vmatpush1.msra.mxu0 0.0
        %4643 = vmatprep.subr.mxu0 0.0
        %4644 = vmatpush1.msra.mxu0 0.0
        %4645 = vmatprep.subr.mxu0 0.0
        %4646 = vmatpush1.msra.mxu0 0.0
        %4647 = vmatprep.subr.mxu0 0.0
        %4648 = vmatpush1.msra.mxu0 0.0
        %4649 = vmatprep.subr.mxu0 0.0
        %4650 = vmatpush1.msra.mxu0 0.0
        %4651 = vmatprep.subr.mxu0 0.0
        %4652 = vmatpush1.msra.mxu0 0.0
        %4653 = vmatprep.subr.mxu0 0.0
        %4654 = vmatpush1.msra.mxu0 0.0
        %4655 = vmatprep.subr.mxu0 0.0
        %4656 = vmatpush1.msra.mxu0 0.0
        %4657 = vmatprep.subr.mxu0 0.0
        %4658 = vmatpush1.msra.mxu0 0.0
        %4659 = vmatprep.subr.mxu0 0.0
        %4660 = vmatpush1.msra.mxu0 0.0
        %4661 = vmatprep.subr.mxu0 0.0
        %4662 = vmatpush1.msra.mxu0 0.0
        %4663 = vmatprep.subr.mxu0 0.0
        %4664 = vmatpush1.msra.mxu0 0.0
        %4665 = vmatprep.subr.mxu0 0.0
        %4666 = vmatpush1.msra.mxu0 0.0
        %4667 = vmatprep.subr.mxu0 0.0
        %4668 = vmatpush1.msra.mxu0 0.0
        %4669 = vmatprep.subr.mxu0 0.0
        %4670 = vmatpush1.msra.mxu0 0.0
        %4671 = vmatprep.mubr.f32.mxu0 0.0
        %4672 = vmatmul.mubr.f32.gmra.mrb[0].mxu0 %v4602
        %v4673 = vpop.f32.mrb[0].mxu0
        %v4674 = vadd.f32 0.0, %v4673
        %v4675 = vpop.f32.mrb[0].mxu0
        %4676 = vmatprep.mubr.f32.mxu0 0.0
        %4677 = vmatmul.mubr.f32.gmra.mrb[0].mxu0 %v4605
        %v4678 = vpop.f32.mrb[0].mxu0
        %v4679 = vadd.f32 0.0, %v4678
        %v4680 = vpop.f32.mrb[0].mxu0
        %4681 = vdwg.mxu0
        %v4682 = vadd.f32 %v4594, %v4674
        %v4683 = vadd.f32 %v4595, %v4679
        %s4684 = scalar_lea.vmem [#allocation10], 128
        %v4685 = vld [vmem:[%s4684] sm:$0xff]
        %v4686 = vld [vmem:[%s4684 + $0x8] sm:$0xff]
        %v4687 = vld [vmem:[%s4684 + $0x10] sm:$0xff]
        %v4688 = vld [vmem:[%s4684 + $0x18] sm:$0xff]
        %v4690 = vsel %vm2055, %v4234, 0
        %v4693 = vsel %vm2055, %v4235, 0
        %4695 = vmatprep.subr.mxu0 0.0
        %4696 = vmatpush1.msra.mxu0 %v4685
        %4697 = vmatprep.subr.mxu0 0.0
        %4698 = vmatpush1.msra.mxu0 %v4686
        %4699 = vmatprep.subr.mxu0 0.0
        %4700 = vmatpush1.msra.mxu0 %v4687
        %4701 = vmatprep.subr.mxu0 0.0
        %4702 = vmatpush1.msra.mxu0 %v4688
        %4703 = vmatprep.subr.mxu0 0.0
        %4704 = vmatpush1.msra.mxu0 0.0
        %4705 = vmatprep.subr.mxu0 0.0
        %4706 = vmatpush1.msra.mxu0 0.0
        %4707 = vmatprep.subr.mxu0 0.0
        %4708 = vmatpush1.msra.mxu0 0.0
        %4709 = vmatprep.subr.mxu0 0.0
        %4710 = vmatpush1.msra.mxu0 0.0
        %4711 = vmatprep.subr.mxu0 0.0
        %4712 = vmatpush1.msra.mxu0 0.0
        %4713 = vmatprep.subr.mxu0 0.0
        %4714 = vmatpush1.msra.mxu0 0.0
        %4715 = vmatprep.subr.mxu0 0.0
        %4716 = vmatpush1.msra.mxu0 0.0
        %4717 = vmatprep.subr.mxu0 0.0
        %4718 = vmatpush1.msra.mxu0 0.0
        %4719 = vmatprep.subr.mxu0 0.0
        %4720 = vmatpush1.msra.mxu0 0.0
        %4721 = vmatprep.subr.mxu0 0.0
        %4722 = vmatpush1.msra.mxu0 0.0
        %4723 = vmatprep.subr.mxu0 0.0
        %4724 = vmatpush1.msra.mxu0 0.0
        %4725 = vmatprep.subr.mxu0 0.0
        %4726 = vmatpush1.msra.mxu0 0.0
        %4727 = vmatprep.subr.mxu0 0.0
        %4728 = vmatpush1.msra.mxu0 0.0
        %4729 = vmatprep.subr.mxu0 0.0
        %4730 = vmatpush1.msra.mxu0 0.0
        %4731 = vmatprep.subr.mxu0 0.0
        %4732 = vmatpush1.msra.mxu0 0.0
        %4733 = vmatprep.subr.mxu0 0.0
        %4734 = vmatpush1.msra.mxu0 0.0
        %4735 = vmatprep.subr.mxu0 0.0
        %4736 = vmatpush1.msra.mxu0 0.0
        %4737 = vmatprep.subr.mxu0 0.0
        %4738 = vmatpush1.msra.mxu0 0.0
        %4739 = vmatprep.subr.mxu0 0.0
        %4740 = vmatpush1.msra.mxu0 0.0
        %4741 = vmatprep.subr.mxu0 0.0
        %4742 = vmatpush1.msra.mxu0 0.0
        %4743 = vmatprep.subr.mxu0 0.0
        %4744 = vmatpush1.msra.mxu0 0.0
        %4745 = vmatprep.subr.mxu0 0.0
        %4746 = vmatpush1.msra.mxu0 0.0
        %4747 = vmatprep.subr.mxu0 0.0
        %4748 = vmatpush1.msra.mxu0 0.0
        %4749 = vmatprep.subr.mxu0 0.0
        %4750 = vmatpush1.msra.mxu0 0.0
        %4751 = vmatprep.subr.mxu0 0.0
        %4752 = vmatpush1.msra.mxu0 0.0
        %4753 = vmatprep.subr.mxu0 0.0
        %4754 = vmatpush1.msra.mxu0 0.0
        %4755 = vmatprep.subr.mxu0 0.0
        %4756 = vmatpush1.msra.mxu0 0.0
        %4757 = vmatprep.subr.mxu0 0.0
        %4758 = vmatpush1.msra.mxu0 0.0
        %4759 = vmatprep.mubr.f32.mxu0 0.0
        %4760 = vmatmul.mubr.f32.gmra.mrb[0].mxu0 %v4690
        %v4761 = vpop.f32.mrb[0].mxu0
        %v4762 = vadd.f32 0.0, %v4761
        %v4763 = vpop.f32.mrb[0].mxu0
        %4764 = vmatprep.mubr.f32.mxu0 0.0
        %4765 = vmatmul.mubr.f32.gmra.mrb[0].mxu0 %v4693
        %v4766 = vpop.f32.mrb[0].mxu0
        %v4767 = vadd.f32 0.0, %v4766
        %v4768 = vpop.f32.mrb[0].mxu0
        %4769 = vdwg.mxu0
        %v4770 = vadd.f32 %v4682, %v4762
        %v4771 = vadd.f32 %v4683, %v4767
        %s4772 = scalar_lea.vmem [#allocation10], 160
        %v4773 = vld [vmem:[%s4772] sm:$0xff]
        %v4774 = vld [vmem:[%s4772 + $0x8] sm:$0xff]
        %v4775 = vld [vmem:[%s4772 + $0x10] sm:$0xff]
        %v4776 = vld [vmem:[%s4772 + $0x18] sm:$0xff]
        %v4778 = vsel %vm2055, %v4240, 0
        %v4781 = vsel %vm2055, %v4241, 0
        %4783 = vmatprep.subr.mxu0 0.0
        %4784 = vmatpush1.msra.mxu0 %v4773
        %4785 = vmatprep.subr.mxu0 0.0
        %4786 = vmatpush1.msra.mxu0 %v4774
        %4787 = vmatprep.subr.mxu0 0.0
        %4788 = vmatpush1.msra.mxu0 %v4775
        %4789 = vmatprep.subr.mxu0 0.0
        %4790 = vmatpush1.msra.mxu0 %v4776
        %4791 = vmatprep.subr.mxu0 0.0
        %4792 = vmatpush1.msra.mxu0 0.0
        %4793 = vmatprep.subr.mxu0 0.0
        %4794 = vmatpush1.msra.mxu0 0.0
        %4795 = vmatprep.subr.mxu0 0.0
        %4796 = vmatpush1.msra.mxu0 0.0
        %4797 = vmatprep.subr.mxu0 0.0
        %4798 = vmatpush1.msra.mxu0 0.0
        %4799 = vmatprep.subr.mxu0 0.0
        %4800 = vmatpush1.msra.mxu0 0.0
        %4801 = vmatprep.subr.mxu0 0.0
        %4802 = vmatpush1.msra.mxu0 0.0
        %4803 = vmatprep.subr.mxu0 0.0
        %4804 = vmatpush1.msra.mxu0 0.0
        %4805 = vmatprep.subr.mxu0 0.0
        %4806 = vmatpush1.msra.mxu0 0.0
        %4807 = vmatprep.subr.mxu0 0.0
        %4808 = vmatpush1.msra.mxu0 0.0
        %4809 = vmatprep.subr.mxu0 0.0
        %4810 = vmatpush1.msra.mxu0 0.0
        %4811 = vmatprep.subr.mxu0 0.0
        %4812 = vmatpush1.msra.mxu0 0.0
        %4813 = vmatprep.subr.mxu0 0.0
        %4814 = vmatpush1.msra.mxu0 0.0
        %4815 = vmatprep.subr.mxu0 0.0
        %4816 = vmatpush1.msra.mxu0 0.0
        %4817 = vmatprep.subr.mxu0 0.0
        %4818 = vmatpush1.msra.mxu0 0.0
        %4819 = vmatprep.subr.mxu0 0.0
        %4820 = vmatpush1.msra.mxu0 0.0
        %4821 = vmatprep.subr.mxu0 0.0
        %4822 = vmatpush1.msra.mxu0 0.0
        %4823 = vmatprep.subr.mxu0 0.0
        %4824 = vmatpush1.msra.mxu0 0.0
        %4825 = vmatprep.subr.mxu0 0.0
        %4826 = vmatpush1.msra.mxu0 0.0
        %4827 = vmatprep.subr.mxu0 0.0
        %4828 = vmatpush1.msra.mxu0 0.0
        %4829 = vmatprep.subr.mxu0 0.0
        %4830 = vmatpush1.msra.mxu0 0.0
        %4831 = vmatprep.subr.mxu0 0.0
        %4832 = vmatpush1.msra.mxu0 0.0
        %4833 = vmatprep.subr.mxu0 0.0
        %4834 = vmatpush1.msra.mxu0 0.0
        %4835 = vmatprep.subr.mxu0 0.0
        %4836 = vmatpush1.msra.mxu0 0.0
        %4837 = vmatprep.subr.mxu0 0.0
        %4838 = vmatpush1.msra.mxu0 0.0
        %4839 = vmatprep.subr.mxu0 0.0
        %4840 = vmatpush1.msra.mxu0 0.0
        %4841 = vmatprep.subr.mxu0 0.0
        %4842 = vmatpush1.msra.mxu0 0.0
        %4843 = vmatprep.subr.mxu0 0.0
        %4844 = vmatpush1.msra.mxu0 0.0
        %4845 = vmatprep.subr.mxu0 0.0
        %4846 = vmatpush1.msra.mxu0 0.0
        %4847 = vmatprep.mubr.f32.mxu0 0.0
        %4848 = vmatmul.mubr.f32.gmra.mrb[0].mxu0 %v4778
        %v4849 = vpop.f32.mrb[0].mxu0
        %v4850 = vadd.f32 0.0, %v4849
        %v4851 = vpop.f32.mrb[0].mxu0
        %4852 = vmatprep.mubr.f32.mxu0 0.0
        %4853 = vmatmul.mubr.f32.gmra.mrb[0].mxu0 %v4781
        %v4854 = vpop.f32.mrb[0].mxu0
        %v4855 = vadd.f32 0.0, %v4854
        %v4856 = vpop.f32.mrb[0].mxu0
        %4857 = vdwg.mxu0
        %v4858 = vadd.f32 %v4770, %v4850
        %v4859 = vadd.f32 %v4771, %v4855
        %s4860 = scalar_lea.vmem [#allocation10], 192
        %v4861 = vld [vmem:[%s4860] sm:$0xff]
        %v4862 = vld [vmem:[%s4860 + $0x8] sm:$0xff]
        %v4863 = vld [vmem:[%s4860 + $0x10] sm:$0xff]
        %v4864 = vld [vmem:[%s4860 + $0x18] sm:$0xff]
        %v4866 = vsel %vm2055, %v4246, 0
        %v4869 = vsel %vm2055, %v4247, 0
        %4871 = vmatprep.subr.mxu0 0.0
        %4872 = vmatpush1.msra.mxu0 %v4861
        %4873 = vmatprep.subr.mxu0 0.0
        %4874 = vmatpush1.msra.mxu0 %v4862
        %4875 = vmatprep.subr.mxu0 0.0
        %4876 = vmatpush1.msra.mxu0 %v4863
        %4877 = vmatprep.subr.mxu0 0.0
        %4878 = vmatpush1.msra.mxu0 %v4864
        %4879 = vmatprep.subr.mxu0 0.0
        %4880 = vmatpush1.msra.mxu0 0.0
        %4881 = vmatprep.subr.mxu0 0.0
        %4882 = vmatpush1.msra.mxu0 0.0
        %4883 = vmatprep.subr.mxu0 0.0
        %4884 = vmatpush1.msra.mxu0 0.0
        %4885 = vmatprep.subr.mxu0 0.0
        %4886 = vmatpush1.msra.mxu0 0.0
        %4887 = vmatprep.subr.mxu0 0.0
        %4888 = vmatpush1.msra.mxu0 0.0
        %4889 = vmatprep.subr.mxu0 0.0
        %4890 = vmatpush1.msra.mxu0 0.0
        %4891 = vmatprep.subr.mxu0 0.0
        %4892 = vmatpush1.msra.mxu0 0.0
        %4893 = vmatprep.subr.mxu0 0.0
        %4894 = vmatpush1.msra.mxu0 0.0
        %4895 = vmatprep.subr.mxu0 0.0
        %4896 = vmatpush1.msra.mxu0 0.0
        %4897 = vmatprep.subr.mxu0 0.0
        %4898 = vmatpush1.msra.mxu0 0.0
        %4899 = vmatprep.subr.mxu0 0.0
        %4900 = vmatpush1.msra.mxu0 0.0
        %4901 = vmatprep.subr.mxu0 0.0
        %4902 = vmatpush1.msra.mxu0 0.0
        %4903 = vmatprep.subr.mxu0 0.0
        %4904 = vmatpush1.msra.mxu0 0.0
        %4905 = vmatprep.subr.mxu0 0.0
        %4906 = vmatpush1.msra.mxu0 0.0
        %4907 = vmatprep.subr.mxu0 0.0
        %4908 = vmatpush1.msra.mxu0 0.0
        %4909 = vmatprep.subr.mxu0 0.0
        %4910 = vmatpush1.msra.mxu0 0.0
        %4911 = vmatprep.subr.mxu0 0.0
        %4912 = vmatpush1.msra.mxu0 0.0
        %4913 = vmatprep.subr.mxu0 0.0
        %4914 = vmatpush1.msra.mxu0 0.0
        %4915 = vmatprep.subr.mxu0 0.0
        %4916 = vmatpush1.msra.mxu0 0.0
        %4917 = vmatprep.subr.mxu0 0.0
        %4918 = vmatpush1.msra.mxu0 0.0
        %4919 = vmatprep.subr.mxu0 0.0
        %4920 = vmatpush1.msra.mxu0 0.0
        %4921 = vmatprep.subr.mxu0 0.0
        %4922 = vmatpush1.msra.mxu0 0.0
        %4923 = vmatprep.subr.mxu0 0.0
        %4924 = vmatpush1.msra.mxu0 0.0
        %4925 = vmatprep.subr.mxu0 0.0
        %4926 = vmatpush1.msra.mxu0 0.0
        %4927 = vmatprep.subr.mxu0 0.0
        %4928 = vmatpush1.msra.mxu0 0.0
        %4929 = vmatprep.subr.mxu0 0.0
        %4930 = vmatpush1.msra.mxu0 0.0
        %4931 = vmatprep.subr.mxu0 0.0
        %4932 = vmatpush1.msra.mxu0 0.0
        %4933 = vmatprep.subr.mxu0 0.0
        %4934 = vmatpush1.msra.mxu0 0.0
        %4935 = vmatprep.mubr.f32.mxu0 0.0
        %4936 = vmatmul.mubr.f32.gmra.mrb[0].mxu0 %v4866
        %v4937 = vpop.f32.mrb[0].mxu0
        %v4938 = vadd.f32 0.0, %v4937
        %v4939 = vpop.f32.mrb[0].mxu0
        %4940 = vmatprep.mubr.f32.mxu0 0.0
        %4941 = vmatmul.mubr.f32.gmra.mrb[0].mxu0 %v4869
        %v4942 = vpop.f32.mrb[0].mxu0
        %v4943 = vadd.f32 0.0, %v4942
        %v4944 = vpop.f32.mrb[0].mxu0
        %4945 = vdwg.mxu0
        %v4946 = vadd.f32 %v4858, %v4938
        %v4947 = vadd.f32 %v4859, %v4943
        %s4948 = scalar_lea.vmem [#allocation10], 224
        %v4949 = vld [vmem:[%s4948] sm:$0xff]
        %v4950 = vld [vmem:[%s4948 + $0x8] sm:$0xff]
        %v4951 = vld [vmem:[%s4948 + $0x10] sm:$0xff]
        %v4952 = vld [vmem:[%s4948 + $0x18] sm:$0xff]
        %v4954 = vsel %vm2055, %v4252, 0
        %v4957 = vsel %vm2055, %v4253, 0
        %4959 = vmatprep.subr.mxu0 0.0
        %4960 = vmatpush1.msra.mxu0 %v4949
        %4961 = vmatprep.subr.mxu0 0.0
        %4962 = vmatpush1.msra.mxu0 %v4950
        %4963 = vmatprep.subr.mxu0 0.0
        %4964 = vmatpush1.msra.mxu0 %v4951
        %4965 = vmatprep.subr.mxu0 0.0
        %4966 = vmatpush1.msra.mxu0 %v4952
        %4967 = vmatprep.subr.mxu0 0.0
        %4968 = vmatpush1.msra.mxu0 0.0
        %4969 = vmatprep.subr.mxu0 0.0
        %4970 = vmatpush1.msra.mxu0 0.0
        %4971 = vmatprep.subr.mxu0 0.0
        %4972 = vmatpush1.msra.mxu0 0.0
        %4973 = vmatprep.subr.mxu0 0.0
        %4974 = vmatpush1.msra.mxu0 0.0
        %4975 = vmatprep.subr.mxu0 0.0
        %4976 = vmatpush1.msra.mxu0 0.0
        %4977 = vmatprep.subr.mxu0 0.0
        %4978 = vmatpush1.msra.mxu0 0.0
        %4979 = vmatprep.subr.mxu0 0.0
        %4980 = vmatpush1.msra.mxu0 0.0
        %4981 = vmatprep.subr.mxu0 0.0
        %4982 = vmatpush1.msra.mxu0 0.0
        %4983 = vmatprep.subr.mxu0 0.0
        %4984 = vmatpush1.msra.mxu0 0.0
        %4985 = vmatprep.subr.mxu0 0.0
        %4986 = vmatpush1.msra.mxu0 0.0
        %4987 = vmatprep.subr.mxu0 0.0
        %4988 = vmatpush1.msra.mxu0 0.0
        %4989 = vmatprep.subr.mxu0 0.0
        %4990 = vmatpush1.msra.mxu0 0.0
        %4991 = vmatprep.subr.mxu0 0.0
        %4992 = vmatpush1.msra.mxu0 0.0
        %4993 = vmatprep.subr.mxu0 0.0
        %4994 = vmatpush1.msra.mxu0 0.0
        %4995 = vmatprep.subr.mxu0 0.0
        %4996 = vmatpush1.msra.mxu0 0.0
        %4997 = vmatprep.subr.mxu0 0.0
        %4998 = vmatpush1.msra.mxu0 0.0
        %4999 = vmatprep.subr.mxu0 0.0
        %5000 = vmatpush1.msra.mxu0 0.0
        %5001 = vmatprep.subr.mxu0 0.0
        %5002 = vmatpush1.msra.mxu0 0.0
        %5003 = vmatprep.subr.mxu0 0.0
        %5004 = vmatpush1.msra.mxu0 0.0
        %5005 = vmatprep.subr.mxu0 0.0
        %5006 = vmatpush1.msra.mxu0 0.0
        %5007 = vmatprep.subr.mxu0 0.0
        %5008 = vmatpush1.msra.mxu0 0.0
        %5009 = vmatprep.subr.mxu0 0.0
        %5010 = vmatpush1.msra.mxu0 0.0
        %5011 = vmatprep.subr.mxu0 0.0
        %5012 = vmatpush1.msra.mxu0 0.0
        %5013 = vmatprep.subr.mxu0 0.0
        %5014 = vmatpush1.msra.mxu0 0.0
        %5015 = vmatprep.subr.mxu0 0.0
        %5016 = vmatpush1.msra.mxu0 0.0
        %5017 = vmatprep.subr.mxu0 0.0
        %5018 = vmatpush1.msra.mxu0 0.0
        %5019 = vmatprep.subr.mxu0 0.0
        %5020 = vmatpush1.msra.mxu0 0.0
        %5021 = vmatprep.subr.mxu0 0.0
        %5022 = vmatpush1.msra.mxu0 0.0
        %5023 = vmatprep.mubr.f32.mxu0 0.0
        %5024 = vmatmul.mubr.f32.gmra.mrb[0].mxu0 %v4954
        %v5025 = vpop.f32.mrb[0].mxu0
        %v5026 = vadd.f32 0.0, %v5025
        %v5027 = vpop.f32.mrb[0].mxu0
        %5028 = vmatprep.mubr.f32.mxu0 0.0
        %5029 = vmatmul.mubr.f32.gmra.mrb[0].mxu0 %v4957
        %v5030 = vpop.f32.mrb[0].mxu0
        %v5031 = vadd.f32 0.0, %v5030
        %v5032 = vpop.f32.mrb[0].mxu0
        %5033 = vdwg.mxu0
        %v5034 = vadd.f32 %v4946, %v5026
        %v5035 = vadd.f32 %v4947, %v5031
        %v5036 = vld [vmem:[#allocation12] sm:$0x1]
        %v5038 = vlaneseq
        %v5039 = vshrl.u32 %v5038, 7
        %v5040 = vsub.s32 0, %v5039
        %v5041 = vrot.slane %v5036, %v5040
        %v5043 = vadd.f32 %v5034, %v5041
        %v5044 = vadd.f32 %v5035, %v5041
        %v5045 = vxor.u32 %v5043, 2147483648
        %v5046 = vxor.u32 %v5044, 2147483648
        %v5047 = vmul.f32 %v5045, 1.442695
        %v5048 = vpow.pop %v5047
        %v5049 = vmul.f32 %v5046, 1.442695
        %v5050 = vpow.pop %v5049
        %v5051 = vadd.f32 %v5048, 1.0
        %v5052 = vadd.f32 %v5050, 1.0
        %v5053 = vrcp.pop %v5051
        %v5054 = vmul.f32 1.0, %v5053
        %v5055 = vrcp.pop %v5052
        %v5056 = vmul.f32 1.0, %v5055
        %v5057 = vmul.f32 %v5043, %v5054
        %v5058 = vmul.f32 %v5044, %v5056
        %v5059 = vld [vmem:[%s12] sm:$0xff]
        %v5060 = vld [vmem:[%s12 + $0x8] sm:$0xff]
        %v5061 = vld [vmem:[%s12 + $0x10] sm:$0xff]
        %v5062 = vld [vmem:[%s12 + $0x18] sm:$0xff]
        %v5063 = vsub.f32 %v5043, -2.2
        %v5064 = vsub.f32 %v5044, -2.2
        %v5065 = vmul.f32 %v5063, 2.5
        %v5066 = vmul.f32 %v5064, 2.5
        %v5067 = vsub.f32 %v5065, 1.0
        %v5068 = vsub.f32 %v5066, 1.0
        %v5069 = vsub.f32 %v5067, 1.0
        %v5070 = vsub.f32 %v5068, 1.0
        %v5071 = vsub.f32 %v5069, 1.0
        %v5072 = vsub.f32 %v5070, 1.0
        %v5073 = vsub.f32 %v5071, 1.0
        %v5074 = vsub.f32 %v5072, 1.0
        %v5075 = vsub.f32 %v5073, 1.0
        %v5076 = vsub.f32 %v5074, 1.0
        %v5077 = vsub.f32 %v5075, 1.0
        %v5078 = vsub.f32 %v5076, 1.0
        %v5079 = vsub.f32 %v5077, 1.0
        %v5080 = vsub.f32 %v5078, 1.0
        %v5081 = vsub.f32 %v5079, 1.0
        %v5082 = vsub.f32 %v5080, 1.0
        %v5083 = vsub.f32 %v5081, 1.0
        %v5084 = vsub.f32 %v5082, 1.0
        %v5085 = vsub.f32 %v5083, 1.0
        %v5086 = vsub.f32 %v5084, 1.0
        %v5087 = vsub.f32 %v5085, 1.0
        %v5088 = vsub.f32 %v5086, 1.0
        %vm5089 = vcmp.ge.f32.partialorder %v5065, 0.0
        %vm5090 = vcmp.ge.f32.partialorder %v5066, 0.0
        %v5091 = vsel %vm5089, 1.0, 0.0
        %v5092 = vsel %vm5090, 1.0, 0.0
        %vm5093 = vcmp.ge.f32.partialorder %v5067, 0.0
        %vm5094 = vcmp.ge.f32.partialorder %v5068, 0.0
        %v5095 = vsel %vm5093, 1.0, 0.0
        %v5096 = vsel %vm5094, 1.0, 0.0
        %vm5097 = vcmp.ge.f32.partialorder %v5069, 0.0
        %vm5098 = vcmp.ge.f32.partialorder %v5070, 0.0
        %v5099 = vsel %vm5097, 1.0, 0.0
        %v5100 = vsel %vm5098, 1.0, 0.0
        %vm5101 = vcmp.ge.f32.partialorder %v5071, 0.0
        %vm5102 = vcmp.ge.f32.partialorder %v5072, 0.0
        %v5103 = vsel %vm5101, 1.0, 0.0
        %v5104 = vsel %vm5102, 1.0, 0.0
        %vm5105 = vcmp.ge.f32.partialorder %v5073, 0.0
        %vm5106 = vcmp.ge.f32.partialorder %v5074, 0.0
        %v5107 = vsel %vm5105, 1.0, 0.0
        %v5108 = vsel %vm5106, 1.0, 0.0
        %vm5109 = vcmp.ge.f32.partialorder %v5075, 0.0
        %vm5110 = vcmp.ge.f32.partialorder %v5076, 0.0
        %v5111 = vsel %vm5109, 1.0, 0.0
        %v5112 = vsel %vm5110, 1.0, 0.0
        %vm5113 = vcmp.ge.f32.partialorder %v5077, 0.0
        %vm5114 = vcmp.ge.f32.partialorder %v5078, 0.0
        %v5115 = vsel %vm5113, 1.0, 0.0
        %v5116 = vsel %vm5114, 1.0, 0.0
        %vm5117 = vcmp.ge.f32.partialorder %v5079, 0.0
        %vm5118 = vcmp.ge.f32.partialorder %v5080, 0.0
        %v5119 = vsel %vm5117, 1.0, 0.0
        %v5120 = vsel %vm5118, 1.0, 0.0
        %vm5121 = vcmp.ge.f32.partialorder %v5081, 0.0
        %vm5122 = vcmp.ge.f32.partialorder %v5082, 0.0
        %v5123 = vsel %vm5121, 1.0, 0.0
        %v5124 = vsel %vm5122, 1.0, 0.0
        %vm5125 = vcmp.ge.f32.partialorder %v5083, 0.0
        %vm5126 = vcmp.ge.f32.partialorder %v5084, 0.0
        %v5127 = vsel %vm5125, 1.0, 0.0
        %v5128 = vsel %vm5126, 1.0, 0.0
        %vm5129 = vcmp.ge.f32.partialorder %v5085, 0.0
        %vm5130 = vcmp.ge.f32.partialorder %v5086, 0.0
        %v5131 = vsel %vm5129, 1.0, 0.0
        %v5132 = vsel %vm5130, 1.0, 0.0
        %vm5133 = vcmp.ge.f32.partialorder %v5087, 0.0
        %vm5134 = vcmp.ge.f32.partialorder %v5088, 0.0
        %v5135 = vsel %vm5133, 1.0, 0.0
        %v5136 = vsel %vm5134, 1.0, 0.0
        %v5137 = vsub.f32 %v5091, %v5095
        %v5138 = vsub.f32 %v5092, %v5096
        %v5139 = vsub.f32 %v5095, %v5099
        %v5140 = vsub.f32 %v5096, %v5100
        %v5141 = vsub.f32 %v5099, %v5103
        %v5142 = vsub.f32 %v5100, %v5104
        %v5143 = vsub.f32 %v5103, %v5107
        %v5144 = vsub.f32 %v5104, %v5108
        %v5145 = vsub.f32 %v5107, %v5111
        %v5146 = vsub.f32 %v5108, %v5112
        %v5147 = vsub.f32 %v5111, %v5115
        %v5148 = vsub.f32 %v5112, %v5116
        %v5149 = vsub.f32 %v5115, %v5119
        %v5150 = vsub.f32 %v5116, %v5120
        %v5151 = vsub.f32 %v5119, %v5123
        %v5152 = vsub.f32 %v5120, %v5124
        %v5153 = vsub.f32 %v5123, %v5127
        %v5154 = vsub.f32 %v5124, %v5128
        %v5155 = vsub.f32 %v5127, %v5131
        %v5156 = vsub.f32 %v5128, %v5132
        %v5157 = vsub.f32 %v5131, %v5135
        %v5158 = vsub.f32 %v5132, %v5136
        %v5159 = vmul.f32 %v5065, %v5137
        %v5160 = vmul.f32 %v5066, %v5138
        %v5161 = vmul.f32 %v5069, %v5139
        %v5162 = vmul.f32 %v5070, %v5140
        %v5163 = vsub.f32 %v5159, %v5161
        %v5164 = vsub.f32 %v5160, %v5162
        %v5165 = vmul.f32 %v5067, %v5139
        %v5166 = vmul.f32 %v5068, %v5140
        %v5167 = vmul.f32 %v5071, %v5141
        %v5168 = vmul.f32 %v5072, %v5142
        %v5169 = vsub.f32 %v5165, %v5167
        %v5170 = vsub.f32 %v5166, %v5168
        %v5171 = vmul.f32 %v5069, %v5141
        %v5172 = vmul.f32 %v5070, %v5142
        %v5173 = vmul.f32 %v5073, %v5143
        %v5174 = vmul.f32 %v5074, %v5144
        %v5175 = vsub.f32 %v5171, %v5173
        %v5176 = vsub.f32 %v5172, %v5174
        %v5177 = vmul.f32 %v5071, %v5143
        %v5178 = vmul.f32 %v5072, %v5144
        %v5179 = vmul.f32 %v5075, %v5145
        %v5180 = vmul.f32 %v5076, %v5146
        %v5181 = vsub.f32 %v5177, %v5179
        %v5182 = vsub.f32 %v5178, %v5180
        %v5183 = vmul.f32 %v5073, %v5145
        %v5184 = vmul.f32 %v5074, %v5146
        %v5185 = vmul.f32 %v5077, %v5147
        %v5186 = vmul.f32 %v5078, %v5148
        %v5187 = vsub.f32 %v5183, %v5185
        %v5188 = vsub.f32 %v5184, %v5186
        %v5189 = vmul.f32 %v5075, %v5147
        %v5190 = vmul.f32 %v5076, %v5148
        %v5191 = vmul.f32 %v5079, %v5149
        %v5192 = vmul.f32 %v5080, %v5150
        %v5193 = vsub.f32 %v5189, %v5191
        %v5194 = vsub.f32 %v5190, %v5192
        %v5195 = vmul.f32 %v5077, %v5149
        %v5196 = vmul.f32 %v5078, %v5150
        %v5197 = vmul.f32 %v5081, %v5151
        %v5198 = vmul.f32 %v5082, %v5152
        %v5199 = vsub.f32 %v5195, %v5197
        %v5200 = vsub.f32 %v5196, %v5198
        %v5201 = vmul.f32 %v5079, %v5151
        %v5202 = vmul.f32 %v5080, %v5152
        %v5203 = vmul.f32 %v5083, %v5153
        %v5204 = vmul.f32 %v5084, %v5154
        %v5205 = vsub.f32 %v5201, %v5203
        %v5206 = vsub.f32 %v5202, %v5204
        %v5207 = vmul.f32 %v5081, %v5153
        %v5208 = vmul.f32 %v5082, %v5154
        %v5209 = vmul.f32 %v5085, %v5155
        %v5210 = vmul.f32 %v5086, %v5156
        %v5211 = vsub.f32 %v5207, %v5209
        %v5212 = vsub.f32 %v5208, %v5210
        %v5213 = vmul.f32 %v5083, %v5155
        %v5214 = vmul.f32 %v5084, %v5156
        %v5215 = vmul.f32 %v5087, %v5157
        %v5216 = vmul.f32 %v5088, %v5158
        %v5217 = vsub.f32 %v5213, %v5215
        %v5218 = vsub.f32 %v5214, %v5216
        %v5219 = vmul.f32 %v5065, %v5163
        %v5220 = vmul.f32 %v5066, %v5164
        %v5221 = vmul.f32 %v5071, %v5169
        %v5222 = vmul.f32 %v5072, %v5170
        %v5223 = vsub.f32 %v5219, %v5221
        %v5224 = vsub.f32 %v5220, %v5222
        %v5225 = vmul.f32 %v5067, %v5169
        %v5226 = vmul.f32 %v5068, %v5170
        %v5227 = vmul.f32 %v5073, %v5175
        %v5228 = vmul.f32 %v5074, %v5176
        %v5229 = vsub.f32 %v5225, %v5227
        %v5230 = vsub.f32 %v5226, %v5228
        %v5231 = vmul.f32 %v5069, %v5175
        %v5232 = vmul.f32 %v5070, %v5176
        %v5233 = vmul.f32 %v5075, %v5181
        %v5234 = vmul.f32 %v5076, %v5182
        %v5235 = vsub.f32 %v5231, %v5233
        %v5236 = vsub.f32 %v5232, %v5234
        %v5237 = vmul.f32 %v5071, %v5181
        %v5238 = vmul.f32 %v5072, %v5182
        %v5239 = vmul.f32 %v5077, %v5187
        %v5240 = vmul.f32 %v5078, %v5188
        %v5241 = vsub.f32 %v5237, %v5239
        %v5242 = vsub.f32 %v5238, %v5240
        %v5243 = vmul.f32 %v5073, %v5187
        %v5244 = vmul.f32 %v5074, %v5188
        %v5245 = vmul.f32 %v5079, %v5193
        %v5246 = vmul.f32 %v5080, %v5194
        %v5247 = vsub.f32 %v5243, %v5245
        %v5248 = vsub.f32 %v5244, %v5246
        %v5249 = vmul.f32 %v5075, %v5193
        %v5250 = vmul.f32 %v5076, %v5194
        %v5251 = vmul.f32 %v5081, %v5199
        %v5252 = vmul.f32 %v5082, %v5200
        %v5253 = vsub.f32 %v5249, %v5251
        %v5254 = vsub.f32 %v5250, %v5252
        %v5255 = vmul.f32 %v5077, %v5199
        %v5256 = vmul.f32 %v5078, %v5200
        %v5257 = vmul.f32 %v5083, %v5205
        %v5258 = vmul.f32 %v5084, %v5206
        %v5259 = vsub.f32 %v5255, %v5257
        %v5260 = vsub.f32 %v5256, %v5258
        %v5261 = vmul.f32 %v5079, %v5205
        %v5262 = vmul.f32 %v5080, %v5206
        %v5263 = vmul.f32 %v5085, %v5211
        %v5264 = vmul.f32 %v5086, %v5212
        %v5265 = vsub.f32 %v5261, %v5263
        %v5266 = vsub.f32 %v5262, %v5264
        %v5267 = vmul.f32 %v5081, %v5211
        %v5268 = vmul.f32 %v5082, %v5212
        %v5269 = vmul.f32 %v5087, %v5217
        %v5270 = vmul.f32 %v5088, %v5218
        %v5271 = vsub.f32 %v5267, %v5269
        %v5272 = vsub.f32 %v5268, %v5270
        %v5273 = vmul.f32 %v5065, %v5223
        %v5274 = vmul.f32 %v5066, %v5224
        %v5275 = vmul.f32 %v5073, %v5229
        %v5276 = vmul.f32 %v5074, %v5230
        %v5277 = vsub.f32 %v5273, %v5275
        %v5278 = vsub.f32 %v5274, %v5276
        %v5279 = vmul.f32 %v5067, %v5229
        %v5280 = vmul.f32 %v5068, %v5230
        %v5281 = vmul.f32 %v5075, %v5235
        %v5282 = vmul.f32 %v5076, %v5236
        %v5283 = vsub.f32 %v5279, %v5281
        %v5284 = vsub.f32 %v5280, %v5282
        %v5285 = vmul.f32 %v5069, %v5235
        %v5286 = vmul.f32 %v5070, %v5236
        %v5287 = vmul.f32 %v5077, %v5241
        %v5288 = vmul.f32 %v5078, %v5242
        %v5289 = vsub.f32 %v5285, %v5287
        %v5290 = vsub.f32 %v5286, %v5288
        %v5291 = vmul.f32 %v5071, %v5241
        %v5292 = vmul.f32 %v5072, %v5242
        %v5293 = vmul.f32 %v5079, %v5247
        %v5294 = vmul.f32 %v5080, %v5248
        %v5295 = vsub.f32 %v5291, %v5293
        %v5296 = vsub.f32 %v5292, %v5294
        %v5297 = vmul.f32 %v5073, %v5247
        %v5298 = vmul.f32 %v5074, %v5248
        %v5299 = vmul.f32 %v5081, %v5253
        %v5300 = vmul.f32 %v5082, %v5254
        %v5301 = vsub.f32 %v5297, %v5299
        %v5302 = vsub.f32 %v5298, %v5300
        %v5303 = vmul.f32 %v5075, %v5253
        %v5304 = vmul.f32 %v5076, %v5254
        %v5305 = vmul.f32 %v5083, %v5259
        %v5306 = vmul.f32 %v5084, %v5260
        %v5307 = vsub.f32 %v5303, %v5305
        %v5308 = vsub.f32 %v5304, %v5306
        %v5309 = vmul.f32 %v5077, %v5259
        %v5310 = vmul.f32 %v5078, %v5260
        %v5311 = vmul.f32 %v5085, %v5265
        %v5312 = vmul.f32 %v5086, %v5266
        %v5313 = vsub.f32 %v5309, %v5311
        %v5314 = vsub.f32 %v5310, %v5312
        %v5315 = vmul.f32 %v5079, %v5265
        %v5316 = vmul.f32 %v5080, %v5266
        %v5317 = vmul.f32 %v5087, %v5271
        %v5318 = vmul.f32 %v5088, %v5272
        %v5319 = vsub.f32 %v5315, %v5317
        %v5320 = vsub.f32 %v5316, %v5318
        %v5321 = vld [vmem:[#allocation13] sm:$0xff]
        %v5322 = vld [vmem:[#allocation13 + $0x8] sm:$0xff]
        %v5323 = vld [vmem:[#allocation13 + $0x10] sm:$0xff]
        %v5324 = vld [vmem:[#allocation13 + $0x18] sm:$0xff]
        %v5326 = vsel %vm2055, %v5277, 0
        %v5329 = vsel %vm2055, %v5278, 0
        %5331 = vmatprep.subr.mxu0 0.0
        %5332 = vmatpush1.msra.mxu0 %v5321
        %5333 = vmatprep.subr.mxu0 0.0
        %5334 = vmatpush1.msra.mxu0 %v5322
        %5335 = vmatprep.subr.mxu0 0.0
        %5336 = vmatpush1.msra.mxu0 %v5323
        %5337 = vmatprep.subr.mxu0 0.0
        %5338 = vmatpush1.msra.mxu0 %v5324
        %5339 = vmatprep.subr.mxu0 0.0
        %5340 = vmatpush1.msra.mxu0 0.0
        %5341 = vmatprep.subr.mxu0 0.0
        %5342 = vmatpush1.msra.mxu0 0.0
        %5343 = vmatprep.subr.mxu0 0.0
        %5344 = vmatpush1.msra.mxu0 0.0
        %5345 = vmatprep.subr.mxu0 0.0
        %5346 = vmatpush1.msra.mxu0 0.0
        %5347 = vmatprep.subr.mxu0 0.0
        %5348 = vmatpush1.msra.mxu0 0.0
        %5349 = vmatprep.subr.mxu0 0.0
        %5350 = vmatpush1.msra.mxu0 0.0
        %5351 = vmatprep.subr.mxu0 0.0
        %5352 = vmatpush1.msra.mxu0 0.0
        %5353 = vmatprep.subr.mxu0 0.0
        %5354 = vmatpush1.msra.mxu0 0.0
        %5355 = vmatprep.subr.mxu0 0.0
        %5356 = vmatpush1.msra.mxu0 0.0
        %5357 = vmatprep.subr.mxu0 0.0
        %5358 = vmatpush1.msra.mxu0 0.0
        %5359 = vmatprep.subr.mxu0 0.0
        %5360 = vmatpush1.msra.mxu0 0.0
        %5361 = vmatprep.subr.mxu0 0.0
        %5362 = vmatpush1.msra.mxu0 0.0
        %5363 = vmatprep.subr.mxu0 0.0
        %5364 = vmatpush1.msra.mxu0 0.0
        %5365 = vmatprep.subr.mxu0 0.0
        %5366 = vmatpush1.msra.mxu0 0.0
        %5367 = vmatprep.subr.mxu0 0.0
        %5368 = vmatpush1.msra.mxu0 0.0
        %5369 = vmatprep.subr.mxu0 0.0
        %5370 = vmatpush1.msra.mxu0 0.0
        %5371 = vmatprep.subr.mxu0 0.0
        %5372 = vmatpush1.msra.mxu0 0.0
        %5373 = vmatprep.subr.mxu0 0.0
        %5374 = vmatpush1.msra.mxu0 0.0
        %5375 = vmatprep.subr.mxu0 0.0
        %5376 = vmatpush1.msra.mxu0 0.0
        %5377 = vmatprep.subr.mxu0 0.0
        %5378 = vmatpush1.msra.mxu0 0.0
        %5379 = vmatprep.subr.mxu0 0.0
        %5380 = vmatpush1.msra.mxu0 0.0
        %5381 = vmatprep.subr.mxu0 0.0
        %5382 = vmatpush1.msra.mxu0 0.0
        %5383 = vmatprep.subr.mxu0 0.0
        %5384 = vmatpush1.msra.mxu0 0.0
        %5385 = vmatprep.subr.mxu0 0.0
        %5386 = vmatpush1.msra.mxu0 0.0
        %5387 = vmatprep.subr.mxu0 0.0
        %5388 = vmatpush1.msra.mxu0 0.0
        %5389 = vmatprep.subr.mxu0 0.0
        %5390 = vmatpush1.msra.mxu0 0.0
        %5391 = vmatprep.subr.mxu0 0.0
        %5392 = vmatpush1.msra.mxu0 0.0
        %5393 = vmatprep.subr.mxu0 0.0
        %5394 = vmatpush1.msra.mxu0 0.0
        %5395 = vmatprep.mubr.f32.mxu0 0.0
        %5396 = vmatmul.mubr.f32.gmra.mrb[0].mxu0 %v5326
        %v5397 = vpop.f32.mrb[0].mxu0
        %v5398 = vadd.f32 0.0, %v5397
        %v5399 = vpop.f32.mrb[0].mxu0
        %5400 = vmatprep.mubr.f32.mxu0 0.0
        %5401 = vmatmul.mubr.f32.gmra.mrb[0].mxu0 %v5329
        %v5402 = vpop.f32.mrb[0].mxu0
        %v5403 = vadd.f32 0.0, %v5402
        %v5404 = vpop.f32.mrb[0].mxu0
        %5405 = vdwg.mxu0
        %v5407 = vsel %vm2055, %v5057, 0
        %v5410 = vsel %vm2055, %v5058, 0
        %5412 = vmatprep.subr.mxu0 0.0
        %5413 = vmatpush1.msra.mxu0 %v5059
        %5414 = vmatprep.subr.mxu0 0.0
        %5415 = vmatpush1.msra.mxu0 %v5060
        %5416 = vmatprep.subr.mxu0 0.0
        %5417 = vmatpush1.msra.mxu0 %v5061
        %5418 = vmatprep.subr.mxu0 0.0
        %5419 = vmatpush1.msra.mxu0 %v5062
        %5420 = vmatprep.subr.mxu0 0.0
        %5421 = vmatpush1.msra.mxu0 0.0
        %5422 = vmatprep.subr.mxu0 0.0
        %5423 = vmatpush1.msra.mxu0 0.0
        %5424 = vmatprep.subr.mxu0 0.0
        %5425 = vmatpush1.msra.mxu0 0.0
        %5426 = vmatprep.subr.mxu0 0.0
        %5427 = vmatpush1.msra.mxu0 0.0
        %5428 = vmatprep.subr.mxu0 0.0
        %5429 = vmatpush1.msra.mxu0 0.0
        %5430 = vmatprep.subr.mxu0 0.0
        %5431 = vmatpush1.msra.mxu0 0.0
        %5432 = vmatprep.subr.mxu0 0.0
        %5433 = vmatpush1.msra.mxu0 0.0
        %5434 = vmatprep.subr.mxu0 0.0
        %5435 = vmatpush1.msra.mxu0 0.0
        %5436 = vmatprep.subr.mxu0 0.0
        %5437 = vmatpush1.msra.mxu0 0.0
        %5438 = vmatprep.subr.mxu0 0.0
        %5439 = vmatpush1.msra.mxu0 0.0
        %5440 = vmatprep.subr.mxu0 0.0
        %5441 = vmatpush1.msra.mxu0 0.0
        %5442 = vmatprep.subr.mxu0 0.0
        %5443 = vmatpush1.msra.mxu0 0.0
        %5444 = vmatprep.subr.mxu0 0.0
        %5445 = vmatpush1.msra.mxu0 0.0
        %5446 = vmatprep.subr.mxu0 0.0
        %5447 = vmatpush1.msra.mxu0 0.0
        %5448 = vmatprep.subr.mxu0 0.0
        %5449 = vmatpush1.msra.mxu0 0.0
        %5450 = vmatprep.subr.mxu0 0.0
        %5451 = vmatpush1.msra.mxu0 0.0
        %5452 = vmatprep.subr.mxu0 0.0
        %5453 = vmatpush1.msra.mxu0 0.0
        %5454 = vmatprep.subr.mxu0 0.0
        %5455 = vmatpush1.msra.mxu0 0.0
        %5456 = vmatprep.subr.mxu0 0.0
        %5457 = vmatpush1.msra.mxu0 0.0
        %5458 = vmatprep.subr.mxu0 0.0
        %5459 = vmatpush1.msra.mxu0 0.0
        %5460 = vmatprep.subr.mxu0 0.0
        %5461 = vmatpush1.msra.mxu0 0.0
        %5462 = vmatprep.subr.mxu0 0.0
        %5463 = vmatpush1.msra.mxu0 0.0
        %5464 = vmatprep.subr.mxu0 0.0
        %5465 = vmatpush1.msra.mxu0 0.0
        %5466 = vmatprep.subr.mxu0 0.0
        %5467 = vmatpush1.msra.mxu0 0.0
        %5468 = vmatprep.subr.mxu0 0.0
        %5469 = vmatpush1.msra.mxu0 0.0
        %5470 = vmatprep.subr.mxu0 0.0
        %5471 = vmatpush1.msra.mxu0 0.0
        %5472 = vmatprep.subr.mxu0 0.0
        %5473 = vmatpush1.msra.mxu0 0.0
        %5474 = vmatprep.subr.mxu0 0.0
        %5475 = vmatpush1.msra.mxu0 0.0
        %5476 = vmatprep.mubr.f32.mxu0 0.0
        %5477 = vmatmul.mubr.f32.gmra.mrb[0].mxu0 %v5407
        %v5478 = vpop.f32.mrb[0].mxu0
        %v5479 = vadd.f32 %v5398, %v5478
        %v5480 = vpop.f32.mrb[0].mxu0
        %5481 = vmatprep.mubr.f32.mxu0 0.0
        %5482 = vmatmul.mubr.f32.gmra.mrb[0].mxu0 %v5410
        %v5483 = vpop.f32.mrb[0].mxu0
        %v5484 = vadd.f32 %v5403, %v5483
        %v5485 = vpop.f32.mrb[0].mxu0
        %5486 = vdwg.mxu0
        %s5487 = scalar_lea.vmem [#allocation13], 32
        %v5488 = vld [vmem:[%s5487] sm:$0xff]
        %v5489 = vld [vmem:[%s5487 + $0x8] sm:$0xff]
        %v5490 = vld [vmem:[%s5487 + $0x10] sm:$0xff]
        %v5491 = vld [vmem:[%s5487 + $0x18] sm:$0xff]
        %v5493 = vsel %vm2055, %v5283, 0
        %v5496 = vsel %vm2055, %v5284, 0
        %5498 = vmatprep.subr.mxu0 0.0
        %5499 = vmatpush1.msra.mxu0 %v5488
        %5500 = vmatprep.subr.mxu0 0.0
        %5501 = vmatpush1.msra.mxu0 %v5489
        %5502 = vmatprep.subr.mxu0 0.0
        %5503 = vmatpush1.msra.mxu0 %v5490
        %5504 = vmatprep.subr.mxu0 0.0
        %5505 = vmatpush1.msra.mxu0 %v5491
        %5506 = vmatprep.subr.mxu0 0.0
        %5507 = vmatpush1.msra.mxu0 0.0
        %5508 = vmatprep.subr.mxu0 0.0
        %5509 = vmatpush1.msra.mxu0 0.0
        %5510 = vmatprep.subr.mxu0 0.0
        %5511 = vmatpush1.msra.mxu0 0.0
        %5512 = vmatprep.subr.mxu0 0.0
        %5513 = vmatpush1.msra.mxu0 0.0
        %5514 = vmatprep.subr.mxu0 0.0
        %5515 = vmatpush1.msra.mxu0 0.0
        %5516 = vmatprep.subr.mxu0 0.0
        %5517 = vmatpush1.msra.mxu0 0.0
        %5518 = vmatprep.subr.mxu0 0.0
        %5519 = vmatpush1.msra.mxu0 0.0
        %5520 = vmatprep.subr.mxu0 0.0
        %5521 = vmatpush1.msra.mxu0 0.0
        %5522 = vmatprep.subr.mxu0 0.0
        %5523 = vmatpush1.msra.mxu0 0.0
        %5524 = vmatprep.subr.mxu0 0.0
        %5525 = vmatpush1.msra.mxu0 0.0
        %5526 = vmatprep.subr.mxu0 0.0
        %5527 = vmatpush1.msra.mxu0 0.0
        %5528 = vmatprep.subr.mxu0 0.0
        %5529 = vmatpush1.msra.mxu0 0.0
        %5530 = vmatprep.subr.mxu0 0.0
        %5531 = vmatpush1.msra.mxu0 0.0
        %5532 = vmatprep.subr.mxu0 0.0
        %5533 = vmatpush1.msra.mxu0 0.0
        %5534 = vmatprep.subr.mxu0 0.0
        %5535 = vmatpush1.msra.mxu0 0.0
        %5536 = vmatprep.subr.mxu0 0.0
        %5537 = vmatpush1.msra.mxu0 0.0
        %5538 = vmatprep.subr.mxu0 0.0
        %5539 = vmatpush1.msra.mxu0 0.0
        %5540 = vmatprep.subr.mxu0 0.0
        %5541 = vmatpush1.msra.mxu0 0.0
        %5542 = vmatprep.subr.mxu0 0.0
        %5543 = vmatpush1.msra.mxu0 0.0
        %5544 = vmatprep.subr.mxu0 0.0
        %5545 = vmatpush1.msra.mxu0 0.0
        %5546 = vmatprep.subr.mxu0 0.0
        %5547 = vmatpush1.msra.mxu0 0.0
        %5548 = vmatprep.subr.mxu0 0.0
        %5549 = vmatpush1.msra.mxu0 0.0
        %5550 = vmatprep.subr.mxu0 0.0
        %5551 = vmatpush1.msra.mxu0 0.0
        %5552 = vmatprep.subr.mxu0 0.0
        %5553 = vmatpush1.msra.mxu0 0.0
        %5554 = vmatprep.subr.mxu0 0.0
        %5555 = vmatpush1.msra.mxu0 0.0
        %5556 = vmatprep.subr.mxu0 0.0
        %5557 = vmatpush1.msra.mxu0 0.0
        %5558 = vmatprep.subr.mxu0 0.0
        %5559 = vmatpush1.msra.mxu0 0.0
        %5560 = vmatprep.subr.mxu0 0.0
        %5561 = vmatpush1.msra.mxu0 0.0
        %5562 = vmatprep.mubr.f32.mxu0 0.0
        %5563 = vmatmul.mubr.f32.gmra.mrb[0].mxu0 %v5493
        %v5564 = vpop.f32.mrb[0].mxu0
        %v5565 = vadd.f32 0.0, %v5564
        %v5566 = vpop.f32.mrb[0].mxu0
        %5567 = vmatprep.mubr.f32.mxu0 0.0
        %5568 = vmatmul.mubr.f32.gmra.mrb[0].mxu0 %v5496
        %v5569 = vpop.f32.mrb[0].mxu0
        %v5570 = vadd.f32 0.0, %v5569
        %v5571 = vpop.f32.mrb[0].mxu0
        %5572 = vdwg.mxu0
        %v5573 = vadd.f32 %v5479, %v5565
        %v5574 = vadd.f32 %v5484, %v5570
        %s5575 = scalar_lea.vmem [#allocation13], 64
        %v5576 = vld [vmem:[%s5575] sm:$0xff]
        %v5577 = vld [vmem:[%s5575 + $0x8] sm:$0xff]
        %v5578 = vld [vmem:[%s5575 + $0x10] sm:$0xff]
        %v5579 = vld [vmem:[%s5575 + $0x18] sm:$0xff]
        %v5581 = vsel %vm2055, %v5289, 0
        %v5584 = vsel %vm2055, %v5290, 0
        %5586 = vmatprep.subr.mxu0 0.0
        %5587 = vmatpush1.msra.mxu0 %v5576
        %5588 = vmatprep.subr.mxu0 0.0
        %5589 = vmatpush1.msra.mxu0 %v5577
        %5590 = vmatprep.subr.mxu0 0.0
        %5591 = vmatpush1.msra.mxu0 %v5578
        %5592 = vmatprep.subr.mxu0 0.0
        %5593 = vmatpush1.msra.mxu0 %v5579
        %5594 = vmatprep.subr.mxu0 0.0
        %5595 = vmatpush1.msra.mxu0 0.0
        %5596 = vmatprep.subr.mxu0 0.0
        %5597 = vmatpush1.msra.mxu0 0.0
        %5598 = vmatprep.subr.mxu0 0.0
        %5599 = vmatpush1.msra.mxu0 0.0
        %5600 = vmatprep.subr.mxu0 0.0
        %5601 = vmatpush1.msra.mxu0 0.0
        %5602 = vmatprep.subr.mxu0 0.0
        %5603 = vmatpush1.msra.mxu0 0.0
        %5604 = vmatprep.subr.mxu0 0.0
        %5605 = vmatpush1.msra.mxu0 0.0
        %5606 = vmatprep.subr.mxu0 0.0
        %5607 = vmatpush1.msra.mxu0 0.0
        %5608 = vmatprep.subr.mxu0 0.0
        %5609 = vmatpush1.msra.mxu0 0.0
        %5610 = vmatprep.subr.mxu0 0.0
        %5611 = vmatpush1.msra.mxu0 0.0
        %5612 = vmatprep.subr.mxu0 0.0
        %5613 = vmatpush1.msra.mxu0 0.0
        %5614 = vmatprep.subr.mxu0 0.0
        %5615 = vmatpush1.msra.mxu0 0.0
        %5616 = vmatprep.subr.mxu0 0.0
        %5617 = vmatpush1.msra.mxu0 0.0
        %5618 = vmatprep.subr.mxu0 0.0
        %5619 = vmatpush1.msra.mxu0 0.0
        %5620 = vmatprep.subr.mxu0 0.0
        %5621 = vmatpush1.msra.mxu0 0.0
        %5622 = vmatprep.subr.mxu0 0.0
        %5623 = vmatpush1.msra.mxu0 0.0
        %5624 = vmatprep.subr.mxu0 0.0
        %5625 = vmatpush1.msra.mxu0 0.0
        %5626 = vmatprep.subr.mxu0 0.0
        %5627 = vmatpush1.msra.mxu0 0.0
        %5628 = vmatprep.subr.mxu0 0.0
        %5629 = vmatpush1.msra.mxu0 0.0
        %5630 = vmatprep.subr.mxu0 0.0
        %5631 = vmatpush1.msra.mxu0 0.0
        %5632 = vmatprep.subr.mxu0 0.0
        %5633 = vmatpush1.msra.mxu0 0.0
        %5634 = vmatprep.subr.mxu0 0.0
        %5635 = vmatpush1.msra.mxu0 0.0
        %5636 = vmatprep.subr.mxu0 0.0
        %5637 = vmatpush1.msra.mxu0 0.0
        %5638 = vmatprep.subr.mxu0 0.0
        %5639 = vmatpush1.msra.mxu0 0.0
        %5640 = vmatprep.subr.mxu0 0.0
        %5641 = vmatpush1.msra.mxu0 0.0
        %5642 = vmatprep.subr.mxu0 0.0
        %5643 = vmatpush1.msra.mxu0 0.0
        %5644 = vmatprep.subr.mxu0 0.0
        %5645 = vmatpush1.msra.mxu0 0.0
        %5646 = vmatprep.subr.mxu0 0.0
        %5647 = vmatpush1.msra.mxu0 0.0
        %5648 = vmatprep.subr.mxu0 0.0
        %5649 = vmatpush1.msra.mxu0 0.0
        %5650 = vmatprep.mubr.f32.mxu0 0.0
        %5651 = vmatmul.mubr.f32.gmra.mrb[0].mxu0 %v5581
        %v5652 = vpop.f32.mrb[0].mxu0
        %v5653 = vadd.f32 0.0, %v5652
        %v5654 = vpop.f32.mrb[0].mxu0
        %5655 = vmatprep.mubr.f32.mxu0 0.0
        %5656 = vmatmul.mubr.f32.gmra.mrb[0].mxu0 %v5584
        %v5657 = vpop.f32.mrb[0].mxu0
        %v5658 = vadd.f32 0.0, %v5657
        %v5659 = vpop.f32.mrb[0].mxu0
        %5660 = vdwg.mxu0
        %v5661 = vadd.f32 %v5573, %v5653
        %v5662 = vadd.f32 %v5574, %v5658
        %s5663 = scalar_lea.vmem [#allocation13], 96
        %v5664 = vld [vmem:[%s5663] sm:$0xff]
        %v5665 = vld [vmem:[%s5663 + $0x8] sm:$0xff]
        %v5666 = vld [vmem:[%s5663 + $0x10] sm:$0xff]
        %v5667 = vld [vmem:[%s5663 + $0x18] sm:$0xff]
        %v5669 = vsel %vm2055, %v5295, 0
        %v5672 = vsel %vm2055, %v5296, 0
        %5674 = vmatprep.subr.mxu0 0.0
        %5675 = vmatpush1.msra.mxu0 %v5664
        %5676 = vmatprep.subr.mxu0 0.0
        %5677 = vmatpush1.msra.mxu0 %v5665
        %5678 = vmatprep.subr.mxu0 0.0
        %5679 = vmatpush1.msra.mxu0 %v5666
        %5680 = vmatprep.subr.mxu0 0.0
        %5681 = vmatpush1.msra.mxu0 %v5667
        %5682 = vmatprep.subr.mxu0 0.0
        %5683 = vmatpush1.msra.mxu0 0.0
        %5684 = vmatprep.subr.mxu0 0.0
        %5685 = vmatpush1.msra.mxu0 0.0
        %5686 = vmatprep.subr.mxu0 0.0
        %5687 = vmatpush1.msra.mxu0 0.0
        %5688 = vmatprep.subr.mxu0 0.0
        %5689 = vmatpush1.msra.mxu0 0.0
        %5690 = vmatprep.subr.mxu0 0.0
        %5691 = vmatpush1.msra.mxu0 0.0
        %5692 = vmatprep.subr.mxu0 0.0
        %5693 = vmatpush1.msra.mxu0 0.0
        %5694 = vmatprep.subr.mxu0 0.0
        %5695 = vmatpush1.msra.mxu0 0.0
        %5696 = vmatprep.subr.mxu0 0.0
        %5697 = vmatpush1.msra.mxu0 0.0
        %5698 = vmatprep.subr.mxu0 0.0
        %5699 = vmatpush1.msra.mxu0 0.0
        %5700 = vmatprep.subr.mxu0 0.0
        %5701 = vmatpush1.msra.mxu0 0.0
        %5702 = vmatprep.subr.mxu0 0.0
        %5703 = vmatpush1.msra.mxu0 0.0
        %5704 = vmatprep.subr.mxu0 0.0
        %5705 = vmatpush1.msra.mxu0 0.0
        %5706 = vmatprep.subr.mxu0 0.0
        %5707 = vmatpush1.msra.mxu0 0.0
        %5708 = vmatprep.subr.mxu0 0.0
        %5709 = vmatpush1.msra.mxu0 0.0
        %5710 = vmatprep.subr.mxu0 0.0
        %5711 = vmatpush1.msra.mxu0 0.0
        %5712 = vmatprep.subr.mxu0 0.0
        %5713 = vmatpush1.msra.mxu0 0.0
        %5714 = vmatprep.subr.mxu0 0.0
        %5715 = vmatpush1.msra.mxu0 0.0
        %5716 = vmatprep.subr.mxu0 0.0
        %5717 = vmatpush1.msra.mxu0 0.0
        %5718 = vmatprep.subr.mxu0 0.0
        %5719 = vmatpush1.msra.mxu0 0.0
        %5720 = vmatprep.subr.mxu0 0.0
        %5721 = vmatpush1.msra.mxu0 0.0
        %5722 = vmatprep.subr.mxu0 0.0
        %5723 = vmatpush1.msra.mxu0 0.0
        %5724 = vmatprep.subr.mxu0 0.0
        %5725 = vmatpush1.msra.mxu0 0.0
        %5726 = vmatprep.subr.mxu0 0.0
        %5727 = vmatpush1.msra.mxu0 0.0
        %5728 = vmatprep.subr.mxu0 0.0
        %5729 = vmatpush1.msra.mxu0 0.0
        %5730 = vmatprep.subr.mxu0 0.0
        %5731 = vmatpush1.msra.mxu0 0.0
        %5732 = vmatprep.subr.mxu0 0.0
        %5733 = vmatpush1.msra.mxu0 0.0
        %5734 = vmatprep.subr.mxu0 0.0
        %5735 = vmatpush1.msra.mxu0 0.0
        %5736 = vmatprep.subr.mxu0 0.0
        %5737 = vmatpush1.msra.mxu0 0.0
        %5738 = vmatprep.mubr.f32.mxu0 0.0
        %5739 = vmatmul.mubr.f32.gmra.mrb[0].mxu0 %v5669
        %v5740 = vpop.f32.mrb[0].mxu0
        %v5741 = vadd.f32 0.0, %v5740
        %v5742 = vpop.f32.mrb[0].mxu0
        %5743 = vmatprep.mubr.f32.mxu0 0.0
        %5744 = vmatmul.mubr.f32.gmra.mrb[0].mxu0 %v5672
        %v5745 = vpop.f32.mrb[0].mxu0
        %v5746 = vadd.f32 0.0, %v5745
        %v5747 = vpop.f32.mrb[0].mxu0
        %5748 = vdwg.mxu0
        %v5749 = vadd.f32 %v5661, %v5741
        %v5750 = vadd.f32 %v5662, %v5746
        %s5751 = scalar_lea.vmem [#allocation13], 128
        %v5752 = vld [vmem:[%s5751] sm:$0xff]
        %v5753 = vld [vmem:[%s5751 + $0x8] sm:$0xff]
        %v5754 = vld [vmem:[%s5751 + $0x10] sm:$0xff]
        %v5755 = vld [vmem:[%s5751 + $0x18] sm:$0xff]
        %v5757 = vsel %vm2055, %v5301, 0
        %v5760 = vsel %vm2055, %v5302, 0
        %5762 = vmatprep.subr.mxu0 0.0
        %5763 = vmatpush1.msra.mxu0 %v5752
        %5764 = vmatprep.subr.mxu0 0.0
        %5765 = vmatpush1.msra.mxu0 %v5753
        %5766 = vmatprep.subr.mxu0 0.0
        %5767 = vmatpush1.msra.mxu0 %v5754
        %5768 = vmatprep.subr.mxu0 0.0
        %5769 = vmatpush1.msra.mxu0 %v5755
        %5770 = vmatprep.subr.mxu0 0.0
        %5771 = vmatpush1.msra.mxu0 0.0
        %5772 = vmatprep.subr.mxu0 0.0
        %5773 = vmatpush1.msra.mxu0 0.0
        %5774 = vmatprep.subr.mxu0 0.0
        %5775 = vmatpush1.msra.mxu0 0.0
        %5776 = vmatprep.subr.mxu0 0.0
        %5777 = vmatpush1.msra.mxu0 0.0
        %5778 = vmatprep.subr.mxu0 0.0
        %5779 = vmatpush1.msra.mxu0 0.0
        %5780 = vmatprep.subr.mxu0 0.0
        %5781 = vmatpush1.msra.mxu0 0.0
        %5782 = vmatprep.subr.mxu0 0.0
        %5783 = vmatpush1.msra.mxu0 0.0
        %5784 = vmatprep.subr.mxu0 0.0
        %5785 = vmatpush1.msra.mxu0 0.0
        %5786 = vmatprep.subr.mxu0 0.0
        %5787 = vmatpush1.msra.mxu0 0.0
        %5788 = vmatprep.subr.mxu0 0.0
        %5789 = vmatpush1.msra.mxu0 0.0
        %5790 = vmatprep.subr.mxu0 0.0
        %5791 = vmatpush1.msra.mxu0 0.0
        %5792 = vmatprep.subr.mxu0 0.0
        %5793 = vmatpush1.msra.mxu0 0.0
        %5794 = vmatprep.subr.mxu0 0.0
        %5795 = vmatpush1.msra.mxu0 0.0
        %5796 = vmatprep.subr.mxu0 0.0
        %5797 = vmatpush1.msra.mxu0 0.0
        %5798 = vmatprep.subr.mxu0 0.0
        %5799 = vmatpush1.msra.mxu0 0.0
        %5800 = vmatprep.subr.mxu0 0.0
        %5801 = vmatpush1.msra.mxu0 0.0
        %5802 = vmatprep.subr.mxu0 0.0
        %5803 = vmatpush1.msra.mxu0 0.0
        %5804 = vmatprep.subr.mxu0 0.0
        %5805 = vmatpush1.msra.mxu0 0.0
        %5806 = vmatprep.subr.mxu0 0.0
        %5807 = vmatpush1.msra.mxu0 0.0
        %5808 = vmatprep.subr.mxu0 0.0
        %5809 = vmatpush1.msra.mxu0 0.0
        %5810 = vmatprep.subr.mxu0 0.0
        %5811 = vmatpush1.msra.mxu0 0.0
        %5812 = vmatprep.subr.mxu0 0.0
        %5813 = vmatpush1.msra.mxu0 0.0
        %5814 = vmatprep.subr.mxu0 0.0
        %5815 = vmatpush1.msra.mxu0 0.0
        %5816 = vmatprep.subr.mxu0 0.0
        %5817 = vmatpush1.msra.mxu0 0.0
        %5818 = vmatprep.subr.mxu0 0.0
        %5819 = vmatpush1.msra.mxu0 0.0
        %5820 = vmatprep.subr.mxu0 0.0
        %5821 = vmatpush1.msra.mxu0 0.0
        %5822 = vmatprep.subr.mxu0 0.0
        %5823 = vmatpush1.msra.mxu0 0.0
        %5824 = vmatprep.subr.mxu0 0.0
        %5825 = vmatpush1.msra.mxu0 0.0
        %5826 = vmatprep.mubr.f32.mxu0 0.0
        %5827 = vmatmul.mubr.f32.gmra.mrb[0].mxu0 %v5757
        %v5828 = vpop.f32.mrb[0].mxu0
        %v5829 = vadd.f32 0.0, %v5828
        %v5830 = vpop.f32.mrb[0].mxu0
        %5831 = vmatprep.mubr.f32.mxu0 0.0
        %5832 = vmatmul.mubr.f32.gmra.mrb[0].mxu0 %v5760
        %v5833 = vpop.f32.mrb[0].mxu0
        %v5834 = vadd.f32 0.0, %v5833
        %v5835 = vpop.f32.mrb[0].mxu0
        %5836 = vdwg.mxu0
        %v5837 = vadd.f32 %v5749, %v5829
        %v5838 = vadd.f32 %v5750, %v5834
        %s5839 = scalar_lea.vmem [#allocation13], 160
        %v5840 = vld [vmem:[%s5839] sm:$0xff]
        %v5841 = vld [vmem:[%s5839 + $0x8] sm:$0xff]
        %v5842 = vld [vmem:[%s5839 + $0x10] sm:$0xff]
        %v5843 = vld [vmem:[%s5839 + $0x18] sm:$0xff]
        %v5845 = vsel %vm2055, %v5307, 0
        %v5848 = vsel %vm2055, %v5308, 0
        %5850 = vmatprep.subr.mxu0 0.0
        %5851 = vmatpush1.msra.mxu0 %v5840
        %5852 = vmatprep.subr.mxu0 0.0
        %5853 = vmatpush1.msra.mxu0 %v5841
        %5854 = vmatprep.subr.mxu0 0.0
        %5855 = vmatpush1.msra.mxu0 %v5842
        %5856 = vmatprep.subr.mxu0 0.0
        %5857 = vmatpush1.msra.mxu0 %v5843
        %5858 = vmatprep.subr.mxu0 0.0
        %5859 = vmatpush1.msra.mxu0 0.0
        %5860 = vmatprep.subr.mxu0 0.0
        %5861 = vmatpush1.msra.mxu0 0.0
        %5862 = vmatprep.subr.mxu0 0.0
        %5863 = vmatpush1.msra.mxu0 0.0
        %5864 = vmatprep.subr.mxu0 0.0
        %5865 = vmatpush1.msra.mxu0 0.0
        %5866 = vmatprep.subr.mxu0 0.0
        %5867 = vmatpush1.msra.mxu0 0.0
        %5868 = vmatprep.subr.mxu0 0.0
        %5869 = vmatpush1.msra.mxu0 0.0
        %5870 = vmatprep.subr.mxu0 0.0
        %5871 = vmatpush1.msra.mxu0 0.0
        %5872 = vmatprep.subr.mxu0 0.0
        %5873 = vmatpush1.msra.mxu0 0.0
        %5874 = vmatprep.subr.mxu0 0.0
        %5875 = vmatpush1.msra.mxu0 0.0
        %5876 = vmatprep.subr.mxu0 0.0
        %5877 = vmatpush1.msra.mxu0 0.0
        %5878 = vmatprep.subr.mxu0 0.0
        %5879 = vmatpush1.msra.mxu0 0.0
        %5880 = vmatprep.subr.mxu0 0.0
        %5881 = vmatpush1.msra.mxu0 0.0
        %5882 = vmatprep.subr.mxu0 0.0
        %5883 = vmatpush1.msra.mxu0 0.0
        %5884 = vmatprep.subr.mxu0 0.0
        %5885 = vmatpush1.msra.mxu0 0.0
        %5886 = vmatprep.subr.mxu0 0.0
        %5887 = vmatpush1.msra.mxu0 0.0
        %5888 = vmatprep.subr.mxu0 0.0
        %5889 = vmatpush1.msra.mxu0 0.0
        %5890 = vmatprep.subr.mxu0 0.0
        %5891 = vmatpush1.msra.mxu0 0.0
        %5892 = vmatprep.subr.mxu0 0.0
        %5893 = vmatpush1.msra.mxu0 0.0
        %5894 = vmatprep.subr.mxu0 0.0
        %5895 = vmatpush1.msra.mxu0 0.0
        %5896 = vmatprep.subr.mxu0 0.0
        %5897 = vmatpush1.msra.mxu0 0.0
        %5898 = vmatprep.subr.mxu0 0.0
        %5899 = vmatpush1.msra.mxu0 0.0
        %5900 = vmatprep.subr.mxu0 0.0
        %5901 = vmatpush1.msra.mxu0 0.0
        %5902 = vmatprep.subr.mxu0 0.0
        %5903 = vmatpush1.msra.mxu0 0.0
        %5904 = vmatprep.subr.mxu0 0.0
        %5905 = vmatpush1.msra.mxu0 0.0
        %5906 = vmatprep.subr.mxu0 0.0
        %5907 = vmatpush1.msra.mxu0 0.0
        %5908 = vmatprep.subr.mxu0 0.0
        %5909 = vmatpush1.msra.mxu0 0.0
        %5910 = vmatprep.subr.mxu0 0.0
        %5911 = vmatpush1.msra.mxu0 0.0
        %5912 = vmatprep.subr.mxu0 0.0
        %5913 = vmatpush1.msra.mxu0 0.0
        %5914 = vmatprep.mubr.f32.mxu0 0.0
        %5915 = vmatmul.mubr.f32.gmra.mrb[0].mxu0 %v5845
        %v5916 = vpop.f32.mrb[0].mxu0
        %v5917 = vadd.f32 0.0, %v5916
        %v5918 = vpop.f32.mrb[0].mxu0
        %5919 = vmatprep.mubr.f32.mxu0 0.0
        %5920 = vmatmul.mubr.f32.gmra.mrb[0].mxu0 %v5848
        %v5921 = vpop.f32.mrb[0].mxu0
        %v5922 = vadd.f32 0.0, %v5921
        %v5923 = vpop.f32.mrb[0].mxu0
        %5924 = vdwg.mxu0
        %v5925 = vadd.f32 %v5837, %v5917
        %v5926 = vadd.f32 %v5838, %v5922
        %s5927 = scalar_lea.vmem [#allocation13], 192
        %v5928 = vld [vmem:[%s5927] sm:$0xff]
        %v5929 = vld [vmem:[%s5927 + $0x8] sm:$0xff]
        %v5930 = vld [vmem:[%s5927 + $0x10] sm:$0xff]
        %v5931 = vld [vmem:[%s5927 + $0x18] sm:$0xff]
        %v5933 = vsel %vm2055, %v5313, 0
        %v5936 = vsel %vm2055, %v5314, 0
        %5938 = vmatprep.subr.mxu0 0.0
        %5939 = vmatpush1.msra.mxu0 %v5928
        %5940 = vmatprep.subr.mxu0 0.0
        %5941 = vmatpush1.msra.mxu0 %v5929
        %5942 = vmatprep.subr.mxu0 0.0
        %5943 = vmatpush1.msra.mxu0 %v5930
        %5944 = vmatprep.subr.mxu0 0.0
        %5945 = vmatpush1.msra.mxu0 %v5931
        %5946 = vmatprep.subr.mxu0 0.0
        %5947 = vmatpush1.msra.mxu0 0.0
        %5948 = vmatprep.subr.mxu0 0.0
        %5949 = vmatpush1.msra.mxu0 0.0
        %5950 = vmatprep.subr.mxu0 0.0
        %5951 = vmatpush1.msra.mxu0 0.0
        %5952 = vmatprep.subr.mxu0 0.0
        %5953 = vmatpush1.msra.mxu0 0.0
        %5954 = vmatprep.subr.mxu0 0.0
        %5955 = vmatpush1.msra.mxu0 0.0
        %5956 = vmatprep.subr.mxu0 0.0
        %5957 = vmatpush1.msra.mxu0 0.0
        %5958 = vmatprep.subr.mxu0 0.0
        %5959 = vmatpush1.msra.mxu0 0.0
        %5960 = vmatprep.subr.mxu0 0.0
        %5961 = vmatpush1.msra.mxu0 0.0
        %5962 = vmatprep.subr.mxu0 0.0
        %5963 = vmatpush1.msra.mxu0 0.0
        %5964 = vmatprep.subr.mxu0 0.0
        %5965 = vmatpush1.msra.mxu0 0.0
        %5966 = vmatprep.subr.mxu0 0.0
        %5967 = vmatpush1.msra.mxu0 0.0
        %5968 = vmatprep.subr.mxu0 0.0
        %5969 = vmatpush1.msra.mxu0 0.0
        %5970 = vmatprep.subr.mxu0 0.0
        %5971 = vmatpush1.msra.mxu0 0.0
        %5972 = vmatprep.subr.mxu0 0.0
        %5973 = vmatpush1.msra.mxu0 0.0
        %5974 = vmatprep.subr.mxu0 0.0
        %5975 = vmatpush1.msra.mxu0 0.0
        %5976 = vmatprep.subr.mxu0 0.0
        %5977 = vmatpush1.msra.mxu0 0.0
        %5978 = vmatprep.subr.mxu0 0.0
        %5979 = vmatpush1.msra.mxu0 0.0
        %5980 = vmatprep.subr.mxu0 0.0
        %5981 = vmatpush1.msra.mxu0 0.0
        %5982 = vmatprep.subr.mxu0 0.0
        %5983 = vmatpush1.msra.mxu0 0.0
        %5984 = vmatprep.subr.mxu0 0.0
        %5985 = vmatpush1.msra.mxu0 0.0
        %5986 = vmatprep.subr.mxu0 0.0
        %5987 = vmatpush1.msra.mxu0 0.0
        %5988 = vmatprep.subr.mxu0 0.0
        %5989 = vmatpush1.msra.mxu0 0.0
        %5990 = vmatprep.subr.mxu0 0.0
        %5991 = vmatpush1.msra.mxu0 0.0
        %5992 = vmatprep.subr.mxu0 0.0
        %5993 = vmatpush1.msra.mxu0 0.0
        %5994 = vmatprep.subr.mxu0 0.0
        %5995 = vmatpush1.msra.mxu0 0.0
        %5996 = vmatprep.subr.mxu0 0.0
        %5997 = vmatpush1.msra.mxu0 0.0
        %5998 = vmatprep.subr.mxu0 0.0
        %5999 = vmatpush1.msra.mxu0 0.0
        %6000 = vmatprep.subr.mxu0 0.0
        %6001 = vmatpush1.msra.mxu0 0.0
        %6002 = vmatprep.mubr.f32.mxu0 0.0
        %6003 = vmatmul.mubr.f32.gmra.mrb[0].mxu0 %v5933
        %v6004 = vpop.f32.mrb[0].mxu0
        %v6005 = vadd.f32 0.0, %v6004
        %v6006 = vpop.f32.mrb[0].mxu0
        %6007 = vmatprep.mubr.f32.mxu0 0.0
        %6008 = vmatmul.mubr.f32.gmra.mrb[0].mxu0 %v5936
        %v6009 = vpop.f32.mrb[0].mxu0
        %v6010 = vadd.f32 0.0, %v6009
        %v6011 = vpop.f32.mrb[0].mxu0
        %6012 = vdwg.mxu0
        %v6013 = vadd.f32 %v5925, %v6005
        %v6014 = vadd.f32 %v5926, %v6010
        %s6015 = scalar_lea.vmem [#allocation13], 224
        %v6016 = vld [vmem:[%s6015] sm:$0xff]
        %v6017 = vld [vmem:[%s6015 + $0x8] sm:$0xff]
        %v6018 = vld [vmem:[%s6015 + $0x10] sm:$0xff]
        %v6019 = vld [vmem:[%s6015 + $0x18] sm:$0xff]
        %v6021 = vsel %vm2055, %v5319, 0
        %v6024 = vsel %vm2055, %v5320, 0
        %6026 = vmatprep.subr.mxu0 0.0
        %6027 = vmatpush1.msra.mxu0 %v6016
        %6028 = vmatprep.subr.mxu0 0.0
        %6029 = vmatpush1.msra.mxu0 %v6017
        %6030 = vmatprep.subr.mxu0 0.0
        %6031 = vmatpush1.msra.mxu0 %v6018
        %6032 = vmatprep.subr.mxu0 0.0
        %6033 = vmatpush1.msra.mxu0 %v6019
        %6034 = vmatprep.subr.mxu0 0.0
        %6035 = vmatpush1.msra.mxu0 0.0
        %6036 = vmatprep.subr.mxu0 0.0
        %6037 = vmatpush1.msra.mxu0 0.0
        %6038 = vmatprep.subr.mxu0 0.0
        %6039 = vmatpush1.msra.mxu0 0.0
        %6040 = vmatprep.subr.mxu0 0.0
        %6041 = vmatpush1.msra.mxu0 0.0
        %6042 = vmatprep.subr.mxu0 0.0
        %6043 = vmatpush1.msra.mxu0 0.0
        %6044 = vmatprep.subr.mxu0 0.0
        %6045 = vmatpush1.msra.mxu0 0.0
        %6046 = vmatprep.subr.mxu0 0.0
        %6047 = vmatpush1.msra.mxu0 0.0
        %6048 = vmatprep.subr.mxu0 0.0
        %6049 = vmatpush1.msra.mxu0 0.0
        %6050 = vmatprep.subr.mxu0 0.0
        %6051 = vmatpush1.msra.mxu0 0.0
        %6052 = vmatprep.subr.mxu0 0.0
        %6053 = vmatpush1.msra.mxu0 0.0
        %6054 = vmatprep.subr.mxu0 0.0
        %6055 = vmatpush1.msra.mxu0 0.0
        %6056 = vmatprep.subr.mxu0 0.0
        %6057 = vmatpush1.msra.mxu0 0.0
        %6058 = vmatprep.subr.mxu0 0.0
        %6059 = vmatpush1.msra.mxu0 0.0
        %6060 = vmatprep.subr.mxu0 0.0
        %6061 = vmatpush1.msra.mxu0 0.0
        %6062 = vmatprep.subr.mxu0 0.0
        %6063 = vmatpush1.msra.mxu0 0.0
        %6064 = vmatprep.subr.mxu0 0.0
        %6065 = vmatpush1.msra.mxu0 0.0
        %6066 = vmatprep.subr.mxu0 0.0
        %6067 = vmatpush1.msra.mxu0 0.0
        %6068 = vmatprep.subr.mxu0 0.0
        %6069 = vmatpush1.msra.mxu0 0.0
        %6070 = vmatprep.subr.mxu0 0.0
        %6071 = vmatpush1.msra.mxu0 0.0
        %6072 = vmatprep.subr.mxu0 0.0
        %6073 = vmatpush1.msra.mxu0 0.0
        %6074 = vmatprep.subr.mxu0 0.0
        %6075 = vmatpush1.msra.mxu0 0.0
        %6076 = vmatprep.subr.mxu0 0.0
        %6077 = vmatpush1.msra.mxu0 0.0
        %6078 = vmatprep.subr.mxu0 0.0
        %6079 = vmatpush1.msra.mxu0 0.0
        %6080 = vmatprep.subr.mxu0 0.0
        %6081 = vmatpush1.msra.mxu0 0.0
        %6082 = vmatprep.subr.mxu0 0.0
        %6083 = vmatpush1.msra.mxu0 0.0
        %6084 = vmatprep.subr.mxu0 0.0
        %6085 = vmatpush1.msra.mxu0 0.0
        %6086 = vmatprep.subr.mxu0 0.0
        %6087 = vmatpush1.msra.mxu0 0.0
        %6088 = vmatprep.subr.mxu0 0.0
        %6089 = vmatpush1.msra.mxu0 0.0
        %6090 = vmatprep.mubr.f32.mxu0 0.0
        %6091 = vmatmul.mubr.f32.gmra.mrb[0].mxu0 %v6021
        %v6092 = vpop.f32.mrb[0].mxu0
        %v6093 = vadd.f32 0.0, %v6092
        %v6094 = vpop.f32.mrb[0].mxu0
        %6095 = vmatprep.mubr.f32.mxu0 0.0
        %6096 = vmatmul.mubr.f32.gmra.mrb[0].mxu0 %v6024
        %v6097 = vpop.f32.mrb[0].mxu0
        %v6098 = vadd.f32 0.0, %v6097
        %v6099 = vpop.f32.mrb[0].mxu0
        %6100 = vdwg.mxu0
        %v6101 = vadd.f32 %v6013, %v6093
        %v6102 = vadd.f32 %v6014, %v6098
        %v6103 = vxor.u32 %v6101, 2147483648
        %v6104 = vxor.u32 %v6102, 2147483648
        %v6105 = vmul.f32 %v6103, 1.442695
        %v6106 = vpow.pop %v6105
        %v6107 = vmul.f32 %v6104, 1.442695
        %v6108 = vpow.pop %v6107
        %v6109 = vadd.f32 %v6106, 1.0
        %v6110 = vadd.f32 %v6108, 1.0
        %v6111 = vrcp.pop %v6109
        %v6112 = vmul.f32 1.0, %v6111
        %v6113 = vrcp.pop %v6110
        %v6114 = vmul.f32 1.0, %v6113
        %v6115 = vmul.f32 %v6101, %v6112
        %v6116 = vmul.f32 %v6102, %v6114
        %v6117 = vld [vmem:[%s14] sm:$0xff]
        %v6118 = vld [vmem:[%s14 + $0x8] sm:$0xff]
        %v6119 = vld [vmem:[%s14 + $0x10] sm:$0xff]
        %v6120 = vld [vmem:[%s14 + $0x18] sm:$0xff]
        %v6121 = vsub.f32 %v6101, -2.2
        %v6122 = vsub.f32 %v6102, -2.2
        %v6123 = vmul.f32 %v6121, 2.5
        %v6124 = vmul.f32 %v6122, 2.5
        %v6125 = vsub.f32 %v6123, 1.0
        %v6126 = vsub.f32 %v6124, 1.0
        %v6127 = vsub.f32 %v6125, 1.0
        %v6128 = vsub.f32 %v6126, 1.0
        %v6129 = vsub.f32 %v6127, 1.0
        %v6130 = vsub.f32 %v6128, 1.0
        %v6131 = vsub.f32 %v6129, 1.0
        %v6132 = vsub.f32 %v6130, 1.0
        %v6133 = vsub.f32 %v6131, 1.0
        %v6134 = vsub.f32 %v6132, 1.0
        %v6135 = vsub.f32 %v6133, 1.0
        %v6136 = vsub.f32 %v6134, 1.0
        %v6137 = vsub.f32 %v6135, 1.0
        %v6138 = vsub.f32 %v6136, 1.0
        %v6139 = vsub.f32 %v6137, 1.0
        %v6140 = vsub.f32 %v6138, 1.0
        %v6141 = vsub.f32 %v6139, 1.0
        %v6142 = vsub.f32 %v6140, 1.0
        %v6143 = vsub.f32 %v6141, 1.0
        %v6144 = vsub.f32 %v6142, 1.0
        %v6145 = vsub.f32 %v6143, 1.0
        %v6146 = vsub.f32 %v6144, 1.0
        %vm6147 = vcmp.ge.f32.partialorder %v6123, 0.0
        %vm6148 = vcmp.ge.f32.partialorder %v6124, 0.0
        %v6149 = vsel %vm6147, 1.0, 0.0
        %v6150 = vsel %vm6148, 1.0, 0.0
        %vm6151 = vcmp.ge.f32.partialorder %v6125, 0.0
        %vm6152 = vcmp.ge.f32.partialorder %v6126, 0.0
        %v6153 = vsel %vm6151, 1.0, 0.0
        %v6154 = vsel %vm6152, 1.0, 0.0
        %vm6155 = vcmp.ge.f32.partialorder %v6127, 0.0
        %vm6156 = vcmp.ge.f32.partialorder %v6128, 0.0
        %v6157 = vsel %vm6155, 1.0, 0.0
        %v6158 = vsel %vm6156, 1.0, 0.0
        %vm6159 = vcmp.ge.f32.partialorder %v6129, 0.0
        %vm6160 = vcmp.ge.f32.partialorder %v6130, 0.0
        %v6161 = vsel %vm6159, 1.0, 0.0
        %v6162 = vsel %vm6160, 1.0, 0.0
        %vm6163 = vcmp.ge.f32.partialorder %v6131, 0.0
        %vm6164 = vcmp.ge.f32.partialorder %v6132, 0.0
        %v6165 = vsel %vm6163, 1.0, 0.0
        %v6166 = vsel %vm6164, 1.0, 0.0
        %vm6167 = vcmp.ge.f32.partialorder %v6133, 0.0
        %vm6168 = vcmp.ge.f32.partialorder %v6134, 0.0
        %v6169 = vsel %vm6167, 1.0, 0.0
        %v6170 = vsel %vm6168, 1.0, 0.0
        %vm6171 = vcmp.ge.f32.partialorder %v6135, 0.0
        %vm6172 = vcmp.ge.f32.partialorder %v6136, 0.0
        %v6173 = vsel %vm6171, 1.0, 0.0
        %v6174 = vsel %vm6172, 1.0, 0.0
        %vm6175 = vcmp.ge.f32.partialorder %v6137, 0.0
        %vm6176 = vcmp.ge.f32.partialorder %v6138, 0.0
        %v6177 = vsel %vm6175, 1.0, 0.0
        %v6178 = vsel %vm6176, 1.0, 0.0
        %vm6179 = vcmp.ge.f32.partialorder %v6139, 0.0
        %vm6180 = vcmp.ge.f32.partialorder %v6140, 0.0
        %v6181 = vsel %vm6179, 1.0, 0.0
        %v6182 = vsel %vm6180, 1.0, 0.0
        %vm6183 = vcmp.ge.f32.partialorder %v6141, 0.0
        %vm6184 = vcmp.ge.f32.partialorder %v6142, 0.0
        %v6185 = vsel %vm6183, 1.0, 0.0
        %v6186 = vsel %vm6184, 1.0, 0.0
        %vm6187 = vcmp.ge.f32.partialorder %v6143, 0.0
        %vm6188 = vcmp.ge.f32.partialorder %v6144, 0.0
        %v6189 = vsel %vm6187, 1.0, 0.0
        %v6190 = vsel %vm6188, 1.0, 0.0
        %vm6191 = vcmp.ge.f32.partialorder %v6145, 0.0
        %vm6192 = vcmp.ge.f32.partialorder %v6146, 0.0
        %v6193 = vsel %vm6191, 1.0, 0.0
        %v6194 = vsel %vm6192, 1.0, 0.0
        %v6195 = vsub.f32 %v6149, %v6153
        %v6196 = vsub.f32 %v6150, %v6154
        %v6197 = vsub.f32 %v6153, %v6157
        %v6198 = vsub.f32 %v6154, %v6158
        %v6199 = vsub.f32 %v6157, %v6161
        %v6200 = vsub.f32 %v6158, %v6162
        %v6201 = vsub.f32 %v6161, %v6165
        %v6202 = vsub.f32 %v6162, %v6166
        %v6203 = vsub.f32 %v6165, %v6169
        %v6204 = vsub.f32 %v6166, %v6170
        %v6205 = vsub.f32 %v6169, %v6173
        %v6206 = vsub.f32 %v6170, %v6174
        %v6207 = vsub.f32 %v6173, %v6177
        %v6208 = vsub.f32 %v6174, %v6178
        %v6209 = vsub.f32 %v6177, %v6181
        %v6210 = vsub.f32 %v6178, %v6182
        %v6211 = vsub.f32 %v6181, %v6185
        %v6212 = vsub.f32 %v6182, %v6186
        %v6213 = vsub.f32 %v6185, %v6189
        %v6214 = vsub.f32 %v6186, %v6190
        %v6215 = vsub.f32 %v6189, %v6193
        %v6216 = vsub.f32 %v6190, %v6194
        %v6217 = vmul.f32 %v6123, %v6195
        %v6218 = vmul.f32 %v6124, %v6196
        %v6219 = vmul.f32 %v6127, %v6197
        %v6220 = vmul.f32 %v6128, %v6198
        %v6221 = vsub.f32 %v6217, %v6219
        %v6222 = vsub.f32 %v6218, %v6220
        %v6223 = vmul.f32 %v6125, %v6197
        %v6224 = vmul.f32 %v6126, %v6198
        %v6225 = vmul.f32 %v6129, %v6199
        %v6226 = vmul.f32 %v6130, %v6200
        %v6227 = vsub.f32 %v6223, %v6225
        %v6228 = vsub.f32 %v6224, %v6226
        %v6229 = vmul.f32 %v6127, %v6199
        %v6230 = vmul.f32 %v6128, %v6200
        %v6231 = vmul.f32 %v6131, %v6201
        %v6232 = vmul.f32 %v6132, %v6202
        %v6233 = vsub.f32 %v6229, %v6231
        %v6234 = vsub.f32 %v6230, %v6232
        %v6235 = vmul.f32 %v6129, %v6201
        %v6236 = vmul.f32 %v6130, %v6202
        %v6237 = vmul.f32 %v6133, %v6203
        %v6238 = vmul.f32 %v6134, %v6204
        %v6239 = vsub.f32 %v6235, %v6237
        %v6240 = vsub.f32 %v6236, %v6238
        %v6241 = vmul.f32 %v6131, %v6203
        %v6242 = vmul.f32 %v6132, %v6204
        %v6243 = vmul.f32 %v6135, %v6205
        %v6244 = vmul.f32 %v6136, %v6206
        %v6245 = vsub.f32 %v6241, %v6243
        %v6246 = vsub.f32 %v6242, %v6244
        %v6247 = vmul.f32 %v6133, %v6205
        %v6248 = vmul.f32 %v6134, %v6206
        %v6249 = vmul.f32 %v6137, %v6207
        %v6250 = vmul.f32 %v6138, %v6208
        %v6251 = vsub.f32 %v6247, %v6249
        %v6252 = vsub.f32 %v6248, %v6250
        %v6253 = vmul.f32 %v6135, %v6207
        %v6254 = vmul.f32 %v6136, %v6208
        %v6255 = vmul.f32 %v6139, %v6209
        %v6256 = vmul.f32 %v6140, %v6210
        %v6257 = vsub.f32 %v6253, %v6255
        %v6258 = vsub.f32 %v6254, %v6256
        %v6259 = vmul.f32 %v6137, %v6209
        %v6260 = vmul.f32 %v6138, %v6210
        %v6261 = vmul.f32 %v6141, %v6211
        %v6262 = vmul.f32 %v6142, %v6212
        %v6263 = vsub.f32 %v6259, %v6261
        %v6264 = vsub.f32 %v6260, %v6262
        %v6265 = vmul.f32 %v6139, %v6211
        %v6266 = vmul.f32 %v6140, %v6212
        %v6267 = vmul.f32 %v6143, %v6213
        %v6268 = vmul.f32 %v6144, %v6214
        %v6269 = vsub.f32 %v6265, %v6267
        %v6270 = vsub.f32 %v6266, %v6268
        %v6271 = vmul.f32 %v6141, %v6213
        %v6272 = vmul.f32 %v6142, %v6214
        %v6273 = vmul.f32 %v6145, %v6215
        %v6274 = vmul.f32 %v6146, %v6216
        %v6275 = vsub.f32 %v6271, %v6273
        %v6276 = vsub.f32 %v6272, %v6274
        %v6277 = vmul.f32 %v6123, %v6221
        %v6278 = vmul.f32 %v6124, %v6222
        %v6279 = vmul.f32 %v6129, %v6227
        %v6280 = vmul.f32 %v6130, %v6228
        %v6281 = vsub.f32 %v6277, %v6279
        %v6282 = vsub.f32 %v6278, %v6280
        %v6283 = vmul.f32 %v6125, %v6227
        %v6284 = vmul.f32 %v6126, %v6228
        %v6285 = vmul.f32 %v6131, %v6233
        %v6286 = vmul.f32 %v6132, %v6234
        %v6287 = vsub.f32 %v6283, %v6285
        %v6288 = vsub.f32 %v6284, %v6286
        %v6289 = vmul.f32 %v6127, %v6233
        %v6290 = vmul.f32 %v6128, %v6234
        %v6291 = vmul.f32 %v6133, %v6239
        %v6292 = vmul.f32 %v6134, %v6240
        %v6293 = vsub.f32 %v6289, %v6291
        %v6294 = vsub.f32 %v6290, %v6292
        %v6295 = vmul.f32 %v6129, %v6239
        %v6296 = vmul.f32 %v6130, %v6240
        %v6297 = vmul.f32 %v6135, %v6245
        %v6298 = vmul.f32 %v6136, %v6246
        %v6299 = vsub.f32 %v6295, %v6297
        %v6300 = vsub.f32 %v6296, %v6298
        %v6301 = vmul.f32 %v6131, %v6245
        %v6302 = vmul.f32 %v6132, %v6246
        %v6303 = vmul.f32 %v6137, %v6251
        %v6304 = vmul.f32 %v6138, %v6252
        %v6305 = vsub.f32 %v6301, %v6303
        %v6306 = vsub.f32 %v6302, %v6304
        %v6307 = vmul.f32 %v6133, %v6251
        %v6308 = vmul.f32 %v6134, %v6252
        %v6309 = vmul.f32 %v6139, %v6257
        %v6310 = vmul.f32 %v6140, %v6258
        %v6311 = vsub.f32 %v6307, %v6309
        %v6312 = vsub.f32 %v6308, %v6310
        %v6313 = vmul.f32 %v6135, %v6257
        %v6314 = vmul.f32 %v6136, %v6258
        %v6315 = vmul.f32 %v6141, %v6263
        %v6316 = vmul.f32 %v6142, %v6264
        %v6317 = vsub.f32 %v6313, %v6315
        %v6318 = vsub.f32 %v6314, %v6316
        %v6319 = vmul.f32 %v6137, %v6263
        %v6320 = vmul.f32 %v6138, %v6264
        %v6321 = vmul.f32 %v6143, %v6269
        %v6322 = vmul.f32 %v6144, %v6270
        %v6323 = vsub.f32 %v6319, %v6321
        %v6324 = vsub.f32 %v6320, %v6322
        %v6325 = vmul.f32 %v6139, %v6269
        %v6326 = vmul.f32 %v6140, %v6270
        %v6327 = vmul.f32 %v6145, %v6275
        %v6328 = vmul.f32 %v6146, %v6276
        %v6329 = vsub.f32 %v6325, %v6327
        %v6330 = vsub.f32 %v6326, %v6328
        %v6331 = vmul.f32 %v6123, %v6281
        %v6332 = vmul.f32 %v6124, %v6282
        %v6333 = vmul.f32 %v6131, %v6287
        %v6334 = vmul.f32 %v6132, %v6288
        %v6335 = vsub.f32 %v6331, %v6333
        %v6336 = vsub.f32 %v6332, %v6334
        %v6337 = vmul.f32 %v6125, %v6287
        %v6338 = vmul.f32 %v6126, %v6288
        %v6339 = vmul.f32 %v6133, %v6293
        %v6340 = vmul.f32 %v6134, %v6294
        %v6341 = vsub.f32 %v6337, %v6339
        %v6342 = vsub.f32 %v6338, %v6340
        %v6343 = vmul.f32 %v6127, %v6293
        %v6344 = vmul.f32 %v6128, %v6294
        %v6345 = vmul.f32 %v6135, %v6299
        %v6346 = vmul.f32 %v6136, %v6300
        %v6347 = vsub.f32 %v6343, %v6345
        %v6348 = vsub.f32 %v6344, %v6346
        %v6349 = vmul.f32 %v6129, %v6299
        %v6350 = vmul.f32 %v6130, %v6300
        %v6351 = vmul.f32 %v6137, %v6305
        %v6352 = vmul.f32 %v6138, %v6306
        %v6353 = vsub.f32 %v6349, %v6351
        %v6354 = vsub.f32 %v6350, %v6352
        %v6355 = vmul.f32 %v6131, %v6305
        %v6356 = vmul.f32 %v6132, %v6306
        %v6357 = vmul.f32 %v6139, %v6311
        %v6358 = vmul.f32 %v6140, %v6312
        %v6359 = vsub.f32 %v6355, %v6357
        %v6360 = vsub.f32 %v6356, %v6358
        %v6361 = vmul.f32 %v6133, %v6311
        %v6362 = vmul.f32 %v6134, %v6312
        %v6363 = vmul.f32 %v6141, %v6317
        %v6364 = vmul.f32 %v6142, %v6318
        %v6365 = vsub.f32 %v6361, %v6363
        %v6366 = vsub.f32 %v6362, %v6364
        %v6367 = vmul.f32 %v6135, %v6317
        %v6368 = vmul.f32 %v6136, %v6318
        %v6369 = vmul.f32 %v6143, %v6323
        %v6370 = vmul.f32 %v6144, %v6324
        %v6371 = vsub.f32 %v6367, %v6369
        %v6372 = vsub.f32 %v6368, %v6370
        %v6373 = vmul.f32 %v6137, %v6323
        %v6374 = vmul.f32 %v6138, %v6324
        %v6375 = vmul.f32 %v6145, %v6329
        %v6376 = vmul.f32 %v6146, %v6330
        %v6377 = vsub.f32 %v6373, %v6375
        %v6378 = vsub.f32 %v6374, %v6376
        %v6379 = vld [vmem:[%s15] sm:$0xff]
        %v6380 = vld [vmem:[%s15 + $0x8] sm:$0xff]
        %v6381 = vld [vmem:[%s15 + $0x10] sm:$0xff]
        %v6382 = vld [vmem:[%s15 + $0x18] sm:$0xff]
        %v6384 = vsel %vm2055, %v6335, 0
        %v6387 = vsel %vm2055, %v6336, 0
        %6389 = vmatprep.subr.mxu0 0.0
        %6390 = vmatpush1.msra.mxu0 %v6379
        %6391 = vmatprep.subr.mxu0 0.0
        %6392 = vmatpush1.msra.mxu0 %v6380
        %6393 = vmatprep.subr.mxu0 0.0
        %6394 = vmatpush1.msra.mxu0 %v6381
        %6395 = vmatprep.subr.mxu0 0.0
        %6396 = vmatpush1.msra.mxu0 %v6382
        %6397 = vmatprep.subr.mxu0 0.0
        %6398 = vmatpush1.msra.mxu0 0.0
        %6399 = vmatprep.subr.mxu0 0.0
        %6400 = vmatpush1.msra.mxu0 0.0
        %6401 = vmatprep.subr.mxu0 0.0
        %6402 = vmatpush1.msra.mxu0 0.0
        %6403 = vmatprep.subr.mxu0 0.0
        %6404 = vmatpush1.msra.mxu0 0.0
        %6405 = vmatprep.subr.mxu0 0.0
        %6406 = vmatpush1.msra.mxu0 0.0
        %6407 = vmatprep.subr.mxu0 0.0
        %6408 = vmatpush1.msra.mxu0 0.0
        %6409 = vmatprep.subr.mxu0 0.0
        %6410 = vmatpush1.msra.mxu0 0.0
        %6411 = vmatprep.subr.mxu0 0.0
        %6412 = vmatpush1.msra.mxu0 0.0
        %6413 = vmatprep.subr.mxu0 0.0
        %6414 = vmatpush1.msra.mxu0 0.0
        %6415 = vmatprep.subr.mxu0 0.0
        %6416 = vmatpush1.msra.mxu0 0.0
        %6417 = vmatprep.subr.mxu0 0.0
        %6418 = vmatpush1.msra.mxu0 0.0
        %6419 = vmatprep.subr.mxu0 0.0
        %6420 = vmatpush1.msra.mxu0 0.0
        %6421 = vmatprep.subr.mxu0 0.0
        %6422 = vmatpush1.msra.mxu0 0.0
        %6423 = vmatprep.subr.mxu0 0.0
        %6424 = vmatpush1.msra.mxu0 0.0
        %6425 = vmatprep.subr.mxu0 0.0
        %6426 = vmatpush1.msra.mxu0 0.0
        %6427 = vmatprep.subr.mxu0 0.0
        %6428 = vmatpush1.msra.mxu0 0.0
        %6429 = vmatprep.subr.mxu0 0.0
        %6430 = vmatpush1.msra.mxu0 0.0
        %6431 = vmatprep.subr.mxu0 0.0
        %6432 = vmatpush1.msra.mxu0 0.0
        %6433 = vmatprep.subr.mxu0 0.0
        %6434 = vmatpush1.msra.mxu0 0.0
        %6435 = vmatprep.subr.mxu0 0.0
        %6436 = vmatpush1.msra.mxu0 0.0
        %6437 = vmatprep.subr.mxu0 0.0
        %6438 = vmatpush1.msra.mxu0 0.0
        %6439 = vmatprep.subr.mxu0 0.0
        %6440 = vmatpush1.msra.mxu0 0.0
        %6441 = vmatprep.subr.mxu0 0.0
        %6442 = vmatpush1.msra.mxu0 0.0
        %6443 = vmatprep.subr.mxu0 0.0
        %6444 = vmatpush1.msra.mxu0 0.0
        %6445 = vmatprep.subr.mxu0 0.0
        %6446 = vmatpush1.msra.mxu0 0.0
        %6447 = vmatprep.subr.mxu0 0.0
        %6448 = vmatpush1.msra.mxu0 0.0
        %6449 = vmatprep.subr.mxu0 0.0
        %6450 = vmatpush1.msra.mxu0 0.0
        %6451 = vmatprep.subr.mxu0 0.0
        %6452 = vmatpush1.msra.mxu0 0.0
        %6453 = vmatprep.mubr.f32.mxu0 0.0
        %6454 = vmatmul.mubr.f32.gmra.mrb[0].mxu0 %v6384
        %v6455 = vpop.f32.mrb[0].mxu0
        %v6456 = vadd.f32 0.0, %v6455
        %v6457 = vpop.f32.mrb[0].mxu0
        %6458 = vmatprep.mubr.f32.mxu0 0.0
        %6459 = vmatmul.mubr.f32.gmra.mrb[0].mxu0 %v6387
        %v6460 = vpop.f32.mrb[0].mxu0
        %v6461 = vadd.f32 0.0, %v6460
        %v6462 = vpop.f32.mrb[0].mxu0
        %6463 = vdwg.mxu0
        %v6465 = vsel %vm2055, %v6115, 0
        %v6468 = vsel %vm2055, %v6116, 0
        %6470 = vmatprep.subr.mxu0 0.0
        %6471 = vmatpush1.msra.mxu0 %v6117
        %6472 = vmatprep.subr.mxu0 0.0
        %6473 = vmatpush1.msra.mxu0 %v6118
        %6474 = vmatprep.subr.mxu0 0.0
        %6475 = vmatpush1.msra.mxu0 %v6119
        %6476 = vmatprep.subr.mxu0 0.0
        %6477 = vmatpush1.msra.mxu0 %v6120
        %6478 = vmatprep.subr.mxu0 0.0
        %6479 = vmatpush1.msra.mxu0 0.0
        %6480 = vmatprep.subr.mxu0 0.0
        %6481 = vmatpush1.msra.mxu0 0.0
        %6482 = vmatprep.subr.mxu0 0.0
        %6483 = vmatpush1.msra.mxu0 0.0
        %6484 = vmatprep.subr.mxu0 0.0
        %6485 = vmatpush1.msra.mxu0 0.0
        %6486 = vmatprep.subr.mxu0 0.0
        %6487 = vmatpush1.msra.mxu0 0.0
        %6488 = vmatprep.subr.mxu0 0.0
        %6489 = vmatpush1.msra.mxu0 0.0
        %6490 = vmatprep.subr.mxu0 0.0
        %6491 = vmatpush1.msra.mxu0 0.0
        %6492 = vmatprep.subr.mxu0 0.0
        %6493 = vmatpush1.msra.mxu0 0.0
        %6494 = vmatprep.subr.mxu0 0.0
        %6495 = vmatpush1.msra.mxu0 0.0
        %6496 = vmatprep.subr.mxu0 0.0
        %6497 = vmatpush1.msra.mxu0 0.0
        %6498 = vmatprep.subr.mxu0 0.0
        %6499 = vmatpush1.msra.mxu0 0.0
        %6500 = vmatprep.subr.mxu0 0.0
        %6501 = vmatpush1.msra.mxu0 0.0
        %6502 = vmatprep.subr.mxu0 0.0
        %6503 = vmatpush1.msra.mxu0 0.0
        %6504 = vmatprep.subr.mxu0 0.0
        %6505 = vmatpush1.msra.mxu0 0.0
        %6506 = vmatprep.subr.mxu0 0.0
        %6507 = vmatpush1.msra.mxu0 0.0
        %6508 = vmatprep.subr.mxu0 0.0
        %6509 = vmatpush1.msra.mxu0 0.0
        %6510 = vmatprep.subr.mxu0 0.0
        %6511 = vmatpush1.msra.mxu0 0.0
        %6512 = vmatprep.subr.mxu0 0.0
        %6513 = vmatpush1.msra.mxu0 0.0
        %6514 = vmatprep.subr.mxu0 0.0
        %6515 = vmatpush1.msra.mxu0 0.0
        %6516 = vmatprep.subr.mxu0 0.0
        %6517 = vmatpush1.msra.mxu0 0.0
        %6518 = vmatprep.subr.mxu0 0.0
        %6519 = vmatpush1.msra.mxu0 0.0
        %6520 = vmatprep.subr.mxu0 0.0
        %6521 = vmatpush1.msra.mxu0 0.0
        %6522 = vmatprep.subr.mxu0 0.0
        %6523 = vmatpush1.msra.mxu0 0.0
        %6524 = vmatprep.subr.mxu0 0.0
        %6525 = vmatpush1.msra.mxu0 0.0
        %6526 = vmatprep.subr.mxu0 0.0
        %6527 = vmatpush1.msra.mxu0 0.0
        %6528 = vmatprep.subr.mxu0 0.0
        %6529 = vmatpush1.msra.mxu0 0.0
        %6530 = vmatprep.subr.mxu0 0.0
        %6531 = vmatpush1.msra.mxu0 0.0
        %6532 = vmatprep.subr.mxu0 0.0
        %6533 = vmatpush1.msra.mxu0 0.0
        %6534 = vmatprep.mubr.f32.mxu0 0.0
        %6535 = vmatmul.mubr.f32.gmra.mrb[0].mxu0 %v6465
        %v6536 = vpop.f32.mrb[0].mxu0
        %v6537 = vadd.f32 %v6456, %v6536
        %v6538 = vpop.f32.mrb[0].mxu0
        %6539 = vmatprep.mubr.f32.mxu0 0.0
        %6540 = vmatmul.mubr.f32.gmra.mrb[0].mxu0 %v6468
        %v6541 = vpop.f32.mrb[0].mxu0
        %v6542 = vadd.f32 %v6461, %v6541
        %v6543 = vpop.f32.mrb[0].mxu0
        %6544 = vdwg.mxu0
        %s6545 = scalar_lea.vmem %s15, 32
        %v6546 = vld [vmem:[%s6545] sm:$0xff]
        %v6547 = vld [vmem:[%s6545 + $0x8] sm:$0xff]
        %v6548 = vld [vmem:[%s6545 + $0x10] sm:$0xff]
        %v6549 = vld [vmem:[%s6545 + $0x18] sm:$0xff]
        %v6551 = vsel %vm2055, %v6341, 0
        %v6554 = vsel %vm2055, %v6342, 0
        %6556 = vmatprep.subr.mxu0 0.0
        %6557 = vmatpush1.msra.mxu0 %v6546
        %6558 = vmatprep.subr.mxu0 0.0
        %6559 = vmatpush1.msra.mxu0 %v6547
        %6560 = vmatprep.subr.mxu0 0.0
        %6561 = vmatpush1.msra.mxu0 %v6548
        %6562 = vmatprep.subr.mxu0 0.0
        %6563 = vmatpush1.msra.mxu0 %v6549
        %6564 = vmatprep.subr.mxu0 0.0
        %6565 = vmatpush1.msra.mxu0 0.0
        %6566 = vmatprep.subr.mxu0 0.0
        %6567 = vmatpush1.msra.mxu0 0.0
        %6568 = vmatprep.subr.mxu0 0.0
        %6569 = vmatpush1.msra.mxu0 0.0
        %6570 = vmatprep.subr.mxu0 0.0
        %6571 = vmatpush1.msra.mxu0 0.0
        %6572 = vmatprep.subr.mxu0 0.0
        %6573 = vmatpush1.msra.mxu0 0.0
        %6574 = vmatprep.subr.mxu0 0.0
        %6575 = vmatpush1.msra.mxu0 0.0
        %6576 = vmatprep.subr.mxu0 0.0
        %6577 = vmatpush1.msra.mxu0 0.0
        %6578 = vmatprep.subr.mxu0 0.0
        %6579 = vmatpush1.msra.mxu0 0.0
        %6580 = vmatprep.subr.mxu0 0.0
        %6581 = vmatpush1.msra.mxu0 0.0
        %6582 = vmatprep.subr.mxu0 0.0
        %6583 = vmatpush1.msra.mxu0 0.0
        %6584 = vmatprep.subr.mxu0 0.0
        %6585 = vmatpush1.msra.mxu0 0.0
        %6586 = vmatprep.subr.mxu0 0.0
        %6587 = vmatpush1.msra.mxu0 0.0
        %6588 = vmatprep.subr.mxu0 0.0
        %6589 = vmatpush1.msra.mxu0 0.0
        %6590 = vmatprep.subr.mxu0 0.0
        %6591 = vmatpush1.msra.mxu0 0.0
        %6592 = vmatprep.subr.mxu0 0.0
        %6593 = vmatpush1.msra.mxu0 0.0
        %6594 = vmatprep.subr.mxu0 0.0
        %6595 = vmatpush1.msra.mxu0 0.0
        %6596 = vmatprep.subr.mxu0 0.0
        %6597 = vmatpush1.msra.mxu0 0.0
        %6598 = vmatprep.subr.mxu0 0.0
        %6599 = vmatpush1.msra.mxu0 0.0
        %6600 = vmatprep.subr.mxu0 0.0
        %6601 = vmatpush1.msra.mxu0 0.0
        %6602 = vmatprep.subr.mxu0 0.0
        %6603 = vmatpush1.msra.mxu0 0.0
        %6604 = vmatprep.subr.mxu0 0.0
        %6605 = vmatpush1.msra.mxu0 0.0
        %6606 = vmatprep.subr.mxu0 0.0
        %6607 = vmatpush1.msra.mxu0 0.0
        %6608 = vmatprep.subr.mxu0 0.0
        %6609 = vmatpush1.msra.mxu0 0.0
        %6610 = vmatprep.subr.mxu0 0.0
        %6611 = vmatpush1.msra.mxu0 0.0
        %6612 = vmatprep.subr.mxu0 0.0
        %6613 = vmatpush1.msra.mxu0 0.0
        %6614 = vmatprep.subr.mxu0 0.0
        %6615 = vmatpush1.msra.mxu0 0.0
        %6616 = vmatprep.subr.mxu0 0.0
        %6617 = vmatpush1.msra.mxu0 0.0
        %6618 = vmatprep.subr.mxu0 0.0
        %6619 = vmatpush1.msra.mxu0 0.0
        %6620 = vmatprep.mubr.f32.mxu0 0.0
        %6621 = vmatmul.mubr.f32.gmra.mrb[0].mxu0 %v6551
        %v6622 = vpop.f32.mrb[0].mxu0
        %v6623 = vadd.f32 0.0, %v6622
        %v6624 = vpop.f32.mrb[0].mxu0
        %6625 = vmatprep.mubr.f32.mxu0 0.0
        %6626 = vmatmul.mubr.f32.gmra.mrb[0].mxu0 %v6554
        %v6627 = vpop.f32.mrb[0].mxu0
        %v6628 = vadd.f32 0.0, %v6627
        %v6629 = vpop.f32.mrb[0].mxu0
        %6630 = vdwg.mxu0
        %v6631 = vadd.f32 %v6537, %v6623
        %v6632 = vadd.f32 %v6542, %v6628
        %s6633 = scalar_lea.vmem %s15, 64
        %v6634 = vld [vmem:[%s6633] sm:$0xff]
        %v6635 = vld [vmem:[%s6633 + $0x8] sm:$0xff]
        %v6636 = vld [vmem:[%s6633 + $0x10] sm:$0xff]
        %v6637 = vld [vmem:[%s6633 + $0x18] sm:$0xff]
        %v6639 = vsel %vm2055, %v6347, 0
        %v6642 = vsel %vm2055, %v6348, 0
        %6644 = vmatprep.subr.mxu0 0.0
        %6645 = vmatpush1.msra.mxu0 %v6634
        %6646 = vmatprep.subr.mxu0 0.0
        %6647 = vmatpush1.msra.mxu0 %v6635
        %6648 = vmatprep.subr.mxu0 0.0
        %6649 = vmatpush1.msra.mxu0 %v6636
        %6650 = vmatprep.subr.mxu0 0.0
        %6651 = vmatpush1.msra.mxu0 %v6637
        %6652 = vmatprep.subr.mxu0 0.0
        %6653 = vmatpush1.msra.mxu0 0.0
        %6654 = vmatprep.subr.mxu0 0.0
        %6655 = vmatpush1.msra.mxu0 0.0
        %6656 = vmatprep.subr.mxu0 0.0
        %6657 = vmatpush1.msra.mxu0 0.0
        %6658 = vmatprep.subr.mxu0 0.0
        %6659 = vmatpush1.msra.mxu0 0.0
        %6660 = vmatprep.subr.mxu0 0.0
        %6661 = vmatpush1.msra.mxu0 0.0
        %6662 = vmatprep.subr.mxu0 0.0
        %6663 = vmatpush1.msra.mxu0 0.0
        %6664 = vmatprep.subr.mxu0 0.0
        %6665 = vmatpush1.msra.mxu0 0.0
        %6666 = vmatprep.subr.mxu0 0.0
        %6667 = vmatpush1.msra.mxu0 0.0
        %6668 = vmatprep.subr.mxu0 0.0
        %6669 = vmatpush1.msra.mxu0 0.0
        %6670 = vmatprep.subr.mxu0 0.0
        %6671 = vmatpush1.msra.mxu0 0.0
        %6672 = vmatprep.subr.mxu0 0.0
        %6673 = vmatpush1.msra.mxu0 0.0
        %6674 = vmatprep.subr.mxu0 0.0
        %6675 = vmatpush1.msra.mxu0 0.0
        %6676 = vmatprep.subr.mxu0 0.0
        %6677 = vmatpush1.msra.mxu0 0.0
        %6678 = vmatprep.subr.mxu0 0.0
        %6679 = vmatpush1.msra.mxu0 0.0
        %6680 = vmatprep.subr.mxu0 0.0
        %6681 = vmatpush1.msra.mxu0 0.0
        %6682 = vmatprep.subr.mxu0 0.0
        %6683 = vmatpush1.msra.mxu0 0.0
        %6684 = vmatprep.subr.mxu0 0.0
        %6685 = vmatpush1.msra.mxu0 0.0
        %6686 = vmatprep.subr.mxu0 0.0
        %6687 = vmatpush1.msra.mxu0 0.0
        %6688 = vmatprep.subr.mxu0 0.0
        %6689 = vmatpush1.msra.mxu0 0.0
        %6690 = vmatprep.subr.mxu0 0.0
        %6691 = vmatpush1.msra.mxu0 0.0
        %6692 = vmatprep.subr.mxu0 0.0
        %6693 = vmatpush1.msra.mxu0 0.0
        %6694 = vmatprep.subr.mxu0 0.0
        %6695 = vmatpush1.msra.mxu0 0.0
        %6696 = vmatprep.subr.mxu0 0.0
        %6697 = vmatpush1.msra.mxu0 0.0
        %6698 = vmatprep.subr.mxu0 0.0
        %6699 = vmatpush1.msra.mxu0 0.0
        %6700 = vmatprep.subr.mxu0 0.0
        %6701 = vmatpush1.msra.mxu0 0.0
        %6702 = vmatprep.subr.mxu0 0.0
        %6703 = vmatpush1.msra.mxu0 0.0
        %6704 = vmatprep.subr.mxu0 0.0
        %6705 = vmatpush1.msra.mxu0 0.0
        %6706 = vmatprep.subr.mxu0 0.0
        %6707 = vmatpush1.msra.mxu0 0.0
        %6708 = vmatprep.mubr.f32.mxu0 0.0
        %6709 = vmatmul.mubr.f32.gmra.mrb[0].mxu0 %v6639
        %v6710 = vpop.f32.mrb[0].mxu0
        %v6711 = vadd.f32 0.0, %v6710
        %v6712 = vpop.f32.mrb[0].mxu0
        %6713 = vmatprep.mubr.f32.mxu0 0.0
        %6714 = vmatmul.mubr.f32.gmra.mrb[0].mxu0 %v6642
        %v6715 = vpop.f32.mrb[0].mxu0
        %v6716 = vadd.f32 0.0, %v6715
        %v6717 = vpop.f32.mrb[0].mxu0
        %6718 = vdwg.mxu0
        %v6719 = vadd.f32 %v6631, %v6711
        %v6720 = vadd.f32 %v6632, %v6716
        %s6721 = scalar_lea.vmem %s15, 96
        %v6722 = vld [vmem:[%s6721] sm:$0xff]
        %v6723 = vld [vmem:[%s6721 + $0x8] sm:$0xff]
        %v6724 = vld [vmem:[%s6721 + $0x10] sm:$0xff]
        %v6725 = vld [vmem:[%s6721 + $0x18] sm:$0xff]
        %v6727 = vsel %vm2055, %v6353, 0
        %v6730 = vsel %vm2055, %v6354, 0
        %6732 = vmatprep.subr.mxu0 0.0
        %6733 = vmatpush1.msra.mxu0 %v6722
        %6734 = vmatprep.subr.mxu0 0.0
        %6735 = vmatpush1.msra.mxu0 %v6723
        %6736 = vmatprep.subr.mxu0 0.0
        %6737 = vmatpush1.msra.mxu0 %v6724
        %6738 = vmatprep.subr.mxu0 0.0
        %6739 = vmatpush1.msra.mxu0 %v6725
        %6740 = vmatprep.subr.mxu0 0.0
        %6741 = vmatpush1.msra.mxu0 0.0
        %6742 = vmatprep.subr.mxu0 0.0
        %6743 = vmatpush1.msra.mxu0 0.0
        %6744 = vmatprep.subr.mxu0 0.0
        %6745 = vmatpush1.msra.mxu0 0.0
        %6746 = vmatprep.subr.mxu0 0.0
        %6747 = vmatpush1.msra.mxu0 0.0
        %6748 = vmatprep.subr.mxu0 0.0
        %6749 = vmatpush1.msra.mxu0 0.0
        %6750 = vmatprep.subr.mxu0 0.0
        %6751 = vmatpush1.msra.mxu0 0.0
        %6752 = vmatprep.subr.mxu0 0.0
        %6753 = vmatpush1.msra.mxu0 0.0
        %6754 = vmatprep.subr.mxu0 0.0
        %6755 = vmatpush1.msra.mxu0 0.0
        %6756 = vmatprep.subr.mxu0 0.0
        %6757 = vmatpush1.msra.mxu0 0.0
        %6758 = vmatprep.subr.mxu0 0.0
        %6759 = vmatpush1.msra.mxu0 0.0
        %6760 = vmatprep.subr.mxu0 0.0
        %6761 = vmatpush1.msra.mxu0 0.0
        %6762 = vmatprep.subr.mxu0 0.0
        %6763 = vmatpush1.msra.mxu0 0.0
        %6764 = vmatprep.subr.mxu0 0.0
        %6765 = vmatpush1.msra.mxu0 0.0
        %6766 = vmatprep.subr.mxu0 0.0
        %6767 = vmatpush1.msra.mxu0 0.0
        %6768 = vmatprep.subr.mxu0 0.0
        %6769 = vmatpush1.msra.mxu0 0.0
        %6770 = vmatprep.subr.mxu0 0.0
        %6771 = vmatpush1.msra.mxu0 0.0
        %6772 = vmatprep.subr.mxu0 0.0
        %6773 = vmatpush1.msra.mxu0 0.0
        %6774 = vmatprep.subr.mxu0 0.0
        %6775 = vmatpush1.msra.mxu0 0.0
        %6776 = vmatprep.subr.mxu0 0.0
        %6777 = vmatpush1.msra.mxu0 0.0
        %6778 = vmatprep.subr.mxu0 0.0
        %6779 = vmatpush1.msra.mxu0 0.0
        %6780 = vmatprep.subr.mxu0 0.0
        %6781 = vmatpush1.msra.mxu0 0.0
        %6782 = vmatprep.subr.mxu0 0.0
        %6783 = vmatpush1.msra.mxu0 0.0
        %6784 = vmatprep.subr.mxu0 0.0
        %6785 = vmatpush1.msra.mxu0 0.0
        %6786 = vmatprep.subr.mxu0 0.0
        %6787 = vmatpush1.msra.mxu0 0.0
        %6788 = vmatprep.subr.mxu0 0.0
        %6789 = vmatpush1.msra.mxu0 0.0
        %6790 = vmatprep.subr.mxu0 0.0
        %6791 = vmatpush1.msra.mxu0 0.0
        %6792 = vmatprep.subr.mxu0 0.0
        %6793 = vmatpush1.msra.mxu0 0.0
        %6794 = vmatprep.subr.mxu0 0.0
        %6795 = vmatpush1.msra.mxu0 0.0
        %6796 = vmatprep.mubr.f32.mxu0 0.0
        %6797 = vmatmul.mubr.f32.gmra.mrb[0].mxu0 %v6727
        %v6798 = vpop.f32.mrb[0].mxu0
        %v6799 = vadd.f32 0.0, %v6798
        %v6800 = vpop.f32.mrb[0].mxu0
        %6801 = vmatprep.mubr.f32.mxu0 0.0
        %6802 = vmatmul.mubr.f32.gmra.mrb[0].mxu0 %v6730
        %v6803 = vpop.f32.mrb[0].mxu0
        %v6804 = vadd.f32 0.0, %v6803
        %v6805 = vpop.f32.mrb[0].mxu0
        %6806 = vdwg.mxu0
        %v6807 = vadd.f32 %v6719, %v6799
        %v6808 = vadd.f32 %v6720, %v6804
        %s6809 = scalar_lea.vmem %s15, 128
        %v6810 = vld [vmem:[%s6809] sm:$0xff]
        %v6811 = vld [vmem:[%s6809 + $0x8] sm:$0xff]
        %v6812 = vld [vmem:[%s6809 + $0x10] sm:$0xff]
        %v6813 = vld [vmem:[%s6809 + $0x18] sm:$0xff]
        %v6815 = vsel %vm2055, %v6359, 0
        %v6818 = vsel %vm2055, %v6360, 0
        %6820 = vmatprep.subr.mxu0 0.0
        %6821 = vmatpush1.msra.mxu0 %v6810
        %6822 = vmatprep.subr.mxu0 0.0
        %6823 = vmatpush1.msra.mxu0 %v6811
        %6824 = vmatprep.subr.mxu0 0.0
        %6825 = vmatpush1.msra.mxu0 %v6812
        %6826 = vmatprep.subr.mxu0 0.0
        %6827 = vmatpush1.msra.mxu0 %v6813
        %6828 = vmatprep.subr.mxu0 0.0
        %6829 = vmatpush1.msra.mxu0 0.0
        %6830 = vmatprep.subr.mxu0 0.0
        %6831 = vmatpush1.msra.mxu0 0.0
        %6832 = vmatprep.subr.mxu0 0.0
        %6833 = vmatpush1.msra.mxu0 0.0
        %6834 = vmatprep.subr.mxu0 0.0
        %6835 = vmatpush1.msra.mxu0 0.0
        %6836 = vmatprep.subr.mxu0 0.0
        %6837 = vmatpush1.msra.mxu0 0.0
        %6838 = vmatprep.subr.mxu0 0.0
        %6839 = vmatpush1.msra.mxu0 0.0
        %6840 = vmatprep.subr.mxu0 0.0
        %6841 = vmatpush1.msra.mxu0 0.0
        %6842 = vmatprep.subr.mxu0 0.0
        %6843 = vmatpush1.msra.mxu0 0.0
        %6844 = vmatprep.subr.mxu0 0.0
        %6845 = vmatpush1.msra.mxu0 0.0
        %6846 = vmatprep.subr.mxu0 0.0
        %6847 = vmatpush1.msra.mxu0 0.0
        %6848 = vmatprep.subr.mxu0 0.0
        %6849 = vmatpush1.msra.mxu0 0.0
        %6850 = vmatprep.subr.mxu0 0.0
        %6851 = vmatpush1.msra.mxu0 0.0
        %6852 = vmatprep.subr.mxu0 0.0
        %6853 = vmatpush1.msra.mxu0 0.0
        %6854 = vmatprep.subr.mxu0 0.0
        %6855 = vmatpush1.msra.mxu0 0.0
        %6856 = vmatprep.subr.mxu0 0.0
        %6857 = vmatpush1.msra.mxu0 0.0
        %6858 = vmatprep.subr.mxu0 0.0
        %6859 = vmatpush1.msra.mxu0 0.0
        %6860 = vmatprep.subr.mxu0 0.0
        %6861 = vmatpush1.msra.mxu0 0.0
        %6862 = vmatprep.subr.mxu0 0.0
        %6863 = vmatpush1.msra.mxu0 0.0
        %6864 = vmatprep.subr.mxu0 0.0
        %6865 = vmatpush1.msra.mxu0 0.0
        %6866 = vmatprep.subr.mxu0 0.0
        %6867 = vmatpush1.msra.mxu0 0.0
        %6868 = vmatprep.subr.mxu0 0.0
        %6869 = vmatpush1.msra.mxu0 0.0
        %6870 = vmatprep.subr.mxu0 0.0
        %6871 = vmatpush1.msra.mxu0 0.0
        %6872 = vmatprep.subr.mxu0 0.0
        %6873 = vmatpush1.msra.mxu0 0.0
        %6874 = vmatprep.subr.mxu0 0.0
        %6875 = vmatpush1.msra.mxu0 0.0
        %6876 = vmatprep.subr.mxu0 0.0
        %6877 = vmatpush1.msra.mxu0 0.0
        %6878 = vmatprep.subr.mxu0 0.0
        %6879 = vmatpush1.msra.mxu0 0.0
        %6880 = vmatprep.subr.mxu0 0.0
        %6881 = vmatpush1.msra.mxu0 0.0
        %6882 = vmatprep.subr.mxu0 0.0
        %6883 = vmatpush1.msra.mxu0 0.0
        %6884 = vmatprep.mubr.f32.mxu0 0.0
        %6885 = vmatmul.mubr.f32.gmra.mrb[0].mxu0 %v6815
        %v6886 = vpop.f32.mrb[0].mxu0
        %v6887 = vadd.f32 0.0, %v6886
        %v6888 = vpop.f32.mrb[0].mxu0
        %6889 = vmatprep.mubr.f32.mxu0 0.0
        %6890 = vmatmul.mubr.f32.gmra.mrb[0].mxu0 %v6818
        %v6891 = vpop.f32.mrb[0].mxu0
        %v6892 = vadd.f32 0.0, %v6891
        %v6893 = vpop.f32.mrb[0].mxu0
        %6894 = vdwg.mxu0
        %v6895 = vadd.f32 %v6807, %v6887
        %v6896 = vadd.f32 %v6808, %v6892
        %s6897 = scalar_lea.vmem %s15, 160
        %v6898 = vld [vmem:[%s6897] sm:$0xff]
        %v6899 = vld [vmem:[%s6897 + $0x8] sm:$0xff]
        %v6900 = vld [vmem:[%s6897 + $0x10] sm:$0xff]
        %v6901 = vld [vmem:[%s6897 + $0x18] sm:$0xff]
        %v6903 = vsel %vm2055, %v6365, 0
        %v6906 = vsel %vm2055, %v6366, 0
        %6908 = vmatprep.subr.mxu0 0.0
        %6909 = vmatpush1.msra.mxu0 %v6898
        %6910 = vmatprep.subr.mxu0 0.0
        %6911 = vmatpush1.msra.mxu0 %v6899
        %6912 = vmatprep.subr.mxu0 0.0
        %6913 = vmatpush1.msra.mxu0 %v6900
        %6914 = vmatprep.subr.mxu0 0.0
        %6915 = vmatpush1.msra.mxu0 %v6901
        %6916 = vmatprep.subr.mxu0 0.0
        %6917 = vmatpush1.msra.mxu0 0.0
        %6918 = vmatprep.subr.mxu0 0.0
        %6919 = vmatpush1.msra.mxu0 0.0
        %6920 = vmatprep.subr.mxu0 0.0
        %6921 = vmatpush1.msra.mxu0 0.0
        %6922 = vmatprep.subr.mxu0 0.0
        %6923 = vmatpush1.msra.mxu0 0.0
        %6924 = vmatprep.subr.mxu0 0.0
        %6925 = vmatpush1.msra.mxu0 0.0
        %6926 = vmatprep.subr.mxu0 0.0
        %6927 = vmatpush1.msra.mxu0 0.0
        %6928 = vmatprep.subr.mxu0 0.0
        %6929 = vmatpush1.msra.mxu0 0.0
        %6930 = vmatprep.subr.mxu0 0.0
        %6931 = vmatpush1.msra.mxu0 0.0
        %6932 = vmatprep.subr.mxu0 0.0
        %6933 = vmatpush1.msra.mxu0 0.0
        %6934 = vmatprep.subr.mxu0 0.0
        %6935 = vmatpush1.msra.mxu0 0.0
        %6936 = vmatprep.subr.mxu0 0.0
        %6937 = vmatpush1.msra.mxu0 0.0
        %6938 = vmatprep.subr.mxu0 0.0
        %6939 = vmatpush1.msra.mxu0 0.0
        %6940 = vmatprep.subr.mxu0 0.0
        %6941 = vmatpush1.msra.mxu0 0.0
        %6942 = vmatprep.subr.mxu0 0.0
        %6943 = vmatpush1.msra.mxu0 0.0
        %6944 = vmatprep.subr.mxu0 0.0
        %6945 = vmatpush1.msra.mxu0 0.0
        %6946 = vmatprep.subr.mxu0 0.0
        %6947 = vmatpush1.msra.mxu0 0.0
        %6948 = vmatprep.subr.mxu0 0.0
        %6949 = vmatpush1.msra.mxu0 0.0
        %6950 = vmatprep.subr.mxu0 0.0
        %6951 = vmatpush1.msra.mxu0 0.0
        %6952 = vmatprep.subr.mxu0 0.0
        %6953 = vmatpush1.msra.mxu0 0.0
        %6954 = vmatprep.subr.mxu0 0.0
        %6955 = vmatpush1.msra.mxu0 0.0
        %6956 = vmatprep.subr.mxu0 0.0
        %6957 = vmatpush1.msra.mxu0 0.0
        %6958 = vmatprep.subr.mxu0 0.0
        %6959 = vmatpush1.msra.mxu0 0.0
        %6960 = vmatprep.subr.mxu0 0.0
        %6961 = vmatpush1.msra.mxu0 0.0
        %6962 = vmatprep.subr.mxu0 0.0
        %6963 = vmatpush1.msra.mxu0 0.0
        %6964 = vmatprep.subr.mxu0 0.0
        %6965 = vmatpush1.msra.mxu0 0.0
        %6966 = vmatprep.subr.mxu0 0.0
        %6967 = vmatpush1.msra.mxu0 0.0
        %6968 = vmatprep.subr.mxu0 0.0
        %6969 = vmatpush1.msra.mxu0 0.0
        %6970 = vmatprep.subr.mxu0 0.0
        %6971 = vmatpush1.msra.mxu0 0.0
        %6972 = vmatprep.mubr.f32.mxu0 0.0
        %6973 = vmatmul.mubr.f32.gmra.mrb[0].mxu0 %v6903
        %v6974 = vpop.f32.mrb[0].mxu0
        %v6975 = vadd.f32 0.0, %v6974
        %v6976 = vpop.f32.mrb[0].mxu0
        %6977 = vmatprep.mubr.f32.mxu0 0.0
        %6978 = vmatmul.mubr.f32.gmra.mrb[0].mxu0 %v6906
        %v6979 = vpop.f32.mrb[0].mxu0
        %v6980 = vadd.f32 0.0, %v6979
        %v6981 = vpop.f32.mrb[0].mxu0
        %6982 = vdwg.mxu0
        %v6983 = vadd.f32 %v6895, %v6975
        %v6984 = vadd.f32 %v6896, %v6980
        %s6985 = scalar_lea.vmem %s15, 192
        %v6986 = vld [vmem:[%s6985] sm:$0xff]
        %v6987 = vld [vmem:[%s6985 + $0x8] sm:$0xff]
        %v6988 = vld [vmem:[%s6985 + $0x10] sm:$0xff]
        %v6989 = vld [vmem:[%s6985 + $0x18] sm:$0xff]
        %v6991 = vsel %vm2055, %v6371, 0
        %v6994 = vsel %vm2055, %v6372, 0
        %6996 = vmatprep.subr.mxu0 0.0
        %6997 = vmatpush1.msra.mxu0 %v6986
        %6998 = vmatprep.subr.mxu0 0.0
        %6999 = vmatpush1.msra.mxu0 %v6987
        %7000 = vmatprep.subr.mxu0 0.0
        %7001 = vmatpush1.msra.mxu0 %v6988
        %7002 = vmatprep.subr.mxu0 0.0
        %7003 = vmatpush1.msra.mxu0 %v6989
        %7004 = vmatprep.subr.mxu0 0.0
        %7005 = vmatpush1.msra.mxu0 0.0
        %7006 = vmatprep.subr.mxu0 0.0
        %7007 = vmatpush1.msra.mxu0 0.0
        %7008 = vmatprep.subr.mxu0 0.0
        %7009 = vmatpush1.msra.mxu0 0.0
        %7010 = vmatprep.subr.mxu0 0.0
        %7011 = vmatpush1.msra.mxu0 0.0
        %7012 = vmatprep.subr.mxu0 0.0
        %7013 = vmatpush1.msra.mxu0 0.0
        %7014 = vmatprep.subr.mxu0 0.0
        %7015 = vmatpush1.msra.mxu0 0.0
        %7016 = vmatprep.subr.mxu0 0.0
        %7017 = vmatpush1.msra.mxu0 0.0
        %7018 = vmatprep.subr.mxu0 0.0
        %7019 = vmatpush1.msra.mxu0 0.0
        %7020 = vmatprep.subr.mxu0 0.0
        %7021 = vmatpush1.msra.mxu0 0.0
        %7022 = vmatprep.subr.mxu0 0.0
        %7023 = vmatpush1.msra.mxu0 0.0
        %7024 = vmatprep.subr.mxu0 0.0
        %7025 = vmatpush1.msra.mxu0 0.0
        %7026 = vmatprep.subr.mxu0 0.0
        %7027 = vmatpush1.msra.mxu0 0.0
        %7028 = vmatprep.subr.mxu0 0.0
        %7029 = vmatpush1.msra.mxu0 0.0
        %7030 = vmatprep.subr.mxu0 0.0
        %7031 = vmatpush1.msra.mxu0 0.0
        %7032 = vmatprep.subr.mxu0 0.0
        %7033 = vmatpush1.msra.mxu0 0.0
        %7034 = vmatprep.subr.mxu0 0.0
        %7035 = vmatpush1.msra.mxu0 0.0
        %7036 = vmatprep.subr.mxu0 0.0
        %7037 = vmatpush1.msra.mxu0 0.0
        %7038 = vmatprep.subr.mxu0 0.0
        %7039 = vmatpush1.msra.mxu0 0.0
        %7040 = vmatprep.subr.mxu0 0.0
        %7041 = vmatpush1.msra.mxu0 0.0
        %7042 = vmatprep.subr.mxu0 0.0
        %7043 = vmatpush1.msra.mxu0 0.0
        %7044 = vmatprep.subr.mxu0 0.0
        %7045 = vmatpush1.msra.mxu0 0.0
        %7046 = vmatprep.subr.mxu0 0.0
        %7047 = vmatpush1.msra.mxu0 0.0
        %7048 = vmatprep.subr.mxu0 0.0
        %7049 = vmatpush1.msra.mxu0 0.0
        %7050 = vmatprep.subr.mxu0 0.0
        %7051 = vmatpush1.msra.mxu0 0.0
        %7052 = vmatprep.subr.mxu0 0.0
        %7053 = vmatpush1.msra.mxu0 0.0
        %7054 = vmatprep.subr.mxu0 0.0
        %7055 = vmatpush1.msra.mxu0 0.0
        %7056 = vmatprep.subr.mxu0 0.0
        %7057 = vmatpush1.msra.mxu0 0.0
        %7058 = vmatprep.subr.mxu0 0.0
        %7059 = vmatpush1.msra.mxu0 0.0
        %7060 = vmatprep.mubr.f32.mxu0 0.0
        %7061 = vmatmul.mubr.f32.gmra.mrb[0].mxu0 %v6991
        %v7062 = vpop.f32.mrb[0].mxu0
        %v7063 = vadd.f32 0.0, %v7062
        %v7064 = vpop.f32.mrb[0].mxu0
        %7065 = vmatprep.mubr.f32.mxu0 0.0
        %7066 = vmatmul.mubr.f32.gmra.mrb[0].mxu0 %v6994
        %v7067 = vpop.f32.mrb[0].mxu0
        %v7068 = vadd.f32 0.0, %v7067
        %v7069 = vpop.f32.mrb[0].mxu0
        %7070 = vdwg.mxu0
        %v7071 = vadd.f32 %v6983, %v7063
        %v7072 = vadd.f32 %v6984, %v7068
        %s7073 = scalar_lea.vmem %s15, 224
        %v7074 = vld [vmem:[%s7073] sm:$0xff]
        %v7075 = vld [vmem:[%s7073 + $0x8] sm:$0xff]
        %v7076 = vld [vmem:[%s7073 + $0x10] sm:$0xff]
        %v7077 = vld [vmem:[%s7073 + $0x18] sm:$0xff]
        %v7079 = vsel %vm2055, %v6377, 0
        %v7082 = vsel %vm2055, %v6378, 0
        %7084 = vmatprep.subr.mxu0 0.0
        %7085 = vmatpush1.msra.mxu0 %v7074
        %7086 = vmatprep.subr.mxu0 0.0
        %7087 = vmatpush1.msra.mxu0 %v7075
        %7088 = vmatprep.subr.mxu0 0.0
        %7089 = vmatpush1.msra.mxu0 %v7076
        %7090 = vmatprep.subr.mxu0 0.0
        %7091 = vmatpush1.msra.mxu0 %v7077
        %7092 = vmatprep.subr.mxu0 0.0
        %7093 = vmatpush1.msra.mxu0 0.0
        %7094 = vmatprep.subr.mxu0 0.0
        %7095 = vmatpush1.msra.mxu0 0.0
        %7096 = vmatprep.subr.mxu0 0.0
        %7097 = vmatpush1.msra.mxu0 0.0
        %7098 = vmatprep.subr.mxu0 0.0
        %7099 = vmatpush1.msra.mxu0 0.0
        %7100 = vmatprep.subr.mxu0 0.0
        %7101 = vmatpush1.msra.mxu0 0.0
        %7102 = vmatprep.subr.mxu0 0.0
        %7103 = vmatpush1.msra.mxu0 0.0
        %7104 = vmatprep.subr.mxu0 0.0
        %7105 = vmatpush1.msra.mxu0 0.0
        %7106 = vmatprep.subr.mxu0 0.0
        %7107 = vmatpush1.msra.mxu0 0.0
        %7108 = vmatprep.subr.mxu0 0.0
        %7109 = vmatpush1.msra.mxu0 0.0
        %7110 = vmatprep.subr.mxu0 0.0
        %7111 = vmatpush1.msra.mxu0 0.0
        %7112 = vmatprep.subr.mxu0 0.0
        %7113 = vmatpush1.msra.mxu0 0.0
        %7114 = vmatprep.subr.mxu0 0.0
        %7115 = vmatpush1.msra.mxu0 0.0
        %7116 = vmatprep.subr.mxu0 0.0
        %7117 = vmatpush1.msra.mxu0 0.0
        %7118 = vmatprep.subr.mxu0 0.0
        %7119 = vmatpush1.msra.mxu0 0.0
        %7120 = vmatprep.subr.mxu0 0.0
        %7121 = vmatpush1.msra.mxu0 0.0
        %7122 = vmatprep.subr.mxu0 0.0
        %7123 = vmatpush1.msra.mxu0 0.0
        %7124 = vmatprep.subr.mxu0 0.0
        %7125 = vmatpush1.msra.mxu0 0.0
        %7126 = vmatprep.subr.mxu0 0.0
        %7127 = vmatpush1.msra.mxu0 0.0
        %7128 = vmatprep.subr.mxu0 0.0
        %7129 = vmatpush1.msra.mxu0 0.0
        %7130 = vmatprep.subr.mxu0 0.0
        %7131 = vmatpush1.msra.mxu0 0.0
        %7132 = vmatprep.subr.mxu0 0.0
        %7133 = vmatpush1.msra.mxu0 0.0
        %7134 = vmatprep.subr.mxu0 0.0
        %7135 = vmatpush1.msra.mxu0 0.0
        %7136 = vmatprep.subr.mxu0 0.0
        %7137 = vmatpush1.msra.mxu0 0.0
        %7138 = vmatprep.subr.mxu0 0.0
        %7139 = vmatpush1.msra.mxu0 0.0
        %7140 = vmatprep.subr.mxu0 0.0
        %7141 = vmatpush1.msra.mxu0 0.0
        %7142 = vmatprep.subr.mxu0 0.0
        %7143 = vmatpush1.msra.mxu0 0.0
        %7144 = vmatprep.subr.mxu0 0.0
        %7145 = vmatpush1.msra.mxu0 0.0
        %7146 = vmatprep.subr.mxu0 0.0
        %7147 = vmatpush1.msra.mxu0 0.0
        %7148 = vmatprep.mubr.f32.mxu0 0.0
        %7149 = vmatmul.mubr.f32.gmra.mrb[0].mxu0 %v7079
        %v7150 = vpop.f32.mrb[0].mxu0
        %v7151 = vadd.f32 0.0, %v7150
        %v7152 = vpop.f32.mrb[0].mxu0
        %7153 = vmatprep.mubr.f32.mxu0 0.0
        %7154 = vmatmul.mubr.f32.gmra.mrb[0].mxu0 %v7082
        %v7155 = vpop.f32.mrb[0].mxu0
        %v7156 = vadd.f32 0.0, %v7155
        %v7157 = vpop.f32.mrb[0].mxu0
        %7158 = vdwg.mxu0
        %v7159 = vadd.f32 %v7071, %v7151
        %v7160 = vadd.f32 %v7072, %v7156
        %vm7161 = vcmask 31744
        %v7162 = vsel %vm7161, %v7159, -inf
        %7163 = vmax.xlane.f32.xlu0 %v7162
        %v7164 = vpop.xlane.xlu0 %7163
        %v7165 = vsel %vm7161, %v7160, -inf
        %7166 = vmax.xlane.f32.xlu0 %v7165
        %v7167 = vpop.xlane.xlu0 %7166
        %v7168 = vsub.f32 %v7159, %v7164
        %v7169 = vsub.f32 %v7160, %v7167
        %v7170 = vmul.f32 %v7168, 1.442695
        %v7171 = vpow.pop %v7170
        %v7172 = vmul.f32 %v7169, 1.442695
        %v7173 = vpow.pop %v7172
        %v7174 = vsel %vm7161, %v7171, 0.0
        %7175 = vadd.xlane.f32.xlu0 %v7174
        %v7176 = vpop.xlane.xlu0 %7175
        %v7177 = vsel %vm7161, %v7173, 0.0
        %7178 = vadd.xlane.f32.xlu0 %v7177
        %v7179 = vpop.xlane.xlu0 %7178
        %v7180 = vlog2.pop %v7176
        %v7181 = vmul.f32 %v7180, 0.6931472
        %v7182 = vlog2.pop %v7179
        %v7183 = vmul.f32 %v7182, 0.6931472
        %v7184 = vsub.f32 %v7168, %v7181
        %v7185 = vsub.f32 %v7169, %v7183
        %7186 = vst.msk [vmem:[%s654] sm:$0xff] %vm7161, %v7184
        %7187 = vst.msk [vmem:[%s654 + $0x8] sm:$0xff] %vm7161, %v7185
        %p7188 = scmp.lt.s32.totalorder %s32, 1
        %s7189 = scalar_select %p7188, %s32, 1
        %s7190 = smul.addr %s7189, 2
        %s7191 = smul.addr %s7190, 8
        %s7192 = scalar_lea.vmem %s16, %s7191
        // Predicated region
        $region117: #{kagin_forward.1} parent=83 // pred_check
          %p7193 = pneg %p396
        $region118: #{kagin_forward.1} parent=83 // pred_check_branch
          %7195 = sbr.rel (%p7193) target = $region120
        $region119: #{kagin_forward.1} parent=83 // pred_region
          _
        $region120: #{kagin_forward.1} parent=83 // pred_fallthru
          _
      $region84: #{kagin_forward.1} parent=5 // pred_fallthru
        _
      %p7196 = scmp.le.s32.totalorder 2, %s27
      // Predicated region
      $region121: #{kagin_forward.1} parent=5 // pred_check
        %p7197 = pneg %p7196
      $region122: #{kagin_forward.1} parent=5 // pred_check_branch
        %7199 = sbr.rel (%p7197) target = $region124
      $region123: #{kagin_forward.1} parent=5 // pred_region
        %s7200 = ssub.s32 %s27, 2
        // Predicated region
        $region125: #{kagin_forward.1} parent=123 // pred_check
          %p7201 = pneg %p402
        $region126: #{kagin_forward.1} parent=123 // pred_check_branch
          %7203 = sbr.rel (%p7201) target = $region128
        $region127: #{kagin_forward.1} parent=123 // pred_region
          %p7204 = scmp.lt.s32.totalorder %s33, 1
          %s7205 = scalar_select %p7204, %s33, 1
          %s7206 = smul.addr %s7205, 2
          %s7207 = smul.addr %s7206, 8
          %s7208 = scalar_lea.vmem %s16, %s7207
        $region128: #{kagin_forward.1} parent=123 // pred_fallthru
          _
      $region124: #{kagin_forward.1} parent=5 // pred_fallthru
        _
    $region6: #{kagin_forward.1} parent=1 // loop_footer
      %s31 = sadd.s32 1, %s27
    $region7: #{kagin_forward.1} parent=1 // loop_footer_branch
      %26 = sbr.rel target = $region3
    $region8: #{kagin_forward.1} parent=1 // loop_exit
      _
    %7209 = vsyncpa [#allocation3], 1
    %s7210 = scalar_lea.sflag [#allocation3], 1
    %7211 = vsyncpa %s7210, 1
    %7212 = vsyncpa [#allocation5], 1
    %7213 = vsyncpa [#allocation8], 1
    %7214 = vsyncpa [#allocation11], 1
    %7215 = vsyncpa [#allocation14], 1

</llo_original>
